<compile_context>
chip_gen: v6e
topology: v6e:2x2x1
jax: 0.10.0
libtpu: 0.0.40
codegen_flags: <defaults>
</compile_context>

<pallas_src>
import functools
import math

import jax
import jax.numpy as jnp
from jax.experimental import pallas as pl
from jax.experimental.pallas import tpu as pltpu

EPS = 1e-5
LANE = 128


def _rup(x, m):
    return ((x + m - 1) // m) * m


# ---------------------------------------------------------------------------
# Kernel 1: plain tiled matmul (stem 7x7-s2-p1 conv as im2col @ W), f32 acc.
# ---------------------------------------------------------------------------
def _matmul_kernel(x_ref, w_ref, o_ref, acc_ref):
    @pl.when(pl.program_id(2) == 0)
    def _():
        acc_ref[...] = jnp.zeros_like(acc_ref)

    acc_ref[...] += jnp.dot(x_ref[...], w_ref[...],
                            preferred_element_type=jnp.float32)

    @pl.when(pl.program_id(2) == pl.num_programs(2) - 1)
    def _():
        o_ref[...] = acc_ref[...].astype(o_ref.dtype)


def stem_matmul(x, w):
    # x: (M, K) bf16, w: (K, N) bf16, K and N multiples of 128.
    M, K = x.shape
    N = w.shape[1]
    assert K % LANE == 0 and N % LANE == 0
    # >= 2 M-tiles when possible so both v7x TensorCores get work.
    tm = 8 if M <= 8 else _rup((M + 1) // 2, 8)
    Mp = _rup(M, tm)
    if Mp != M:
        x = jnp.pad(x, ((0, Mp - M), (0, 0)))
    tn = min(N, 256)
    while N % tn:
        tn -= LANE
    tk = min(K, 512)
    while K % tk:
        tk -= LANE
    # NOTE: for non-toy configs raise tiles toward (512,512,512+) and set
    # pltpu.CompilerParams(vmem_limit_bytes=...) (v5e scoped default is 16 MiB).
    out = pl.pallas_call(
        _matmul_kernel,
        out_shape=jax.ShapeDtypeStruct((Mp, N), jnp.bfloat16),
        grid=(Mp // tm, N // tn, K // tk),
        in_specs=[pl.BlockSpec((tm, tk), lambda i, j, k: (i, k)),
                  pl.BlockSpec((tk, tn), lambda i, j, k: (k, j))],
        out_specs=pl.BlockSpec((tm, tn), lambda i, j, k: (i, j)),
        scratch_shapes=[pltpu.VMEM((tm, tn), jnp.float32)],
        compiler_params=pltpu.CompilerParams(
            dimension_semantics=("parallel", "parallel", "arbitrary")),
    )(x, w)
    return out[:M] if Mp != M else out


# ---------------------------------------------------------------------------
# Kernel 2: fused dense layer (one pallas_call per layer, grid over batch):
#   BN1+ReLU -> [1x1 conv -> BN2+ReLU] -> 3x3 conv (9 slab matmuls) -> cat.
# The 3x3 weights are pre-placed at the layer's channel offset inside a
# full-buffer-width (Cp) output, so "cat" is just  out = x + conv  (the slot
# channels of x are zero by construction).  Output aliases the input buffer.
# ---------------------------------------------------------------------------
def _dense_layer_kernel(*refs, H, W, base, bottleneck):
    if bottleneck:
        x_ref, s1_ref, b1_ref, w1_ref, s2_ref, b2_ref, w2_ref, o_ref, pad_ref = refs
    else:
        x_ref, s1_ref, b1_ref, w2_ref, o_ref, pad_ref = refs

    HW = H * W
    x = x_ref[0]                                               # (HW, Cp) bf16
    a = jnp.maximum(x.astype(jnp.float32) * s1_ref[...] + b1_ref[...], 0.0)
    if bottleneck:
        h1 = jnp.dot(a.astype(jnp.bfloat16), w1_ref[...],
                     preferred_element_type=jnp.float32)       # 1x1 conv
        a = jnp.maximum(h1 * s2_ref[...] + b2_ref[...], 0.0)   # BN2 + ReLU
    h = a.astype(jnp.bfloat16)                                 # (HW, Cc)

    # Zero-padded shift buffer in VMEM (flattened HW axis); h placed at an
    # 8-aligned sublane offset so the dense store is aligned.
    pad_ref[...] = jnp.zeros_like(pad_ref)
    pad_ref[pl.ds(base, HW), :] = h

    # Per-tap column masks (row-wrap along the flattened HW axis).
    if W > 1:
        cc = pad_ref.shape[1]
        xpos = jax.lax.broadcasted_iota(jnp.int32, (HW, cc), 0) % W
        not_left = xpos > 0
        not_right = xpos < (W - 1)

    cp = o_ref.shape[-1]
    acc = jnp.zeros((HW, cp), jnp.float32)
    for dy in (-1, 0, 1):
        if H == 1 and dy != 0:          # tap reads only zero padding -> skip
            continue
        for dx in (-1, 0, 1):
            if W == 1 and dx != 0:      # tap reads only zero padding -> skip
                continue
            tap = (dy + 1) * 3 + (dx + 1)
            slab = pad_ref[pl.ds(base + dy * W + dx, HW), :]   # (HW, Cc)
            if dx == -1:
                slab = jnp.where(not_left, slab, jnp.zeros_like(slab))
            elif dx == 1:
                slab = jnp.where(not_right, slab, jnp.zeros_like(slab))
            acc = acc + jnp.dot(slab, w2_ref[tap],
                                preferred_element_type=jnp.float32)

    # torch.cat((x, out), 1): the layer's growth slot in x is zero, and acc is
    # zero outside that slot (weights were placed at init), so out = x + acc.
    o_ref[0] = (x.astype(jnp.float32) + acc).astype(o_ref.dtype)


def dense_layer(buf, lp, H, W):
    N, HW, Cp = buf.shape
    assert HW == H * W
    bottleneck = lp['kind'] == 'bottleneck'
    Cc = lp['w2'].shape[1]                       # conv input channels (padded)
    base = _rup(W + 1, 8)
    pad_rows = _rup(base + HW + W + 1, 8)

    def full(shape):
        return pl.BlockSpec(shape, lambda n, _r=len(shape): (0,) * _r)

    buf_spec = pl.BlockSpec((1, HW, Cp), lambda n: (n, 0, 0))
    if bottleneck:
        args = (buf, lp['s1'], lp['b1'], lp['w1'], lp['s2'], lp['b2'], lp['w2'])
        in_specs = [buf_spec, full((1, Cp)), full((1, Cp)), full(lp['w1'].shape),
                    full(lp['s2'].shape), full(lp['b2'].shape), full(lp['w2'].shape)]
    else:
        args = (buf, lp['s1'], lp['b1'], lp['w2'])
        in_specs = [buf_spec, full((1, Cp)), full((1, Cp)), full(lp['w2'].shape)]

    kernel = functools.partial(_dense_layer_kernel, H=H, W=W, base=base,
                               bottleneck=bottleneck)
    return pl.pallas_call(
        kernel,
        out_shape=jax.ShapeDtypeStruct((N, HW, Cp), jnp.bfloat16),
        grid=(N,),
        in_specs=in_specs,
        out_specs=pl.BlockSpec((1, HW, Cp), lambda n: (n, 0, 0)),
        scratch_shapes=[pltpu.VMEM((pad_rows, Cc), jnp.bfloat16)],
        input_output_aliases={0: 0},             # concat buffer updated in place
        compiler_params=pltpu.CompilerParams(dimension_semantics=("parallel",)),
    )(*args)


# ---------------------------------------------------------------------------
# Kernel 3: Transition = BN+ReLU -> 2x2 avg pool -> 1x1 conv (pool commuted in
# front of the linear conv).  Output is already widened to the next block's
# padded buffer width (extra channels are zero).
# ---------------------------------------------------------------------------
def _transition_kernel(x_ref, pool_ref, s_ref, b_ref, w_ref, o_ref):
    a = jnp.maximum(x_ref[0].astype(jnp.float32) * s_ref[...] + b_ref[...], 0.0)
    pooled = jnp.dot(pool_ref[...], a, preferred_element_type=jnp.float32)
    out = jnp.dot(pooled.astype(jnp.bfloat16), w_ref[...],
                  preferred_element_type=jnp.float32)
    o_ref[0] = out.astype(o_ref.dtype)


def _pool_matrix(H, W):
    # (Ho*Wo, H*W) matrix of the floor-mode 2x2 average pool (trace-time const).
    Ho, Wo = H // 2, W // 2
    o = jnp.arange(Ho * Wo)[:, None]
    i = jnp.arange(H * W)[None, :]
    yo, xo = o // Wo, o % Wo
    y, x = i // W, i % W
    sel = ((y // 2) == yo) & ((x // 2) == xo) & (y < 2 * Ho) & (x < 2 * Wo)
    return jnp.where(sel, 0.25, 0.0).astype(jnp.float32)


def transition(buf, tp, H, W, c_next_pad):
    N, HW, Cp = buf.shape
    Ho, Wo = H // 2, W // 2
    pool = _pool_matrix(H, W)
    return pl.pallas_call(
        _transition_kernel,
        out_shape=jax.ShapeDtypeStruct((N, Ho * Wo, c_next_pad), jnp.bfloat16),
        grid=(N,),
        in_specs=[pl.BlockSpec((1, HW, Cp), lambda n: (n, 0, 0)),
                  pl.BlockSpec((Ho * Wo, HW), lambda n: (0, 0)),
                  pl.BlockSpec((1, Cp), lambda n: (0, 0)),
                  pl.BlockSpec((1, Cp), lambda n: (0, 0)),
                  pl.BlockSpec((Cp, c_next_pad), lambda n: (0, 0))],
        out_specs=pl.BlockSpec((1, Ho * Wo, c_next_pad), lambda n: (n, 0, 0)),
        compiler_params=pltpu.CompilerParams(dimension_semantics=("parallel",)),
    )(buf, pool, tp['s'], tp['b'], tp['w'])


# ---------------------------------------------------------------------------
# Kernel 4: head = BN+ReLU -> global average pool -> Linear, batched (no
# per-sample grid), lane-dense padded FC output.
# ---------------------------------------------------------------------------
def _head_kernel(x_ref, s_ref, b_ref, w_ref, bias_ref, o_ref):
    hw = x_ref.shape[1]
    a = jnp.maximum(x_ref[...].astype(jnp.float32) * s_ref[...] + b_ref[...], 0.0)
    pooled = jnp.sum(a, axis=1) * (1.0 / hw)                       # (N, C)
    o_ref[...] = (jnp.dot(pooled.astype(jnp.bfloat16), w_ref[...],
                          preferred_element_type=jnp.float32)
                  + bias_ref[...]).astype(o_ref.dtype)


def head(buf, hp):
    N = buf.shape[0]
    ncp = hp['w'].shape[1]
    return pl.pallas_call(
        _head_kernel,
        out_shape=jax.ShapeDtypeStruct((N, ncp), jnp.float32),
    )(buf, hp['s'], hp['b'], hp['w'], hp['b_fc'])


# ---------------------------------------------------------------------------
# Glue (plain JAX): small im2col for the 3-channel 7x7 stem only, layer wiring.
# ---------------------------------------------------------------------------
def im2col_stem(x_nhwc, k, stride, pad):
    N, H, W, C = x_nhwc.shape
    xp = jnp.pad(x_nhwc, ((0, 0), (pad, pad), (pad, pad), (0, 0)))
    Ho = (H + 2 * pad - k) // stride + 1
    Wo = (W + 2 * pad - k) // stride + 1
    cols = []
    for ky in range(k):
        for kx in range(k):
            cols.append(xp[:, ky:ky + stride * (Ho - 1) + 1:stride,
                           kx:kx + stride * (Wo - 1) + 1:stride, :])
    patches = jnp.stack(cols, axis=3).reshape(N * Ho * Wo, k * k * C)
    return patches, (N, Ho, Wo)


def stem_forward(x_nhwc, sp):
    # conv1: 7x7, stride 2, pad 1 (exactly as in the reference module), no bias.
    patches, (N, Ho, Wo) = im2col_stem(x_nhwc, 7, 2, 1)
    Kp, Cp1 = sp['w'].shape
    patches = jnp.pad(patches, ((0, 0), (0, Kp - patches.shape[1]))).astype(jnp.bfloat16)
    h = stem_matmul(patches, sp['w'])          # (N*Ho*Wo, Cp1), extra chans zero
    return h.reshape(N, Ho * Wo, Cp1), Ho, Wo


def dense_block_forward(buf, block, H, W):
    for lp in block['layers']:
        buf = dense_layer(buf, lp, H, W)
    return buf


def densenet_forward(x_nchw, params):
    x = jnp.transpose(x_nchw, (0, 2, 3, 1)).astype(jnp.float32)     # NCHW -> NHWC
    buf, H, W = stem_forward(x, params['stem'])
    buf = dense_block_forward(buf, params['dense1'], H, W)
    buf = transition(buf, params['trans1'], H, W, params['dense2']['ctot_pad'])
    H, W = H // 2, W // 2
    buf = dense_block_forward(buf, params['dense2'], H, W)
    buf = transition(buf, params['trans2'], H, W, params['dense3']['ctot_pad'])
    H, W = H // 2, W // 2
    buf = dense_block_forward(buf, params['dense3'], H, W)
    logits = head(buf, params['head'])
    return logits[:, :params['head']['n_classes']]


# ---------------------------------------------------------------------------
# Parameter init: BN folding, bf16 cast, lane padding, channel-offset placement
# of the 3x3 weights — all hoisted to init time.
# ---------------------------------------------------------------------------
def fold_bn(gamma, beta, mean, var, c_pad):
    c = gamma.shape[0]
    scale = gamma / jnp.sqrt(var + EPS)
    shift = beta - mean * scale
    s = jnp.zeros((1, c_pad), jnp.float32).at[0, :c].set(scale)
    b = jnp.zeros((1, c_pad), jnp.float32).at[0, :c].set(shift)
    return s, b


def _bn_identity(c, c_pad):
    # PyTorch init: weight=1, bias=0, running_mean=0, running_var=1 (eval stats).
    return fold_bn(jnp.ones((c,), jnp.float32), jnp.zeros((c,), jnp.float32),
                   jnp.zeros((c,), jnp.float32), jnp.ones((c,), jnp.float32), c_pad)


def init_densenet(key, growthRate, depth, reduction, bottleneck, nClasses):
    nDenseBlocks = (depth - 4) // 3
    if bottleneck:
        nDenseBlocks //= 2
    nDenseBlocks = int(nDenseBlocks)
    g = growthRate
    keys = iter(jax.random.split(key, 1024))
    params = {}

    def make_dense(cin):
        ctot = cin + nDenseBlocks * g
        cp = _rup(ctot, LANE)
        layers = []
        for i in range(nDenseBlocks):
            c_in_i = cin + i * g
            off = c_in_i                                   # growth-slot offset
            if bottleneck:
                inter = 4 * g
                ip = _rup(inter, LANE)
                s1, b1 = _bn_identity(c_in_i, cp)
                s2, b2 = _bn_identity(inter, ip)
                w1 = 0.01 * jax.random.normal(next(keys), (c_in_i, inter), jnp.float32)
                w1 = (jnp.zeros((cp, ip), jnp.float32)
                      .at[:c_in_i, :inter].set(w1).astype(jnp.bfloat16))
                # Real PyTorch (cout,cin,kh,kw) weights map to (kh,kw,cin,cout) here.
                w2 = 0.01 * jax.random.normal(next(keys), (3, 3, inter, g), jnp.float32)
                w2 = (jnp.zeros((3, 3, ip, cp), jnp.float32)
                      .at[:, :, :inter, off:off + g].set(w2)
                      .reshape(9, ip, cp).astype(jnp.bfloat16))
                layers.append(dict(kind='bottleneck', s1=s1, b1=b1, w1=w1,
                                   s2=s2, b2=b2, w2=w2))
            else:
                s1, b1 = _bn_identity(c_in_i, cp)
                w2 = 0.01 * jax.random.normal(next(keys), (3, 3, c_in_i, g), jnp.float32)
                w2 = (jnp.zeros((3, 3, cp, cp), jnp.float32)
                      .at[:, :, :c_in_i, off:off + g].set(w2)
                      .reshape(9, cp, cp).astype(jnp.bfloat16))
                layers.append(dict(kind='single', s1=s1, b1=b1, w2=w2))
        return dict(layers=layers, cin=cin, ctot=ctot, ctot_pad=cp), ctot

    nC0 = 2 * g
    params['dense1'], c1 = make_dense(nC0)
    n1 = int(math.floor(c1 * reduction))
    params['dense2'], c2 = make_dense(n1)
    n2 = int(math.floor(c2 * reduction))
    params['dense3'], c3 = make_dense(n2)
    cp1, cp2, cp3 = (params['dense1']['ctot_pad'], params['dense2']['ctot_pad'],
                     params['dense3']['ctot_pad'])

    # Stem: im2col matmul weight, output widened to dense1's buffer width.
    Kp = _rup(7 * 7 * 3, LANE)
    ws = 0.01 * jax.random.normal(next(keys), (7, 7, 3, nC0), jnp.float32).reshape(-1, nC0)
    params['stem'] = dict(
        w=(jnp.zeros((Kp, cp1), jnp.float32)
           .at[:ws.shape[0], :nC0].set(ws).astype(jnp.bfloat16)))

    # Transitions: 1x1 weight widened to the NEXT block's buffer width.
    def make_trans(c_in, cp_in, n_out, cp_out):
        s, b = _bn_identity(c_in, cp_in)
        w = 0.01 * jax.random.normal(next(keys), (c_in, n_out), jnp.float32)
        w = (jnp.zeros((cp_in, cp_out), jnp.float32)
             .at[:c_in, :n_out].set(w).astype(jnp.bfloat16))
        return dict(s=s, b=b, w=w)

    params['trans1'] = make_trans(c1, cp1, n1, cp2)
    params['trans2'] = make_trans(c2, cp2, n2, cp3)

    # Head.
    s, b = _bn_identity(c3, cp3)
    ncp = _rup(nClasses, LANE)
    fc = 0.01 * jax.random.normal(next(keys), (c3, nClasses), jnp.float32)
    params['head'] = dict(
        s=s, b=b,
        w=(jnp.zeros((cp3, ncp), jnp.float32)
           .at[:c3, :nClasses].set(fc).astype(jnp.bfloat16)),
        b_fc=jnp.zeros((1, ncp), jnp.float32),
        n_classes=nClasses)
    return params


# ---------------------------------------------------------------------------
# Demo
# ---------------------------------------------------------------------------
if __name__ == "__main__":
    # Small DenseNet config (PyTorch constructor args):
    #   growthRate=4, depth=16, bottleneck=True -> nDenseBlocks = ((16-4)//3)//2 = 2
    #   CLASS_NUM = 4 -> nClasses = (CLASS_NUM + 1) * 4 = 20
    CLASS_NUM = 4
    growthRate, depth, reduction, bottleneck = 4, 16, 0.5, True
    nClasses = (CLASS_NUM + 1) * 4

    key = jax.random.PRNGKey(0)
    k_params, k_input = jax.random.split(key)
    params = init_densenet(k_params, growthRate, depth, reduction, bottleneck, nClasses)

    # Input in PyTorch NCHW convention: (batch=2, channels=3, 16, 16)
    x = jax.random.normal(k_input, (2, 3, 16, 16), jnp.float32)

    fwd = jax.jit(lambda inp: densenet_forward(inp, params))
    out = jax.block_until_ready(fwd(x))
    assert out.shape == (2, nClasses), out.shape
    assert bool(jnp.all(jnp.isfinite(out)))
    print("KERNEL_OK")
</pallas_src>

<mosaic_0001>
module attributes {stable_mosaic.version = 11 : i64} {
  func.func @_matmul_kernel(%arg0: i32, %arg1: i32, %arg2: i32, %arg3: memref<40x256xbf16, #tpu.memory_space<vmem>>, %arg4: memref<256x128xbf16, #tpu.memory_space<vmem>>, %arg5: memref<40x128xbf16, #tpu.memory_space<vmem>>, %arg6: memref<40x128xf32, #tpu.memory_space<vmem>>) attributes {dimension_semantics = [#tpu.dimension_semantics<parallel>, #tpu.dimension_semantics<parallel>, #tpu.dimension_semantics<arbitrary>], iteration_bounds = array<i64: 2, 1, 1>, scalar_prefetch = 0 : i64, scratch_operands = 1 : i64, tpu.core_type = #tpu.core_type<tc>, window_params = [{transform_indices = @transform_0, window_bounds = array<i64: 40, 256>}, {transform_indices = @transform_1, window_bounds = array<i64: 256, 128>}, {transform_indices = @transform_2, window_bounds = array<i64: 40, 128>}]} {
    %c0_i32 = arith.constant 0 : i32
    %0 = arith.cmpi eq, %arg2, %c0_i32 : i32
    %1 = arith.extui %0 : i1 to i32
    %c0_i32_0 = arith.constant 0 : i32
    %2 = arith.cmpi ne, %1, %c0_i32_0 : i32
    scf.if %2 {
      %cst_10 = arith.constant 0.000000e+00 : f32
      %12 = vector.broadcast %cst_10 : f32 to vector<40x128xf32>
      %c0_11 = arith.constant 0 : index
      %c0_12 = arith.constant 0 : index
      %13 = vector.load %arg6[%c0_11, %c0_12] : memref<40x128xf32, #tpu.memory_space<vmem>>, vector<40x128xf32>
      tpu.vector_store %arg6[%c0_11, %c0_12], %12 {strides = array<i32>} : memref<40x128xf32, #tpu.memory_space<vmem>>, vector<40x128xf32>,
    } else {
    }
    %c0 = arith.constant 0 : index
    %c0_1 = arith.constant 0 : index
    %3 = vector.load %arg6[%c0, %c0_1] : memref<40x128xf32, #tpu.memory_space<vmem>>, vector<40x128xf32>
    %c0_2 = arith.constant 0 : index
    %c0_3 = arith.constant 0 : index
    %4 = vector.load %arg3[%c0_2, %c0_3] : memref<40x256xbf16, #tpu.memory_space<vmem>>, vector<40x256xbf16>
    %c0_4 = arith.constant 0 : index
    %c0_5 = arith.constant 0 : index
    %5 = vector.load %arg4[%c0_4, %c0_5] : memref<256x128xbf16, #tpu.memory_space<vmem>>, vector<256x128xbf16>
    %cst = arith.constant dense<0.000000e+00> : vector<40x128xf32>
    %6 = tpu.matmul %4, %5, %cst {dimension_numbers = #tpu.dot_dimension_numbers<[1], [0], [0], [1], [0, 0, 1, 1], [], []>} : vector<40x256xbf16>, vector<256x128xbf16>, vector<40x128xf32> -> vector<40x128xf32>
    %7 = arith.addf %3, %6 : vector<40x128xf32>
    %c0_6 = arith.constant 0 : index
    %c0_7 = arith.constant 0 : index
    %8 = vector.load %arg6[%c0_6, %c0_7] : memref<40x128xf32, #tpu.memory_space<vmem>>, vector<40x128xf32>
    tpu.vector_store %arg6[%c0_6, %c0_7], %7 {strides = array<i32>} : memref<40x128xf32, #tpu.memory_space<vmem>>, vector<40x128xf32>,
    %c0_i32_8 = arith.constant 0 : i32
    %9 = arith.cmpi eq, %arg2, %c0_i32_8 : i32
    %10 = arith.extui %9 : i1 to i32
    %c0_i32_9 = arith.constant 0 : i32
    %11 = arith.cmpi ne, %10, %c0_i32_9 : i32
    scf.if %11 {
      %c0_10 = arith.constant 0 : index
      %c0_11 = arith.constant 0 : index
      %12 = vector.load %arg6[%c0_10, %c0_11] : memref<40x128xf32, #tpu.memory_space<vmem>>, vector<40x128xf32>
      %13 = arith.truncf %12 : vector<40x128xf32> to vector<40x128xbf16>
      %c0_12 = arith.constant 0 : index
      %c0_13 = arith.constant 0 : index
      %14 = vector.load %arg5[%c0_12, %c0_13] : memref<40x128xbf16, #tpu.memory_space<vmem>>, vector<40x128xbf16>
      tpu.vector_store %arg5[%c0_12, %c0_13], %13 {strides = array<i32>} : memref<40x128xbf16, #tpu.memory_space<vmem>>, vector<40x128xbf16>,
    } else {
    }
    return
  }
  func.func @transform_0(%arg0: i32, %arg1: i32, %arg2: i32) -> (i32, i32) {
    %c0_i32 = arith.constant 0 : i32
    return %arg0, %arg2 : i32, i32
  }
  func.func @transform_1(%arg0: i32, %arg1: i32, %arg2: i32) -> (i32, i32) {
    %c0_i32 = arith.constant 0 : i32
    return %arg2, %arg1 : i32, i32
  }
  func.func @transform_2(%arg0: i32, %arg1: i32, %arg2: i32) -> (i32, i32) {
    %c0_i32 = arith.constant 0 : i32
    return %arg0, %arg1 : i32, i32
  }
}

module attributes {stable_mosaic.version = 11 : i64} {
  func.func @_dense_layer_kernel(%arg0: i32, %arg1: memref<1x36x128xbf16, #tpu.memory_space<vmem>>, %arg2: memref<1x128xf32, #tpu.memory_space<vmem>>, %arg3: memref<1x128xf32, #tpu.memory_space<vmem>>, %arg4: memref<128x128xbf16, #tpu.memory_space<vmem>>, %arg5: memref<1x128xf32, #tpu.memory_space<vmem>>, %arg6: memref<1x128xf32, #tpu.memory_space<vmem>>, %arg7: memref<9x128x128xbf16, #tpu.memory_space<vmem>>, %arg8: memref<1x36x128xbf16, #tpu.memory_space<vmem>>, %arg9: memref<56x128xbf16, #tpu.memory_space<vmem>>) attributes {dimension_semantics = [#tpu.dimension_semantics<parallel>], iteration_bounds = array<i64: 2>, scalar_prefetch = 0 : i64, scratch_operands = 1 : i64, tpu.core_type = #tpu.core_type<tc>, window_params = [{transform_indices = @transform_0, window_bounds = array<i64: 1, 36, 128>}, {pipeline_mode = #tpu.pipeline_mode<synchronous>, transform_indices = @transform_1, window_bounds = array<i64: 1, 128>}, {pipeline_mode = #tpu.pipeline_mode<synchronous>, transform_indices = @transform_2, window_bounds = array<i64: 1, 128>}, {pipeline_mode = #tpu.pipeline_mode<synchronous>, transform_indices = @transform_3, window_bounds = array<i64: 128, 128>}, {pipeline_mode = #tpu.pipeline_mode<synchronous>, transform_indices = @transform_4, window_bounds = array<i64: 1, 128>}, {pipeline_mode = #tpu.pipeline_mode<synchronous>, transform_indices = @transform_5, window_bounds = array<i64: 1, 128>}, {pipeline_mode = #tpu.pipeline_mode<synchronous>, transform_indices = @transform_6, window_bounds = array<i64: 9, 128, 128>}, {transform_indices = @transform_7, window_bounds = array<i64: 1, 36, 128>}]} {
    %c0 = arith.constant 0 : index
    %c0_0 = arith.constant 0 : index
    %c0_1 = arith.constant 0 : index
    %0 = vector.load %arg1[%c0, %c0_0, %c0_1] : memref<1x36x128xbf16, #tpu.memory_space<vmem>>, vector<1x36x128xbf16>
    %1 = vector.shape_cast %0 : vector<1x36x128xbf16> to vector<36x128xbf16>
    %2 = arith.extf %1 : vector<36x128xbf16> to vector<36x128xf32>
    %c0_2 = arith.constant 0 : index
    %c0_3 = arith.constant 0 : index
    %3 = vector.load %arg2[%c0_2, %c0_3] : memref<1x128xf32, #tpu.memory_space<vmem>>, vector<1x128xf32>
    %4 = vector.broadcast %3 : vector<1x128xf32> to vector<36x128xf32>
    %5 = arith.mulf %2, %4 : vector<36x128xf32>
    %c0_4 = arith.constant 0 : index
    %c0_5 = arith.constant 0 : index
    %6 = vector.load %arg3[%c0_4, %c0_5] : memref<1x128xf32, #tpu.memory_space<vmem>>, vector<1x128xf32>
    %7 = vector.broadcast %6 : vector<1x128xf32> to vector<36x128xf32>
    %8 = arith.addf %5, %7 : vector<36x128xf32>
    %cst = arith.constant 0.000000e+00 : f32
    %9 = vector.broadcast %cst : f32 to vector<36x128xf32>
    %10 = arith.maximumf %8, %9 : vector<36x128xf32>
    %11 = arith.truncf %10 : vector<36x128xf32> to vector<36x128xbf16>
    %c0_6 = arith.constant 0 : index
    %c0_7 = arith.constant 0 : index
    %12 = vector.load %arg4[%c0_6, %c0_7] : memref<128x128xbf16, #tpu.memory_space<vmem>>, vector<128x128xbf16>
    %cst_8 = arith.constant dense<0.000000e+00> : vector<36x128xf32>
    %13 = tpu.matmul %11, %12, %cst_8 {dimension_numbers = #tpu.dot_dimension_numbers<[1], [0], [0], [1], [0, 0, 1, 1], [], []>} : vector<36x128xbf16>, vector<128x128xbf16>, vector<36x128xf32> -> vector<36x128xf32>
    %c0_9 = arith.constant 0 : index
    %c0_10 = arith.constant 0 : index
    %14 = vector.load %arg5[%c0_9, %c0_10] : memref<1x128xf32, #tpu.memory_space<vmem>>, vector<1x128xf32>
    %15 = vector.broadcast %14 : vector<1x128xf32> to vector<36x128xf32>
    %16 = arith.mulf %13, %15 : vector<36x128xf32>
    %c0_11 = arith.constant 0 : index
    %c0_12 = arith.constant 0 : index
    %17 = vector.load %arg6[%c0_11, %c0_12] : memref<1x128xf32, #tpu.memory_space<vmem>>, vector<1x128xf32>
    %18 = vector.broadcast %17 : vector<1x128xf32> to vector<36x128xf32>
    %19 = arith.addf %16, %18 : vector<36x128xf32>
    %cst_13 = arith.constant 0.000000e+00 : f32
    %20 = vector.broadcast %cst_13 : f32 to vector<36x128xf32>
    %21 = arith.maximumf %19, %20 : vector<36x128xf32>
    %22 = arith.truncf %21 : vector<36x128xf32> to vector<36x128xbf16>
    %cst_14 = arith.constant 0.000000e+00 : bf16
    %23 = vector.broadcast %cst_14 : bf16 to vector<56x128xbf16>
    %c0_15 = arith.constant 0 : index
    %c0_16 = arith.constant 0 : index
    %24 = vector.load %arg9[%c0_15, %c0_16] : memref<56x128xbf16, #tpu.memory_space<vmem>>, vector<56x128xbf16>
    tpu.vector_store %arg9[%c0_15, %c0_16], %23 {strides = array<i32>} : memref<56x128xbf16, #tpu.memory_space<vmem>>, vector<56x128xbf16>,
    %c8 = arith.constant 8 : index
    %c0_17 = arith.constant 0 : index
    %25 = vector.load %arg9[%c8, %c0_17] : memref<56x128xbf16, #tpu.memory_space<vmem>>, vector<36x128xbf16>
    tpu.vector_store %arg9[%c8, %c0_17], %22 {strides = array<i32>} : memref<56x128xbf16, #tpu.memory_space<vmem>>, vector<36x128xbf16>,
    %26 = tpu.iota {dimensions = array<i32: 0>} : vector<36x128xi32>
    %c6_i32 = arith.constant 6 : i32
    %c0_i32 = arith.constant 0 : i32
    %27 = arith.cmpi eq, %c6_i32, %c0_i32 : i32
    %c1_i32 = arith.constant 1 : i32
    %28 = arith.select %27, %c1_i32, %c6_i32 : i32
    %29 = vector.broadcast %28 : i32 to vector<36x128xi32>
    %30 = arith.remsi %26, %29 : vector<36x128xi32>
    %c0_i32_18 = arith.constant 0 : i32
    %31 = vector.broadcast %c0_i32_18 : i32 to vector<36x128xi32>
    %32 = arith.cmpi ne, %30, %31 : vector<36x128xi32>
    %c0_i32_19 = arith.constant 0 : i32
    %33 = vector.broadcast %c0_i32_19 : i32 to vector<36x128xi32>
    %34 = arith.cmpi slt, %30, %33 : vector<36x128xi32>
    %c0_i32_20 = arith.constant 0 : i32
    %35 = arith.cmpi slt, %28, %c0_i32_20 : i32
    %36 = vector.broadcast %35 : i1 to vector<36x128xi1>
    %37 = vector.broadcast %36 : vector<36x128xi1> to vector<36x128xi1>
    %38 = arith.xori %34, %37 : vector<36x128xi1>
    %39 = arith.andi %38, %32 : vector<36x128xi1>
    %40 = vector.broadcast %28 : i32 to vector<36x128xi32>
    %41 = arith.addi %30, %40 : vector<36x128xi32>
    %42 = arith.select %39, %41, %30 : vector<36x128xi1>, vector<36x128xi32>
    %c0_i32_21 = arith.constant 0 : i32
    %43 = vector.broadcast %c0_i32_21 : i32 to vector<36x128xi32>
    %44 = arith.cmpi sgt, %42, %43 : vector<36x128xi32>
    %c5_i32 = arith.constant 5 : i32
    %45 = vector.broadcast %c5_i32 : i32 to vector<36x128xi32>
    %46 = arith.cmpi slt, %42, %45 : vector<36x128xi32>
    %cst_22 = arith.constant 0.000000e+00 : f32
    %47 = vector.broadcast %cst_22 : f32 to vector<36x128xf32>
    %c1 = arith.constant 1 : index
    %c0_23 = arith.constant 0 : index
    %48 = vector.load %arg9[%c1, %c0_23] : memref<56x128xbf16, #tpu.memory_space<vmem>>, vector<36x128xbf16>
    %cst_24 = arith.constant 0.000000e+00 : bf16
    %49 = vector.broadcast %cst_24 : bf16 to vector<36x128xbf16>
    %50 = arith.select %44, %48, %49 : vector<36x128xi1>, vector<36x128xbf16>
    %c0_25 = arith.constant 0 : index
    %c0_26 = arith.constant 0 : index
    %c0_27 = arith.constant 0 : index
    %51 = vector.load %arg7[%c0_25, %c0_26, %c0_27] : memref<9x128x128xbf16, #tpu.memory_space<vmem>>, vector<1x128x128xbf16>
    %52 = vector.shape_cast %51 : vector<1x128x128xbf16> to vector<128x128xbf16>
    %cst_28 = arith.constant dense<0.000000e+00> : vector<36x128xf32>
    %53 = tpu.matmul %50, %52, %cst_28 {dimension_numbers = #tpu.dot_dimension_numbers<[1], [0], [0], [1], [0, 0, 1, 1], [], []>} : vector<36x128xbf16>, vector<128x128xbf16>, vector<36x128xf32> -> vector<36x128xf32>
    %54 = arith.addf %47, %53 : vector<36x128xf32>
    %c2 = arith.constant 2 : index
    %c0_29 = arith.constant 0 : index
    %55 = vector.load %arg9[%c2, %c0_29] : memref<56x128xbf16, #tpu.memory_space<vmem>>, vector<36x128xbf16>
    %c1_30 = arith.constant 1 : index
    %c0_31 = arith.constant 0 : index
    %c0_32 = arith.constant 0 : index
    %56 = vector.load %arg7[%c1_30, %c0_31, %c0_32] : memref<9x128x128xbf16, #tpu.memory_space<vmem>>, vector<1x128x128xbf16>
    %57 = vector.shape_cast %56 : vector<1x128x128xbf16> to vector<128x128xbf16>
    %cst_33 = arith.constant dense<0.000000e+00> : vector<36x128xf32>
    %58 = tpu.matmul %55, %57, %cst_33 {dimension_numbers = #tpu.dot_dimension_numbers<[1], [0], [0], [1], [0, 0, 1, 1], [], []>} : vector<36x128xbf16>, vector<128x128xbf16>, vector<36x128xf32> -> vector<36x128xf32>
    %59 = arith.addf %54, %58 : vector<36x128xf32>
    %c3 = arith.constant 3 : index
    %c0_34 = arith.constant 0 : index
    %60 = vector.load %arg9[%c3, %c0_34] : memref<56x128xbf16, #tpu.memory_space<vmem>>, vector<36x128xbf16>
    %cst_35 = arith.constant 0.000000e+00 : bf16
    %61 = vector.broadcast %cst_35 : bf16 to vector<36x128xbf16>
    %62 = arith.select %46, %60, %61 : vector<36x128xi1>, vector<36x128xbf16>
    %c2_36 = arith.constant 2 : index
    %c0_37 = arith.constant 0 : index
    %c0_38 = arith.constant 0 : index
    %63 = vector.load %arg7[%c2_36, %c0_37, %c0_38] : memref<9x128x128xbf16, #tpu.memory_space<vmem>>, vector<1x128x128xbf16>
    %64 = vector.shape_cast %63 : vector<1x128x128xbf16> to vector<128x128xbf16>
    %cst_39 = arith.constant dense<0.000000e+00> : vector<36x128xf32>
    %65 = tpu.matmul %62, %64, %cst_39 {dimension_numbers = #tpu.dot_dimension_numbers<[1], [0], [0], [1], [0, 0, 1, 1], [], []>} : vector<36x128xbf16>, vector<128x128xbf16>, vector<36x128xf32> -> vector<36x128xf32>
    %66 = arith.addf %59, %65 : vector<36x128xf32>
    %c7 = arith.constant 7 : index
    %c0_40 = arith.constant 0 : index
    %67 = vector.load %arg9[%c7, %c0_40] : memref<56x128xbf16, #tpu.memory_space<vmem>>, vector<36x128xbf16>
    %cst_41 = arith.constant 0.000000e+00 : bf16
    %68 = vector.broadcast %cst_41 : bf16 to vector<36x128xbf16>
    %69 = arith.select %44, %67, %68 : vector<36x128xi1>, vector<36x128xbf16>
    %c3_42 = arith.constant 3 : index
    %c0_43 = arith.constant 0 : index
    %c0_44 = arith.constant 0 : index
    %70 = vector.load %arg7[%c3_42, %c0_43, %c0_44] : memref<9x128x128xbf16, #tpu.memory_space<vmem>>, vector<1x128x128xbf16>
    %71 = vector.shape_cast %70 : vector<1x128x128xbf16> to vector<128x128xbf16>
    %cst_45 = arith.constant dense<0.000000e+00> : vector<36x128xf32>
    %72 = tpu.matmul %69, %71, %cst_45 {dimension_numbers = #tpu.dot_dimension_numbers<[1], [0], [0], [1], [0, 0, 1, 1], [], []>} : vector<36x128xbf16>, vector<128x128xbf16>, vector<36x128xf32> -> vector<36x128xf32>
    %73 = arith.addf %66, %72 : vector<36x128xf32>
    %c8_46 = arith.constant 8 : index
    %c0_47 = arith.constant 0 : index
    %74 = vector.load %arg9[%c8_46, %c0_47] : memref<56x128xbf16, #tpu.memory_space<vmem>>, vector<36x128xbf16>
    %c4 = arith.constant 4 : index
    %c0_48 = arith.constant 0 : index
    %c0_49 = arith.constant 0 : index
    %75 = vector.load %arg7[%c4, %c0_48, %c0_49] : memref<9x128x128xbf16, #tpu.memory_space<vmem>>, vector<1x128x128xbf16>
    %76 = vector.shape_cast %75 : vector<1x128x128xbf16> to vector<128x128xbf16>
    %cst_50 = arith.constant dense<0.000000e+00> : vector<36x128xf32>
    %77 = tpu.matmul %74, %76, %cst_50 {dimension_numbers = #tpu.dot_dimension_numbers<[1], [0], [0], [1], [0, 0, 1, 1], [], []>} : vector<36x128xbf16>, vector<128x128xbf16>, vector<36x128xf32> -> vector<36x128xf32>
    %78 = arith.addf %73, %77 : vector<36x128xf32>
    %c9 = arith.constant 9 : index
    %c0_51 = arith.constant 0 : index
    %79 = vector.load %arg9[%c9, %c0_51] : memref<56x128xbf16, #tpu.memory_space<vmem>>, vector<36x128xbf16>
    %cst_52 = arith.constant 0.000000e+00 : bf16
    %80 = vector.broadcast %cst_52 : bf16 to vector<36x128xbf16>
    %81 = arith.select %46, %79, %80 : vector<36x128xi1>, vector<36x128xbf16>
    %c5 = arith.constant 5 : index
    %c0_53 = arith.constant 0 : index
    %c0_54 = arith.constant 0 : index
    %82 = vector.load %arg7[%c5, %c0_53, %c0_54] : memref<9x128x128xbf16, #tpu.memory_space<vmem>>, vector<1x128x128xbf16>
    %83 = vector.shape_cast %82 : vector<1x128x128xbf16> to vector<128x128xbf16>
    %cst_55 = arith.constant dense<0.000000e+00> : vector<36x128xf32>
    %84 = tpu.matmul %81, %83, %cst_55 {dimension_numbers = #tpu.dot_dimension_numbers<[1], [0], [0], [1], [0, 0, 1, 1], [], []>} : vector<36x128xbf16>, vector<128x128xbf16>, vector<36x128xf32> -> vector<36x128xf32>
    %85 = arith.addf %78, %84 : vector<36x128xf32>
    %c13 = arith.constant 13 : index
    %c0_56 = arith.constant 0 : index
    %86 = vector.load %arg9[%c13, %c0_56] : memref<56x128xbf16, #tpu.memory_space<vmem>>, vector<36x128xbf16>
    %cst_57 = arith.constant 0.000000e+00 : bf16
    %87 = vector.broadcast %cst_57 : bf16 to vector<36x128xbf16>
    %88 = arith.select %44, %86, %87 : vector<36x128xi1>, vector<36x128xbf16>
    %c6 = arith.constant 6 : index
    %c0_58 = arith.constant 0 : index
    %c0_59 = arith.constant 0 : index
    %89 = vector.load %arg7[%c6, %c0_58, %c0_59] : memref<9x128x128xbf16, #tpu.memory_space<vmem>>, vector<1x128x128xbf16>
    %90 = vector.shape_cast %89 : vector<1x128x128xbf16> to vector<128x128xbf16>
    %cst_60 = arith.constant dense<0.000000e+00> : vector<36x128xf32>
    %91 = tpu.matmul %88, %90, %cst_60 {dimension_numbers = #tpu.dot_dimension_numbers<[1], [0], [0], [1], [0, 0, 1, 1], [], []>} : vector<36x128xbf16>, vector<128x128xbf16>, vector<36x128xf32> -> vector<36x128xf32>
    %92 = arith.addf %85, %91 : vector<36x128xf32>
    %c14 = arith.constant 14 : index
    %c0_61 = arith.constant 0 : index
    %93 = vector.load %arg9[%c14, %c0_61] : memref<56x128xbf16, #tpu.memory_space<vmem>>, vector<36x128xbf16>
    %c7_62 = arith.constant 7 : index
    %c0_63 = arith.constant 0 : index
    %c0_64 = arith.constant 0 : index
    %94 = vector.load %arg7[%c7_62, %c0_63, %c0_64] : memref<9x128x128xbf16, #tpu.memory_space<vmem>>, vector<1x128x128xbf16>
    %95 = vector.shape_cast %94 : vector<1x128x128xbf16> to vector<128x128xbf16>
    %cst_65 = arith.constant dense<0.000000e+00> : vector<36x128xf32>
    %96 = tpu.matmul %93, %95, %cst_65 {dimension_numbers = #tpu.dot_dimension_numbers<[1], [0], [0], [1], [0, 0, 1, 1], [], []>} : vector<36x128xbf16>, vector<128x128xbf16>, vector<36x128xf32> -> vector<36x128xf32>
    %97 = arith.addf %92, %96 : vector<36x128xf32>
    %c15 = arith.constant 15 : index
    %c0_66 = arith.constant 0 : index
    %98 = vector.load %arg9[%c15, %c0_66] : memref<56x128xbf16, #tpu.memory_space<vmem>>, vector<36x128xbf16>
    %cst_67 = arith.constant 0.000000e+00 : bf16
    %99 = vector.broadcast %cst_67 : bf16 to vector<36x128xbf16>
    %100 = arith.select %46, %98, %99 : vector<36x128xi1>, vector<36x128xbf16>
    %c8_68 = arith.constant 8 : index
    %c0_69 = arith.constant 0 : index
    %c0_70 = arith.constant 0 : index
    %101 = vector.load %arg7[%c8_68, %c0_69, %c0_70] : memref<9x128x128xbf16, #tpu.memory_space<vmem>>, vector<1x128x128xbf16>
    %102 = vector.shape_cast %101 : vector<1x128x128xbf16> to vector<128x128xbf16>
    %cst_71 = arith.constant dense<0.000000e+00> : vector<36x128xf32>
    %103 = tpu.matmul %100, %102, %cst_71 {dimension_numbers = #tpu.dot_dimension_numbers<[1], [0], [0], [1], [0, 0, 1, 1], [], []>} : vector<36x128xbf16>, vector<128x128xbf16>, vector<36x128xf32> -> vector<36x128xf32>
    %104 = arith.addf %97, %103 : vector<36x128xf32>
    %105 = arith.extf %1 : vector<36x128xbf16> to vector<36x128xf32>
    %106 = arith.addf %105, %104 : vector<36x128xf32>
    %107 = arith.truncf %106 : vector<36x128xf32> to vector<36x128xbf16>
    %c0_72 = arith.constant 0 : index
    %c0_73 = arith.constant 0 : index
    %c0_74 = arith.constant 0 : index
    %108 = vector.load %arg8[%c0_72, %c0_73, %c0_74] : memref<1x36x128xbf16, #tpu.memory_space<vmem>>, vector<1x36x128xbf16>
    %109 = vector.shape_cast %108 : vector<1x36x128xbf16> to vector<36x128xbf16>
    %110 = vector.shape_cast %107 : vector<36x128xbf16> to vector<1x36x128xbf16>
    tpu.vector_store %arg8[%c0_72, %c0_73, %c0_74], %110 {strides = array<i32>} : memref<1x36x128xbf16, #tpu.memory_space<vmem>>, vector<1x36x128xbf16>,
    return
  }
  func.func @transform_0(%arg0: i32) -> (i32, i32, i32) {
    %c0_i32 = arith.constant 0 : i32
    %c0_i32_0 = arith.constant 0 : i32
    %c0_i32_1 = arith.constant 0 : i32
    return %arg0, %c0_i32, %c0_i32_0 : i32, i32, i32
  }
  func.func @transform_1(%arg0: i32) -> (i32, i32) {
    %c0_i32 = arith.constant 0 : i32
    %c0_i32_0 = arith.constant 0 : i32
    %c0_i32_1 = arith.constant 0 : i32
    return %c0_i32, %c0_i32_0 : i32, i32
  }
  func.func @transform_2(%arg0: i32) -> (i32, i32) {
    %c0_i32 = arith.constant 0 : i32
    %c0_i32_0 = arith.constant 0 : i32
    %c0_i32_1 = arith.constant 0 : i32
    return %c0_i32, %c0_i32_0 : i32, i32
  }
  func.func @transform_3(%arg0: i32) -> (i32, i32) {
    %c0_i32 = arith.constant 0 : i32
    %c0_i32_0 = arith.constant 0 : i32
    %c0_i32_1 = arith.constant 0 : i32
    return %c0_i32, %c0_i32_0 : i32, i32
  }
  func.func @transform_4(%arg0: i32) -> (i32, i32) {
    %c0_i32 = arith.constant 0 : i32
    %c0_i32_0 = arith.constant 0 : i32
    %c0_i32_1 = arith.constant 0 : i32
    return %c0_i32, %c0_i32_0 : i32, i32
  }
  func.func @transform_5(%arg0: i32) -> (i32, i32) {
    %c0_i32 = arith.constant 0 : i32
    %c0_i32_0 = arith.constant 0 : i32
    %c0_i32_1 = arith.constant 0 : i32
    return %c0_i32, %c0_i32_0 : i32, i32
  }
  func.func @transform_6(%arg0: i32) -> (i32, i32, i32) {
    %c0_i32 = arith.constant 0 : i32
    %c0_i32_0 = arith.constant 0 : i32
    %c0_i32_1 = arith.constant 0 : i32
    %c0_i32_2 = arith.constant 0 : i32
    return %c0_i32, %c0_i32_0, %c0_i32_1 : i32, i32, i32
  }
  func.func @transform_7(%arg0: i32) -> (i32, i32, i32) {
    %c0_i32 = arith.constant 0 : i32
    %c0_i32_0 = arith.constant 0 : i32
    %c0_i32_1 = arith.constant 0 : i32
    return %arg0, %c0_i32, %c0_i32_0 : i32, i32, i32
  }
}

module attributes {stable_mosaic.version = 11 : i64} {
  func.func @_transition_kernel(%arg0: i32, %arg1: memref<1x36x128xbf16, #tpu.memory_space<vmem>>, %arg2: memref<9x36xf32, #tpu.memory_space<vmem>>, %arg3: memref<1x128xf32, #tpu.memory_space<vmem>>, %arg4: memref<1x128xf32, #tpu.memory_space<vmem>>, %arg5: memref<128x128xbf16, #tpu.memory_space<vmem>>, %arg6: memref<1x9x128xbf16, #tpu.memory_space<vmem>>) attributes {dimension_semantics = [#tpu.dimension_semantics<parallel>], iteration_bounds = array<i64: 2>, scalar_prefetch = 0 : i64, scratch_operands = 0 : i64, tpu.core_type = #tpu.core_type<tc>, window_params = [{transform_indices = @transform_0, window_bounds = array<i64: 1, 36, 128>}, {pipeline_mode = #tpu.pipeline_mode<synchronous>, transform_indices = @transform_1, window_bounds = array<i64: 9, 36>}, {pipeline_mode = #tpu.pipeline_mode<synchronous>, transform_indices = @transform_2, window_bounds = array<i64: 1, 128>}, {pipeline_mode = #tpu.pipeline_mode<synchronous>, transform_indices = @transform_3, window_bounds = array<i64: 1, 128>}, {pipeline_mode = #tpu.pipeline_mode<synchronous>, transform_indices = @transform_4, window_bounds = array<i64: 128, 128>}, {transform_indices = @transform_5, window_bounds = array<i64: 1, 9, 128>}]} {
    %c0 = arith.constant 0 : index
    %c0_0 = arith.constant 0 : index
    %c0_1 = arith.constant 0 : index
    %0 = vector.load %arg1[%c0, %c0_0, %c0_1] : memref<1x36x128xbf16, #tpu.memory_space<vmem>>, vector<1x36x128xbf16>
    %1 = vector.shape_cast %0 : vector<1x36x128xbf16> to vector<36x128xbf16>
    %2 = arith.extf %1 : vector<36x128xbf16> to vector<36x128xf32>
    %c0_2 = arith.constant 0 : index
    %c0_3 = arith.constant 0 : index
    %3 = vector.load %arg3[%c0_2, %c0_3] : memref<1x128xf32, #tpu.memory_space<vmem>>, vector<1x128xf32>
    %4 = vector.broadcast %3 : vector<1x128xf32> to vector<36x128xf32>
    %5 = arith.mulf %2, %4 : vector<36x128xf32>
    %c0_4 = arith.constant 0 : index
    %c0_5 = arith.constant 0 : index
    %6 = vector.load %arg4[%c0_4, %c0_5] : memref<1x128xf32, #tpu.memory_space<vmem>>, vector<1x128xf32>
    %7 = vector.broadcast %6 : vector<1x128xf32> to vector<36x128xf32>
    %8 = arith.addf %5, %7 : vector<36x128xf32>
    %cst = arith.constant 0.000000e+00 : f32
    %9 = vector.broadcast %cst : f32 to vector<36x128xf32>
    %10 = arith.maximumf %8, %9 : vector<36x128xf32>
    %c0_6 = arith.constant 0 : index
    %c0_7 = arith.constant 0 : index
    %11 = vector.load %arg2[%c0_6, %c0_7] : memref<9x36xf32, #tpu.memory_space<vmem>>, vector<9x36xf32>
    %cst_8 = arith.constant dense<0.000000e+00> : vector<9x128xf32>
    %12 = tpu.matmul %11, %10, %cst_8 {dimension_numbers = #tpu.dot_dimension_numbers<[1], [0], [0], [1], [0, 0, 1, 1], [], []>} : vector<9x36xf32>, vector<36x128xf32>, vector<9x128xf32> -> vector<9x128xf32>
    %13 = arith.truncf %12 : vector<9x128xf32> to vector<9x128xbf16>
    %c0_9 = arith.constant 0 : index
    %c0_10 = arith.constant 0 : index
    %14 = vector.load %arg5[%c0_9, %c0_10] : memref<128x128xbf16, #tpu.memory_space<vmem>>, vector<128x128xbf16>
    %cst_11 = arith.constant dense<0.000000e+00> : vector<9x128xf32>
    %15 = tpu.matmul %13, %14, %cst_11 {dimension_numbers = #tpu.dot_dimension_numbers<[1], [0], [0], [1], [0, 0, 1, 1], [], []>} : vector<9x128xbf16>, vector<128x128xbf16>, vector<9x128xf32> -> vector<9x128xf32>
    %16 = arith.truncf %15 : vector<9x128xf32> to vector<9x128xbf16>
    %c0_12 = arith.constant 0 : index
    %c0_13 = arith.constant 0 : index
    %c0_14 = arith.constant 0 : index
    %17 = vector.load %arg6[%c0_12, %c0_13, %c0_14] : memref<1x9x128xbf16, #tpu.memory_space<vmem>>, vector<1x9x128xbf16>
    %18 = vector.shape_cast %17 : vector<1x9x128xbf16> to vector<9x128xbf16>
    %19 = vector.shape_cast %16 : vector<9x128xbf16> to vector<1x9x128xbf16>
    tpu.vector_store %arg6[%c0_12, %c0_13, %c0_14], %19 {strides = array<i32>} : memref<1x9x128xbf16, #tpu.memory_space<vmem>>, vector<1x9x128xbf16>,
    return
  }
  func.func @transform_0(%arg0: i32) -> (i32, i32, i32) {
    %c0_i32 = arith.constant 0 : i32
    %c0_i32_0 = arith.constant 0 : i32
    %c0_i32_1 = arith.constant 0 : i32
    return %arg0, %c0_i32, %c0_i32_0 : i32, i32, i32
  }
  func.func @transform_1(%arg0: i32) -> (i32, i32) {
    %c0_i32 = arith.constant 0 : i32
    %c0_i32_0 = arith.constant 0 : i32
    %c0_i32_1 = arith.constant 0 : i32
    return %c0_i32, %c0_i32_0 : i32, i32
  }
  func.func @transform_2(%arg0: i32) -> (i32, i32) {
    %c0_i32 = arith.constant 0 : i32
    %c0_i32_0 = arith.constant 0 : i32
    %c0_i32_1 = arith.constant 0 : i32
    return %c0_i32, %c0_i32_0 : i32, i32
  }
  func.func @transform_3(%arg0: i32) -> (i32, i32) {
    %c0_i32 = arith.constant 0 : i32
    %c0_i32_0 = arith.constant 0 : i32
    %c0_i32_1 = arith.constant 0 : i32
    return %c0_i32, %c0_i32_0 : i32, i32
  }
  func.func @transform_4(%arg0: i32) -> (i32, i32) {
    %c0_i32 = arith.constant 0 : i32
    %c0_i32_0 = arith.constant 0 : i32
    %c0_i32_1 = arith.constant 0 : i32
    return %c0_i32, %c0_i32_0 : i32, i32
  }
  func.func @transform_5(%arg0: i32) -> (i32, i32, i32) {
    %c0_i32 = arith.constant 0 : i32
    %c0_i32_0 = arith.constant 0 : i32
    %c0_i32_1 = arith.constant 0 : i32
    return %arg0, %c0_i32, %c0_i32_0 : i32, i32, i32
  }
}

module attributes {stable_mosaic.version = 11 : i64} {
  func.func @_dense_layer_kernel(%arg0: i32, %arg1: memref<1x9x128xbf16, #tpu.memory_space<vmem>>, %arg2: memref<1x128xf32, #tpu.memory_space<vmem>>, %arg3: memref<1x128xf32, #tpu.memory_space<vmem>>, %arg4: memref<128x128xbf16, #tpu.memory_space<vmem>>, %arg5: memref<1x128xf32, #tpu.memory_space<vmem>>, %arg6: memref<1x128xf32, #tpu.memory_space<vmem>>, %arg7: memref<9x128x128xbf16, #tpu.memory_space<vmem>>, %arg8: memref<1x9x128xbf16, #tpu.memory_space<vmem>>, %arg9: memref<24x128xbf16, #tpu.memory_space<vmem>>) attributes {dimension_semantics = [#tpu.dimension_semantics<parallel>], iteration_bounds = array<i64: 2>, scalar_prefetch = 0 : i64, scratch_operands = 1 : i64, tpu.core_type = #tpu.core_type<tc>, window_params = [{transform_indices = @transform_0, window_bounds = array<i64: 1, 9, 128>}, {pipeline_mode = #tpu.pipeline_mode<synchronous>, transform_indices = @transform_1, window_bounds = array<i64: 1, 128>}, {pipeline_mode = #tpu.pipeline_mode<synchronous>, transform_indices = @transform_2, window_bounds = array<i64: 1, 128>}, {pipeline_mode = #tpu.pipeline_mode<synchronous>, transform_indices = @transform_3, window_bounds = array<i64: 128, 128>}, {pipeline_mode = #tpu.pipeline_mode<synchronous>, transform_indices = @transform_4, window_bounds = array<i64: 1, 128>}, {pipeline_mode = #tpu.pipeline_mode<synchronous>, transform_indices = @transform_5, window_bounds = array<i64: 1, 128>}, {pipeline_mode = #tpu.pipeline_mode<synchronous>, transform_indices = @transform_6, window_bounds = array<i64: 9, 128, 128>}, {transform_indices = @transform_7, window_bounds = array<i64: 1, 9, 128>}]} {
    %c0 = arith.constant 0 : index
    %c0_0 = arith.constant 0 : index
    %c0_1 = arith.constant 0 : index
    %0 = vector.load %arg1[%c0, %c0_0, %c0_1] : memref<1x9x128xbf16, #tpu.memory_space<vmem>>, vector<1x9x128xbf16>
    %1 = vector.shape_cast %0 : vector<1x9x128xbf16> to vector<9x128xbf16>
    %2 = arith.extf %1 : vector<9x128xbf16> to vector<9x128xf32>
    %c0_2 = arith.constant 0 : index
    %c0_3 = arith.constant 0 : index
    %3 = vector.load %arg2[%c0_2, %c0_3] : memref<1x128xf32, #tpu.memory_space<vmem>>, vector<1x128xf32>
    %4 = vector.broadcast %3 : vector<1x128xf32> to vector<9x128xf32>
    %5 = arith.mulf %2, %4 : vector<9x128xf32>
    %c0_4 = arith.constant 0 : index
    %c0_5 = arith.constant 0 : index
    %6 = vector.load %arg3[%c0_4, %c0_5] : memref<1x128xf32, #tpu.memory_space<vmem>>, vector<1x128xf32>
    %7 = vector.broadcast %6 : vector<1x128xf32> to vector<9x128xf32>
    %8 = arith.addf %5, %7 : vector<9x128xf32>
    %cst = arith.constant 0.000000e+00 : f32
    %9 = vector.broadcast %cst : f32 to vector<9x128xf32>
    %10 = arith.maximumf %8, %9 : vector<9x128xf32>
    %11 = arith.truncf %10 : vector<9x128xf32> to vector<9x128xbf16>
    %c0_6 = arith.constant 0 : index
    %c0_7 = arith.constant 0 : index
    %12 = vector.load %arg4[%c0_6, %c0_7] : memref<128x128xbf16, #tpu.memory_space<vmem>>, vector<128x128xbf16>
    %cst_8 = arith.constant dense<0.000000e+00> : vector<9x128xf32>
    %13 = tpu.matmul %11, %12, %cst_8 {dimension_numbers = #tpu.dot_dimension_numbers<[1], [0], [0], [1], [0, 0, 1, 1], [], []>} : vector<9x128xbf16>, vector<128x128xbf16>, vector<9x128xf32> -> vector<9x128xf32>
    %c0_9 = arith.constant 0 : index
    %c0_10 = arith.constant 0 : index
    %14 = vector.load %arg5[%c0_9, %c0_10] : memref<1x128xf32, #tpu.memory_space<vmem>>, vector<1x128xf32>
    %15 = vector.broadcast %14 : vector<1x128xf32> to vector<9x128xf32>
    %16 = arith.mulf %13, %15 : vector<9x128xf32>
    %c0_11 = arith.constant 0 : index
    %c0_12 = arith.constant 0 : index
    %17 = vector.load %arg6[%c0_11, %c0_12] : memref<1x128xf32, #tpu.memory_space<vmem>>, vector<1x128xf32>
    %18 = vector.broadcast %17 : vector<1x128xf32> to vector<9x128xf32>
    %19 = arith.addf %16, %18 : vector<9x128xf32>
    %cst_13 = arith.constant 0.000000e+00 : f32
    %20 = vector.broadcast %cst_13 : f32 to vector<9x128xf32>
    %21 = arith.maximumf %19, %20 : vector<9x128xf32>
    %22 = arith.truncf %21 : vector<9x128xf32> to vector<9x128xbf16>
    %cst_14 = arith.constant 0.000000e+00 : bf16
    %23 = vector.broadcast %cst_14 : bf16 to vector<24x128xbf16>
    %c0_15 = arith.constant 0 : index
    %c0_16 = arith.constant 0 : index
    %24 = vector.load %arg9[%c0_15, %c0_16] : memref<24x128xbf16, #tpu.memory_space<vmem>>, vector<24x128xbf16>
    tpu.vector_store %arg9[%c0_15, %c0_16], %23 {strides = array<i32>} : memref<24x128xbf16, #tpu.memory_space<vmem>>, vector<24x128xbf16>,
    %c8 = arith.constant 8 : index
    %c0_17 = arith.constant 0 : index
    %25 = vector.load %arg9[%c8, %c0_17] : memref<24x128xbf16, #tpu.memory_space<vmem>>, vector<9x128xbf16>
    tpu.vector_store %arg9[%c8, %c0_17], %22 {strides = array<i32>} : memref<24x128xbf16, #tpu.memory_space<vmem>>, vector<9x128xbf16>,
    %26 = tpu.iota {dimensions = array<i32: 0>} : vector<9x128xi32>
    %c3_i32 = arith.constant 3 : i32
    %c0_i32 = arith.constant 0 : i32
    %27 = arith.cmpi eq, %c3_i32, %c0_i32 : i32
    %c1_i32 = arith.constant 1 : i32
    %28 = arith.select %27, %c1_i32, %c3_i32 : i32
    %29 = vector.broadcast %28 : i32 to vector<9x128xi32>
    %30 = arith.remsi %26, %29 : vector<9x128xi32>
    %c0_i32_18 = arith.constant 0 : i32
    %31 = vector.broadcast %c0_i32_18 : i32 to vector<9x128xi32>
    %32 = arith.cmpi ne, %30, %31 : vector<9x128xi32>
    %c0_i32_19 = arith.constant 0 : i32
    %33 = vector.broadcast %c0_i32_19 : i32 to vector<9x128xi32>
    %34 = arith.cmpi slt, %30, %33 : vector<9x128xi32>
    %c0_i32_20 = arith.constant 0 : i32
    %35 = arith.cmpi slt, %28, %c0_i32_20 : i32
    %36 = vector.broadcast %35 : i1 to vector<9x128xi1>
    %37 = vector.broadcast %36 : vector<9x128xi1> to vector<9x128xi1>
    %38 = arith.xori %34, %37 : vector<9x128xi1>
    %39 = arith.andi %38, %32 : vector<9x128xi1>
    %40 = vector.broadcast %28 : i32 to vector<9x128xi32>
    %41 = arith.addi %30, %40 : vector<9x128xi32>
    %42 = arith.select %39, %41, %30 : vector<9x128xi1>, vector<9x128xi32>
    %c0_i32_21 = arith.constant 0 : i32
    %43 = vector.broadcast %c0_i32_21 : i32 to vector<9x128xi32>
    %44 = arith.cmpi sgt, %42, %43 : vector<9x128xi32>
    %c2_i32 = arith.constant 2 : i32
    %45 = vector.broadcast %c2_i32 : i32 to vector<9x128xi32>
    %46 = arith.cmpi slt, %42, %45 : vector<9x128xi32>
    %cst_22 = arith.constant 0.000000e+00 : f32
    %47 = vector.broadcast %cst_22 : f32 to vector<9x128xf32>
    %c4 = arith.constant 4 : index
    %c0_23 = arith.constant 0 : index
    %48 = vector.load %arg9[%c4, %c0_23] : memref<24x128xbf16, #tpu.memory_space<vmem>>, vector<9x128xbf16>
    %cst_24 = arith.constant 0.000000e+00 : bf16
    %49 = vector.broadcast %cst_24 : bf16 to vector<9x128xbf16>
    %50 = arith.select %44, %48, %49 : vector<9x128xi1>, vector<9x128xbf16>
    %c0_25 = arith.constant 0 : index
    %c0_26 = arith.constant 0 : index
    %c0_27 = arith.constant 0 : index
    %51 = vector.load %arg7[%c0_25, %c0_26, %c0_27] : memref<9x128x128xbf16, #tpu.memory_space<vmem>>, vector<1x128x128xbf16>
    %52 = vector.shape_cast %51 : vector<1x128x128xbf16> to vector<128x128xbf16>
    %cst_28 = arith.constant dense<0.000000e+00> : vector<9x128xf32>
    %53 = tpu.matmul %50, %52, %cst_28 {dimension_numbers = #tpu.dot_dimension_numbers<[1], [0], [0], [1], [0, 0, 1, 1], [], []>} : vector<9x128xbf16>, vector<128x128xbf16>, vector<9x128xf32> -> vector<9x128xf32>
    %54 = arith.addf %47, %53 : vector<9x128xf32>
    %c5 = arith.constant 5 : index
    %c0_29 = arith.constant 0 : index
    %55 = vector.load %arg9[%c5, %c0_29] : memref<24x128xbf16, #tpu.memory_space<vmem>>, vector<9x128xbf16>
    %c1 = arith.constant 1 : index
    %c0_30 = arith.constant 0 : index
    %c0_31 = arith.constant 0 : index
    %56 = vector.load %arg7[%c1, %c0_30, %c0_31] : memref<9x128x128xbf16, #tpu.memory_space<vmem>>, vector<1x128x128xbf16>
    %57 = vector.shape_cast %56 : vector<1x128x128xbf16> to vector<128x128xbf16>
    %cst_32 = arith.constant dense<0.000000e+00> : vector<9x128xf32>
    %58 = tpu.matmul %55, %57, %cst_32 {dimension_numbers = #tpu.dot_dimension_numbers<[1], [0], [0], [1], [0, 0, 1, 1], [], []>} : vector<9x128xbf16>, vector<128x128xbf16>, vector<9x128xf32> -> vector<9x128xf32>
    %59 = arith.addf %54, %58 : vector<9x128xf32>
    %c6 = arith.constant 6 : index
    %c0_33 = arith.constant 0 : index
    %60 = vector.load %arg9[%c6, %c0_33] : memref<24x128xbf16, #tpu.memory_space<vmem>>, vector<9x128xbf16>
    %cst_34 = arith.constant 0.000000e+00 : bf16
    %61 = vector.broadcast %cst_34 : bf16 to vector<9x128xbf16>
    %62 = arith.select %46, %60, %61 : vector<9x128xi1>, vector<9x128xbf16>
    %c2 = arith.constant 2 : index
    %c0_35 = arith.constant 0 : index
    %c0_36 = arith.constant 0 : index
    %63 = vector.load %arg7[%c2, %c0_35, %c0_36] : memref<9x128x128xbf16, #tpu.memory_space<vmem>>, vector<1x128x128xbf16>
    %64 = vector.shape_cast %63 : vector<1x128x128xbf16> to vector<128x128xbf16>
    %cst_37 = arith.constant dense<0.000000e+00> : vector<9x128xf32>
    %65 = tpu.matmul %62, %64, %cst_37 {dimension_numbers = #tpu.dot_dimension_numbers<[1], [0], [0], [1], [0, 0, 1, 1], [], []>} : vector<9x128xbf16>, vector<128x128xbf16>, vector<9x128xf32> -> vector<9x128xf32>
    %66 = arith.addf %59, %65 : vector<9x128xf32>
    %c7 = arith.constant 7 : index
    %c0_38 = arith.constant 0 : index
    %67 = vector.load %arg9[%c7, %c0_38] : memref<24x128xbf16, #tpu.memory_space<vmem>>, vector<9x128xbf16>
    %cst_39 = arith.constant 0.000000e+00 : bf16
    %68 = vector.broadcast %cst_39 : bf16 to vector<9x128xbf16>
    %69 = arith.select %44, %67, %68 : vector<9x128xi1>, vector<9x128xbf16>
    %c3 = arith.constant 3 : index
    %c0_40 = arith.constant 0 : index
    %c0_41 = arith.constant 0 : index
    %70 = vector.load %arg7[%c3, %c0_40, %c0_41] : memref<9x128x128xbf16, #tpu.memory_space<vmem>>, vector<1x128x128xbf16>
    %71 = vector.shape_cast %70 : vector<1x128x128xbf16> to vector<128x128xbf16>
    %cst_42 = arith.constant dense<0.000000e+00> : vector<9x128xf32>
    %72 = tpu.matmul %69, %71, %cst_42 {dimension_numbers = #tpu.dot_dimension_numbers<[1], [0], [0], [1], [0, 0, 1, 1], [], []>} : vector<9x128xbf16>, vector<128x128xbf16>, vector<9x128xf32> -> vector<9x128xf32>
    %73 = arith.addf %66, %72 : vector<9x128xf32>
    %c8_43 = arith.constant 8 : index
    %c0_44 = arith.constant 0 : index
    %74 = vector.load %arg9[%c8_43, %c0_44] : memref<24x128xbf16, #tpu.memory_space<vmem>>, vector<9x128xbf16>
    %c4_45 = arith.constant 4 : index
    %c0_46 = arith.constant 0 : index
    %c0_47 = arith.constant 0 : index
    %75 = vector.load %arg7[%c4_45, %c0_46, %c0_47] : memref<9x128x128xbf16, #tpu.memory_space<vmem>>, vector<1x128x128xbf16>
    %76 = vector.shape_cast %75 : vector<1x128x128xbf16> to vector<128x128xbf16>
    %cst_48 = arith.constant dense<0.000000e+00> : vector<9x128xf32>
    %77 = tpu.matmul %74, %76, %cst_48 {dimension_numbers = #tpu.dot_dimension_numbers<[1], [0], [0], [1], [0, 0, 1, 1], [], []>} : vector<9x128xbf16>, vector<128x128xbf16>, vector<9x128xf32> -> vector<9x128xf32>
    %78 = arith.addf %73, %77 : vector<9x128xf32>
    %c9 = arith.constant 9 : index
    %c0_49 = arith.constant 0 : index
    %79 = vector.load %arg9[%c9, %c0_49] : memref<24x128xbf16, #tpu.memory_space<vmem>>, vector<9x128xbf16>
    %cst_50 = arith.constant 0.000000e+00 : bf16
    %80 = vector.broadcast %cst_50 : bf16 to vector<9x128xbf16>
    %81 = arith.select %46, %79, %80 : vector<9x128xi1>, vector<9x128xbf16>
    %c5_51 = arith.constant 5 : index
    %c0_52 = arith.constant 0 : index
    %c0_53 = arith.constant 0 : index
    %82 = vector.load %arg7[%c5_51, %c0_52, %c0_53] : memref<9x128x128xbf16, #tpu.memory_space<vmem>>, vector<1x128x128xbf16>
    %83 = vector.shape_cast %82 : vector<1x128x128xbf16> to vector<128x128xbf16>
    %cst_54 = arith.constant dense<0.000000e+00> : vector<9x128xf32>
    %84 = tpu.matmul %81, %83, %cst_54 {dimension_numbers = #tpu.dot_dimension_numbers<[1], [0], [0], [1], [0, 0, 1, 1], [], []>} : vector<9x128xbf16>, vector<128x128xbf16>, vector<9x128xf32> -> vector<9x128xf32>
    %85 = arith.addf %78, %84 : vector<9x128xf32>
    %c10 = arith.constant 10 : index
    %c0_55 = arith.constant 0 : index
    %86 = vector.load %arg9[%c10, %c0_55] : memref<24x128xbf16, #tpu.memory_space<vmem>>, vector<9x128xbf16>
    %cst_56 = arith.constant 0.000000e+00 : bf16
    %87 = vector.broadcast %cst_56 : bf16 to vector<9x128xbf16>
    %88 = arith.select %44, %86, %87 : vector<9x128xi1>, vector<9x128xbf16>
    %c6_57 = arith.constant 6 : index
    %c0_58 = arith.constant 0 : index
    %c0_59 = arith.constant 0 : index
    %89 = vector.load %arg7[%c6_57, %c0_58, %c0_59] : memref<9x128x128xbf16, #tpu.memory_space<vmem>>, vector<1x128x128xbf16>
    %90 = vector.shape_cast %89 : vector<1x128x128xbf16> to vector<128x128xbf16>
    %cst_60 = arith.constant dense<0.000000e+00> : vector<9x128xf32>
    %91 = tpu.matmul %88, %90, %cst_60 {dimension_numbers = #tpu.dot_dimension_numbers<[1], [0], [0], [1], [0, 0, 1, 1], [], []>} : vector<9x128xbf16>, vector<128x128xbf16>, vector<9x128xf32> -> vector<9x128xf32>
    %92 = arith.addf %85, %91 : vector<9x128xf32>
    %c11 = arith.constant 11 : index
    %c0_61 = arith.constant 0 : index
    %93 = vector.load %arg9[%c11, %c0_61] : memref<24x128xbf16, #tpu.memory_space<vmem>>, vector<9x128xbf16>
    %c7_62 = arith.constant 7 : index
    %c0_63 = arith.constant 0 : index
    %c0_64 = arith.constant 0 : index
    %94 = vector.load %arg7[%c7_62, %c0_63, %c0_64] : memref<9x128x128xbf16, #tpu.memory_space<vmem>>, vector<1x128x128xbf16>
    %95 = vector.shape_cast %94 : vector<1x128x128xbf16> to vector<128x128xbf16>
    %cst_65 = arith.constant dense<0.000000e+00> : vector<9x128xf32>
    %96 = tpu.matmul %93, %95, %cst_65 {dimension_numbers = #tpu.dot_dimension_numbers<[1], [0], [0], [1], [0, 0, 1, 1], [], []>} : vector<9x128xbf16>, vector<128x128xbf16>, vector<9x128xf32> -> vector<9x128xf32>
    %97 = arith.addf %92, %96 : vector<9x128xf32>
    %c12 = arith.constant 12 : index
    %c0_66 = arith.constant 0 : index
    %98 = vector.load %arg9[%c12, %c0_66] : memref<24x128xbf16, #tpu.memory_space<vmem>>, vector<9x128xbf16>
    %cst_67 = arith.constant 0.000000e+00 : bf16
    %99 = vector.broadcast %cst_67 : bf16 to vector<9x128xbf16>
    %100 = arith.select %46, %98, %99 : vector<9x128xi1>, vector<9x128xbf16>
    %c8_68 = arith.constant 8 : index
    %c0_69 = arith.constant 0 : index
    %c0_70 = arith.constant 0 : index
    %101 = vector.load %arg7[%c8_68, %c0_69, %c0_70] : memref<9x128x128xbf16, #tpu.memory_space<vmem>>, vector<1x128x128xbf16>
    %102 = vector.shape_cast %101 : vector<1x128x128xbf16> to vector<128x128xbf16>
    %cst_71 = arith.constant dense<0.000000e+00> : vector<9x128xf32>
    %103 = tpu.matmul %100, %102, %cst_71 {dimension_numbers = #tpu.dot_dimension_numbers<[1], [0], [0], [1], [0, 0, 1, 1], [], []>} : vector<9x128xbf16>, vector<128x128xbf16>, vector<9x128xf32> -> vector<9x128xf32>
    %104 = arith.addf %97, %103 : vector<9x128xf32>
    %105 = arith.extf %1 : vector<9x128xbf16> to vector<9x128xf32>
    %106 = arith.addf %105, %104 : vector<9x128xf32>
    %107 = arith.truncf %106 : vector<9x128xf32> to vector<9x128xbf16>
    %c0_72 = arith.constant 0 : index
    %c0_73 = arith.constant 0 : index
    %c0_74 = arith.constant 0 : index
    %108 = vector.load %arg8[%c0_72, %c0_73, %c0_74] : memref<1x9x128xbf16, #tpu.memory_space<vmem>>, vector<1x9x128xbf16>
    %109 = vector.shape_cast %108 : vector<1x9x128xbf16> to vector<9x128xbf16>
    %110 = vector.shape_cast %107 : vector<9x128xbf16> to vector<1x9x128xbf16>
    tpu.vector_store %arg8[%c0_72, %c0_73, %c0_74], %110 {strides = array<i32>} : memref<1x9x128xbf16, #tpu.memory_space<vmem>>, vector<1x9x128xbf16>,
    return
  }
  func.func @transform_0(%arg0: i32) -> (i32, i32, i32) {
    %c0_i32 = arith.constant 0 : i32
    %c0_i32_0 = arith.constant 0 : i32
    %c0_i32_1 = arith.constant 0 : i32
    return %arg0, %c0_i32, %c0_i32_0 : i32, i32, i32
  }
  func.func @transform_1(%arg0: i32) -> (i32, i32) {
    %c0_i32 = arith.constant 0 : i32
    %c0_i32_0 = arith.constant 0 : i32
    %c0_i32_1 = arith.constant 0 : i32
    return %c0_i32, %c0_i32_0 : i32, i32
  }
  func.func @transform_2(%arg0: i32) -> (i32, i32) {
    %c0_i32 = arith.constant 0 : i32
    %c0_i32_0 = arith.constant 0 : i32
    %c0_i32_1 = arith.constant 0 : i32
    return %c0_i32, %c0_i32_0 : i32, i32
  }
  func.func @transform_3(%arg0: i32) -> (i32, i32) {
    %c0_i32 = arith.constant 0 : i32
    %c0_i32_0 = arith.constant 0 : i32
    %c0_i32_1 = arith.constant 0 : i32
    return %c0_i32, %c0_i32_0 : i32, i32
  }
  func.func @transform_4(%arg0: i32) -> (i32, i32) {
    %c0_i32 = arith.constant 0 : i32
    %c0_i32_0 = arith.constant 0 : i32
    %c0_i32_1 = arith.constant 0 : i32
    return %c0_i32, %c0_i32_0 : i32, i32
  }
  func.func @transform_5(%arg0: i32) -> (i32, i32) {
    %c0_i32 = arith.constant 0 : i32
    %c0_i32_0 = arith.constant 0 : i32
    %c0_i32_1 = arith.constant 0 : i32
    return %c0_i32, %c0_i32_0 : i32, i32
  }
  func.func @transform_6(%arg0: i32) -> (i32, i32, i32) {
    %c0_i32 = arith.constant 0 : i32
    %c0_i32_0 = arith.constant 0 : i32
    %c0_i32_1 = arith.constant 0 : i32
    %c0_i32_2 = arith.constant 0 : i32
    return %c0_i32, %c0_i32_0, %c0_i32_1 : i32, i32, i32
  }
  func.func @transform_7(%arg0: i32) -> (i32, i32, i32) {
    %c0_i32 = arith.constant 0 : i32
    %c0_i32_0 = arith.constant 0 : i32
    %c0_i32_1 = arith.constant 0 : i32
    return %arg0, %c0_i32, %c0_i32_0 : i32, i32, i32
  }
}

module attributes {stable_mosaic.version = 11 : i64} {
  func.func @_transition_kernel(%arg0: i32, %arg1: memref<1x9x128xbf16, #tpu.memory_space<vmem>>, %arg2: memref<1x9xf32, #tpu.memory_space<vmem>>, %arg3: memref<1x128xf32, #tpu.memory_space<vmem>>, %arg4: memref<1x128xf32, #tpu.memory_space<vmem>>, %arg5: memref<128x128xbf16, #tpu.memory_space<vmem>>, %arg6: memref<1x1x128xbf16, #tpu.memory_space<vmem>>) attributes {dimension_semantics = [#tpu.dimension_semantics<parallel>], iteration_bounds = array<i64: 2>, scalar_prefetch = 0 : i64, scratch_operands = 0 : i64, tpu.core_type = #tpu.core_type<tc>, window_params = [{transform_indices = @transform_0, window_bounds = array<i64: 1, 9, 128>}, {pipeline_mode = #tpu.pipeline_mode<synchronous>, transform_indices = @transform_1, window_bounds = array<i64: 1, 9>}, {pipeline_mode = #tpu.pipeline_mode<synchronous>, transform_indices = @transform_2, window_bounds = array<i64: 1, 128>}, {pipeline_mode = #tpu.pipeline_mode<synchronous>, transform_indices = @transform_3, window_bounds = array<i64: 1, 128>}, {pipeline_mode = #tpu.pipeline_mode<synchronous>, transform_indices = @transform_4, window_bounds = array<i64: 128, 128>}, {transform_indices = @transform_5, window_bounds = array<i64: 1, 1, 128>}]} {
    %c0 = arith.constant 0 : index
    %c0_0 = arith.constant 0 : index
    %c0_1 = arith.constant 0 : index
    %0 = vector.load %arg1[%c0, %c0_0, %c0_1] : memref<1x9x128xbf16, #tpu.memory_space<vmem>>, vector<1x9x128xbf16>
    %1 = vector.shape_cast %0 : vector<1x9x128xbf16> to vector<9x128xbf16>
    %2 = arith.extf %1 : vector<9x128xbf16> to vector<9x128xf32>
    %c0_2 = arith.constant 0 : index
    %c0_3 = arith.constant 0 : index
    %3 = vector.load %arg3[%c0_2, %c0_3] : memref<1x128xf32, #tpu.memory_space<vmem>>, vector<1x128xf32>
    %4 = vector.broadcast %3 : vector<1x128xf32> to vector<9x128xf32>
    %5 = arith.mulf %2, %4 : vector<9x128xf32>
    %c0_4 = arith.constant 0 : index
    %c0_5 = arith.constant 0 : index
    %6 = vector.load %arg4[%c0_4, %c0_5] : memref<1x128xf32, #tpu.memory_space<vmem>>, vector<1x128xf32>
    %7 = vector.broadcast %6 : vector<1x128xf32> to vector<9x128xf32>
    %8 = arith.addf %5, %7 : vector<9x128xf32>
    %cst = arith.constant 0.000000e+00 : f32
    %9 = vector.broadcast %cst : f32 to vector<9x128xf32>
    %10 = arith.maximumf %8, %9 : vector<9x128xf32>
    %c0_6 = arith.constant 0 : index
    %c0_7 = arith.constant 0 : index
    %11 = vector.load %arg2[%c0_6, %c0_7] : memref<1x9xf32, #tpu.memory_space<vmem>>, vector<1x9xf32>
    %cst_8 = arith.constant dense<0.000000e+00> : vector<1x128xf32>
    %12 = tpu.matmul %11, %10, %cst_8 {dimension_numbers = #tpu.dot_dimension_numbers<[1], [0], [0], [1], [0, 0, 1, 1], [], []>} : vector<1x9xf32>, vector<9x128xf32>, vector<1x128xf32> -> vector<1x128xf32>
    %13 = arith.truncf %12 : vector<1x128xf32> to vector<1x128xbf16>
    %c0_9 = arith.constant 0 : index
    %c0_10 = arith.constant 0 : index
    %14 = vector.load %arg5[%c0_9, %c0_10] : memref<128x128xbf16, #tpu.memory_space<vmem>>, vector<128x128xbf16>
    %cst_11 = arith.constant dense<0.000000e+00> : vector<1x128xf32>
    %15 = tpu.matmul %13, %14, %cst_11 {dimension_numbers = #tpu.dot_dimension_numbers<[1], [0], [0], [1], [0, 0, 1, 1], [], []>} : vector<1x128xbf16>, vector<128x128xbf16>, vector<1x128xf32> -> vector<1x128xf32>
    %16 = arith.truncf %15 : vector<1x128xf32> to vector<1x128xbf16>
    %c0_12 = arith.constant 0 : index
    %c0_13 = arith.constant 0 : index
    %c0_14 = arith.constant 0 : index
    %17 = vector.load %arg6[%c0_12, %c0_13, %c0_14] : memref<1x1x128xbf16, #tpu.memory_space<vmem>>, vector<1x1x128xbf16>
    %18 = vector.shape_cast %17 : vector<1x1x128xbf16> to vector<1x128xbf16>
    %19 = vector.shape_cast %16 : vector<1x128xbf16> to vector<1x1x128xbf16>
    tpu.vector_store %arg6[%c0_12, %c0_13, %c0_14], %19 {strides = array<i32>} : memref<1x1x128xbf16, #tpu.memory_space<vmem>>, vector<1x1x128xbf16>,
    return
  }
  func.func @transform_0(%arg0: i32) -> (i32, i32, i32) {
    %c0_i32 = arith.constant 0 : i32
    %c0_i32_0 = arith.constant 0 : i32
    %c0_i32_1 = arith.constant 0 : i32
    return %arg0, %c0_i32, %c0_i32_0 : i32, i32, i32
  }
  func.func @transform_1(%arg0: i32) -> (i32, i32) {
    %c0_i32 = arith.constant 0 : i32
    %c0_i32_0 = arith.constant 0 : i32
    %c0_i32_1 = arith.constant 0 : i32
    return %c0_i32, %c0_i32_0 : i32, i32
  }
  func.func @transform_2(%arg0: i32) -> (i32, i32) {
    %c0_i32 = arith.constant 0 : i32
    %c0_i32_0 = arith.constant 0 : i32
    %c0_i32_1 = arith.constant 0 : i32
    return %c0_i32, %c0_i32_0 : i32, i32
  }
  func.func @transform_3(%arg0: i32) -> (i32, i32) {
    %c0_i32 = arith.constant 0 : i32
    %c0_i32_0 = arith.constant 0 : i32
    %c0_i32_1 = arith.constant 0 : i32
    return %c0_i32, %c0_i32_0 : i32, i32
  }
  func.func @transform_4(%arg0: i32) -> (i32, i32) {
    %c0_i32 = arith.constant 0 : i32
    %c0_i32_0 = arith.constant 0 : i32
    %c0_i32_1 = arith.constant 0 : i32
    return %c0_i32, %c0_i32_0 : i32, i32
  }
  func.func @transform_5(%arg0: i32) -> (i32, i32, i32) {
    %c0_i32 = arith.constant 0 : i32
    %c0_i32_0 = arith.constant 0 : i32
    %c0_i32_1 = arith.constant 0 : i32
    return %arg0, %c0_i32, %c0_i32_0 : i32, i32, i32
  }
}

module attributes {stable_mosaic.version = 11 : i64} {
  func.func @_dense_layer_kernel(%arg0: i32, %arg1: memref<1x1x128xbf16, #tpu.memory_space<vmem>>, %arg2: memref<1x128xf32, #tpu.memory_space<vmem>>, %arg3: memref<1x128xf32, #tpu.memory_space<vmem>>, %arg4: memref<128x128xbf16, #tpu.memory_space<vmem>>, %arg5: memref<1x128xf32, #tpu.memory_space<vmem>>, %arg6: memref<1x128xf32, #tpu.memory_space<vmem>>, %arg7: memref<9x128x128xbf16, #tpu.memory_space<vmem>>, %arg8: memref<1x1x128xbf16, #tpu.memory_space<vmem>>, %arg9: memref<16x128xbf16, #tpu.memory_space<vmem>>) attributes {dimension_semantics = [#tpu.dimension_semantics<parallel>], iteration_bounds = array<i64: 2>, scalar_prefetch = 0 : i64, scratch_operands = 1 : i64, tpu.core_type = #tpu.core_type<tc>, window_params = [{transform_indices = @transform_0, window_bounds = array<i64: 1, 1, 128>}, {pipeline_mode = #tpu.pipeline_mode<synchronous>, transform_indices = @transform_1, window_bounds = array<i64: 1, 128>}, {pipeline_mode = #tpu.pipeline_mode<synchronous>, transform_indices = @transform_2, window_bounds = array<i64: 1, 128>}, {pipeline_mode = #tpu.pipeline_mode<synchronous>, transform_indices = @transform_3, window_bounds = array<i64: 128, 128>}, {pipeline_mode = #tpu.pipeline_mode<synchronous>, transform_indices = @transform_4, window_bounds = array<i64: 1, 128>}, {pipeline_mode = #tpu.pipeline_mode<synchronous>, transform_indices = @transform_5, window_bounds = array<i64: 1, 128>}, {pipeline_mode = #tpu.pipeline_mode<synchronous>, transform_indices = @transform_6, window_bounds = array<i64: 9, 128, 128>}, {transform_indices = @transform_7, window_bounds = array<i64: 1, 1, 128>}]} {
    %c0 = arith.constant 0 : index
    %c0_0 = arith.constant 0 : index
    %c0_1 = arith.constant 0 : index
    %0 = vector.load %arg1[%c0, %c0_0, %c0_1] : memref<1x1x128xbf16, #tpu.memory_space<vmem>>, vector<1x1x128xbf16>
    %1 = vector.shape_cast %0 : vector<1x1x128xbf16> to vector<1x128xbf16>
    %2 = arith.extf %1 : vector<1x128xbf16> to vector<1x128xf32>
    %c0_2 = arith.constant 0 : index
    %c0_3 = arith.constant 0 : index
    %3 = vector.load %arg2[%c0_2, %c0_3] : memref<1x128xf32, #tpu.memory_space<vmem>>, vector<1x128xf32>
    %4 = arith.mulf %2, %3 : vector<1x128xf32>
    %c0_4 = arith.constant 0 : index
    %c0_5 = arith.constant 0 : index
    %5 = vector.load %arg3[%c0_4, %c0_5] : memref<1x128xf32, #tpu.memory_space<vmem>>, vector<1x128xf32>
    %6 = arith.addf %4, %5 : vector<1x128xf32>
    %cst = arith.constant 0.000000e+00 : f32
    %7 = vector.broadcast %cst : f32 to vector<1x128xf32>
    %8 = arith.maximumf %6, %7 : vector<1x128xf32>
    %9 = arith.truncf %8 : vector<1x128xf32> to vector<1x128xbf16>
    %c0_6 = arith.constant 0 : index
    %c0_7 = arith.constant 0 : index
    %10 = vector.load %arg4[%c0_6, %c0_7] : memref<128x128xbf16, #tpu.memory_space<vmem>>, vector<128x128xbf16>
    %cst_8 = arith.constant dense<0.000000e+00> : vector<1x128xf32>
    %11 = tpu.matmul %9, %10, %cst_8 {dimension_numbers = #tpu.dot_dimension_numbers<[1], [0], [0], [1], [0, 0, 1, 1], [], []>} : vector<1x128xbf16>, vector<128x128xbf16>, vector<1x128xf32> -> vector<1x128xf32>
    %c0_9 = arith.constant 0 : index
    %c0_10 = arith.constant 0 : index
    %12 = vector.load %arg5[%c0_9, %c0_10] : memref<1x128xf32, #tpu.memory_space<vmem>>, vector<1x128xf32>
    %13 = arith.mulf %11, %12 : vector<1x128xf32>
    %c0_11 = arith.constant 0 : index
    %c0_12 = arith.constant 0 : index
    %14 = vector.load %arg6[%c0_11, %c0_12] : memref<1x128xf32, #tpu.memory_space<vmem>>, vector<1x128xf32>
    %15 = arith.addf %13, %14 : vector<1x128xf32>
    %cst_13 = arith.constant 0.000000e+00 : f32
    %16 = vector.broadcast %cst_13 : f32 to vector<1x128xf32>
    %17 = arith.maximumf %15, %16 : vector<1x128xf32>
    %18 = arith.truncf %17 : vector<1x128xf32> to vector<1x128xbf16>
    %cst_14 = arith.constant 0.000000e+00 : bf16
    %19 = vector.broadcast %cst_14 : bf16 to vector<16x128xbf16>
    %c0_15 = arith.constant 0 : index
    %c0_16 = arith.constant 0 : index
    %20 = vector.load %arg9[%c0_15, %c0_16] : memref<16x128xbf16, #tpu.memory_space<vmem>>, vector<16x128xbf16>
    tpu.vector_store %arg9[%c0_15, %c0_16], %19 {strides = array<i32>} : memref<16x128xbf16, #tpu.memory_space<vmem>>, vector<16x128xbf16>,
    %c8 = arith.constant 8 : index
    %c0_17 = arith.constant 0 : index
    %21 = vector.load %arg9[%c8, %c0_17] : memref<16x128xbf16, #tpu.memory_space<vmem>>, vector<1x128xbf16>
    tpu.vector_store %arg9[%c8, %c0_17], %18 {strides = array<i32>} : memref<16x128xbf16, #tpu.memory_space<vmem>>, vector<1x128xbf16>,
    %cst_18 = arith.constant 0.000000e+00 : f32
    %22 = vector.broadcast %cst_18 : f32 to vector<1x128xf32>
    %c8_19 = arith.constant 8 : index
    %c0_20 = arith.constant 0 : index
    %23 = vector.load %arg9[%c8_19, %c0_20] : memref<16x128xbf16, #tpu.memory_space<vmem>>, vector<1x128xbf16>
    %c4 = arith.constant 4 : index
    %c0_21 = arith.constant 0 : index
    %c0_22 = arith.constant 0 : index
    %24 = vector.load %arg7[%c4, %c0_21, %c0_22] : memref<9x128x128xbf16, #tpu.memory_space<vmem>>, vector<1x128x128xbf16>
    %25 = vector.shape_cast %24 : vector<1x128x128xbf16> to vector<128x128xbf16>
    %cst_23 = arith.constant dense<0.000000e+00> : vector<1x128xf32>
    %26 = tpu.matmul %23, %25, %cst_23 {dimension_numbers = #tpu.dot_dimension_numbers<[1], [0], [0], [1], [0, 0, 1, 1], [], []>} : vector<1x128xbf16>, vector<128x128xbf16>, vector<1x128xf32> -> vector<1x128xf32>
    %27 = arith.addf %22, %26 : vector<1x128xf32>
    %28 = arith.extf %1 : vector<1x128xbf16> to vector<1x128xf32>
    %29 = arith.addf %28, %27 : vector<1x128xf32>
    %30 = arith.truncf %29 : vector<1x128xf32> to vector<1x128xbf16>
    %c0_24 = arith.constant 0 : index
    %c0_25 = arith.constant 0 : index
    %c0_26 = arith.constant 0 : index
    %31 = vector.load %arg8[%c0_24, %c0_25, %c0_26] : memref<1x1x128xbf16, #tpu.memory_space<vmem>>, vector<1x1x128xbf16>
    %32 = vector.shape_cast %31 : vector<1x1x128xbf16> to vector<1x128xbf16>
    %33 = vector.shape_cast %30 : vector<1x128xbf16> to vector<1x1x128xbf16>
    tpu.vector_store %arg8[%c0_24, %c0_25, %c0_26], %33 {strides = array<i32>} : memref<1x1x128xbf16, #tpu.memory_space<vmem>>, vector<1x1x128xbf16>,
    return
  }
  func.func @transform_0(%arg0: i32) -> (i32, i32, i32) {
    %c0_i32 = arith.constant 0 : i32
    %c0_i32_0 = arith.constant 0 : i32
    %c0_i32_1 = arith.constant 0 : i32
    return %arg0, %c0_i32, %c0_i32_0 : i32, i32, i32
  }
  func.func @transform_1(%arg0: i32) -> (i32, i32) {
    %c0_i32 = arith.constant 0 : i32
    %c0_i32_0 = arith.constant 0 : i32
    %c0_i32_1 = arith.constant 0 : i32
    return %c0_i32, %c0_i32_0 : i32, i32
  }
  func.func @transform_2(%arg0: i32) -> (i32, i32) {
    %c0_i32 = arith.constant 0 : i32
    %c0_i32_0 = arith.constant 0 : i32
    %c0_i32_1 = arith.constant 0 : i32
    return %c0_i32, %c0_i32_0 : i32, i32
  }
  func.func @transform_3(%arg0: i32) -> (i32, i32) {
    %c0_i32 = arith.constant 0 : i32
    %c0_i32_0 = arith.constant 0 : i32
    %c0_i32_1 = arith.constant 0 : i32
    return %c0_i32, %c0_i32_0 : i32, i32
  }
  func.func @transform_4(%arg0: i32) -> (i32, i32) {
    %c0_i32 = arith.constant 0 : i32
    %c0_i32_0 = arith.constant 0 : i32
    %c0_i32_1 = arith.constant 0 : i32
    return %c0_i32, %c0_i32_0 : i32, i32
  }
  func.func @transform_5(%arg0: i32) -> (i32, i32) {
    %c0_i32 = arith.constant 0 : i32
    %c0_i32_0 = arith.constant 0 : i32
    %c0_i32_1 = arith.constant 0 : i32
    return %c0_i32, %c0_i32_0 : i32, i32
  }
  func.func @transform_6(%arg0: i32) -> (i32, i32, i32) {
    %c0_i32 = arith.constant 0 : i32
    %c0_i32_0 = arith.constant 0 : i32
    %c0_i32_1 = arith.constant 0 : i32
    %c0_i32_2 = arith.constant 0 : i32
    return %c0_i32, %c0_i32_0, %c0_i32_1 : i32, i32, i32
  }
  func.func @transform_7(%arg0: i32) -> (i32, i32, i32) {
    %c0_i32 = arith.constant 0 : i32
    %c0_i32_0 = arith.constant 0 : i32
    %c0_i32_1 = arith.constant 0 : i32
    return %arg0, %c0_i32, %c0_i32_0 : i32, i32, i32
  }
}

module attributes {stable_mosaic.version = 11 : i64} {
  func.func @_head_kernel(%arg0: memref<2x1x128xbf16, #tpu.memory_space<vmem>>, %arg1: memref<1x128xf32, #tpu.memory_space<vmem>>, %arg2: memref<1x128xf32, #tpu.memory_space<vmem>>, %arg3: memref<128x128xbf16, #tpu.memory_space<vmem>>, %arg4: memref<1x128xf32, #tpu.memory_space<vmem>>, %arg5: memref<2x128xf32, #tpu.memory_space<vmem>>) attributes {dimension_semantics = [], scalar_prefetch = 0 : i64, scratch_operands = 0 : i64, tpu.core_type = #tpu.core_type<tc>} {
    %c0 = arith.constant 0 : index
    %c0_0 = arith.constant 0 : index
    %c0_1 = arith.constant 0 : index
    %0 = vector.load %arg0[%c0, %c0_0, %c0_1] : memref<2x1x128xbf16, #tpu.memory_space<vmem>>, vector<2x1x128xbf16>
    %1 = arith.extf %0 : vector<2x1x128xbf16> to vector<2x1x128xf32>
    %c0_2 = arith.constant 0 : index
    %c0_3 = arith.constant 0 : index
    %2 = vector.load %arg1[%c0_2, %c0_3] : memref<1x128xf32, #tpu.memory_space<vmem>>, vector<1x128xf32>
    %3 = vector.shape_cast %2 : vector<1x128xf32> to vector<1x1x128xf32>
    %4 = vector.broadcast %3 : vector<1x1x128xf32> to vector<2x1x128xf32>
    %5 = arith.mulf %1, %4 : vector<2x1x128xf32>
    %c0_4 = arith.constant 0 : index
    %c0_5 = arith.constant 0 : index
    %6 = vector.load %arg2[%c0_4, %c0_5] : memref<1x128xf32, #tpu.memory_space<vmem>>, vector<1x128xf32>
    %7 = vector.shape_cast %6 : vector<1x128xf32> to vector<1x1x128xf32>
    %8 = vector.broadcast %7 : vector<1x1x128xf32> to vector<2x1x128xf32>
    %9 = arith.addf %5, %8 : vector<2x1x128xf32>
    %cst = arith.constant 0.000000e+00 : f32
    %10 = vector.broadcast %cst : f32 to vector<2x1x128xf32>
    %11 = arith.maximumf %9, %10 : vector<2x1x128xf32>
    %cst_6 = arith.constant dense<0.000000e+00> : vector<2x128xf32>
    %12 = vector.multi_reduction <add>, %11, %cst_6 [1] : vector<2x1x128xf32> to vector<2x128xf32>
    %cst_7 = arith.constant 1.000000e+00 : f32
    %13 = vector.broadcast %cst_7 : f32 to vector<2x128xf32>
    %14 = arith.mulf %12, %13 : vector<2x128xf32>
    %15 = arith.truncf %14 : vector<2x128xf32> to vector<2x128xbf16>
    %c0_8 = arith.constant 0 : index
    %c0_9 = arith.constant 0 : index
    %16 = vector.load %arg3[%c0_8, %c0_9] : memref<128x128xbf16, #tpu.memory_space<vmem>>, vector<128x128xbf16>
    %cst_10 = arith.constant dense<0.000000e+00> : vector<2x128xf32>
    %17 = tpu.matmul %15, %16, %cst_10 {dimension_numbers = #tpu.dot_dimension_numbers<[1], [0], [0], [1], [0, 0, 1, 1], [], []>} : vector<2x128xbf16>, vector<128x128xbf16>, vector<2x128xf32> -> vector<2x128xf32>
    %c0_11 = arith.constant 0 : index
    %c0_12 = arith.constant 0 : index
    %18 = vector.load %arg4[%c0_11, %c0_12] : memref<1x128xf32, #tpu.memory_space<vmem>>, vector<1x128xf32>
    %19 = vector.broadcast %18 : vector<1x128xf32> to vector<2x128xf32>
    %20 = arith.addf %17, %19 : vector<2x128xf32>
    %c0_13 = arith.constant 0 : index
    %c0_14 = arith.constant 0 : index
    %21 = vector.load %arg5[%c0_13, %c0_14] : memref<2x128xf32, #tpu.memory_space<vmem>>, vector<2x128xf32>
    tpu.vector_store %arg5[%c0_13, %c0_14], %20 {strides = array<i32>} : memref<2x128xf32, #tpu.memory_space<vmem>>, vector<2x128xf32>,
    return
  }
}

</mosaic_0001>

<llo_original>
// kernel: _lambda_.10
$region0: #{_lambda_.10}
  #allocation0 [shape = 'u32[]', space=smem, size = 0x4, offset = 0x4, fixed_abs, tag = 'smem constant byte address 0x4 - core index']
  #allocation1 [shape = 'u32[144,128]{1,0:T(1,128)}', space=vmem, size = 0x12000, scoped, tag = 'internal scratch']
  #allocation2 [shape = 'f32[40,128]{1,0:T(8,128)}', space=vmem, size = 0x5000, scoped, tag = 'scratch operand']
  %s0 = inlined_call_operand.vmem [shape: bf16[80,256], index: 0, kind: input, shape index: {}]
  %s1 = inlined_call_operand.vmem [shape: bf16[256,128], index: 1, kind: input, shape index: {}]
  %s2 = inlined_call_operand.vmem [shape: bf16[80,128], index: 2, kind: output, shape index: {}]
  %s3 = sld [smem:[#allocation0]]
  $region49: #{_lambda_.10} parent=0
    _
  %s5 = ssub.s32 1, %s3
  %s6 = scalar_select 0, %s5, %s3
  loop: start=0, step=1, limit=4
  $region2: #{_lambda_.10} parent=0 // loop_pre_header
    _
  $region3: #{_lambda_.10} parent=0 // loop_header
    %s8 = sphi 0, %s12
    %p9 = scmp.ge.s32.totalorder %s8, 4
    %s15 = sphi 0, %s34
    %s16 = sphi 0, %s30
    %s17 = sphi 0, %s26
    %s18 = sphi 0, %s15
    %s19 = sphi 0, %s16
    %s20 = sphi 0, %s17
    %s21 = sphi 0, %s18
    %s22 = sphi 0, %s19
    %s23 = sphi 0, %s20
    %s39 = sphi 0, %s41
    %s42 = sphi 0, %s39
    %s43 = sphi 0, %s42
    %s59 = sphi 0, %s43
    %s67 = sphi 0, %s69
    %s70 = sphi 0, %s67
    %s71 = sphi 0, %s70
    %s87 = sphi 0, %s71
    %s95 = sphi 0, %s97
    %s98 = sphi 0, %s95
    %s99 = sphi 0, %s98
    %s115 = sphi 0, %s99
  $region4: #{_lambda_.10} parent=0 // loop_header_branch
    %11 = sbr.rel (%p9) target = $region8
  $region5: #{_lambda_.10} parent=0 // loop_body
    %s13 = ssub.s32 %s8, 1
    %s14 = ssub.s32 %s8, 2
    %s24 = sadd.s32 1, %s17
    %p25 = scmp.ge.s32.totalorder %s24, 1
    %s26 = scalar_select %p25, 0, %s24
    %s27 = sadd.s32 1, %s16
    %s28 = scalar_select %p25, %s27, %s16
    %p29 = scmp.ge.s32.totalorder %s28, 1
    %s30 = scalar_select %p29, 0, %s28
    %s31 = sadd.s32 1, %s15
    %s32 = scalar_select %p29, %s31, %s15
    %p33 = scmp.ge.s32.totalorder %s32, 2
    %s34 = scalar_select %p33, 0, %s32
    %s35 = ssub.s32 %s15, %s34
    %s36 = ssub.s32 %s17, %s26
    %s37 = sor.u32 %s35, %s36
    %p38 = scmp.eq.s32.totalorder %s37, 0
    %s40 = sadd.s32 %s39, 1
    %s41 = scalar_select %p38, %s39, %s40
    %p44 = pneg %p38
    %p45 = scmp.eq.s32.totalorder %s8, 1
    %p46 = por %p44, %p45
    %p47 = scmp.ne.s32.totalorder %s39, %s42
    %p48 = scmp.eq.s32.totalorder %s8, 0
    %p49 = por %p47, %p48
    %p50 = scmp.ne.s32.totalorder %s39, %s42
    %p51 = scmp.eq.s32.totalorder %s13, 1
    %p52 = por %p50, %p51
    %p53 = scmp.ne.s32.totalorder %s42, %s43
    %p54 = scmp.eq.s32.totalorder %s13, 0
    %p55 = por %p53, %p54
    %p56 = scmp.ne.s32.totalorder %s42, %s43
    %p57 = scmp.eq.s32.totalorder %s14, 1
    %p58 = por %p56, %p57
    %p60 = scmp.ne.s32.totalorder %s43, %s59
    %p61 = scmp.eq.s32.totalorder %s14, 0
    %p62 = por %p60, %p61
    %s63 = ssub.s32 %s17, %s26
    %s64 = ssub.s32 %s16, %s30
    %s65 = sor.u32 %s63, %s64
    %p66 = scmp.eq.s32.totalorder %s65, 0
    %s68 = sadd.s32 %s67, 1
    %s69 = scalar_select %p66, %s67, %s68
    %p72 = pneg %p66
    %p73 = scmp.eq.s32.totalorder %s8, 1
    %p74 = por %p72, %p73
    %p75 = scmp.ne.s32.totalorder %s67, %s70
    %p76 = scmp.eq.s32.totalorder %s8, 0
    %p77 = por %p75, %p76
    %p78 = scmp.ne.s32.totalorder %s67, %s70
    %p79 = scmp.eq.s32.totalorder %s13, 1
    %p80 = por %p78, %p79
    %p81 = scmp.ne.s32.totalorder %s70, %s71
    %p82 = scmp.eq.s32.totalorder %s13, 0
    %p83 = por %p81, %p82
    %p84 = scmp.ne.s32.totalorder %s70, %s71
    %p85 = scmp.eq.s32.totalorder %s14, 1
    %p86 = por %p84, %p85
    %p88 = scmp.ne.s32.totalorder %s71, %s87
    %p89 = scmp.eq.s32.totalorder %s14, 0
    %p90 = por %p88, %p89
    %s91 = ssub.s32 %s15, %s34
    %s92 = ssub.s32 %s16, %s30
    %s93 = sor.u32 %s91, %s92
    %p94 = scmp.eq.s32.totalorder %s93, 0
    %s96 = sadd.s32 %s95, 1
    %s97 = scalar_select %p94, %s95, %s96
    %p100 = pneg %p94
    %p101 = scmp.eq.s32.totalorder %s8, 1
    %p102 = por %p100, %p101
    %p103 = scmp.ne.s32.totalorder %s95, %s98
    %p104 = scmp.eq.s32.totalorder %s8, 0
    %p105 = por %p103, %p104
    %p106 = scmp.ne.s32.totalorder %s95, %s98
    %p107 = scmp.eq.s32.totalorder %s13, 1
    %p108 = por %p106, %p107
    %p109 = scmp.ne.s32.totalorder %s98, %s99
    %p110 = scmp.eq.s32.totalorder %s13, 0
    %p111 = por %p109, %p110
    %p112 = scmp.ne.s32.totalorder %s98, %s99
    %p113 = scmp.eq.s32.totalorder %s14, 1
    %p114 = por %p112, %p113
    %p116 = scmp.ne.s32.totalorder %s99, %s115
    %p117 = scmp.eq.s32.totalorder %s14, 0
    %p118 = por %p116, %p117
    %p119 = scmp.le.s32.totalorder 1, %s8
    %p120 = scmp.lt.s32.totalorder %s8, 3
    %p121 = pnand %p119, %p120
    %p122 = pneg %p121
    // Predicated region
    $region9: #{_lambda_.10} parent=5 // pred_check
      _
    $region10: #{_lambda_.10} parent=5 // pred_check_branch
      %124 = sbr.rel (%p121) target = $region12
    $region11: #{_lambda_.10} parent=5 // pred_region
      %s125 = ssub.s32 %s8, 1
      // Predicated region
      $region13: #{_lambda_.10} parent=11 // pred_check
        %p126 = pneg %p83
      $region14: #{_lambda_.10} parent=11 // pred_check_branch
        %128 = sbr.rel (%p126) target = $region16
      $region15: #{_lambda_.10} parent=11 // pred_region
        %s129 = smul.u32 32, %s20
        %p130 = scmp.lt.s32.totalorder %s129, 31
        %s131 = scalar_select %p130, %s129, 31
        %p132 = scmp.lt.s32.totalorder %s19, 0
        %s133 = scalar_select %p132, %s19, 0
        %s134 = sadd.s32 %s133, %s131
        %s135 = smul.addr %s134, 4
        %s136 = scalar_lea.vmem %s1, %s135
        %s137 = smul.u32 32, %s20
      $region16: #{_lambda_.10} parent=11 // pred_fallthru
        _
    $region12: #{_lambda_.10} parent=5 // pred_fallthru
      _
    %p138 = scmp.lt.s32.totalorder %s8, 2
    // Predicated region
    $region17: #{_lambda_.10} parent=5 // pred_check
      %p139 = pneg %p138
    $region18: #{_lambda_.10} parent=5 // pred_check_branch
      %141 = sbr.rel (%p139) target = $region20
    $region19: #{_lambda_.10} parent=5 // pred_region
      // Predicated region
      $region21: #{_lambda_.10} parent=19 // pred_check
        %p142 = pneg %p49
      $region22: #{_lambda_.10} parent=19 // pred_check_branch
        %144 = sbr.rel (%p142) target = $region24
      $region23: #{_lambda_.10} parent=19 // pred_region
        %s145 = smul.u32 5, %s15
        %s146 = smul.u32 2, %s17
        %p147 = scmp.lt.s32.totalorder %s145, 9
        %s148 = scalar_select %p147, %s145, 9
        %p149 = scmp.lt.s32.totalorder %s146, 1
        %s150 = scalar_select %p149, %s146, 1
        %s151 = smul.addr %s148, 2
        %s152 = sadd.s32 %s150, %s151
        %s153 = smul.addr %s152, 4
        %s154 = scalar_lea.vmem %s0, %s153
        %s155 = smul.u32 5, %s15
        %s156 = smul.u32 2, %s17
      $region24: #{_lambda_.10} parent=19 // pred_fallthru
        _
    $region20: #{_lambda_.10} parent=5 // pred_fallthru
      _
    %p157 = scmp.le.s32.totalorder 1, %s8
    %p158 = scmp.lt.s32.totalorder %s8, 3
    %p159 = pnand %p157, %p158
    %p160 = pneg %p159
    // Predicated region
    $region25: #{_lambda_.10} parent=5 // pred_check
      _
    $region26: #{_lambda_.10} parent=5 // pred_check_branch
      %162 = sbr.rel (%p159) target = $region28
    $region27: #{_lambda_.10} parent=5 // pred_region
      %s163 = ssub.s32 %s8, 1
      %s164 = smul.u32 5, %s18
      %s165 = smul.u32 2, %s20
      %p166 = scmp.lt.s32.totalorder %s164, 9
      %s167 = scalar_select %p166, %s164, 9
      %p168 = scmp.lt.s32.totalorder %s165, 1
      %s169 = scalar_select %p168, %s165, 1
      %s170 = smul.addr %s167, 2
      %s171 = sadd.s32 %s169, %s170
      %s172 = smul.addr %s171, 4
      %s173 = scalar_lea.vmem %s0, %s172
      %p174 = pneg %p55
      %p175 = pneg %p52
      %s176 = smul.u32 32, %s20
      %p177 = scmp.lt.s32.totalorder %s176, 31
      %s178 = scalar_select %p177, %s176, 31
      %p179 = scmp.lt.s32.totalorder %s19, 0
      %s180 = scalar_select %p179, %s19, 0
      %s181 = sadd.s32 %s180, %s178
      %s182 = smul.addr %s181, 4
      %s183 = scalar_lea.vmem %s1, %s182
      %p184 = pneg %p83
      %p185 = pneg %p80
      %p186 = pneg %p111
      %p187 = pneg %p108
      %s188 = smul.u32 5, %s18
      %p189 = scmp.lt.s32.totalorder %s188, 9
      %s190 = scalar_select %p189, %s188, 9
      %p191 = scmp.lt.s32.totalorder %s19, 0
      %s192 = scalar_select %p191, %s19, 0
      %s193 = sadd.s32 %s192, %s190
      %s194 = smul.addr %s193, 4
      %s195 = scalar_lea.vmem %s2, %s194
      %s196 = smul.u32 5, %s18
      %s197 = smul.u32 2, %s20
      %p198 = scmp.lt.s32.totalorder %s196, 9
      %s199 = scalar_select %p198, %s196, 9
      %p200 = scmp.lt.s32.totalorder %s197, 1
      %s201 = scalar_select %p200, %s197, 1
      %s202 = smul.addr %s199, 2
      %s203 = sadd.s32 %s201, %s202
      %s204 = smul.addr %s203, 4
      %s205 = scalar_lea.vmem %s0, %s204
      %s206 = smul.u32 5, %s18
      %s207 = smul.u32 2, %s20
      %s208 = smul.u32 32, %s20
      %p209 = scmp.lt.s32.totalorder %s208, 31
      %s210 = scalar_select %p209, %s208, 31
      %p211 = scmp.lt.s32.totalorder %s19, 0
      %s212 = scalar_select %p211, %s19, 0
      %s213 = sadd.s32 %s212, %s210
      %s214 = smul.addr %s213, 4
      %s215 = scalar_lea.vmem %s1, %s214
      %s216 = smul.u32 32, %s20
      %s217 = smul.u32 5, %s18
      %p218 = scmp.lt.s32.totalorder %s217, 9
      %s219 = scalar_select %p218, %s217, 9
      %p220 = scmp.lt.s32.totalorder %s19, 0
      %s221 = scalar_select %p220, %s19, 0
      %s222 = sadd.s32 %s221, %s219
      %s223 = smul.addr %s222, 4
      %s224 = scalar_lea.vmem %s2, %s223
      %s225 = smul.u32 5, %s18
      %p227 = scmp.eq.s32.totalorder %s20, 0
      // Predicated region
      $region29: #{_lambda_.10} parent=27 // pred_check
        %p228 = pneg %p227
      $region30: #{_lambda_.10} parent=27 // pred_check_branch
        %230 = sbr.rel (%p228) target = $region32
      $region31: #{_lambda_.10} parent=27 // pred_region
        %231 = vst [vmem:[#allocation2] sm:$0xff] 0.0
        %232 = vst [vmem:[#allocation2 + $0x8] sm:$0xff] 0.0
        %233 = vst [vmem:[#allocation2 + $0x10] sm:$0xff] 0.0
        %234 = vst [vmem:[#allocation2 + $0x18] sm:$0xff] 0.0
        %235 = vst [vmem:[#allocation2 + $0x20] sm:$0xff] 0.0
      $region32: #{_lambda_.10} parent=27 // pred_fallthru
        _
      %v236 = vld [vmem:[#allocation2] sm:$0xff]
      %v237 = vld [vmem:[#allocation2 + $0x8] sm:$0xff]
      %v238 = vld [vmem:[#allocation2 + $0x10] sm:$0xff]
      %v239 = vld [vmem:[#allocation2 + $0x18] sm:$0xff]
      %v240 = vld [vmem:[#allocation2 + $0x20] sm:$0xff]
      %v241 = vld [vmem:[%s205] sm:$0xff]
      %v242 = vld [vmem:[%s205 + $0x8] sm:$0xff]
      %v243 = vld [vmem:[%s205 + $0x10] sm:$0xff]
      %v244 = vld [vmem:[%s205 + $0x18] sm:$0xff]
      %v245 = vld [vmem:[%s205 + $0x20] sm:$0xff]
      %v246 = vld [vmem:[%s215] sm:$0xf]
      %v247 = vld [vmem:[%s215 + $0x4] sm:$0xf]
      %v248 = vld [vmem:[%s215 + $0x8] sm:$0xf]
      %v249 = vld [vmem:[%s215 + $0xc] sm:$0xf]
      %v250 = vld [vmem:[%s215 + $0x10] sm:$0xf]
      %v251 = vld [vmem:[%s215 + $0x14] sm:$0xf]
      %v252 = vld [vmem:[%s215 + $0x18] sm:$0xf]
      %v253 = vld [vmem:[%s215 + $0x1c] sm:$0xf]
      %v254 = vld [vmem:[%s215 + $0x20] sm:$0xf]
      %v255 = vld [vmem:[%s215 + $0x24] sm:$0xf]
      %v256 = vld [vmem:[%s215 + $0x28] sm:$0xf]
      %v257 = vld [vmem:[%s215 + $0x2c] sm:$0xf]
      %v258 = vld [vmem:[%s215 + $0x30] sm:$0xf]
      %v259 = vld [vmem:[%s215 + $0x34] sm:$0xf]
      %v260 = vld [vmem:[%s215 + $0x38] sm:$0xf]
      %v261 = vld [vmem:[%s215 + $0x3c] sm:$0xf]
      %v262 = vld [vmem:[%s215 + $0x40] sm:$0xf]
      %v263 = vld [vmem:[%s215 + $0x44] sm:$0xf]
      %v264 = vld [vmem:[%s215 + $0x48] sm:$0xf]
      %v265 = vld [vmem:[%s215 + $0x4c] sm:$0xf]
      %v266 = vld [vmem:[%s215 + $0x50] sm:$0xf]
      %v267 = vld [vmem:[%s215 + $0x54] sm:$0xf]
      %v268 = vld [vmem:[%s215 + $0x58] sm:$0xf]
      %v269 = vld [vmem:[%s215 + $0x5c] sm:$0xf]
      %v270 = vld [vmem:[%s215 + $0x60] sm:$0xf]
      %v271 = vld [vmem:[%s215 + $0x64] sm:$0xf]
      %v272 = vld [vmem:[%s215 + $0x68] sm:$0xf]
      %v273 = vld [vmem:[%s215 + $0x6c] sm:$0xf]
      %v274 = vld [vmem:[%s215 + $0x70] sm:$0xf]
      %v275 = vld [vmem:[%s215 + $0x74] sm:$0xf]
      %v276 = vld [vmem:[%s215 + $0x78] sm:$0xf]
      %v277 = vld [vmem:[%s215 + $0x7c] sm:$0xf]
      %v283 = vunpack.c.l.b16 %v241
      %v284 = vunpack.c.h.b16 %v241
      %v285 = vunpack.c.l.b16 %v242
      %v286 = vunpack.c.h.b16 %v242
      %v287 = vunpack.c.l.b16 %v243
      %v288 = vunpack.c.h.b16 %v243
      %v289 = vunpack.c.l.b16 %v244
      %v290 = vunpack.c.h.b16 %v244
      %v291 = vunpack.c.l.b16 %v245
      %v292 = vunpack.c.h.b16 %v245
      %v293 = vpack.c.b16 %v285, %v283
      %v294 = vpack.c.b16 %v286, %v284
      %v295 = vpack.c.b16 %v289, %v287
      %v296 = vpack.c.b16 %v290, %v288
      %v297 = vpack.c.b16 %v291, %v291
      %v298 = vpack.c.b16 %v292, %v292
      %v337 = vunpack.c.l.b16 %v246
      %v338 = vunpack.c.l.b16 %v247
      %v339 = vunpack.c.l.b16 %v248
      %v340 = vunpack.c.l.b16 %v249
      %v341 = vunpack.c.l.b16 %v250
      %v342 = vunpack.c.l.b16 %v251
      %v343 = vunpack.c.l.b16 %v252
      %v344 = vunpack.c.l.b16 %v253
      %v345 = vunpack.c.l.b16 %v254
      %v346 = vunpack.c.l.b16 %v255
      %v347 = vunpack.c.l.b16 %v256
      %v348 = vunpack.c.l.b16 %v257
      %v349 = vunpack.c.l.b16 %v258
      %v350 = vunpack.c.l.b16 %v259
      %v351 = vunpack.c.l.b16 %v260
      %v352 = vunpack.c.l.b16 %v261
      %v353 = vunpack.c.l.b16 %v262
      %v354 = vunpack.c.l.b16 %v263
      %v355 = vunpack.c.l.b16 %v264
      %v356 = vunpack.c.l.b16 %v265
      %v357 = vunpack.c.l.b16 %v266
      %v358 = vunpack.c.l.b16 %v267
      %v359 = vunpack.c.l.b16 %v268
      %v360 = vunpack.c.l.b16 %v269
      %v361 = vunpack.c.l.b16 %v270
      %v362 = vunpack.c.l.b16 %v271
      %v363 = vunpack.c.l.b16 %v272
      %v364 = vunpack.c.l.b16 %v273
      %v365 = vunpack.c.l.b16 %v274
      %v366 = vunpack.c.l.b16 %v275
      %v367 = vunpack.c.l.b16 %v276
      %v368 = vunpack.c.l.b16 %v277
      %v369 = vpack.c.b16 %v338, %v337
      %v370 = vpack.c.b16 %v340, %v339
      %v371 = vpack.c.b16 %v342, %v341
      %v372 = vpack.c.b16 %v344, %v343
      %v373 = vpack.c.b16 %v346, %v345
      %v374 = vpack.c.b16 %v348, %v347
      %v375 = vpack.c.b16 %v350, %v349
      %v376 = vpack.c.b16 %v352, %v351
      %v377 = vpack.c.b16 %v354, %v353
      %v378 = vpack.c.b16 %v356, %v355
      %v379 = vpack.c.b16 %v358, %v357
      %v380 = vpack.c.b16 %v360, %v359
      %v381 = vpack.c.b16 %v362, %v361
      %v382 = vpack.c.b16 %v364, %v363
      %v383 = vpack.c.b16 %v366, %v365
      %v384 = vpack.c.b16 %v368, %v367
      %401 = vmatprep.subr.bf16.mxu0 0
      %402 = vmatpush1.bf16.msra.mxu0 %v376
      %403 = vmatprep.subr.bf16.mxu0 0
      %404 = vmatpush1.bf16.msra.mxu0 %v375
      %405 = vmatprep.subr.bf16.mxu0 0
      %406 = vmatpush1.bf16.msra.mxu0 %v374
      %407 = vmatprep.subr.bf16.mxu0 0
      %408 = vmatpush1.bf16.msra.mxu0 %v373
      %409 = vmatprep.subr.bf16.mxu0 0
      %410 = vmatpush1.bf16.msra.mxu0 %v372
      %411 = vmatprep.subr.bf16.mxu0 0
      %412 = vmatpush1.bf16.msra.mxu0 %v371
      %413 = vmatprep.subr.bf16.mxu0 0
      %414 = vmatpush1.bf16.msra.mxu0 %v370
      %415 = vmatprep.subr.bf16.mxu0 0
      %416 = vmatpush1.bf16.msra.mxu0 %v369
      %417 = vmatprep.subr.bf16.mxu0 0
      %418 = vmatpush2.bf16.msra.mxu0 %v384
      %419 = vmatprep.subr.bf16.mxu0 0
      %420 = vmatpush2.bf16.msra.mxu0 %v383
      %421 = vmatprep.subr.bf16.mxu0 0
      %422 = vmatpush2.bf16.msra.mxu0 %v382
      %423 = vmatprep.subr.bf16.mxu0 0
      %424 = vmatpush2.bf16.msra.mxu0 %v381
      %425 = vmatprep.subr.bf16.mxu0 0
      %426 = vmatpush2.bf16.msra.mxu0 %v380
      %427 = vmatprep.subr.bf16.mxu0 0
      %428 = vmatpush2.bf16.msra.mxu0 %v379
      %429 = vmatprep.subr.bf16.mxu0 0
      %430 = vmatpush2.bf16.msra.mxu0 %v378
      %431 = vmatprep.subr.bf16.mxu0 0
      %432 = vmatpush2.bf16.msra.mxu0 %v377
      %433 = vmatprep.mubr.bf16.mxu0 %v294
      %434 = vmatmul.mubr.bf16.gmra.mxu0 %v293
      %v435 = vpop.f32.mrf.mxu0
      %v436 = vadd.f32 0.0, %v435
      %v437 = vpop.f32.mrf.mxu0
      %v438 = vpop.f32.mrf.mxu0
      %v439 = vadd.f32 0.0, %v438
      %v440 = vpop.f32.mrf.mxu0
      %441 = vmatprep.mubr.bf16.mxu0 %v296
      %442 = vmatmul.mubr.bf16.gmra.mxu0 %v295
      %v443 = vpop.f32.mrf.mxu0
      %v444 = vadd.f32 0.0, %v443
      %v445 = vpop.f32.mrf.mxu0
      %v446 = vpop.f32.mrf.mxu0
      %v447 = vadd.f32 0.0, %v446
      %v448 = vpop.f32.mrf.mxu0
      %449 = vmatprep.mubr.bf16.mxu0 %v298
      %450 = vmatmul.mubr.bf16.gmra.mxu0 %v297
      %v451 = vpop.f32.mrf.mxu0
      %v452 = vadd.f32 0.0, %v451
      %v453 = vpop.f32.mrf.mxu0
      %v454 = vpop.f32.mrf.mxu0
      %v455 = vpop.f32.mrf.mxu0
      %456 = vdwg.mxu0
      %v457 = vadd.f32 %v236, %v436
      %v458 = vadd.f32 %v237, %v439
      %v459 = vadd.f32 %v238, %v444
      %v460 = vadd.f32 %v239, %v447
      %v461 = vadd.f32 %v240, %v452
      %462 = vst [vmem:[#allocation2] sm:$0xff] %v457
      %463 = vst [vmem:[#allocation2 + $0x8] sm:$0xff] %v458
      %464 = vst [vmem:[#allocation2 + $0x10] sm:$0xff] %v459
      %465 = vst [vmem:[#allocation2 + $0x18] sm:$0xff] %v460
      %466 = vst [vmem:[#allocation2 + $0x20] sm:$0xff] %v461
      // Predicated region
      $region33: #{_lambda_.10} parent=27 // pred_check
        %p467 = pneg %p227
      $region34: #{_lambda_.10} parent=27 // pred_check_branch
        %469 = sbr.rel (%p467) target = $region36
      $region35: #{_lambda_.10} parent=27 // pred_region
        %v470 = vld [vmem:[#allocation2] sm:$0xff]
        %v471 = vld [vmem:[#allocation2 + $0x8] sm:$0xff]
        %v472 = vld [vmem:[#allocation2 + $0x10] sm:$0xff]
        %v473 = vld [vmem:[#allocation2 + $0x18] sm:$0xff]
        %v474 = vld [vmem:[#allocation2 + $0x20] sm:$0xff]
        %v475 = vpack.c.bf16 %v471, %v470
        %v476 = vpack.c.bf16 %v473, %v472
        %v477 = vpack.c.bf16 %v474, %v474
        %v481 = vunpack.c.l.b16 %v475
        %v482 = vunpack.c.h.b16 %v475
        %v483 = vunpack.c.l.b16 %v476
        %v484 = vunpack.c.h.b16 %v476
        %v485 = vunpack.c.l.b16 %v477
        %v486 = vpack.c.b16 %v481, %v481
        %v487 = vpack.c.b16 %v482, %v482
        %v488 = vpack.c.b16 %v483, %v483
        %v489 = vpack.c.b16 %v484, %v484
        %v490 = vpack.c.b16 %v485, %v485
        %496 = vst [vmem:[%s224] sm:$0xf] %v486
        %497 = vst [vmem:[%s224 + $0x4] sm:$0xf] %v487
        %498 = vst [vmem:[%s224 + $0x8] sm:$0xf] %v488
        %499 = vst [vmem:[%s224 + $0xc] sm:$0xf] %v489
        %500 = vst [vmem:[%s224 + $0x10] sm:$0xf] %v490
      $region36: #{_lambda_.10} parent=27 // pred_fallthru
        _
      %s501 = smul.u32 5, %s18
      %p502 = scmp.lt.s32.totalorder %s501, 9
      %s503 = scalar_select %p502, %s501, 9
      %p504 = scmp.lt.s32.totalorder %s19, 0
      %s505 = scalar_select %p504, %s19, 0
      %s506 = sadd.s32 %s505, %s503
      %s507 = smul.addr %s506, 4
      %s508 = scalar_lea.vmem %s2, %s507
      // Predicated region
      $region37: #{_lambda_.10} parent=27 // pred_check
        %p509 = pneg %p108
      $region38: #{_lambda_.10} parent=27 // pred_check_branch
        %511 = sbr.rel (%p509) target = $region40
      $region39: #{_lambda_.10} parent=27 // pred_region
        %s512 = smul.u32 5, %s18
      $region40: #{_lambda_.10} parent=27 // pred_fallthru
        _
    $region28: #{_lambda_.10} parent=5 // pred_fallthru
      _
    %p513 = scmp.le.s32.totalorder 2, %s8
    // Predicated region
    $region41: #{_lambda_.10} parent=5 // pred_check
      %p514 = pneg %p513
    $region42: #{_lambda_.10} parent=5 // pred_check_branch
      %516 = sbr.rel (%p514) target = $region44
    $region43: #{_lambda_.10} parent=5 // pred_region
      %s517 = ssub.s32 %s8, 2
      // Predicated region
      $region45: #{_lambda_.10} parent=43 // pred_check
        %p518 = pneg %p114
      $region46: #{_lambda_.10} parent=43 // pred_check_branch
        %520 = sbr.rel (%p518) target = $region48
      $region47: #{_lambda_.10} parent=43 // pred_region
        %s521 = smul.u32 5, %s21
        %p522 = scmp.lt.s32.totalorder %s521, 9
        %s523 = scalar_select %p522, %s521, 9
        %p524 = scmp.lt.s32.totalorder %s22, 0
        %s525 = scalar_select %p524, %s22, 0
        %s526 = sadd.s32 %s525, %s523
        %s527 = smul.addr %s526, 4
        %s528 = scalar_lea.vmem %s2, %s527
      $region48: #{_lambda_.10} parent=43 // pred_fallthru
        _
    $region44: #{_lambda_.10} parent=5 // pred_fallthru
      _
  $region6: #{_lambda_.10} parent=0 // loop_footer
    %s12 = sadd.s32 1, %s8
  $region7: #{_lambda_.10} parent=0 // loop_footer_branch
    %7 = sbr.rel target = $region3
  $region8: #{_lambda_.10} parent=0 // loop_exit
    _

// kernel: _lambda_.13
$region0: #{_lambda_.13}
  #allocation0 [shape = 'u32[]', space=smem, size = 0x4, offset = 0x4, fixed_abs, tag = 'smem constant byte address 0x4 - core index']
  #allocation1 [shape = 'u32[144,128]{1,0:T(1,128)}', space=vmem, size = 0x12000, scoped, tag = 'internal scratch']
  %s0 = inlined_call_operand.vmem [shape: bf16[2,36,128], index: 0, kind: input, shape index: {}]
  %s1 = inlined_call_operand.vmem [shape: f32[9,36], index: 1, kind: input, shape index: {}]
  %s2 = inlined_call_operand.vmem [shape: f32[1,128], index: 2, kind: input, shape index: {}]
  %s3 = inlined_call_operand.vmem [shape: f32[1,128], index: 3, kind: input, shape index: {}]
  %s4 = inlined_call_operand.vmem [shape: bf16[128,128], index: 4, kind: input, shape index: {}]
  %s5 = inlined_call_operand.vmem [shape: bf16[2,9,128], index: 5, kind: output, shape index: {}]
  %s6 = sld [smem:[#allocation0]]
  $region53: #{_lambda_.13} parent=0
    _
  %s8 = ssub.s32 1, %s6
  %s9 = scalar_select 0, %s8, %s6
  loop: start=0, step=1, limit=4
  $region2: #{_lambda_.13} parent=0 // loop_pre_header
    _
  $region3: #{_lambda_.13} parent=0 // loop_header
    %s11 = sphi 0, %s15
    %p12 = scmp.ge.s32.totalorder %s11, 4
    %s21 = sphi 0, %s23
    %s24 = sphi 0, %s21
    %s25 = sphi 0, %s24
    %s41 = sphi 0, %s25
    %s45 = sphi 0, %s45
    %s47 = sphi 0, %s45
    %s48 = sphi 0, %s47
    %s62 = sphi 0, %s48
    %s66 = sphi 0, %s66
    %s68 = sphi 0, %s66
    %s69 = sphi 0, %s68
    %s83 = sphi 0, %s69
    %s87 = sphi 0, %s87
    %s89 = sphi 0, %s87
    %s90 = sphi 0, %s89
    %s104 = sphi 0, %s90
    %s108 = sphi 0, %s108
    %s110 = sphi 0, %s108
    %s111 = sphi 0, %s110
    %s125 = sphi 0, %s111
    %s131 = sphi 0, %s133
    %s134 = sphi 0, %s131
    %s135 = sphi 0, %s134
    %s151 = sphi 0, %s135
  $region4: #{_lambda_.13} parent=0 // loop_header_branch
    %14 = sbr.rel (%p12) target = $region8
  $region5: #{_lambda_.13} parent=0 // loop_body
    %s16 = ssub.s32 %s11, 1
    %s17 = ssub.s32 %s11, 2
    %s18 = sadd.s32 %s11, 1
    %s19 = ssub.s32 %s11, %s18
    %p20 = scmp.eq.s32.totalorder %s19, 0
    %s22 = sadd.s32 %s21, 1
    %s23 = scalar_select %p20, %s21, %s22
    %p26 = pneg %p20
    %p27 = scmp.eq.s32.totalorder %s11, 1
    %p28 = por %p26, %p27
    %p29 = scmp.ne.s32.totalorder %s21, %s24
    %p30 = scmp.eq.s32.totalorder %s11, 0
    %p31 = por %p29, %p30
    %p32 = scmp.ne.s32.totalorder %s21, %s24
    %p33 = scmp.eq.s32.totalorder %s16, 1
    %p34 = por %p32, %p33
    %p35 = scmp.ne.s32.totalorder %s24, %s25
    %p36 = scmp.eq.s32.totalorder %s16, 0
    %p37 = por %p35, %p36
    %p38 = scmp.ne.s32.totalorder %s24, %s25
    %p39 = scmp.eq.s32.totalorder %s17, 1
    %p40 = por %p38, %p39
    %p42 = scmp.ne.s32.totalorder %s25, %s41
    %p43 = scmp.eq.s32.totalorder %s17, 0
    %p44 = por %p42, %p43
    %s46 = sadd.s32 %s45, 1
    %p49 = scmp.eq.s32.totalorder %s11, 1
    %p50 = scmp.ne.s32.totalorder %s45, %s47
    %p51 = scmp.eq.s32.totalorder %s11, 0
    %p52 = por %p50, %p51
    %p53 = scmp.ne.s32.totalorder %s45, %s47
    %p54 = scmp.eq.s32.totalorder %s16, 1
    %p55 = por %p53, %p54
    %p56 = scmp.ne.s32.totalorder %s47, %s48
    %p57 = scmp.eq.s32.totalorder %s16, 0
    %p58 = por %p56, %p57
    %p59 = scmp.ne.s32.totalorder %s47, %s48
    %p60 = scmp.eq.s32.totalorder %s17, 1
    %p61 = por %p59, %p60
    %p63 = scmp.ne.s32.totalorder %s48, %s62
    %p64 = scmp.eq.s32.totalorder %s17, 0
    %p65 = por %p63, %p64
    %s67 = sadd.s32 %s66, 1
    %p70 = scmp.eq.s32.totalorder %s11, 1
    %p71 = scmp.ne.s32.totalorder %s66, %s68
    %p72 = scmp.eq.s32.totalorder %s11, 0
    %p73 = por %p71, %p72
    %p74 = scmp.ne.s32.totalorder %s66, %s68
    %p75 = scmp.eq.s32.totalorder %s16, 1
    %p76 = por %p74, %p75
    %p77 = scmp.ne.s32.totalorder %s68, %s69
    %p78 = scmp.eq.s32.totalorder %s16, 0
    %p79 = por %p77, %p78
    %p80 = scmp.ne.s32.totalorder %s68, %s69
    %p81 = scmp.eq.s32.totalorder %s17, 1
    %p82 = por %p80, %p81
    %p84 = scmp.ne.s32.totalorder %s69, %s83
    %p85 = scmp.eq.s32.totalorder %s17, 0
    %p86 = por %p84, %p85
    %s88 = sadd.s32 %s87, 1
    %p91 = scmp.eq.s32.totalorder %s11, 1
    %p92 = scmp.ne.s32.totalorder %s87, %s89
    %p93 = scmp.eq.s32.totalorder %s11, 0
    %p94 = por %p92, %p93
    %p95 = scmp.ne.s32.totalorder %s87, %s89
    %p96 = scmp.eq.s32.totalorder %s16, 1
    %p97 = por %p95, %p96
    %p98 = scmp.ne.s32.totalorder %s89, %s90
    %p99 = scmp.eq.s32.totalorder %s16, 0
    %p100 = por %p98, %p99
    %p101 = scmp.ne.s32.totalorder %s89, %s90
    %p102 = scmp.eq.s32.totalorder %s17, 1
    %p103 = por %p101, %p102
    %p105 = scmp.ne.s32.totalorder %s90, %s104
    %p106 = scmp.eq.s32.totalorder %s17, 0
    %p107 = por %p105, %p106
    %s109 = sadd.s32 %s108, 1
    %p112 = scmp.eq.s32.totalorder %s11, 1
    %p113 = scmp.ne.s32.totalorder %s108, %s110
    %p114 = scmp.eq.s32.totalorder %s11, 0
    %p115 = por %p113, %p114
    %p116 = scmp.ne.s32.totalorder %s108, %s110
    %p117 = scmp.eq.s32.totalorder %s16, 1
    %p118 = por %p116, %p117
    %p119 = scmp.ne.s32.totalorder %s110, %s111
    %p120 = scmp.eq.s32.totalorder %s16, 0
    %p121 = por %p119, %p120
    %p122 = scmp.ne.s32.totalorder %s110, %s111
    %p123 = scmp.eq.s32.totalorder %s17, 1
    %p124 = por %p122, %p123
    %p126 = scmp.ne.s32.totalorder %s111, %s125
    %p127 = scmp.eq.s32.totalorder %s17, 0
    %p128 = por %p126, %p127
    %s129 = ssub.s32 %s11, %s18
    %p130 = scmp.eq.s32.totalorder %s129, 0
    %s132 = sadd.s32 %s131, 1
    %s133 = scalar_select %p130, %s131, %s132
    %p136 = pneg %p130
    %p137 = scmp.eq.s32.totalorder %s11, 1
    %p138 = por %p136, %p137
    %p139 = scmp.ne.s32.totalorder %s131, %s134
    %p140 = scmp.eq.s32.totalorder %s11, 0
    %p141 = por %p139, %p140
    %p142 = scmp.ne.s32.totalorder %s131, %s134
    %p143 = scmp.eq.s32.totalorder %s16, 1
    %p144 = por %p142, %p143
    %p145 = scmp.ne.s32.totalorder %s134, %s135
    %p146 = scmp.eq.s32.totalorder %s16, 0
    %p147 = por %p145, %p146
    %p148 = scmp.ne.s32.totalorder %s134, %s135
    %p149 = scmp.eq.s32.totalorder %s17, 1
    %p150 = por %p148, %p149
    %p152 = scmp.ne.s32.totalorder %s135, %s151
    %p153 = scmp.eq.s32.totalorder %s17, 0
    %p154 = por %p152, %p153
    %p155 = scmp.le.s32.totalorder 1, %s11
    %p156 = scmp.lt.s32.totalorder %s11, 3
    %p157 = pnand %p155, %p156
    %p158 = pneg %p157
    // Predicated region
    $region9: #{_lambda_.13} parent=5 // pred_check
      _
    $region10: #{_lambda_.13} parent=5 // pred_check_branch
      %160 = sbr.rel (%p157) target = $region12
    $region11: #{_lambda_.13} parent=5 // pred_region
      %s161 = ssub.s32 %s11, 1
      // Predicated region
      $region13: #{_lambda_.13} parent=11 // pred_check
        %p162 = pneg %p58
      $region14: #{_lambda_.13} parent=11 // pred_check_branch
        %164 = sbr.rel (%p162) target = $region16
      $region15: #{_lambda_.13} parent=11 // pred_region
        _
      $region16: #{_lambda_.13} parent=11 // pred_fallthru
        _
      // Predicated region
      $region17: #{_lambda_.13} parent=11 // pred_check
        %p165 = pneg %p79
      $region18: #{_lambda_.13} parent=11 // pred_check_branch
        %167 = sbr.rel (%p165) target = $region20
      $region19: #{_lambda_.13} parent=11 // pred_region
        _
      $region20: #{_lambda_.13} parent=11 // pred_fallthru
        _
      // Predicated region
      $region21: #{_lambda_.13} parent=11 // pred_check
        %p168 = pneg %p100
      $region22: #{_lambda_.13} parent=11 // pred_check_branch
        %170 = sbr.rel (%p168) target = $region24
      $region23: #{_lambda_.13} parent=11 // pred_region
        _
      $region24: #{_lambda_.13} parent=11 // pred_fallthru
        _
      // Predicated region
      $region25: #{_lambda_.13} parent=11 // pred_check
        %p171 = pneg %p121
      $region26: #{_lambda_.13} parent=11 // pred_check_branch
        %173 = sbr.rel (%p171) target = $region28
      $region27: #{_lambda_.13} parent=11 // pred_region
        _
      $region28: #{_lambda_.13} parent=11 // pred_fallthru
        _
    $region12: #{_lambda_.13} parent=5 // pred_fallthru
      _
    %p174 = scmp.lt.s32.totalorder %s11, 2
    // Predicated region
    $region29: #{_lambda_.13} parent=5 // pred_check
      %p175 = pneg %p174
    $region30: #{_lambda_.13} parent=5 // pred_check_branch
      %177 = sbr.rel (%p175) target = $region32
    $region31: #{_lambda_.13} parent=5 // pred_region
      // Predicated region
      $region33: #{_lambda_.13} parent=31 // pred_check
        %p178 = pneg %p31
      $region34: #{_lambda_.13} parent=31 // pred_check_branch
        %180 = sbr.rel (%p178) target = $region36
      $region35: #{_lambda_.13} parent=31 // pred_region
        %p181 = scmp.lt.s32.totalorder %s11, 1
        %s182 = scalar_select %p181, %s11, 1
        %s183 = smul.addr %s182, 5
        %s184 = smul.addr %s183, 4
        %s185 = scalar_lea.vmem %s0, %s184
      $region36: #{_lambda_.13} parent=31 // pred_fallthru
        _
    $region32: #{_lambda_.13} parent=5 // pred_fallthru
      _
    %p186 = scmp.le.s32.totalorder 1, %s11
    %p187 = scmp.lt.s32.totalorder %s11, 3
    %p188 = pnand %p186, %p187
    %p189 = pneg %p188
    // Predicated region
    $region37: #{_lambda_.13} parent=5 // pred_check
      _
    $region38: #{_lambda_.13} parent=5 // pred_check_branch
      %191 = sbr.rel (%p188) target = $region40
    $region39: #{_lambda_.13} parent=5 // pred_region
      %s192 = ssub.s32 %s11, 1
      %p193 = scmp.lt.s32.totalorder %s16, 1
      %s194 = scalar_select %p193, %s16, 1
      %s195 = smul.addr %s194, 5
      %s196 = smul.addr %s195, 4
      %s197 = scalar_lea.vmem %s0, %s196
      %p198 = pneg %p37
      %p199 = pneg %p34
      %p200 = pneg %p58
      %p201 = pneg %p55
      %p202 = pneg %p79
      %p203 = pneg %p76
      %p204 = pneg %p100
      %p205 = pneg %p97
      %p206 = pneg %p121
      %p207 = pneg %p118
      %p208 = pneg %p147
      %p209 = pneg %p144
      %p210 = scmp.lt.s32.totalorder %s16, 1
      %s211 = scalar_select %p210, %s16, 1
      %s212 = smul.addr %s211, 2
      %s213 = smul.addr %s212, 4
      %s214 = scalar_lea.vmem %s5, %s213
      %p215 = scmp.lt.s32.totalorder %s16, 1
      %s216 = scalar_select %p215, %s16, 1
      %s217 = smul.addr %s216, 5
      %s218 = smul.addr %s217, 4
      %s219 = scalar_lea.vmem %s0, %s218
      %p220 = scmp.lt.s32.totalorder %s16, 1
      %s221 = scalar_select %p220, %s16, 1
      %s222 = smul.addr %s221, 2
      %s223 = smul.addr %s222, 4
      %s224 = scalar_lea.vmem %s5, %s223
      %v226 = vld [vmem:[%s219] sm:$0xf]
      %v227 = vld [vmem:[%s219 + $0x4] sm:$0xf]
      %v228 = vld [vmem:[%s219 + $0x8] sm:$0xf]
      %v229 = vld [vmem:[%s219 + $0xc] sm:$0xf]
      %v230 = vld [vmem:[%s219 + $0x10] sm:$0x3]
      %v231 = vunpack.c.l.bf16 %v226
      %v232 = vunpack.c.l.bf16 %v227
      %v233 = vunpack.c.l.bf16 %v228
      %v234 = vunpack.c.l.bf16 %v229
      %v235 = vunpack.c.l.bf16 %v230
      %v236 = vld [vmem:[%s2] sm:$0x1]
      %v238 = vlaneseq
      %v239 = vshrl.u32 %v238, 7
      %v240 = vsub.s32 0, %v239
      %v241 = vrot.slane %v236, %v240
      %v243 = vmul.f32 %v231, %v241
      %v244 = vmul.f32 %v232, %v241
      %v245 = vmul.f32 %v233, %v241
      %v246 = vmul.f32 %v234, %v241
      %v247 = vmul.f32 %v235, %v241
      %v248 = vld [vmem:[%s3] sm:$0x1]
      %v250 = vlaneseq
      %v251 = vshrl.u32 %v250, 7
      %v252 = vsub.s32 0, %v251
      %v253 = vrot.slane %v248, %v252
      %v255 = vadd.f32 %v243, %v253
      %v256 = vadd.f32 %v244, %v253
      %v257 = vadd.f32 %v245, %v253
      %v258 = vadd.f32 %v246, %v253
      %v259 = vadd.f32 %v247, %v253
      %v260 = vmax.f32 %v255, 0.0
      %v261 = vmax.f32 %v256, 0.0
      %v262 = vmax.f32 %v257, 0.0
      %v263 = vmax.f32 %v258, 0.0
      %v264 = vmax.f32 %v259, 0.0
      %v265 = vld [vmem:[%s1] sm:$0xff]
      %v266 = vld [vmem:[%s1 + $0x8] sm:$0x1]
      %vm267 = vcmask 293888
      %v269 = vsel %vm267, %v265, 0
      %v272 = vsel %vm267, %v266, 0
      %vm274 = vcmask 1043456
      %v276 = vsel %vm274, %v264, 0
      %278 = vmatprep.subr.mxu0 0.0
      %279 = vmatpush1.msra.mxu0 0.0
      %280 = vmatprep.subr.mxu0 0.0
      %281 = vmatpush1.msra.mxu0 0.0
      %282 = vmatprep.subr.mxu0 0.0
      %283 = vmatpush1.msra.mxu0 0.0
      %284 = vmatprep.subr.mxu0 0.0
      %285 = vmatpush1.msra.mxu0 0.0
      %286 = vmatprep.subr.mxu0 0.0
      %287 = vmatpush1.msra.mxu0 0.0
      %288 = vmatprep.subr.mxu0 0.0
      %289 = vmatpush1.msra.mxu0 0.0
      %290 = vmatprep.subr.mxu0 0.0
      %291 = vmatpush1.msra.mxu0 0.0
      %292 = vmatprep.subr.mxu0 0.0
      %293 = vmatpush1.msra.mxu0 0.0
      %294 = vmatprep.subr.mxu0 0.0
      %295 = vmatpush1.msra.mxu0 0.0
      %296 = vmatprep.subr.mxu0 0.0
      %297 = vmatpush1.msra.mxu0 0.0
      %298 = vmatprep.subr.mxu0 0.0
      %299 = vmatpush1.msra.mxu0 0.0
      %300 = vmatprep.subr.mxu0 0.0
      %301 = vmatpush1.msra.mxu0 %v276
      %302 = vmatprep.subr.mxu0 0.0
      %303 = vmatpush1.msra.mxu0 %v263
      %304 = vmatprep.subr.mxu0 0.0
      %305 = vmatpush1.msra.mxu0 %v262
      %306 = vmatprep.subr.mxu0 0.0
      %307 = vmatpush1.msra.mxu0 %v261
      %308 = vmatprep.subr.mxu0 0.0
      %309 = vmatpush1.msra.mxu0 %v260
      %310 = vmatprep.subr.mxu0 0.0
      %311 = vmatpush2.msra.mxu0 0.0
      %312 = vmatprep.subr.mxu0 0.0
      %313 = vmatpush2.msra.mxu0 0.0
      %314 = vmatprep.subr.mxu0 0.0
      %315 = vmatpush2.msra.mxu0 0.0
      %316 = vmatprep.subr.mxu0 0.0
      %317 = vmatpush2.msra.mxu0 0.0
      %318 = vmatprep.subr.mxu0 0.0
      %319 = vmatpush2.msra.mxu0 0.0
      %320 = vmatprep.subr.mxu0 0.0
      %321 = vmatpush2.msra.mxu0 0.0
      %322 = vmatprep.subr.mxu0 0.0
      %323 = vmatpush2.msra.mxu0 0.0
      %324 = vmatprep.subr.mxu0 0.0
      %325 = vmatpush2.msra.mxu0 0.0
      %326 = vmatprep.subr.mxu0 0.0
      %327 = vmatpush2.msra.mxu0 0.0
      %328 = vmatprep.subr.mxu0 0.0
      %329 = vmatpush2.msra.mxu0 0.0
      %330 = vmatprep.subr.mxu0 0.0
      %331 = vmatpush2.msra.mxu0 0.0
      %332 = vmatprep.subr.mxu0 0.0
      %333 = vmatpush2.msra.mxu0 0.0
      %334 = vmatprep.subr.mxu0 0.0
      %335 = vmatpush2.msra.mxu0 0.0
      %336 = vmatprep.subr.mxu0 0.0
      %337 = vmatpush2.msra.mxu0 0.0
      %338 = vmatprep.subr.mxu0 0.0
      %339 = vmatpush2.msra.mxu0 0.0
      %340 = vmatprep.subr.mxu0 0.0
      %341 = vmatpush2.msra.mxu0 0.0
      %342 = vmatprep.mubr.f32.mxu0 0.0
      %343 = vmatmul.mubr.f32.gmra.mxu0 %v269
      %v344 = vpop.f32.mrf.mxu0
      %v345 = vadd.f32 0.0, %v344
      %v346 = vpop.f32.mrf.mxu0
      %347 = vmatprep.mubr.f32.mxu0 0.0
      %348 = vmatmul.mubr.f32.gmra.mxu0 %v272
      %v349 = vpop.f32.mrf.mxu0
      %v350 = vadd.f32 0.0, %v349
      %v351 = vpop.f32.mrf.mxu0
      %352 = vdwg.mxu0
      %v353 = vpack.c.bf16 %v350, %v345
      %v354 = vld [vmem:[%s4] sm:$0xf]
      %v355 = vld [vmem:[%s4 + $0x4] sm:$0xf]
      %v356 = vld [vmem:[%s4 + $0x8] sm:$0xf]
      %v357 = vld [vmem:[%s4 + $0xc] sm:$0xf]
      %v358 = vld [vmem:[%s4 + $0x10] sm:$0xf]
      %v359 = vld [vmem:[%s4 + $0x14] sm:$0xf]
      %v360 = vld [vmem:[%s4 + $0x18] sm:$0xf]
      %v361 = vld [vmem:[%s4 + $0x1c] sm:$0xf]
      %v362 = vld [vmem:[%s4 + $0x20] sm:$0xf]
      %v363 = vld [vmem:[%s4 + $0x24] sm:$0xf]
      %v364 = vld [vmem:[%s4 + $0x28] sm:$0xf]
      %v365 = vld [vmem:[%s4 + $0x2c] sm:$0xf]
      %v366 = vld [vmem:[%s4 + $0x30] sm:$0xf]
      %v367 = vld [vmem:[%s4 + $0x34] sm:$0xf]
      %v368 = vld [vmem:[%s4 + $0x38] sm:$0xf]
      %v369 = vld [vmem:[%s4 + $0x3c] sm:$0xf]
      %v386 = vunpack.c.l.b16 %v354
      %v387 = vunpack.c.l.b16 %v355
      %v388 = vunpack.c.l.b16 %v356
      %v389 = vunpack.c.l.b16 %v357
      %v390 = vunpack.c.l.b16 %v358
      %v391 = vunpack.c.l.b16 %v359
      %v392 = vunpack.c.l.b16 %v360
      %v393 = vunpack.c.l.b16 %v361
      %v394 = vunpack.c.l.b16 %v362
      %v395 = vunpack.c.l.b16 %v363
      %v396 = vunpack.c.l.b16 %v364
      %v397 = vunpack.c.l.b16 %v365
      %v398 = vunpack.c.l.b16 %v366
      %v399 = vunpack.c.l.b16 %v367
      %v400 = vunpack.c.l.b16 %v368
      %v401 = vunpack.c.l.b16 %v369
      %v402 = vpack.c.b16 %v387, %v386
      %v403 = vpack.c.b16 %v389, %v388
      %v404 = vpack.c.b16 %v391, %v390
      %v405 = vpack.c.b16 %v393, %v392
      %v406 = vpack.c.b16 %v395, %v394
      %v407 = vpack.c.b16 %v397, %v396
      %v408 = vpack.c.b16 %v399, %v398
      %v409 = vpack.c.b16 %v401, %v400
      %418 = vmatprep.subr.bf16.mxu0 0
      %419 = vmatpush1.bf16.msra.mxu0 %v409
      %420 = vmatprep.subr.bf16.mxu0 0
      %421 = vmatpush1.bf16.msra.mxu0 %v408
      %422 = vmatprep.subr.bf16.mxu0 0
      %423 = vmatpush1.bf16.msra.mxu0 %v407
      %424 = vmatprep.subr.bf16.mxu0 0
      %425 = vmatpush1.bf16.msra.mxu0 %v406
      %426 = vmatprep.subr.bf16.mxu0 0
      %427 = vmatpush1.bf16.msra.mxu0 %v405
      %428 = vmatprep.subr.bf16.mxu0 0
      %429 = vmatpush1.bf16.msra.mxu0 %v404
      %430 = vmatprep.subr.bf16.mxu0 0
      %431 = vmatpush1.bf16.msra.mxu0 %v403
      %432 = vmatprep.subr.bf16.mxu0 0
      %433 = vmatpush1.bf16.msra.mxu0 %v402
      %434 = vmatprep.subr.bf16.mxu0 0
      %435 = vmatpush2.bf16.msra.mxu0 0
      %436 = vmatprep.subr.bf16.mxu0 0
      %437 = vmatpush2.bf16.msra.mxu0 0
      %438 = vmatprep.subr.bf16.mxu0 0
      %439 = vmatpush2.bf16.msra.mxu0 0
      %440 = vmatprep.subr.bf16.mxu0 0
      %441 = vmatpush2.bf16.msra.mxu0 0
      %442 = vmatprep.subr.bf16.mxu0 0
      %443 = vmatpush2.bf16.msra.mxu0 0
      %444 = vmatprep.subr.bf16.mxu0 0
      %445 = vmatpush2.bf16.msra.mxu0 0
      %446 = vmatprep.subr.bf16.mxu0 0
      %447 = vmatpush2.bf16.msra.mxu0 0
      %448 = vmatprep.subr.bf16.mxu0 0
      %449 = vmatpush2.bf16.msra.mxu0 0
      %450 = vmatprep.mubr.bf16.mxu0 0
      %451 = vmatmul.mubr.bf16.gmra.mxu0 %v353
      %v452 = vpop.f32.mrf.mxu0
      %v453 = vadd.f32 0.0, %v452
      %v454 = vpop.f32.mrf.mxu0
      %v455 = vpop.f32.mrf.mxu0
      %v456 = vadd.f32 0.0, %v455
      %v457 = vpop.f32.mrf.mxu0
      %458 = vdwg.mxu0
      %v459 = vpack.c.bf16 %v456, %v453
      %v461 = vunpack.c.l.b16 %v459
      %v462 = vunpack.c.h.b16 %v459
      %v463 = vpack.c.b16 %v461, %v461
      %v464 = vpack.c.b16 %v462, %v462
      %467 = vst [vmem:[%s224] sm:$0xf] %v463
      %vm468 = vcmask 1040384
      %vm469 = vsmask.f32 256
      %vm470 = vmand %vm468, %vm469
      %v471 = vld [vmem:[%s224 + $0x4] sm:$0x1]
      %v472 = vsel %vm470, %v464, %v471
      %473 = vst [vmem:[%s224 + $0x4] sm:$0x1] %v472
      %p474 = scmp.lt.s32.totalorder %s16, 1
      %s475 = scalar_select %p474, %s16, 1
      %s476 = smul.addr %s475, 2
      %s477 = smul.addr %s476, 4
      %s478 = scalar_lea.vmem %s5, %s477
      // Predicated region
      $region41: #{_lambda_.13} parent=39 // pred_check
        %p479 = pneg %p144
      $region42: #{_lambda_.13} parent=39 // pred_check_branch
        %481 = sbr.rel (%p479) target = $region44
      $region43: #{_lambda_.13} parent=39 // pred_region
        _
      $region44: #{_lambda_.13} parent=39 // pred_fallthru
        _
    $region40: #{_lambda_.13} parent=5 // pred_fallthru
      _
    %p482 = scmp.le.s32.totalorder 2, %s11
    // Predicated region
    $region45: #{_lambda_.13} parent=5 // pred_check
      %p483 = pneg %p482
    $region46: #{_lambda_.13} parent=5 // pred_check_branch
      %485 = sbr.rel (%p483) target = $region48
    $region47: #{_lambda_.13} parent=5 // pred_region
      %s486 = ssub.s32 %s11, 2
      // Predicated region
      $region49: #{_lambda_.13} parent=47 // pred_check
        %p487 = pneg %p150
      $region50: #{_lambda_.13} parent=47 // pred_check_branch
        %489 = sbr.rel (%p487) target = $region52
      $region51: #{_lambda_.13} parent=47 // pred_region
        %p490 = scmp.lt.s32.totalorder %s17, 1
        %s491 = scalar_select %p490, %s17, 1
        %s492 = smul.addr %s491, 2
        %s493 = smul.addr %s492, 4
        %s494 = scalar_lea.vmem %s5, %s493
      $region52: #{_lambda_.13} parent=47 // pred_fallthru
        _
    $region48: #{_lambda_.13} parent=5 // pred_fallthru
      _
  $region6: #{_lambda_.13} parent=0 // loop_footer
    %s15 = sadd.s32 1, %s11
  $region7: #{_lambda_.13} parent=0 // loop_footer_branch
    %10 = sbr.rel target = $region3
  $region8: #{_lambda_.13} parent=0 // loop_exit
    _

// kernel: _lambda_.14
$region0: #{_lambda_.14}
  #allocation0 [shape = 'u32[]', space=smem, size = 0x4, offset = 0x4, fixed_abs, tag = 'smem constant byte address 0x4 - core index']
  #allocation1 [shape = 'u32[144,128]{1,0:T(1,128)}', space=vmem, size = 0x12000, scoped, tag = 'internal scratch']
  #allocation2 [shape = 'bf16[24,128]{1,0:T(8,128)(2,1)}', space=vmem, size = 0x1800, scoped, tag = 'scratch operand']
  %s0 = inlined_call_operand.vmem [shape: bf16[2,9,128], index: 0, kind: input, shape index: {}, may-alias: {0,7}]
  %s1 = inlined_call_operand.vmem [shape: f32[1,128], index: 1, kind: input, shape index: {}]
  %s2 = inlined_call_operand.vmem [shape: f32[1,128], index: 2, kind: input, shape index: {}, may-alias: {2,5}]
  %s3 = inlined_call_operand.vmem [shape: bf16[128,128], index: 3, kind: input, shape index: {}]
  %s4 = inlined_call_operand.vmem [shape: f32[1,128], index: 4, kind: input, shape index: {}]
  %s5 = inlined_call_operand.vmem [shape: f32[1,128], index: 5, kind: input, shape index: {}, may-alias: {2,5}]
  %s6 = inlined_call_operand.vmem [shape: bf16[9,128,128], index: 6, kind: input, shape index: {}]
  %s7 = inlined_call_operand.vmem [shape: bf16[2,9,128], index: 7, kind: output, shape index: {}, may-alias: {0,7}]
  %s8 = sld [smem:[#allocation0]]
  $region61: #{_lambda_.14} parent=0
    _
  %s10 = ssub.s32 1, %s8
  %s11 = scalar_select 0, %s10, %s8
  loop: start=0, step=1, limit=4
  $region2: #{_lambda_.14} parent=0 // loop_pre_header
    _
  $region3: #{_lambda_.14} parent=0 // loop_header
    %s13 = sphi 0, %s17
    %p14 = scmp.ge.s32.totalorder %s13, 4
    %s23 = sphi 0, %s25
    %s26 = sphi 0, %s23
    %s27 = sphi 0, %s26
    %s43 = sphi 0, %s27
    %s47 = sphi 0, %s47
    %s49 = sphi 0, %s47
    %s50 = sphi 0, %s49
    %s64 = sphi 0, %s50
    %s68 = sphi 0, %s68
    %s70 = sphi 0, %s68
    %s71 = sphi 0, %s70
    %s85 = sphi 0, %s71
    %s89 = sphi 0, %s89
    %s91 = sphi 0, %s89
    %s92 = sphi 0, %s91
    %s106 = sphi 0, %s92
    %s110 = sphi 0, %s110
    %s112 = sphi 0, %s110
    %s113 = sphi 0, %s112
    %s127 = sphi 0, %s113
    %s131 = sphi 0, %s131
    %s133 = sphi 0, %s131
    %s134 = sphi 0, %s133
    %s148 = sphi 0, %s134
    %s152 = sphi 0, %s152
    %s154 = sphi 0, %s152
    %s155 = sphi 0, %s154
    %s169 = sphi 0, %s155
    %s175 = sphi 0, %s177
    %s178 = sphi 0, %s175
    %s179 = sphi 0, %s178
    %s195 = sphi 0, %s179
  $region4: #{_lambda_.14} parent=0 // loop_header_branch
    %16 = sbr.rel (%p14) target = $region8
  $region5: #{_lambda_.14} parent=0 // loop_body
    %s18 = ssub.s32 %s13, 1
    %s19 = ssub.s32 %s13, 2
    %s20 = sadd.s32 %s13, 1
    %s21 = ssub.s32 %s13, %s20
    %p22 = scmp.eq.s32.totalorder %s21, 0
    %s24 = sadd.s32 %s23, 1
    %s25 = scalar_select %p22, %s23, %s24
    %p28 = pneg %p22
    %p29 = scmp.eq.s32.totalorder %s13, 1
    %p30 = por %p28, %p29
    %p31 = scmp.ne.s32.totalorder %s23, %s26
    %p32 = scmp.eq.s32.totalorder %s13, 0
    %p33 = por %p31, %p32
    %p34 = scmp.ne.s32.totalorder %s23, %s26
    %p35 = scmp.eq.s32.totalorder %s18, 1
    %p36 = por %p34, %p35
    %p37 = scmp.ne.s32.totalorder %s26, %s27
    %p38 = scmp.eq.s32.totalorder %s18, 0
    %p39 = por %p37, %p38
    %p40 = scmp.ne.s32.totalorder %s26, %s27
    %p41 = scmp.eq.s32.totalorder %s19, 1
    %p42 = por %p40, %p41
    %p44 = scmp.ne.s32.totalorder %s27, %s43
    %p45 = scmp.eq.s32.totalorder %s19, 0
    %p46 = por %p44, %p45
    %s48 = sadd.s32 %s47, 1
    %p51 = scmp.eq.s32.totalorder %s13, 1
    %p52 = scmp.ne.s32.totalorder %s47, %s49
    %p53 = scmp.eq.s32.totalorder %s13, 0
    %p54 = por %p52, %p53
    %p55 = scmp.ne.s32.totalorder %s47, %s49
    %p56 = scmp.eq.s32.totalorder %s18, 1
    %p57 = por %p55, %p56
    %p58 = scmp.ne.s32.totalorder %s49, %s50
    %p59 = scmp.eq.s32.totalorder %s18, 0
    %p60 = por %p58, %p59
    %p61 = scmp.ne.s32.totalorder %s49, %s50
    %p62 = scmp.eq.s32.totalorder %s19, 1
    %p63 = por %p61, %p62
    %p65 = scmp.ne.s32.totalorder %s50, %s64
    %p66 = scmp.eq.s32.totalorder %s19, 0
    %p67 = por %p65, %p66
    %s69 = sadd.s32 %s68, 1
    %p72 = scmp.eq.s32.totalorder %s13, 1
    %p73 = scmp.ne.s32.totalorder %s68, %s70
    %p74 = scmp.eq.s32.totalorder %s13, 0
    %p75 = por %p73, %p74
    %p76 = scmp.ne.s32.totalorder %s68, %s70
    %p77 = scmp.eq.s32.totalorder %s18, 1
    %p78 = por %p76, %p77
    %p79 = scmp.ne.s32.totalorder %s70, %s71
    %p80 = scmp.eq.s32.totalorder %s18, 0
    %p81 = por %p79, %p80
    %p82 = scmp.ne.s32.totalorder %s70, %s71
    %p83 = scmp.eq.s32.totalorder %s19, 1
    %p84 = por %p82, %p83
    %p86 = scmp.ne.s32.totalorder %s71, %s85
    %p87 = scmp.eq.s32.totalorder %s19, 0
    %p88 = por %p86, %p87
    %s90 = sadd.s32 %s89, 1
    %p93 = scmp.eq.s32.totalorder %s13, 1
    %p94 = scmp.ne.s32.totalorder %s89, %s91
    %p95 = scmp.eq.s32.totalorder %s13, 0
    %p96 = por %p94, %p95
    %p97 = scmp.ne.s32.totalorder %s89, %s91
    %p98 = scmp.eq.s32.totalorder %s18, 1
    %p99 = por %p97, %p98
    %p100 = scmp.ne.s32.totalorder %s91, %s92
    %p101 = scmp.eq.s32.totalorder %s18, 0
    %p102 = por %p100, %p101
    %p103 = scmp.ne.s32.totalorder %s91, %s92
    %p104 = scmp.eq.s32.totalorder %s19, 1
    %p105 = por %p103, %p104
    %p107 = scmp.ne.s32.totalorder %s92, %s106
    %p108 = scmp.eq.s32.totalorder %s19, 0
    %p109 = por %p107, %p108
    %s111 = sadd.s32 %s110, 1
    %p114 = scmp.eq.s32.totalorder %s13, 1
    %p115 = scmp.ne.s32.totalorder %s110, %s112
    %p116 = scmp.eq.s32.totalorder %s13, 0
    %p117 = por %p115, %p116
    %p118 = scmp.ne.s32.totalorder %s110, %s112
    %p119 = scmp.eq.s32.totalorder %s18, 1
    %p120 = por %p118, %p119
    %p121 = scmp.ne.s32.totalorder %s112, %s113
    %p122 = scmp.eq.s32.totalorder %s18, 0
    %p123 = por %p121, %p122
    %p124 = scmp.ne.s32.totalorder %s112, %s113
    %p125 = scmp.eq.s32.totalorder %s19, 1
    %p126 = por %p124, %p125
    %p128 = scmp.ne.s32.totalorder %s113, %s127
    %p129 = scmp.eq.s32.totalorder %s19, 0
    %p130 = por %p128, %p129
    %s132 = sadd.s32 %s131, 1
    %p135 = scmp.eq.s32.totalorder %s13, 1
    %p136 = scmp.ne.s32.totalorder %s131, %s133
    %p137 = scmp.eq.s32.totalorder %s13, 0
    %p138 = por %p136, %p137
    %p139 = scmp.ne.s32.totalorder %s131, %s133
    %p140 = scmp.eq.s32.totalorder %s18, 1
    %p141 = por %p139, %p140
    %p142 = scmp.ne.s32.totalorder %s133, %s134
    %p143 = scmp.eq.s32.totalorder %s18, 0
    %p144 = por %p142, %p143
    %p145 = scmp.ne.s32.totalorder %s133, %s134
    %p146 = scmp.eq.s32.totalorder %s19, 1
    %p147 = por %p145, %p146
    %p149 = scmp.ne.s32.totalorder %s134, %s148
    %p150 = scmp.eq.s32.totalorder %s19, 0
    %p151 = por %p149, %p150
    %s153 = sadd.s32 %s152, 1
    %p156 = scmp.eq.s32.totalorder %s13, 1
    %p157 = scmp.ne.s32.totalorder %s152, %s154
    %p158 = scmp.eq.s32.totalorder %s13, 0
    %p159 = por %p157, %p158
    %p160 = scmp.ne.s32.totalorder %s152, %s154
    %p161 = scmp.eq.s32.totalorder %s18, 1
    %p162 = por %p160, %p161
    %p163 = scmp.ne.s32.totalorder %s154, %s155
    %p164 = scmp.eq.s32.totalorder %s18, 0
    %p165 = por %p163, %p164
    %p166 = scmp.ne.s32.totalorder %s154, %s155
    %p167 = scmp.eq.s32.totalorder %s19, 1
    %p168 = por %p166, %p167
    %p170 = scmp.ne.s32.totalorder %s155, %s169
    %p171 = scmp.eq.s32.totalorder %s19, 0
    %p172 = por %p170, %p171
    %s173 = ssub.s32 %s13, %s20
    %p174 = scmp.eq.s32.totalorder %s173, 0
    %s176 = sadd.s32 %s175, 1
    %s177 = scalar_select %p174, %s175, %s176
    %p180 = pneg %p174
    %p181 = scmp.eq.s32.totalorder %s13, 1
    %p182 = por %p180, %p181
    %p183 = scmp.ne.s32.totalorder %s175, %s178
    %p184 = scmp.eq.s32.totalorder %s13, 0
    %p185 = por %p183, %p184
    %p186 = scmp.ne.s32.totalorder %s175, %s178
    %p187 = scmp.eq.s32.totalorder %s18, 1
    %p188 = por %p186, %p187
    %p189 = scmp.ne.s32.totalorder %s178, %s179
    %p190 = scmp.eq.s32.totalorder %s18, 0
    %p191 = por %p189, %p190
    %p192 = scmp.ne.s32.totalorder %s178, %s179
    %p193 = scmp.eq.s32.totalorder %s19, 1
    %p194 = por %p192, %p193
    %p196 = scmp.ne.s32.totalorder %s179, %s195
    %p197 = scmp.eq.s32.totalorder %s19, 0
    %p198 = por %p196, %p197
    %p199 = scmp.le.s32.totalorder 1, %s13
    %p200 = scmp.lt.s32.totalorder %s13, 3
    %p201 = pnand %p199, %p200
    %p202 = pneg %p201
    // Predicated region
    $region9: #{_lambda_.14} parent=5 // pred_check
      _
    $region10: #{_lambda_.14} parent=5 // pred_check_branch
      %204 = sbr.rel (%p201) target = $region12
    $region11: #{_lambda_.14} parent=5 // pred_region
      %s205 = ssub.s32 %s13, 1
      // Predicated region
      $region13: #{_lambda_.14} parent=11 // pred_check
        %p206 = pneg %p60
      $region14: #{_lambda_.14} parent=11 // pred_check_branch
        %208 = sbr.rel (%p206) target = $region16
      $region15: #{_lambda_.14} parent=11 // pred_region
        _
      $region16: #{_lambda_.14} parent=11 // pred_fallthru
        _
      // Predicated region
      $region17: #{_lambda_.14} parent=11 // pred_check
        %p209 = pneg %p81
      $region18: #{_lambda_.14} parent=11 // pred_check_branch
        %211 = sbr.rel (%p209) target = $region20
      $region19: #{_lambda_.14} parent=11 // pred_region
        _
      $region20: #{_lambda_.14} parent=11 // pred_fallthru
        _
      // Predicated region
      $region21: #{_lambda_.14} parent=11 // pred_check
        %p212 = pneg %p102
      $region22: #{_lambda_.14} parent=11 // pred_check_branch
        %214 = sbr.rel (%p212) target = $region24
      $region23: #{_lambda_.14} parent=11 // pred_region
        _
      $region24: #{_lambda_.14} parent=11 // pred_fallthru
        _
      // Predicated region
      $region25: #{_lambda_.14} parent=11 // pred_check
        %p215 = pneg %p123
      $region26: #{_lambda_.14} parent=11 // pred_check_branch
        %217 = sbr.rel (%p215) target = $region28
      $region27: #{_lambda_.14} parent=11 // pred_region
        _
      $region28: #{_lambda_.14} parent=11 // pred_fallthru
        _
      // Predicated region
      $region29: #{_lambda_.14} parent=11 // pred_check
        %p218 = pneg %p144
      $region30: #{_lambda_.14} parent=11 // pred_check_branch
        %220 = sbr.rel (%p218) target = $region32
      $region31: #{_lambda_.14} parent=11 // pred_region
        _
      $region32: #{_lambda_.14} parent=11 // pred_fallthru
        _
      // Predicated region
      $region33: #{_lambda_.14} parent=11 // pred_check
        %p221 = pneg %p165
      $region34: #{_lambda_.14} parent=11 // pred_check_branch
        %223 = sbr.rel (%p221) target = $region36
      $region35: #{_lambda_.14} parent=11 // pred_region
        _
      $region36: #{_lambda_.14} parent=11 // pred_fallthru
        _
    $region12: #{_lambda_.14} parent=5 // pred_fallthru
      _
    %p224 = scmp.lt.s32.totalorder %s13, 2
    // Predicated region
    $region37: #{_lambda_.14} parent=5 // pred_check
      %p225 = pneg %p224
    $region38: #{_lambda_.14} parent=5 // pred_check_branch
      %227 = sbr.rel (%p225) target = $region40
    $region39: #{_lambda_.14} parent=5 // pred_region
      // Predicated region
      $region41: #{_lambda_.14} parent=39 // pred_check
        %p228 = pneg %p33
      $region42: #{_lambda_.14} parent=39 // pred_check_branch
        %230 = sbr.rel (%p228) target = $region44
      $region43: #{_lambda_.14} parent=39 // pred_region
        %p231 = scmp.lt.s32.totalorder %s13, 1
        %s232 = scalar_select %p231, %s13, 1
        %s233 = smul.addr %s232, 2
        %s234 = smul.addr %s233, 4
        %s235 = scalar_lea.vmem %s0, %s234
      $region44: #{_lambda_.14} parent=39 // pred_fallthru
        _
    $region40: #{_lambda_.14} parent=5 // pred_fallthru
      _
    %p236 = scmp.le.s32.totalorder 1, %s13
    %p237 = scmp.lt.s32.totalorder %s13, 3
    %p238 = pnand %p236, %p237
    %p239 = pneg %p238
    // Predicated region
    $region45: #{_lambda_.14} parent=5 // pred_check
      _
    $region46: #{_lambda_.14} parent=5 // pred_check_branch
      %241 = sbr.rel (%p238) target = $region48
    $region47: #{_lambda_.14} parent=5 // pred_region
      %s242 = ssub.s32 %s13, 1
      %p243 = scmp.lt.s32.totalorder %s18, 1
      %s244 = scalar_select %p243, %s18, 1
      %s245 = smul.addr %s244, 2
      %s246 = smul.addr %s245, 4
      %s247 = scalar_lea.vmem %s0, %s246
      %p248 = pneg %p39
      %p249 = pneg %p36
      %p250 = pneg %p60
      %p251 = pneg %p57
      %p252 = pneg %p81
      %p253 = pneg %p78
      %p254 = pneg %p102
      %p255 = pneg %p99
      %p256 = pneg %p123
      %p257 = pneg %p120
      %p258 = pneg %p144
      %p259 = pneg %p141
      %p260 = pneg %p165
      %p261 = pneg %p162
      %p262 = pneg %p191
      %p263 = pneg %p188
      %p264 = scmp.lt.s32.totalorder %s18, 1
      %s265 = scalar_select %p264, %s18, 1
      %s266 = smul.addr %s265, 2
      %s267 = smul.addr %s266, 4
      %s268 = scalar_lea.vmem %s7, %s267
      %p269 = scmp.lt.s32.totalorder %s18, 1
      %s270 = scalar_select %p269, %s18, 1
      %s271 = smul.addr %s270, 2
      %s272 = smul.addr %s271, 4
      %s273 = scalar_lea.vmem %s0, %s272
      %p274 = scmp.lt.s32.totalorder %s18, 1
      %s275 = scalar_select %p274, %s18, 1
      %s276 = smul.addr %s275, 2
      %s277 = smul.addr %s276, 4
      %s278 = scalar_lea.vmem %s7, %s277
      %v282 = vld [vmem:[%s273] sm:$0xf]
      %v283 = vld [vmem:[%s273 + $0x4] sm:$0x1]
      %v284 = vunpack.c.l.bf16 %v282
      %v285 = vunpack.c.l.bf16 %v283
      %v286 = vld [vmem:[%s1] sm:$0x1]
      %v288 = vlaneseq
      %v289 = vshrl.u32 %v288, 7
      %v290 = vsub.s32 0, %v289
      %v291 = vrot.slane %v286, %v290
      %v293 = vmul.f32 %v284, %v291
      %v294 = vmul.f32 %v285, %v291
      %v295 = vld [vmem:[%s2] sm:$0x1]
      %v297 = vlaneseq
      %v298 = vshrl.u32 %v297, 7
      %v299 = vsub.s32 0, %v298
      %v300 = vrot.slane %v295, %v299
      %v302 = vadd.f32 %v293, %v300
      %v303 = vadd.f32 %v294, %v300
      %v304 = vmax.f32 %v302, 0.0
      %v305 = vmax.f32 %v303, 0.0
      %v306 = vpack.c.bf16 %v305, %v304
      %v307 = vld [vmem:[%s3] sm:$0xf]
      %v308 = vld [vmem:[%s3 + $0x4] sm:$0xf]
      %v309 = vld [vmem:[%s3 + $0x8] sm:$0xf]
      %v310 = vld [vmem:[%s3 + $0xc] sm:$0xf]
      %v311 = vld [vmem:[%s3 + $0x10] sm:$0xf]
      %v312 = vld [vmem:[%s3 + $0x14] sm:$0xf]
      %v313 = vld [vmem:[%s3 + $0x18] sm:$0xf]
      %v314 = vld [vmem:[%s3 + $0x1c] sm:$0xf]
      %v315 = vld [vmem:[%s3 + $0x20] sm:$0xf]
      %v316 = vld [vmem:[%s3 + $0x24] sm:$0xf]
      %v317 = vld [vmem:[%s3 + $0x28] sm:$0xf]
      %v318 = vld [vmem:[%s3 + $0x2c] sm:$0xf]
      %v319 = vld [vmem:[%s3 + $0x30] sm:$0xf]
      %v320 = vld [vmem:[%s3 + $0x34] sm:$0xf]
      %v321 = vld [vmem:[%s3 + $0x38] sm:$0xf]
      %v322 = vld [vmem:[%s3 + $0x3c] sm:$0xf]
      %v339 = vunpack.c.l.b16 %v307
      %v340 = vunpack.c.l.b16 %v308
      %v341 = vunpack.c.l.b16 %v309
      %v342 = vunpack.c.l.b16 %v310
      %v343 = vunpack.c.l.b16 %v311
      %v344 = vunpack.c.l.b16 %v312
      %v345 = vunpack.c.l.b16 %v313
      %v346 = vunpack.c.l.b16 %v314
      %v347 = vunpack.c.l.b16 %v315
      %v348 = vunpack.c.l.b16 %v316
      %v349 = vunpack.c.l.b16 %v317
      %v350 = vunpack.c.l.b16 %v318
      %v351 = vunpack.c.l.b16 %v319
      %v352 = vunpack.c.l.b16 %v320
      %v353 = vunpack.c.l.b16 %v321
      %v354 = vunpack.c.l.b16 %v322
      %v355 = vpack.c.b16 %v340, %v339
      %v356 = vpack.c.b16 %v342, %v341
      %v357 = vpack.c.b16 %v344, %v343
      %v358 = vpack.c.b16 %v346, %v345
      %v359 = vpack.c.b16 %v348, %v347
      %v360 = vpack.c.b16 %v350, %v349
      %v361 = vpack.c.b16 %v352, %v351
      %v362 = vpack.c.b16 %v354, %v353
      %371 = vmatprep.subr.bf16.mxu0 0
      %372 = vmatpush1.bf16.msra.mxu0 %v362
      %373 = vmatprep.subr.bf16.mxu0 0
      %374 = vmatpush1.bf16.msra.mxu0 %v361
      %375 = vmatprep.subr.bf16.mxu0 0
      %376 = vmatpush1.bf16.msra.mxu0 %v360
      %377 = vmatprep.subr.bf16.mxu0 0
      %378 = vmatpush1.bf16.msra.mxu0 %v359
      %379 = vmatprep.subr.bf16.mxu0 0
      %380 = vmatpush1.bf16.msra.mxu0 %v358
      %381 = vmatprep.subr.bf16.mxu0 0
      %382 = vmatpush1.bf16.msra.mxu0 %v357
      %383 = vmatprep.subr.bf16.mxu0 0
      %384 = vmatpush1.bf16.msra.mxu0 %v356
      %385 = vmatprep.subr.bf16.mxu0 0
      %386 = vmatpush1.bf16.msra.mxu0 %v355
      %387 = vmatprep.subr.bf16.mxu0 0
      %388 = vmatpush2.bf16.msra.mxu0 0
      %389 = vmatprep.subr.bf16.mxu0 0
      %390 = vmatpush2.bf16.msra.mxu0 0
      %391 = vmatprep.subr.bf16.mxu0 0
      %392 = vmatpush2.bf16.msra.mxu0 0
      %393 = vmatprep.subr.bf16.mxu0 0
      %394 = vmatpush2.bf16.msra.mxu0 0
      %395 = vmatprep.subr.bf16.mxu0 0
      %396 = vmatpush2.bf16.msra.mxu0 0
      %397 = vmatprep.subr.bf16.mxu0 0
      %398 = vmatpush2.bf16.msra.mxu0 0
      %399 = vmatprep.subr.bf16.mxu0 0
      %400 = vmatpush2.bf16.msra.mxu0 0
      %401 = vmatprep.subr.bf16.mxu0 0
      %402 = vmatpush2.bf16.msra.mxu0 0
      %403 = vmatprep.mubr.bf16.mxu0 0
      %404 = vmatmul.mubr.bf16.gmra.mxu0 %v306
      %v405 = vpop.f32.mrf.mxu0
      %v406 = vadd.f32 0.0, %v405
      %v407 = vpop.f32.mrf.mxu0
      %v408 = vpop.f32.mrf.mxu0
      %v409 = vadd.f32 0.0, %v408
      %v410 = vpop.f32.mrf.mxu0
      %411 = vdwg.mxu0
      %v412 = vld [vmem:[%s4] sm:$0x1]
      %v414 = vlaneseq
      %v415 = vshrl.u32 %v414, 7
      %v416 = vsub.s32 0, %v415
      %v417 = vrot.slane %v412, %v416
      %v419 = vmul.f32 %v406, %v417
      %v420 = vmul.f32 %v409, %v417
      %v421 = vld [vmem:[%s5] sm:$0x1]
      %v423 = vlaneseq
      %v424 = vshrl.u32 %v423, 7
      %v425 = vsub.s32 0, %v424
      %v426 = vrot.slane %v421, %v425
      %v428 = vadd.f32 %v419, %v426
      %v429 = vadd.f32 %v420, %v426
      %v430 = vmax.f32 %v428, 0.0
      %v431 = vmax.f32 %v429, 0.0
      %v432 = vpack.c.bf16 %v431, %v430
      %433 = vst [vmem:[#allocation2] sm:$0xf] 0
      %434 = vst [vmem:[#allocation2 + $0x4] sm:$0xf] 0
      %435 = vst [vmem:[#allocation2 + $0x8] sm:$0xf] 0
      %v437 = vunpack.c.l.b16 %v432
      %v438 = vunpack.c.h.b16 %v432
      %v439 = vpack.c.b16 %v437, %v437
      %v440 = vpack.c.b16 %v438, %v438
      %443 = vst [vmem:[#allocation2 + $0x4] sm:$0xf] %v439
      %vm444 = vcmask 1040384
      %vm445 = vsmask.f32 256
      %vm446 = vmand %vm444, %vm445
      %v447 = vld [vmem:[#allocation2 + $0x8] sm:$0x1]
      %v448 = vsel %vm446, %v440, %v447
      %449 = vst [vmem:[#allocation2 + $0x8] sm:$0x1] %v448
      %v450 = vlaneseq
      %v451 = vshrl.u32 %v450, 7
      %v452 = vadd.s32 %v451, 8
      %vm453 = vcmp.lt.s32.totalorder %v451, 0
      %v454 = vsub.s32 0, %v451
      %v455 = vsel %vm453, %v454, %v451
      %v456 = vmul.u32.u64.compose %v455, 2863311531
      %v457 = vextract.low.u32 %v456
      %v458 = vextract.high.u32 %v456
      %v459 = vshrl.u32 %v458, 1
      %v460 = vmul.u32 %v459, 3
      %v461 = vsub.s32 %v455, %v460
      %v462 = vsub.s32 0, %v461
      %v463 = vsel %vm453, %v462, %v461
      %vm464 = vcmp.lt.s32.totalorder %v452, 0
      %v465 = vsub.s32 0, %v452
      %v466 = vsel %vm464, %v465, %v452
      %v467 = vmul.u32.u64.compose %v466, 2863311531
      %v468 = vextract.low.u32 %v467
      %v469 = vextract.high.u32 %v467
      %v470 = vshrl.u32 %v469, 1
      %v471 = vmul.u32 %v470, 3
      %v472 = vsub.s32 %v466, %v471
      %v473 = vsub.s32 0, %v472
      %v474 = vsel %vm464, %v473, %v472
      %vm475 = vcmp.ne.s32.totalorder %v463, 0
      %vm476 = vcmp.ne.s32.totalorder %v474, 0
      %vm477 = vcmp.lt.s32.totalorder %v463, 0
      %vm478 = vcmp.lt.s32.totalorder %v474, 0
      %vm479 = vmand %vm477, %vm475
      %vm480 = vmand %vm478, %vm476
      %v481 = vadd.s32 %v463, 3
      %v482 = vadd.s32 %v474, 3
      %v483 = vsel %vm479, %v481, %v463
      %v484 = vsel %vm480, %v482, %v474
      %vm485 = vcmp.gt.s32.totalorder %v483, 0
      %vm486 = vcmp.gt.s32.totalorder %v484, 0
      %vm487 = vcmp.lt.s32.totalorder %v483, 2
      %vm488 = vcmp.lt.s32.totalorder %v484, 2
      %v489 = vld [vmem:[#allocation2] sm:$0xc]
      %v490 = vld [vmem:[#allocation2 + $0x4] sm:$0x7]
      %vm491 = vmpackc.low %vm485, %vm485
      %vm492 = vmpackc.low %vm486, %vm486
      %v493 = vsel %vm491, 65537, 0
      %v494 = vsel %vm492, 65537, 0
      %vm495 = vcmask 1041408
      %vm496 = vcmask 1045508
      %vm497 = vmor %vm495, %vm496
      %v498 = vrot.slane %v493, 6
      %v499 = vrot.slane %v498, 4
      %v500 = vrot.slane %v494, 6
      %v501 = vsel %vm497, %v499, %v500
      %vm502 = vcmp.ne.s16.totalorder %v498, 0
      %vm503 = vcmp.ne.s16.totalorder %v501, 0
      %v504 = vsel %vm502, %v489, 0
      %v505 = vsel %vm503, %v490, 0
      %v506 = vld [vmem:[%s6] sm:$0xf]
      %v507 = vld [vmem:[%s6 + $0x4] sm:$0xf]
      %v508 = vld [vmem:[%s6 + $0x8] sm:$0xf]
      %v509 = vld [vmem:[%s6 + $0xc] sm:$0xf]
      %v510 = vld [vmem:[%s6 + $0x10] sm:$0xf]
      %v511 = vld [vmem:[%s6 + $0x14] sm:$0xf]
      %v512 = vld [vmem:[%s6 + $0x18] sm:$0xf]
      %v513 = vld [vmem:[%s6 + $0x1c] sm:$0xf]
      %v514 = vld [vmem:[%s6 + $0x20] sm:$0xf]
      %v515 = vld [vmem:[%s6 + $0x24] sm:$0xf]
      %v516 = vld [vmem:[%s6 + $0x28] sm:$0xf]
      %v517 = vld [vmem:[%s6 + $0x2c] sm:$0xf]
      %v518 = vld [vmem:[%s6 + $0x30] sm:$0xf]
      %v519 = vld [vmem:[%s6 + $0x34] sm:$0xf]
      %v520 = vld [vmem:[%s6 + $0x38] sm:$0xf]
      %v521 = vld [vmem:[%s6 + $0x3c] sm:$0xf]
      %s522 = scalar_lea.vmem %s6, 64
      %v523 = vld [vmem:[%s522] sm:$0xf]
      %v524 = vld [vmem:[%s522 + $0x4] sm:$0xf]
      %v525 = vld [vmem:[%s522 + $0x8] sm:$0xf]
      %v526 = vld [vmem:[%s522 + $0xc] sm:$0xf]
      %v527 = vld [vmem:[%s522 + $0x10] sm:$0xf]
      %v528 = vld [vmem:[%s522 + $0x14] sm:$0xf]
      %v529 = vld [vmem:[%s522 + $0x18] sm:$0xf]
      %v530 = vld [vmem:[%s522 + $0x1c] sm:$0xf]
      %v531 = vld [vmem:[%s522 + $0x20] sm:$0xf]
      %v532 = vld [vmem:[%s522 + $0x24] sm:$0xf]
      %v533 = vld [vmem:[%s522 + $0x28] sm:$0xf]
      %v534 = vld [vmem:[%s522 + $0x2c] sm:$0xf]
      %v535 = vld [vmem:[%s522 + $0x30] sm:$0xf]
      %v536 = vld [vmem:[%s522 + $0x34] sm:$0xf]
      %v537 = vld [vmem:[%s522 + $0x38] sm:$0xf]
      %v538 = vld [vmem:[%s522 + $0x3c] sm:$0xf]
      %v541 = vunpack.c.l.b16 %v489
      %v542 = vunpack.c.l.b16 %v490
      %v543 = vpack.c.b16 %v542, %v541
      %v545 = vshrl.u32 %v543, 16
      %v547 = vrot.slane %v545, 2
      %v548 = vshll.u32 %v543, 16
      %v550 = vrot.slane %v548, 3
      %v551 = vor.u32 %v547, %v550
      %v569 = vunpack.c.l.b16 %v523
      %v570 = vunpack.c.l.b16 %v524
      %v571 = vunpack.c.l.b16 %v525
      %v572 = vunpack.c.l.b16 %v526
      %v573 = vunpack.c.l.b16 %v527
      %v574 = vunpack.c.l.b16 %v528
      %v575 = vunpack.c.l.b16 %v529
      %v576 = vunpack.c.l.b16 %v530
      %v577 = vunpack.c.l.b16 %v531
      %v578 = vunpack.c.l.b16 %v532
      %v579 = vunpack.c.l.b16 %v533
      %v580 = vunpack.c.l.b16 %v534
      %v581 = vunpack.c.l.b16 %v535
      %v582 = vunpack.c.l.b16 %v536
      %v583 = vunpack.c.l.b16 %v537
      %v584 = vunpack.c.l.b16 %v538
      %v585 = vpack.c.b16 %v570, %v569
      %v586 = vpack.c.b16 %v572, %v571
      %v587 = vpack.c.b16 %v574, %v573
      %v588 = vpack.c.b16 %v576, %v575
      %v589 = vpack.c.b16 %v578, %v577
      %v590 = vpack.c.b16 %v580, %v579
      %v591 = vpack.c.b16 %v582, %v581
      %v592 = vpack.c.b16 %v584, %v583
      %601 = vmatprep.subr.bf16.mxu0 0
      %602 = vmatpush1.bf16.msra.mxu0 %v592
      %603 = vmatprep.subr.bf16.mxu0 0
      %604 = vmatpush1.bf16.msra.mxu0 %v591
      %605 = vmatprep.subr.bf16.mxu0 0
      %606 = vmatpush1.bf16.msra.mxu0 %v590
      %607 = vmatprep.subr.bf16.mxu0 0
      %608 = vmatpush1.bf16.msra.mxu0 %v589
      %609 = vmatprep.subr.bf16.mxu0 0
      %610 = vmatpush1.bf16.msra.mxu0 %v588
      %611 = vmatprep.subr.bf16.mxu0 0
      %612 = vmatpush1.bf16.msra.mxu0 %v587
      %613 = vmatprep.subr.bf16.mxu0 0
      %614 = vmatpush1.bf16.msra.mxu0 %v586
      %615 = vmatprep.subr.bf16.mxu0 0
      %616 = vmatpush1.bf16.msra.mxu0 %v585
      %617 = vmatprep.subr.bf16.mxu0 0
      %618 = vmatpush2.bf16.msra.mxu0 0
      %619 = vmatprep.subr.bf16.mxu0 0
      %620 = vmatpush2.bf16.msra.mxu0 0
      %621 = vmatprep.subr.bf16.mxu0 0
      %622 = vmatpush2.bf16.msra.mxu0 0
      %623 = vmatprep.subr.bf16.mxu0 0
      %624 = vmatpush2.bf16.msra.mxu0 0
      %625 = vmatprep.subr.bf16.mxu0 0
      %626 = vmatpush2.bf16.msra.mxu0 0
      %627 = vmatprep.subr.bf16.mxu0 0
      %628 = vmatpush2.bf16.msra.mxu0 0
      %629 = vmatprep.subr.bf16.mxu0 0
      %630 = vmatpush2.bf16.msra.mxu0 0
      %631 = vmatprep.subr.bf16.mxu0 0
      %632 = vmatpush2.bf16.msra.mxu0 0
      %633 = vmatprep.mubr.bf16.mxu0 0
      %634 = vmatmul.mubr.bf16.gmra.mxu0 %v551
      %v635 = vpop.f32.mrf.mxu0
      %v636 = vadd.f32 0.0, %v635
      %v637 = vpop.f32.mrf.mxu0
      %v638 = vpop.f32.mrf.mxu0
      %v639 = vadd.f32 0.0, %v638
      %v640 = vpop.f32.mrf.mxu0
      %641 = vdwg.mxu0
      %v644 = vunpack.c.l.b16 %v504
      %v645 = vunpack.c.l.b16 %v505
      %v646 = vpack.c.b16 %v645, %v644
      %v647 = vrot.slane %v646, 2
      %v665 = vunpack.c.l.b16 %v506
      %v666 = vunpack.c.l.b16 %v507
      %v667 = vunpack.c.l.b16 %v508
      %v668 = vunpack.c.l.b16 %v509
      %v669 = vunpack.c.l.b16 %v510
      %v670 = vunpack.c.l.b16 %v511
      %v671 = vunpack.c.l.b16 %v512
      %v672 = vunpack.c.l.b16 %v513
      %v673 = vunpack.c.l.b16 %v514
      %v674 = vunpack.c.l.b16 %v515
      %v675 = vunpack.c.l.b16 %v516
      %v676 = vunpack.c.l.b16 %v517
      %v677 = vunpack.c.l.b16 %v518
      %v678 = vunpack.c.l.b16 %v519
      %v679 = vunpack.c.l.b16 %v520
      %v680 = vunpack.c.l.b16 %v521
      %v681 = vpack.c.b16 %v666, %v665
      %v682 = vpack.c.b16 %v668, %v667
      %v683 = vpack.c.b16 %v670, %v669
      %v684 = vpack.c.b16 %v672, %v671
      %v685 = vpack.c.b16 %v674, %v673
      %v686 = vpack.c.b16 %v676, %v675
      %v687 = vpack.c.b16 %v678, %v677
      %v688 = vpack.c.b16 %v680, %v679
      %697 = vmatprep.subr.bf16.mxu0 0
      %698 = vmatpush1.bf16.msra.mxu0 %v688
      %699 = vmatprep.subr.bf16.mxu0 0
      %700 = vmatpush1.bf16.msra.mxu0 %v687
      %701 = vmatprep.subr.bf16.mxu0 0
      %702 = vmatpush1.bf16.msra.mxu0 %v686
      %703 = vmatprep.subr.bf16.mxu0 0
      %704 = vmatpush1.bf16.msra.mxu0 %v685
      %705 = vmatprep.subr.bf16.mxu0 0
      %706 = vmatpush1.bf16.msra.mxu0 %v684
      %707 = vmatprep.subr.bf16.mxu0 0
      %708 = vmatpush1.bf16.msra.mxu0 %v683
      %709 = vmatprep.subr.bf16.mxu0 0
      %710 = vmatpush1.bf16.msra.mxu0 %v682
      %711 = vmatprep.subr.bf16.mxu0 0
      %712 = vmatpush1.bf16.msra.mxu0 %v681
      %713 = vmatprep.subr.bf16.mxu0 0
      %714 = vmatpush2.bf16.msra.mxu0 0
      %715 = vmatprep.subr.bf16.mxu0 0
      %716 = vmatpush2.bf16.msra.mxu0 0
      %717 = vmatprep.subr.bf16.mxu0 0
      %718 = vmatpush2.bf16.msra.mxu0 0
      %719 = vmatprep.subr.bf16.mxu0 0
      %720 = vmatpush2.bf16.msra.mxu0 0
      %721 = vmatprep.subr.bf16.mxu0 0
      %722 = vmatpush2.bf16.msra.mxu0 0
      %723 = vmatprep.subr.bf16.mxu0 0
      %724 = vmatpush2.bf16.msra.mxu0 0
      %725 = vmatprep.subr.bf16.mxu0 0
      %726 = vmatpush2.bf16.msra.mxu0 0
      %727 = vmatprep.subr.bf16.mxu0 0
      %728 = vmatpush2.bf16.msra.mxu0 0
      %729 = vmatprep.mubr.bf16.mxu0 0
      %730 = vmatmul.mubr.bf16.gmra.mxu0 %v647
      %v731 = vpop.f32.mrf.mxu0
      %v732 = vadd.f32 %v636, %v731
      %v733 = vpop.f32.mrf.mxu0
      %v734 = vpop.f32.mrf.mxu0
      %v735 = vadd.f32 %v639, %v734
      %v736 = vpop.f32.mrf.mxu0
      %737 = vdwg.mxu0
      %v738 = vld [vmem:[#allocation2] sm:$0x8]
      %v739 = vld [vmem:[#allocation2 + $0x4] sm:$0xf]
      %vm740 = vmpackc.low %vm487, %vm487
      %vm741 = vmpackc.low %vm488, %vm488
      %v742 = vsel %vm740, 65537, 0
      %v743 = vsel %vm741, 65537, 0
      %vm744 = vcmask 1042432
      %vm745 = vcmask 1046532
      %vm746 = vmor %vm744, %vm745
      %v747 = vrot.slane %v742, 5
      %v748 = vrot.slane %v747, 4
      %v749 = vrot.slane %v743, 5
      %v750 = vsel %vm746, %v748, %v749
      %vm751 = vcmp.ne.s16.totalorder %v747, 0
      %vm752 = vcmp.ne.s16.totalorder %v750, 0
      %v753 = vsel %vm751, %v738, 0
      %v754 = vsel %vm752, %v739, 0
      %s755 = scalar_lea.vmem %s6, 128
      %v756 = vld [vmem:[%s755] sm:$0xf]
      %v757 = vld [vmem:[%s755 + $0x4] sm:$0xf]
      %v758 = vld [vmem:[%s755 + $0x8] sm:$0xf]
      %v759 = vld [vmem:[%s755 + $0xc] sm:$0xf]
      %v760 = vld [vmem:[%s755 + $0x10] sm:$0xf]
      %v761 = vld [vmem:[%s755 + $0x14] sm:$0xf]
      %v762 = vld [vmem:[%s755 + $0x18] sm:$0xf]
      %v763 = vld [vmem:[%s755 + $0x1c] sm:$0xf]
      %v764 = vld [vmem:[%s755 + $0x20] sm:$0xf]
      %v765 = vld [vmem:[%s755 + $0x24] sm:$0xf]
      %v766 = vld [vmem:[%s755 + $0x28] sm:$0xf]
      %v767 = vld [vmem:[%s755 + $0x2c] sm:$0xf]
      %v768 = vld [vmem:[%s755 + $0x30] sm:$0xf]
      %v769 = vld [vmem:[%s755 + $0x34] sm:$0xf]
      %v770 = vld [vmem:[%s755 + $0x38] sm:$0xf]
      %v771 = vld [vmem:[%s755 + $0x3c] sm:$0xf]
      %v774 = vunpack.c.l.b16 %v753
      %v775 = vunpack.c.l.b16 %v754
      %v776 = vpack.c.b16 %v775, %v774
      %v777 = vrot.slane %v776, 3
      %v795 = vunpack.c.l.b16 %v756
      %v796 = vunpack.c.l.b16 %v757
      %v797 = vunpack.c.l.b16 %v758
      %v798 = vunpack.c.l.b16 %v759
      %v799 = vunpack.c.l.b16 %v760
      %v800 = vunpack.c.l.b16 %v761
      %v801 = vunpack.c.l.b16 %v762
      %v802 = vunpack.c.l.b16 %v763
      %v803 = vunpack.c.l.b16 %v764
      %v804 = vunpack.c.l.b16 %v765
      %v805 = vunpack.c.l.b16 %v766
      %v806 = vunpack.c.l.b16 %v767
      %v807 = vunpack.c.l.b16 %v768
      %v808 = vunpack.c.l.b16 %v769
      %v809 = vunpack.c.l.b16 %v770
      %v810 = vunpack.c.l.b16 %v771
      %v811 = vpack.c.b16 %v796, %v795
      %v812 = vpack.c.b16 %v798, %v797
      %v813 = vpack.c.b16 %v800, %v799
      %v814 = vpack.c.b16 %v802, %v801
      %v815 = vpack.c.b16 %v804, %v803
      %v816 = vpack.c.b16 %v806, %v805
      %v817 = vpack.c.b16 %v808, %v807
      %v818 = vpack.c.b16 %v810, %v809
      %827 = vmatprep.subr.bf16.mxu0 0
      %828 = vmatpush1.bf16.msra.mxu0 %v818
      %829 = vmatprep.subr.bf16.mxu0 0
      %830 = vmatpush1.bf16.msra.mxu0 %v817
      %831 = vmatprep.subr.bf16.mxu0 0
      %832 = vmatpush1.bf16.msra.mxu0 %v816
      %833 = vmatprep.subr.bf16.mxu0 0
      %834 = vmatpush1.bf16.msra.mxu0 %v815
      %835 = vmatprep.subr.bf16.mxu0 0
      %836 = vmatpush1.bf16.msra.mxu0 %v814
      %837 = vmatprep.subr.bf16.mxu0 0
      %838 = vmatpush1.bf16.msra.mxu0 %v813
      %839 = vmatprep.subr.bf16.mxu0 0
      %840 = vmatpush1.bf16.msra.mxu0 %v812
      %841 = vmatprep.subr.bf16.mxu0 0
      %842 = vmatpush1.bf16.msra.mxu0 %v811
      %843 = vmatprep.subr.bf16.mxu0 0
      %844 = vmatpush2.bf16.msra.mxu0 0
      %845 = vmatprep.subr.bf16.mxu0 0
      %846 = vmatpush2.bf16.msra.mxu0 0
      %847 = vmatprep.subr.bf16.mxu0 0
      %848 = vmatpush2.bf16.msra.mxu0 0
      %849 = vmatprep.subr.bf16.mxu0 0
      %850 = vmatpush2.bf16.msra.mxu0 0
      %851 = vmatprep.subr.bf16.mxu0 0
      %852 = vmatpush2.bf16.msra.mxu0 0
      %853 = vmatprep.subr.bf16.mxu0 0
      %854 = vmatpush2.bf16.msra.mxu0 0
      %855 = vmatprep.subr.bf16.mxu0 0
      %856 = vmatpush2.bf16.msra.mxu0 0
      %857 = vmatprep.subr.bf16.mxu0 0
      %858 = vmatpush2.bf16.msra.mxu0 0
      %859 = vmatprep.mubr.bf16.mxu0 0
      %860 = vmatmul.mubr.bf16.gmra.mxu0 %v777
      %v861 = vpop.f32.mrf.mxu0
      %v862 = vadd.f32 0.0, %v861
      %v863 = vpop.f32.mrf.mxu0
      %v864 = vpop.f32.mrf.mxu0
      %v865 = vadd.f32 0.0, %v864
      %v866 = vpop.f32.mrf.mxu0
      %867 = vdwg.mxu0
      %v868 = vadd.f32 %v732, %v862
      %v869 = vadd.f32 %v735, %v865
      %vm870 = vsmask.f32 3328
      %vm871 = vsmask.f32 7440
      %vm872 = vmor %vm870, %vm871
      %v874 = vshll.u32 %v493, 16
      %v876 = vrot.slane %v874, 5
      %v877 = vshrl.u32 %v493, 16
      %v879 = vrot.slane %v877, 4
      %v880 = vor.u32 %v879, %v876
      %v881 = vrot.slane %v880, 4
      %v883 = vshll.u32 %v494, 16
      %v885 = vrot.slane %v883, 5
      %v886 = vsel %vm872, %v881, %v885
      %vm887 = vcmp.ne.s16.totalorder %v876, 0
      %vm888 = vcmp.ne.s16.totalorder %v886, 0
      %v889 = vsel %vm887, %v738, 0
      %v890 = vsel %vm888, %v739, 0
      %s891 = scalar_lea.vmem %s6, 192
      %v892 = vld [vmem:[%s891] sm:$0xf]
      %v893 = vld [vmem:[%s891 + $0x4] sm:$0xf]
      %v894 = vld [vmem:[%s891 + $0x8] sm:$0xf]
      %v895 = vld [vmem:[%s891 + $0xc] sm:$0xf]
      %v896 = vld [vmem:[%s891 + $0x10] sm:$0xf]
      %v897 = vld [vmem:[%s891 + $0x14] sm:$0xf]
      %v898 = vld [vmem:[%s891 + $0x18] sm:$0xf]
      %v899 = vld [vmem:[%s891 + $0x1c] sm:$0xf]
      %v900 = vld [vmem:[%s891 + $0x20] sm:$0xf]
      %v901 = vld [vmem:[%s891 + $0x24] sm:$0xf]
      %v902 = vld [vmem:[%s891 + $0x28] sm:$0xf]
      %v903 = vld [vmem:[%s891 + $0x2c] sm:$0xf]
      %v904 = vld [vmem:[%s891 + $0x30] sm:$0xf]
      %v905 = vld [vmem:[%s891 + $0x34] sm:$0xf]
      %v906 = vld [vmem:[%s891 + $0x38] sm:$0xf]
      %v907 = vld [vmem:[%s891 + $0x3c] sm:$0xf]
      %v910 = vunpack.c.l.b16 %v889
      %v911 = vunpack.c.l.b16 %v890
      %v912 = vpack.c.b16 %v911, %v910
      %v914 = vshrl.u32 %v912, 16
      %v916 = vrot.slane %v914, 3
      %v917 = vshll.u32 %v912, 16
      %v919 = vrot.slane %v917, 4
      %v920 = vor.u32 %v916, %v919
      %v938 = vunpack.c.l.b16 %v892
      %v939 = vunpack.c.l.b16 %v893
      %v940 = vunpack.c.l.b16 %v894
      %v941 = vunpack.c.l.b16 %v895
      %v942 = vunpack.c.l.b16 %v896
      %v943 = vunpack.c.l.b16 %v897
      %v944 = vunpack.c.l.b16 %v898
      %v945 = vunpack.c.l.b16 %v899
      %v946 = vunpack.c.l.b16 %v900
      %v947 = vunpack.c.l.b16 %v901
      %v948 = vunpack.c.l.b16 %v902
      %v949 = vunpack.c.l.b16 %v903
      %v950 = vunpack.c.l.b16 %v904
      %v951 = vunpack.c.l.b16 %v905
      %v952 = vunpack.c.l.b16 %v906
      %v953 = vunpack.c.l.b16 %v907
      %v954 = vpack.c.b16 %v939, %v938
      %v955 = vpack.c.b16 %v941, %v940
      %v956 = vpack.c.b16 %v943, %v942
      %v957 = vpack.c.b16 %v945, %v944
      %v958 = vpack.c.b16 %v947, %v946
      %v959 = vpack.c.b16 %v949, %v948
      %v960 = vpack.c.b16 %v951, %v950
      %v961 = vpack.c.b16 %v953, %v952
      %970 = vmatprep.subr.bf16.mxu0 0
      %971 = vmatpush1.bf16.msra.mxu0 %v961
      %972 = vmatprep.subr.bf16.mxu0 0
      %973 = vmatpush1.bf16.msra.mxu0 %v960
      %974 = vmatprep.subr.bf16.mxu0 0
      %975 = vmatpush1.bf16.msra.mxu0 %v959
      %976 = vmatprep.subr.bf16.mxu0 0
      %977 = vmatpush1.bf16.msra.mxu0 %v958
      %978 = vmatprep.subr.bf16.mxu0 0
      %979 = vmatpush1.bf16.msra.mxu0 %v957
      %980 = vmatprep.subr.bf16.mxu0 0
      %981 = vmatpush1.bf16.msra.mxu0 %v956
      %982 = vmatprep.subr.bf16.mxu0 0
      %983 = vmatpush1.bf16.msra.mxu0 %v955
      %984 = vmatprep.subr.bf16.mxu0 0
      %985 = vmatpush1.bf16.msra.mxu0 %v954
      %986 = vmatprep.subr.bf16.mxu0 0
      %987 = vmatpush2.bf16.msra.mxu0 0
      %988 = vmatprep.subr.bf16.mxu0 0
      %989 = vmatpush2.bf16.msra.mxu0 0
      %990 = vmatprep.subr.bf16.mxu0 0
      %991 = vmatpush2.bf16.msra.mxu0 0
      %992 = vmatprep.subr.bf16.mxu0 0
      %993 = vmatpush2.bf16.msra.mxu0 0
      %994 = vmatprep.subr.bf16.mxu0 0
      %995 = vmatpush2.bf16.msra.mxu0 0
      %996 = vmatprep.subr.bf16.mxu0 0
      %997 = vmatpush2.bf16.msra.mxu0 0
      %998 = vmatprep.subr.bf16.mxu0 0
      %999 = vmatpush2.bf16.msra.mxu0 0
      %1000 = vmatprep.subr.bf16.mxu0 0
      %1001 = vmatpush2.bf16.msra.mxu0 0
      %1002 = vmatprep.mubr.bf16.mxu0 0
      %1003 = vmatmul.mubr.bf16.gmra.mxu0 %v920
      %v1004 = vpop.f32.mrf.mxu0
      %v1005 = vadd.f32 0.0, %v1004
      %v1006 = vpop.f32.mrf.mxu0
      %v1007 = vpop.f32.mrf.mxu0
      %v1008 = vadd.f32 0.0, %v1007
      %v1009 = vpop.f32.mrf.mxu0
      %1010 = vdwg.mxu0
      %v1011 = vadd.f32 %v868, %v1005
      %v1012 = vadd.f32 %v869, %v1008
      %v1013 = vld [vmem:[#allocation2 + $0x4] sm:$0xf]
      %v1014 = vld [vmem:[#allocation2 + $0x8] sm:$0x1]
      %s1015 = scalar_lea.vmem %s6, 256
      %v1016 = vld [vmem:[%s1015] sm:$0xf]
      %v1017 = vld [vmem:[%s1015 + $0x4] sm:$0xf]
      %v1018 = vld [vmem:[%s1015 + $0x8] sm:$0xf]
      %v1019 = vld [vmem:[%s1015 + $0xc] sm:$0xf]
      %v1020 = vld [vmem:[%s1015 + $0x10] sm:$0xf]
      %v1021 = vld [vmem:[%s1015 + $0x14] sm:$0xf]
      %v1022 = vld [vmem:[%s1015 + $0x18] sm:$0xf]
      %v1023 = vld [vmem:[%s1015 + $0x1c] sm:$0xf]
      %v1024 = vld [vmem:[%s1015 + $0x20] sm:$0xf]
      %v1025 = vld [vmem:[%s1015 + $0x24] sm:$0xf]
      %v1026 = vld [vmem:[%s1015 + $0x28] sm:$0xf]
      %v1027 = vld [vmem:[%s1015 + $0x2c] sm:$0xf]
      %v1028 = vld [vmem:[%s1015 + $0x30] sm:$0xf]
      %v1029 = vld [vmem:[%s1015 + $0x34] sm:$0xf]
      %v1030 = vld [vmem:[%s1015 + $0x38] sm:$0xf]
      %v1031 = vld [vmem:[%s1015 + $0x3c] sm:$0xf]
      %v1034 = vunpack.c.l.b16 %v1013
      %v1035 = vunpack.c.l.b16 %v1014
      %v1036 = vpack.c.b16 %v1035, %v1034
      %v1054 = vunpack.c.l.b16 %v1016
      %v1055 = vunpack.c.l.b16 %v1017
      %v1056 = vunpack.c.l.b16 %v1018
      %v1057 = vunpack.c.l.b16 %v1019
      %v1058 = vunpack.c.l.b16 %v1020
      %v1059 = vunpack.c.l.b16 %v1021
      %v1060 = vunpack.c.l.b16 %v1022
      %v1061 = vunpack.c.l.b16 %v1023
      %v1062 = vunpack.c.l.b16 %v1024
      %v1063 = vunpack.c.l.b16 %v1025
      %v1064 = vunpack.c.l.b16 %v1026
      %v1065 = vunpack.c.l.b16 %v1027
      %v1066 = vunpack.c.l.b16 %v1028
      %v1067 = vunpack.c.l.b16 %v1029
      %v1068 = vunpack.c.l.b16 %v1030
      %v1069 = vunpack.c.l.b16 %v1031
      %v1070 = vpack.c.b16 %v1055, %v1054
      %v1071 = vpack.c.b16 %v1057, %v1056
      %v1072 = vpack.c.b16 %v1059, %v1058
      %v1073 = vpack.c.b16 %v1061, %v1060
      %v1074 = vpack.c.b16 %v1063, %v1062
      %v1075 = vpack.c.b16 %v1065, %v1064
      %v1076 = vpack.c.b16 %v1067, %v1066
      %v1077 = vpack.c.b16 %v1069, %v1068
      %1086 = vmatprep.subr.bf16.mxu0 0
      %1087 = vmatpush1.bf16.msra.mxu0 %v1077
      %1088 = vmatprep.subr.bf16.mxu0 0
      %1089 = vmatpush1.bf16.msra.mxu0 %v1076
      %1090 = vmatprep.subr.bf16.mxu0 0
      %1091 = vmatpush1.bf16.msra.mxu0 %v1075
      %1092 = vmatprep.subr.bf16.mxu0 0
      %1093 = vmatpush1.bf16.msra.mxu0 %v1074
      %1094 = vmatprep.subr.bf16.mxu0 0
      %1095 = vmatpush1.bf16.msra.mxu0 %v1073
      %1096 = vmatprep.subr.bf16.mxu0 0
      %1097 = vmatpush1.bf16.msra.mxu0 %v1072
      %1098 = vmatprep.subr.bf16.mxu0 0
      %1099 = vmatpush1.bf16.msra.mxu0 %v1071
      %1100 = vmatprep.subr.bf16.mxu0 0
      %1101 = vmatpush1.bf16.msra.mxu0 %v1070
      %1102 = vmatprep.subr.bf16.mxu0 0
      %1103 = vmatpush2.bf16.msra.mxu0 0
      %1104 = vmatprep.subr.bf16.mxu0 0
      %1105 = vmatpush2.bf16.msra.mxu0 0
      %1106 = vmatprep.subr.bf16.mxu0 0
      %1107 = vmatpush2.bf16.msra.mxu0 0
      %1108 = vmatprep.subr.bf16.mxu0 0
      %1109 = vmatpush2.bf16.msra.mxu0 0
      %1110 = vmatprep.subr.bf16.mxu0 0
      %1111 = vmatpush2.bf16.msra.mxu0 0
      %1112 = vmatprep.subr.bf16.mxu0 0
      %1113 = vmatpush2.bf16.msra.mxu0 0
      %1114 = vmatprep.subr.bf16.mxu0 0
      %1115 = vmatpush2.bf16.msra.mxu0 0
      %1116 = vmatprep.subr.bf16.mxu0 0
      %1117 = vmatpush2.bf16.msra.mxu0 0
      %1118 = vmatprep.mubr.bf16.mxu0 0
      %1119 = vmatmul.mubr.bf16.gmra.mxu0 %v1036
      %v1120 = vpop.f32.mrf.mxu0
      %v1121 = vadd.f32 0.0, %v1120
      %v1122 = vpop.f32.mrf.mxu0
      %v1123 = vpop.f32.mrf.mxu0
      %v1124 = vadd.f32 0.0, %v1123
      %v1125 = vpop.f32.mrf.mxu0
      %1126 = vdwg.mxu0
      %v1127 = vadd.f32 %v1011, %v1121
      %v1128 = vadd.f32 %v1012, %v1124
      %vm1129 = vsmask.f32 4368
      %vm1130 = vmor %vm445, %vm1129
      %v1132 = vshrl.u32 %v742, 16
      %v1134 = vrot.slane %v1132, 7
      %v1135 = vshll.u32 %v742, 16
      %v1137 = vor.u32 %v1134, %v1135
      %v1138 = vrot.slane %v1134, 4
      %v1140 = vshll.u32 %v743, 16
      %v1142 = vsel %vm1130, %v1138, %v1140
      %vm1143 = vcmp.ne.s16.totalorder %v1137, 0
      %vm1144 = vcmp.ne.s16.totalorder %v1142, 0
      %v1145 = vsel %vm1143, %v1013, 0
      %v1146 = vsel %vm1144, %v1014, 0
      %s1147 = scalar_lea.vmem %s6, 320
      %v1148 = vld [vmem:[%s1147] sm:$0xf]
      %v1149 = vld [vmem:[%s1147 + $0x4] sm:$0xf]
      %v1150 = vld [vmem:[%s1147 + $0x8] sm:$0xf]
      %v1151 = vld [vmem:[%s1147 + $0xc] sm:$0xf]
      %v1152 = vld [vmem:[%s1147 + $0x10] sm:$0xf]
      %v1153 = vld [vmem:[%s1147 + $0x14] sm:$0xf]
      %v1154 = vld [vmem:[%s1147 + $0x18] sm:$0xf]
      %v1155 = vld [vmem:[%s1147 + $0x1c] sm:$0xf]
      %v1156 = vld [vmem:[%s1147 + $0x20] sm:$0xf]
      %v1157 = vld [vmem:[%s1147 + $0x24] sm:$0xf]
      %v1158 = vld [vmem:[%s1147 + $0x28] sm:$0xf]
      %v1159 = vld [vmem:[%s1147 + $0x2c] sm:$0xf]
      %v1160 = vld [vmem:[%s1147 + $0x30] sm:$0xf]
      %v1161 = vld [vmem:[%s1147 + $0x34] sm:$0xf]
      %v1162 = vld [vmem:[%s1147 + $0x38] sm:$0xf]
      %v1163 = vld [vmem:[%s1147 + $0x3c] sm:$0xf]
      %v1166 = vunpack.c.l.b16 %v1145
      %v1167 = vunpack.c.l.b16 %v1146
      %v1168 = vpack.c.b16 %v1167, %v1166
      %v1170 = vshrl.u32 %v1168, 16
      %v1172 = vshll.u32 %v1168, 16
      %v1174 = vrot.slane %v1172, 1
      %v1175 = vor.u32 %v1170, %v1174
      %v1193 = vunpack.c.l.b16 %v1148
      %v1194 = vunpack.c.l.b16 %v1149
      %v1195 = vunpack.c.l.b16 %v1150
      %v1196 = vunpack.c.l.b16 %v1151
      %v1197 = vunpack.c.l.b16 %v1152
      %v1198 = vunpack.c.l.b16 %v1153
      %v1199 = vunpack.c.l.b16 %v1154
      %v1200 = vunpack.c.l.b16 %v1155
      %v1201 = vunpack.c.l.b16 %v1156
      %v1202 = vunpack.c.l.b16 %v1157
      %v1203 = vunpack.c.l.b16 %v1158
      %v1204 = vunpack.c.l.b16 %v1159
      %v1205 = vunpack.c.l.b16 %v1160
      %v1206 = vunpack.c.l.b16 %v1161
      %v1207 = vunpack.c.l.b16 %v1162
      %v1208 = vunpack.c.l.b16 %v1163
      %v1209 = vpack.c.b16 %v1194, %v1193
      %v1210 = vpack.c.b16 %v1196, %v1195
      %v1211 = vpack.c.b16 %v1198, %v1197
      %v1212 = vpack.c.b16 %v1200, %v1199
      %v1213 = vpack.c.b16 %v1202, %v1201
      %v1214 = vpack.c.b16 %v1204, %v1203
      %v1215 = vpack.c.b16 %v1206, %v1205
      %v1216 = vpack.c.b16 %v1208, %v1207
      %1225 = vmatprep.subr.bf16.mxu0 0
      %1226 = vmatpush1.bf16.msra.mxu0 %v1216
      %1227 = vmatprep.subr.bf16.mxu0 0
      %1228 = vmatpush1.bf16.msra.mxu0 %v1215
      %1229 = vmatprep.subr.bf16.mxu0 0
      %1230 = vmatpush1.bf16.msra.mxu0 %v1214
      %1231 = vmatprep.subr.bf16.mxu0 0
      %1232 = vmatpush1.bf16.msra.mxu0 %v1213
      %1233 = vmatprep.subr.bf16.mxu0 0
      %1234 = vmatpush1.bf16.msra.mxu0 %v1212
      %1235 = vmatprep.subr.bf16.mxu0 0
      %1236 = vmatpush1.bf16.msra.mxu0 %v1211
      %1237 = vmatprep.subr.bf16.mxu0 0
      %1238 = vmatpush1.bf16.msra.mxu0 %v1210
      %1239 = vmatprep.subr.bf16.mxu0 0
      %1240 = vmatpush1.bf16.msra.mxu0 %v1209
      %1241 = vmatprep.subr.bf16.mxu0 0
      %1242 = vmatpush2.bf16.msra.mxu0 0
      %1243 = vmatprep.subr.bf16.mxu0 0
      %1244 = vmatpush2.bf16.msra.mxu0 0
      %1245 = vmatprep.subr.bf16.mxu0 0
      %1246 = vmatpush2.bf16.msra.mxu0 0
      %1247 = vmatprep.subr.bf16.mxu0 0
      %1248 = vmatpush2.bf16.msra.mxu0 0
      %1249 = vmatprep.subr.bf16.mxu0 0
      %1250 = vmatpush2.bf16.msra.mxu0 0
      %1251 = vmatprep.subr.bf16.mxu0 0
      %1252 = vmatpush2.bf16.msra.mxu0 0
      %1253 = vmatprep.subr.bf16.mxu0 0
      %1254 = vmatpush2.bf16.msra.mxu0 0
      %1255 = vmatprep.subr.bf16.mxu0 0
      %1256 = vmatpush2.bf16.msra.mxu0 0
      %1257 = vmatprep.mubr.bf16.mxu0 0
      %1258 = vmatmul.mubr.bf16.gmra.mxu0 %v1175
      %v1259 = vpop.f32.mrf.mxu0
      %v1260 = vadd.f32 0.0, %v1259
      %v1261 = vpop.f32.mrf.mxu0
      %v1262 = vpop.f32.mrf.mxu0
      %v1263 = vadd.f32 0.0, %v1262
      %v1264 = vpop.f32.mrf.mxu0
      %1265 = vdwg.mxu0
      %v1266 = vadd.f32 %v1127, %v1260
      %v1267 = vadd.f32 %v1128, %v1263
      %v1268 = vld [vmem:[#allocation2 + $0x4] sm:$0xe]
      %v1269 = vld [vmem:[#allocation2 + $0x8] sm:$0x3]
      %vm1270 = vcmask 1044484
      %vm1271 = vmor %vm444, %vm1270
      %v1272 = vrot.slane %v493, 7
      %v1273 = vrot.slane %v1272, 4
      %v1274 = vrot.slane %v494, 7
      %v1275 = vsel %vm1271, %v1273, %v1274
      %vm1276 = vcmp.ne.s16.totalorder %v1272, 0
      %vm1277 = vcmp.ne.s16.totalorder %v1275, 0
      %v1278 = vsel %vm1276, %v1268, 0
      %v1279 = vsel %vm1277, %v1269, 0
      %s1280 = scalar_lea.vmem %s6, 384
      %v1281 = vld [vmem:[%s1280] sm:$0xf]
      %v1282 = vld [vmem:[%s1280 + $0x4] sm:$0xf]
      %v1283 = vld [vmem:[%s1280 + $0x8] sm:$0xf]
      %v1284 = vld [vmem:[%s1280 + $0xc] sm:$0xf]
      %v1285 = vld [vmem:[%s1280 + $0x10] sm:$0xf]
      %v1286 = vld [vmem:[%s1280 + $0x14] sm:$0xf]
      %v1287 = vld [vmem:[%s1280 + $0x18] sm:$0xf]
      %v1288 = vld [vmem:[%s1280 + $0x1c] sm:$0xf]
      %v1289 = vld [vmem:[%s1280 + $0x20] sm:$0xf]
      %v1290 = vld [vmem:[%s1280 + $0x24] sm:$0xf]
      %v1291 = vld [vmem:[%s1280 + $0x28] sm:$0xf]
      %v1292 = vld [vmem:[%s1280 + $0x2c] sm:$0xf]
      %v1293 = vld [vmem:[%s1280 + $0x30] sm:$0xf]
      %v1294 = vld [vmem:[%s1280 + $0x34] sm:$0xf]
      %v1295 = vld [vmem:[%s1280 + $0x38] sm:$0xf]
      %v1296 = vld [vmem:[%s1280 + $0x3c] sm:$0xf]
      %v1299 = vunpack.c.l.b16 %v1278
      %v1300 = vunpack.c.l.b16 %v1279
      %v1301 = vpack.c.b16 %v1300, %v1299
      %v1302 = vrot.slane %v1301, 1
      %v1320 = vunpack.c.l.b16 %v1281
      %v1321 = vunpack.c.l.b16 %v1282
      %v1322 = vunpack.c.l.b16 %v1283
      %v1323 = vunpack.c.l.b16 %v1284
      %v1324 = vunpack.c.l.b16 %v1285
      %v1325 = vunpack.c.l.b16 %v1286
      %v1326 = vunpack.c.l.b16 %v1287
      %v1327 = vunpack.c.l.b16 %v1288
      %v1328 = vunpack.c.l.b16 %v1289
      %v1329 = vunpack.c.l.b16 %v1290
      %v1330 = vunpack.c.l.b16 %v1291
      %v1331 = vunpack.c.l.b16 %v1292
      %v1332 = vunpack.c.l.b16 %v1293
      %v1333 = vunpack.c.l.b16 %v1294
      %v1334 = vunpack.c.l.b16 %v1295
      %v1335 = vunpack.c.l.b16 %v1296
      %v1336 = vpack.c.b16 %v1321, %v1320
      %v1337 = vpack.c.b16 %v1323, %v1322
      %v1338 = vpack.c.b16 %v1325, %v1324
      %v1339 = vpack.c.b16 %v1327, %v1326
      %v1340 = vpack.c.b16 %v1329, %v1328
      %v1341 = vpack.c.b16 %v1331, %v1330
      %v1342 = vpack.c.b16 %v1333, %v1332
      %v1343 = vpack.c.b16 %v1335, %v1334
      %1352 = vmatprep.subr.bf16.mxu0 0
      %1353 = vmatpush1.bf16.msra.mxu0 %v1343
      %1354 = vmatprep.subr.bf16.mxu0 0
      %1355 = vmatpush1.bf16.msra.mxu0 %v1342
      %1356 = vmatprep.subr.bf16.mxu0 0
      %1357 = vmatpush1.bf16.msra.mxu0 %v1341
      %1358 = vmatprep.subr.bf16.mxu0 0
      %1359 = vmatpush1.bf16.msra.mxu0 %v1340
      %1360 = vmatprep.subr.bf16.mxu0 0
      %1361 = vmatpush1.bf16.msra.mxu0 %v1339
      %1362 = vmatprep.subr.bf16.mxu0 0
      %1363 = vmatpush1.bf16.msra.mxu0 %v1338
      %1364 = vmatprep.subr.bf16.mxu0 0
      %1365 = vmatpush1.bf16.msra.mxu0 %v1337
      %1366 = vmatprep.subr.bf16.mxu0 0
      %1367 = vmatpush1.bf16.msra.mxu0 %v1336
      %1368 = vmatprep.subr.bf16.mxu0 0
      %1369 = vmatpush2.bf16.msra.mxu0 0
      %1370 = vmatprep.subr.bf16.mxu0 0
      %1371 = vmatpush2.bf16.msra.mxu0 0
      %1372 = vmatprep.subr.bf16.mxu0 0
      %1373 = vmatpush2.bf16.msra.mxu0 0
      %1374 = vmatprep.subr.bf16.mxu0 0
      %1375 = vmatpush2.bf16.msra.mxu0 0
      %1376 = vmatprep.subr.bf16.mxu0 0
      %1377 = vmatpush2.bf16.msra.mxu0 0
      %1378 = vmatprep.subr.bf16.mxu0 0
      %1379 = vmatpush2.bf16.msra.mxu0 0
      %1380 = vmatprep.subr.bf16.mxu0 0
      %1381 = vmatpush2.bf16.msra.mxu0 0
      %1382 = vmatprep.subr.bf16.mxu0 0
      %1383 = vmatpush2.bf16.msra.mxu0 0
      %1384 = vmatprep.mubr.bf16.mxu0 0
      %1385 = vmatmul.mubr.bf16.gmra.mxu0 %v1302
      %v1386 = vpop.f32.mrf.mxu0
      %v1387 = vadd.f32 0.0, %v1386
      %v1388 = vpop.f32.mrf.mxu0
      %v1389 = vpop.f32.mrf.mxu0
      %v1390 = vadd.f32 0.0, %v1389
      %v1391 = vpop.f32.mrf.mxu0
      %1392 = vdwg.mxu0
      %v1393 = vadd.f32 %v1266, %v1387
      %v1394 = vadd.f32 %v1267, %v1390
      %s1395 = scalar_lea.vmem %s6, 448
      %v1396 = vld [vmem:[%s1395] sm:$0xf]
      %v1397 = vld [vmem:[%s1395 + $0x4] sm:$0xf]
      %v1398 = vld [vmem:[%s1395 + $0x8] sm:$0xf]
      %v1399 = vld [vmem:[%s1395 + $0xc] sm:$0xf]
      %v1400 = vld [vmem:[%s1395 + $0x10] sm:$0xf]
      %v1401 = vld [vmem:[%s1395 + $0x14] sm:$0xf]
      %v1402 = vld [vmem:[%s1395 + $0x18] sm:$0xf]
      %v1403 = vld [vmem:[%s1395 + $0x1c] sm:$0xf]
      %v1404 = vld [vmem:[%s1395 + $0x20] sm:$0xf]
      %v1405 = vld [vmem:[%s1395 + $0x24] sm:$0xf]
      %v1406 = vld [vmem:[%s1395 + $0x28] sm:$0xf]
      %v1407 = vld [vmem:[%s1395 + $0x2c] sm:$0xf]
      %v1408 = vld [vmem:[%s1395 + $0x30] sm:$0xf]
      %v1409 = vld [vmem:[%s1395 + $0x34] sm:$0xf]
      %v1410 = vld [vmem:[%s1395 + $0x38] sm:$0xf]
      %v1411 = vld [vmem:[%s1395 + $0x3c] sm:$0xf]
      %v1414 = vunpack.c.l.b16 %v1268
      %v1415 = vunpack.c.l.b16 %v1269
      %v1416 = vpack.c.b16 %v1415, %v1414
      %v1418 = vshrl.u32 %v1416, 16
      %v1420 = vrot.slane %v1418, 1
      %v1421 = vshll.u32 %v1416, 16
      %v1423 = vrot.slane %v1421, 2
      %v1424 = vor.u32 %v1420, %v1423
      %v1442 = vunpack.c.l.b16 %v1396
      %v1443 = vunpack.c.l.b16 %v1397
      %v1444 = vunpack.c.l.b16 %v1398
      %v1445 = vunpack.c.l.b16 %v1399
      %v1446 = vunpack.c.l.b16 %v1400
      %v1447 = vunpack.c.l.b16 %v1401
      %v1448 = vunpack.c.l.b16 %v1402
      %v1449 = vunpack.c.l.b16 %v1403
      %v1450 = vunpack.c.l.b16 %v1404
      %v1451 = vunpack.c.l.b16 %v1405
      %v1452 = vunpack.c.l.b16 %v1406
      %v1453 = vunpack.c.l.b16 %v1407
      %v1454 = vunpack.c.l.b16 %v1408
      %v1455 = vunpack.c.l.b16 %v1409
      %v1456 = vunpack.c.l.b16 %v1410
      %v1457 = vunpack.c.l.b16 %v1411
      %v1458 = vpack.c.b16 %v1443, %v1442
      %v1459 = vpack.c.b16 %v1445, %v1444
      %v1460 = vpack.c.b16 %v1447, %v1446
      %v1461 = vpack.c.b16 %v1449, %v1448
      %v1462 = vpack.c.b16 %v1451, %v1450
      %v1463 = vpack.c.b16 %v1453, %v1452
      %v1464 = vpack.c.b16 %v1455, %v1454
      %v1465 = vpack.c.b16 %v1457, %v1456
      %1474 = vmatprep.subr.bf16.mxu0 0
      %1475 = vmatpush1.bf16.msra.mxu0 %v1465
      %1476 = vmatprep.subr.bf16.mxu0 0
      %1477 = vmatpush1.bf16.msra.mxu0 %v1464
      %1478 = vmatprep.subr.bf16.mxu0 0
      %1479 = vmatpush1.bf16.msra.mxu0 %v1463
      %1480 = vmatprep.subr.bf16.mxu0 0
      %1481 = vmatpush1.bf16.msra.mxu0 %v1462
      %1482 = vmatprep.subr.bf16.mxu0 0
      %1483 = vmatpush1.bf16.msra.mxu0 %v1461
      %1484 = vmatprep.subr.bf16.mxu0 0
      %1485 = vmatpush1.bf16.msra.mxu0 %v1460
      %1486 = vmatprep.subr.bf16.mxu0 0
      %1487 = vmatpush1.bf16.msra.mxu0 %v1459
      %1488 = vmatprep.subr.bf16.mxu0 0
      %1489 = vmatpush1.bf16.msra.mxu0 %v1458
      %1490 = vmatprep.subr.bf16.mxu0 0
      %1491 = vmatpush2.bf16.msra.mxu0 0
      %1492 = vmatprep.subr.bf16.mxu0 0
      %1493 = vmatpush2.bf16.msra.mxu0 0
      %1494 = vmatprep.subr.bf16.mxu0 0
      %1495 = vmatpush2.bf16.msra.mxu0 0
      %1496 = vmatprep.subr.bf16.mxu0 0
      %1497 = vmatpush2.bf16.msra.mxu0 0
      %1498 = vmatprep.subr.bf16.mxu0 0
      %1499 = vmatpush2.bf16.msra.mxu0 0
      %1500 = vmatprep.subr.bf16.mxu0 0
      %1501 = vmatpush2.bf16.msra.mxu0 0
      %1502 = vmatprep.subr.bf16.mxu0 0
      %1503 = vmatpush2.bf16.msra.mxu0 0
      %1504 = vmatprep.subr.bf16.mxu0 0
      %1505 = vmatpush2.bf16.msra.mxu0 0
      %1506 = vmatprep.mubr.bf16.mxu0 0
      %1507 = vmatmul.mubr.bf16.gmra.mxu0 %v1424
      %v1508 = vpop.f32.mrf.mxu0
      %v1509 = vadd.f32 0.0, %v1508
      %v1510 = vpop.f32.mrf.mxu0
      %v1511 = vpop.f32.mrf.mxu0
      %v1512 = vadd.f32 0.0, %v1511
      %v1513 = vpop.f32.mrf.mxu0
      %1514 = vdwg.mxu0
      %v1515 = vadd.f32 %v1393, %v1509
      %v1516 = vadd.f32 %v1394, %v1512
      %v1517 = vld [vmem:[#allocation2 + $0x4] sm:$0xc]
      %v1518 = vld [vmem:[#allocation2 + $0x8] sm:$0x7]
      %v1519 = vrot.slane %v742, 6
      %v1520 = vrot.slane %v1519, 4
      %v1521 = vrot.slane %v743, 6
      %v1522 = vsel %vm497, %v1520, %v1521
      %vm1523 = vcmp.ne.s16.totalorder %v1519, 0
      %vm1524 = vcmp.ne.s16.totalorder %v1522, 0
      %v1525 = vsel %vm1523, %v1517, 0
      %v1526 = vsel %vm1524, %v1518, 0
      %s1527 = scalar_lea.vmem %s6, 512
      %v1528 = vld [vmem:[%s1527] sm:$0xf]
      %v1529 = vld [vmem:[%s1527 + $0x4] sm:$0xf]
      %v1530 = vld [vmem:[%s1527 + $0x8] sm:$0xf]
      %v1531 = vld [vmem:[%s1527 + $0xc] sm:$0xf]
      %v1532 = vld [vmem:[%s1527 + $0x10] sm:$0xf]
      %v1533 = vld [vmem:[%s1527 + $0x14] sm:$0xf]
      %v1534 = vld [vmem:[%s1527 + $0x18] sm:$0xf]
      %v1535 = vld [vmem:[%s1527 + $0x1c] sm:$0xf]
      %v1536 = vld [vmem:[%s1527 + $0x20] sm:$0xf]
      %v1537 = vld [vmem:[%s1527 + $0x24] sm:$0xf]
      %v1538 = vld [vmem:[%s1527 + $0x28] sm:$0xf]
      %v1539 = vld [vmem:[%s1527 + $0x2c] sm:$0xf]
      %v1540 = vld [vmem:[%s1527 + $0x30] sm:$0xf]
      %v1541 = vld [vmem:[%s1527 + $0x34] sm:$0xf]
      %v1542 = vld [vmem:[%s1527 + $0x38] sm:$0xf]
      %v1543 = vld [vmem:[%s1527 + $0x3c] sm:$0xf]
      %v1546 = vunpack.c.l.b16 %v1525
      %v1547 = vunpack.c.l.b16 %v1526
      %v1548 = vpack.c.b16 %v1547, %v1546
      %v1549 = vrot.slane %v1548, 2
      %v1567 = vunpack.c.l.b16 %v1528
      %v1568 = vunpack.c.l.b16 %v1529
      %v1569 = vunpack.c.l.b16 %v1530
      %v1570 = vunpack.c.l.b16 %v1531
      %v1571 = vunpack.c.l.b16 %v1532
      %v1572 = vunpack.c.l.b16 %v1533
      %v1573 = vunpack.c.l.b16 %v1534
      %v1574 = vunpack.c.l.b16 %v1535
      %v1575 = vunpack.c.l.b16 %v1536
      %v1576 = vunpack.c.l.b16 %v1537
      %v1577 = vunpack.c.l.b16 %v1538
      %v1578 = vunpack.c.l.b16 %v1539
      %v1579 = vunpack.c.l.b16 %v1540
      %v1580 = vunpack.c.l.b16 %v1541
      %v1581 = vunpack.c.l.b16 %v1542
      %v1582 = vunpack.c.l.b16 %v1543
      %v1583 = vpack.c.b16 %v1568, %v1567
      %v1584 = vpack.c.b16 %v1570, %v1569
      %v1585 = vpack.c.b16 %v1572, %v1571
      %v1586 = vpack.c.b16 %v1574, %v1573
      %v1587 = vpack.c.b16 %v1576, %v1575
      %v1588 = vpack.c.b16 %v1578, %v1577
      %v1589 = vpack.c.b16 %v1580, %v1579
      %v1590 = vpack.c.b16 %v1582, %v1581
      %1599 = vmatprep.subr.bf16.mxu0 0
      %1600 = vmatpush1.bf16.msra.mxu0 %v1590
      %1601 = vmatprep.subr.bf16.mxu0 0
      %1602 = vmatpush1.bf16.msra.mxu0 %v1589
      %1603 = vmatprep.subr.bf16.mxu0 0
      %1604 = vmatpush1.bf16.msra.mxu0 %v1588
      %1605 = vmatprep.subr.bf16.mxu0 0
      %1606 = vmatpush1.bf16.msra.mxu0 %v1587
      %1607 = vmatprep.subr.bf16.mxu0 0
      %1608 = vmatpush1.bf16.msra.mxu0 %v1586
      %1609 = vmatprep.subr.bf16.mxu0 0
      %1610 = vmatpush1.bf16.msra.mxu0 %v1585
      %1611 = vmatprep.subr.bf16.mxu0 0
      %1612 = vmatpush1.bf16.msra.mxu0 %v1584
      %1613 = vmatprep.subr.bf16.mxu0 0
      %1614 = vmatpush1.bf16.msra.mxu0 %v1583
      %1615 = vmatprep.subr.bf16.mxu0 0
      %1616 = vmatpush2.bf16.msra.mxu0 0
      %1617 = vmatprep.subr.bf16.mxu0 0
      %1618 = vmatpush2.bf16.msra.mxu0 0
      %1619 = vmatprep.subr.bf16.mxu0 0
      %1620 = vmatpush2.bf16.msra.mxu0 0
      %1621 = vmatprep.subr.bf16.mxu0 0
      %1622 = vmatpush2.bf16.msra.mxu0 0
      %1623 = vmatprep.subr.bf16.mxu0 0
      %1624 = vmatpush2.bf16.msra.mxu0 0
      %1625 = vmatprep.subr.bf16.mxu0 0
      %1626 = vmatpush2.bf16.msra.mxu0 0
      %1627 = vmatprep.subr.bf16.mxu0 0
      %1628 = vmatpush2.bf16.msra.mxu0 0
      %1629 = vmatprep.subr.bf16.mxu0 0
      %1630 = vmatpush2.bf16.msra.mxu0 0
      %1631 = vmatprep.mubr.bf16.mxu0 0
      %1632 = vmatmul.mubr.bf16.gmra.mxu0 %v1549
      %v1633 = vpop.f32.mrf.mxu0
      %v1634 = vadd.f32 0.0, %v1633
      %v1635 = vpop.f32.mrf.mxu0
      %v1636 = vpop.f32.mrf.mxu0
      %v1637 = vadd.f32 0.0, %v1636
      %v1638 = vpop.f32.mrf.mxu0
      %1639 = vdwg.mxu0
      %v1640 = vadd.f32 %v1515, %v1634
      %v1641 = vadd.f32 %v1516, %v1637
      %v1642 = vadd.f32 %v284, %v1640
      %v1643 = vadd.f32 %v285, %v1641
      %v1644 = vpack.c.bf16 %v1643, %v1642
      %v1646 = vunpack.c.l.b16 %v1644
      %v1647 = vunpack.c.h.b16 %v1644
      %v1648 = vpack.c.b16 %v1646, %v1646
      %v1649 = vpack.c.b16 %v1647, %v1647
      %1652 = vst [vmem:[%s278] sm:$0xf] %v1648
      %v1653 = vld [vmem:[%s278 + $0x4] sm:$0x1]
      %v1654 = vsel %vm446, %v1649, %v1653
      %1655 = vst [vmem:[%s278 + $0x4] sm:$0x1] %v1654
      %p1656 = scmp.lt.s32.totalorder %s18, 1
      %s1657 = scalar_select %p1656, %s18, 1
      %s1658 = smul.addr %s1657, 2
      %s1659 = smul.addr %s1658, 4
      %s1660 = scalar_lea.vmem %s7, %s1659
      // Predicated region
      $region49: #{_lambda_.14} parent=47 // pred_check
        %p1661 = pneg %p188
      $region50: #{_lambda_.14} parent=47 // pred_check_branch
        %1663 = sbr.rel (%p1661) target = $region52
      $region51: #{_lambda_.14} parent=47 // pred_region
        _
      $region52: #{_lambda_.14} parent=47 // pred_fallthru
        _
    $region48: #{_lambda_.14} parent=5 // pred_fallthru
      _
    %p1664 = scmp.le.s32.totalorder 2, %s13
    // Predicated region
    $region53: #{_lambda_.14} parent=5 // pred_check
      %p1665 = pneg %p1664
    $region54: #{_lambda_.14} parent=5 // pred_check_branch
      %1667 = sbr.rel (%p1665) target = $region56
    $region55: #{_lambda_.14} parent=5 // pred_region
      %s1668 = ssub.s32 %s13, 2
      // Predicated region
      $region57: #{_lambda_.14} parent=55 // pred_check
        %p1669 = pneg %p194
      $region58: #{_lambda_.14} parent=55 // pred_check_branch
        %1671 = sbr.rel (%p1669) target = $region60
      $region59: #{_lambda_.14} parent=55 // pred_region
        %p1672 = scmp.lt.s32.totalorder %s19, 1
        %s1673 = scalar_select %p1672, %s19, 1
        %s1674 = smul.addr %s1673, 2
        %s1675 = smul.addr %s1674, 4
        %s1676 = scalar_lea.vmem %s7, %s1675
      $region60: #{_lambda_.14} parent=55 // pred_fallthru
        _
    $region56: #{_lambda_.14} parent=5 // pred_fallthru
      _
  $region6: #{_lambda_.14} parent=0 // loop_footer
    %s17 = sadd.s32 1, %s13
  $region7: #{_lambda_.14} parent=0 // loop_footer_branch
    %12 = sbr.rel target = $region3
  $region8: #{_lambda_.14} parent=0 // loop_exit
    _

// kernel: _lambda_.16
$region0: #{_lambda_.16}
  #allocation0 [shape = 'u32[]', space=smem, size = 0x4, offset = 0x4, fixed_abs, tag = 'smem constant byte address 0x4 - core index']
  #allocation1 [shape = 'u32[144,128]{1,0:T(1,128)}', space=vmem, size = 0x12000, scoped, tag = 'internal scratch']
  %s0 = inlined_call_operand.vmem [shape: bf16[2,9,128], index: 0, kind: input, shape index: {}]
  %s1 = inlined_call_operand.vmem [shape: f32[1,9], index: 1, kind: input, shape index: {}]
  %s2 = inlined_call_operand.vmem [shape: f32[1,128], index: 2, kind: input, shape index: {}]
  %s3 = inlined_call_operand.vmem [shape: f32[1,128], index: 3, kind: input, shape index: {}]
  %s4 = inlined_call_operand.vmem [shape: bf16[128,128], index: 4, kind: input, shape index: {}]
  %s5 = inlined_call_operand.vmem [shape: bf16[2,1,128], index: 5, kind: output, shape index: {}]
  %s6 = sld [smem:[#allocation0]]
  $region53: #{_lambda_.16} parent=0
    _
  %s8 = ssub.s32 1, %s6
  %s9 = scalar_select 0, %s8, %s6
  loop: start=0, step=1, limit=4
  $region2: #{_lambda_.16} parent=0 // loop_pre_header
    _
  $region3: #{_lambda_.16} parent=0 // loop_header
    %s11 = sphi 0, %s15
    %p12 = scmp.ge.s32.totalorder %s11, 4
    %s21 = sphi 0, %s23
    %s24 = sphi 0, %s21
    %s25 = sphi 0, %s24
    %s41 = sphi 0, %s25
    %s45 = sphi 0, %s45
    %s47 = sphi 0, %s45
    %s48 = sphi 0, %s47
    %s62 = sphi 0, %s48
    %s66 = sphi 0, %s66
    %s68 = sphi 0, %s66
    %s69 = sphi 0, %s68
    %s83 = sphi 0, %s69
    %s87 = sphi 0, %s87
    %s89 = sphi 0, %s87
    %s90 = sphi 0, %s89
    %s104 = sphi 0, %s90
    %s108 = sphi 0, %s108
    %s110 = sphi 0, %s108
    %s111 = sphi 0, %s110
    %s125 = sphi 0, %s111
    %s131 = sphi 0, %s133
    %s134 = sphi 0, %s131
    %s135 = sphi 0, %s134
    %s151 = sphi 0, %s135
  $region4: #{_lambda_.16} parent=0 // loop_header_branch
    %14 = sbr.rel (%p12) target = $region8
  $region5: #{_lambda_.16} parent=0 // loop_body
    %s16 = ssub.s32 %s11, 1
    %s17 = ssub.s32 %s11, 2
    %s18 = sadd.s32 %s11, 1
    %s19 = ssub.s32 %s11, %s18
    %p20 = scmp.eq.s32.totalorder %s19, 0
    %s22 = sadd.s32 %s21, 1
    %s23 = scalar_select %p20, %s21, %s22
    %p26 = pneg %p20
    %p27 = scmp.eq.s32.totalorder %s11, 1
    %p28 = por %p26, %p27
    %p29 = scmp.ne.s32.totalorder %s21, %s24
    %p30 = scmp.eq.s32.totalorder %s11, 0
    %p31 = por %p29, %p30
    %p32 = scmp.ne.s32.totalorder %s21, %s24
    %p33 = scmp.eq.s32.totalorder %s16, 1
    %p34 = por %p32, %p33
    %p35 = scmp.ne.s32.totalorder %s24, %s25
    %p36 = scmp.eq.s32.totalorder %s16, 0
    %p37 = por %p35, %p36
    %p38 = scmp.ne.s32.totalorder %s24, %s25
    %p39 = scmp.eq.s32.totalorder %s17, 1
    %p40 = por %p38, %p39
    %p42 = scmp.ne.s32.totalorder %s25, %s41
    %p43 = scmp.eq.s32.totalorder %s17, 0
    %p44 = por %p42, %p43
    %s46 = sadd.s32 %s45, 1
    %p49 = scmp.eq.s32.totalorder %s11, 1
    %p50 = scmp.ne.s32.totalorder %s45, %s47
    %p51 = scmp.eq.s32.totalorder %s11, 0
    %p52 = por %p50, %p51
    %p53 = scmp.ne.s32.totalorder %s45, %s47
    %p54 = scmp.eq.s32.totalorder %s16, 1
    %p55 = por %p53, %p54
    %p56 = scmp.ne.s32.totalorder %s47, %s48
    %p57 = scmp.eq.s32.totalorder %s16, 0
    %p58 = por %p56, %p57
    %p59 = scmp.ne.s32.totalorder %s47, %s48
    %p60 = scmp.eq.s32.totalorder %s17, 1
    %p61 = por %p59, %p60
    %p63 = scmp.ne.s32.totalorder %s48, %s62
    %p64 = scmp.eq.s32.totalorder %s17, 0
    %p65 = por %p63, %p64
    %s67 = sadd.s32 %s66, 1
    %p70 = scmp.eq.s32.totalorder %s11, 1
    %p71 = scmp.ne.s32.totalorder %s66, %s68
    %p72 = scmp.eq.s32.totalorder %s11, 0
    %p73 = por %p71, %p72
    %p74 = scmp.ne.s32.totalorder %s66, %s68
    %p75 = scmp.eq.s32.totalorder %s16, 1
    %p76 = por %p74, %p75
    %p77 = scmp.ne.s32.totalorder %s68, %s69
    %p78 = scmp.eq.s32.totalorder %s16, 0
    %p79 = por %p77, %p78
    %p80 = scmp.ne.s32.totalorder %s68, %s69
    %p81 = scmp.eq.s32.totalorder %s17, 1
    %p82 = por %p80, %p81
    %p84 = scmp.ne.s32.totalorder %s69, %s83
    %p85 = scmp.eq.s32.totalorder %s17, 0
    %p86 = por %p84, %p85
    %s88 = sadd.s32 %s87, 1
    %p91 = scmp.eq.s32.totalorder %s11, 1
    %p92 = scmp.ne.s32.totalorder %s87, %s89
    %p93 = scmp.eq.s32.totalorder %s11, 0
    %p94 = por %p92, %p93
    %p95 = scmp.ne.s32.totalorder %s87, %s89
    %p96 = scmp.eq.s32.totalorder %s16, 1
    %p97 = por %p95, %p96
    %p98 = scmp.ne.s32.totalorder %s89, %s90
    %p99 = scmp.eq.s32.totalorder %s16, 0
    %p100 = por %p98, %p99
    %p101 = scmp.ne.s32.totalorder %s89, %s90
    %p102 = scmp.eq.s32.totalorder %s17, 1
    %p103 = por %p101, %p102
    %p105 = scmp.ne.s32.totalorder %s90, %s104
    %p106 = scmp.eq.s32.totalorder %s17, 0
    %p107 = por %p105, %p106
    %s109 = sadd.s32 %s108, 1
    %p112 = scmp.eq.s32.totalorder %s11, 1
    %p113 = scmp.ne.s32.totalorder %s108, %s110
    %p114 = scmp.eq.s32.totalorder %s11, 0
    %p115 = por %p113, %p114
    %p116 = scmp.ne.s32.totalorder %s108, %s110
    %p117 = scmp.eq.s32.totalorder %s16, 1
    %p118 = por %p116, %p117
    %p119 = scmp.ne.s32.totalorder %s110, %s111
    %p120 = scmp.eq.s32.totalorder %s16, 0
    %p121 = por %p119, %p120
    %p122 = scmp.ne.s32.totalorder %s110, %s111
    %p123 = scmp.eq.s32.totalorder %s17, 1
    %p124 = por %p122, %p123
    %p126 = scmp.ne.s32.totalorder %s111, %s125
    %p127 = scmp.eq.s32.totalorder %s17, 0
    %p128 = por %p126, %p127
    %s129 = ssub.s32 %s11, %s18
    %p130 = scmp.eq.s32.totalorder %s129, 0
    %s132 = sadd.s32 %s131, 1
    %s133 = scalar_select %p130, %s131, %s132
    %p136 = pneg %p130
    %p137 = scmp.eq.s32.totalorder %s11, 1
    %p138 = por %p136, %p137
    %p139 = scmp.ne.s32.totalorder %s131, %s134
    %p140 = scmp.eq.s32.totalorder %s11, 0
    %p141 = por %p139, %p140
    %p142 = scmp.ne.s32.totalorder %s131, %s134
    %p143 = scmp.eq.s32.totalorder %s16, 1
    %p144 = por %p142, %p143
    %p145 = scmp.ne.s32.totalorder %s134, %s135
    %p146 = scmp.eq.s32.totalorder %s16, 0
    %p147 = por %p145, %p146
    %p148 = scmp.ne.s32.totalorder %s134, %s135
    %p149 = scmp.eq.s32.totalorder %s17, 1
    %p150 = por %p148, %p149
    %p152 = scmp.ne.s32.totalorder %s135, %s151
    %p153 = scmp.eq.s32.totalorder %s17, 0
    %p154 = por %p152, %p153
    %p155 = scmp.le.s32.totalorder 1, %s11
    %p156 = scmp.lt.s32.totalorder %s11, 3
    %p157 = pnand %p155, %p156
    %p158 = pneg %p157
    // Predicated region
    $region9: #{_lambda_.16} parent=5 // pred_check
      _
    $region10: #{_lambda_.16} parent=5 // pred_check_branch
      %160 = sbr.rel (%p157) target = $region12
    $region11: #{_lambda_.16} parent=5 // pred_region
      %s161 = ssub.s32 %s11, 1
      // Predicated region
      $region13: #{_lambda_.16} parent=11 // pred_check
        %p162 = pneg %p58
      $region14: #{_lambda_.16} parent=11 // pred_check_branch
        %164 = sbr.rel (%p162) target = $region16
      $region15: #{_lambda_.16} parent=11 // pred_region
        _
      $region16: #{_lambda_.16} parent=11 // pred_fallthru
        _
      // Predicated region
      $region17: #{_lambda_.16} parent=11 // pred_check
        %p165 = pneg %p79
      $region18: #{_lambda_.16} parent=11 // pred_check_branch
        %167 = sbr.rel (%p165) target = $region20
      $region19: #{_lambda_.16} parent=11 // pred_region
        _
      $region20: #{_lambda_.16} parent=11 // pred_fallthru
        _
      // Predicated region
      $region21: #{_lambda_.16} parent=11 // pred_check
        %p168 = pneg %p100
      $region22: #{_lambda_.16} parent=11 // pred_check_branch
        %170 = sbr.rel (%p168) target = $region24
      $region23: #{_lambda_.16} parent=11 // pred_region
        _
      $region24: #{_lambda_.16} parent=11 // pred_fallthru
        _
      // Predicated region
      $region25: #{_lambda_.16} parent=11 // pred_check
        %p171 = pneg %p121
      $region26: #{_lambda_.16} parent=11 // pred_check_branch
        %173 = sbr.rel (%p171) target = $region28
      $region27: #{_lambda_.16} parent=11 // pred_region
        _
      $region28: #{_lambda_.16} parent=11 // pred_fallthru
        _
    $region12: #{_lambda_.16} parent=5 // pred_fallthru
      _
    %p174 = scmp.lt.s32.totalorder %s11, 2
    // Predicated region
    $region29: #{_lambda_.16} parent=5 // pred_check
      %p175 = pneg %p174
    $region30: #{_lambda_.16} parent=5 // pred_check_branch
      %177 = sbr.rel (%p175) target = $region32
    $region31: #{_lambda_.16} parent=5 // pred_region
      // Predicated region
      $region33: #{_lambda_.16} parent=31 // pred_check
        %p178 = pneg %p31
      $region34: #{_lambda_.16} parent=31 // pred_check_branch
        %180 = sbr.rel (%p178) target = $region36
      $region35: #{_lambda_.16} parent=31 // pred_region
        %p181 = scmp.lt.s32.totalorder %s11, 1
        %s182 = scalar_select %p181, %s11, 1
        %s183 = smul.addr %s182, 2
        %s184 = smul.addr %s183, 4
        %s185 = scalar_lea.vmem %s0, %s184
      $region36: #{_lambda_.16} parent=31 // pred_fallthru
        _
    $region32: #{_lambda_.16} parent=5 // pred_fallthru
      _
    %p186 = scmp.le.s32.totalorder 1, %s11
    %p187 = scmp.lt.s32.totalorder %s11, 3
    %p188 = pnand %p186, %p187
    %p189 = pneg %p188
    // Predicated region
    $region37: #{_lambda_.16} parent=5 // pred_check
      _
    $region38: #{_lambda_.16} parent=5 // pred_check_branch
      %191 = sbr.rel (%p188) target = $region40
    $region39: #{_lambda_.16} parent=5 // pred_region
      %s192 = ssub.s32 %s11, 1
      %p193 = scmp.lt.s32.totalorder %s16, 1
      %s194 = scalar_select %p193, %s16, 1
      %s195 = smul.addr %s194, 2
      %s196 = smul.addr %s195, 4
      %s197 = scalar_lea.vmem %s0, %s196
      %p198 = pneg %p37
      %p199 = pneg %p34
      %p200 = pneg %p58
      %p201 = pneg %p55
      %p202 = pneg %p79
      %p203 = pneg %p76
      %p204 = pneg %p100
      %p205 = pneg %p97
      %p206 = pneg %p121
      %p207 = pneg %p118
      %p208 = pneg %p147
      %p209 = pneg %p144
      %p210 = scmp.lt.s32.totalorder %s16, 1
      %s211 = scalar_select %p210, %s16, 1
      %s212 = scalar_lea.vmem %s5, %s211
      %p213 = scmp.lt.s32.totalorder %s16, 1
      %s214 = scalar_select %p213, %s16, 1
      %s215 = smul.addr %s214, 2
      %s216 = smul.addr %s215, 4
      %s217 = scalar_lea.vmem %s0, %s216
      %p218 = scmp.lt.s32.totalorder %s16, 1
      %s219 = scalar_select %p218, %s16, 1
      %s220 = scalar_lea.vmem %s5, %s219
      %v222 = vld [vmem:[%s217] sm:$0xf]
      %v223 = vld [vmem:[%s217 + $0x4] sm:$0x1]
      %v224 = vunpack.c.l.bf16 %v222
      %v225 = vunpack.c.l.bf16 %v223
      %v226 = vld [vmem:[%s2] sm:$0x1]
      %v228 = vlaneseq
      %v229 = vshrl.u32 %v228, 7
      %v230 = vsub.s32 0, %v229
      %v231 = vrot.slane %v226, %v230
      %v233 = vmul.f32 %v224, %v231
      %v234 = vmul.f32 %v225, %v231
      %v235 = vld [vmem:[%s3] sm:$0x1]
      %v237 = vlaneseq
      %v238 = vshrl.u32 %v237, 7
      %v239 = vsub.s32 0, %v238
      %v240 = vrot.slane %v235, %v239
      %v242 = vadd.f32 %v233, %v240
      %v243 = vadd.f32 %v234, %v240
      %v244 = vmax.f32 %v242, 0.0
      %v245 = vmax.f32 %v243, 0.0
      %v246 = vld [vmem:[%s1] sm:$0x1]
      %vm247 = vcmask 72704
      %v249 = vsel %vm247, %v246, 0
      %vm251 = vcmask 1040384
      %v253 = vsel %vm251, %v245, 0
      %255 = vmatprep.subr.mxu0 0.0
      %256 = vmatpush1.msra.mxu0 0.0
      %257 = vmatprep.subr.mxu0 0.0
      %258 = vmatpush1.msra.mxu0 0.0
      %259 = vmatprep.subr.mxu0 0.0
      %260 = vmatpush1.msra.mxu0 0.0
      %261 = vmatprep.subr.mxu0 0.0
      %262 = vmatpush1.msra.mxu0 0.0
      %263 = vmatprep.subr.mxu0 0.0
      %264 = vmatpush1.msra.mxu0 0.0
      %265 = vmatprep.subr.mxu0 0.0
      %266 = vmatpush1.msra.mxu0 0.0
      %267 = vmatprep.subr.mxu0 0.0
      %268 = vmatpush1.msra.mxu0 0.0
      %269 = vmatprep.subr.mxu0 0.0
      %270 = vmatpush1.msra.mxu0 0.0
      %271 = vmatprep.subr.mxu0 0.0
      %272 = vmatpush1.msra.mxu0 0.0
      %273 = vmatprep.subr.mxu0 0.0
      %274 = vmatpush1.msra.mxu0 0.0
      %275 = vmatprep.subr.mxu0 0.0
      %276 = vmatpush1.msra.mxu0 0.0
      %277 = vmatprep.subr.mxu0 0.0
      %278 = vmatpush1.msra.mxu0 0.0
      %279 = vmatprep.subr.mxu0 0.0
      %280 = vmatpush1.msra.mxu0 0.0
      %281 = vmatprep.subr.mxu0 0.0
      %282 = vmatpush1.msra.mxu0 0.0
      %283 = vmatprep.subr.mxu0 0.0
      %284 = vmatpush1.msra.mxu0 %v253
      %285 = vmatprep.subr.mxu0 0.0
      %286 = vmatpush1.msra.mxu0 %v244
      %287 = vmatprep.subr.mxu0 0.0
      %288 = vmatpush2.msra.mxu0 0.0
      %289 = vmatprep.subr.mxu0 0.0
      %290 = vmatpush2.msra.mxu0 0.0
      %291 = vmatprep.subr.mxu0 0.0
      %292 = vmatpush2.msra.mxu0 0.0
      %293 = vmatprep.subr.mxu0 0.0
      %294 = vmatpush2.msra.mxu0 0.0
      %295 = vmatprep.subr.mxu0 0.0
      %296 = vmatpush2.msra.mxu0 0.0
      %297 = vmatprep.subr.mxu0 0.0
      %298 = vmatpush2.msra.mxu0 0.0
      %299 = vmatprep.subr.mxu0 0.0
      %300 = vmatpush2.msra.mxu0 0.0
      %301 = vmatprep.subr.mxu0 0.0
      %302 = vmatpush2.msra.mxu0 0.0
      %303 = vmatprep.subr.mxu0 0.0
      %304 = vmatpush2.msra.mxu0 0.0
      %305 = vmatprep.subr.mxu0 0.0
      %306 = vmatpush2.msra.mxu0 0.0
      %307 = vmatprep.subr.mxu0 0.0
      %308 = vmatpush2.msra.mxu0 0.0
      %309 = vmatprep.subr.mxu0 0.0
      %310 = vmatpush2.msra.mxu0 0.0
      %311 = vmatprep.subr.mxu0 0.0
      %312 = vmatpush2.msra.mxu0 0.0
      %313 = vmatprep.subr.mxu0 0.0
      %314 = vmatpush2.msra.mxu0 0.0
      %315 = vmatprep.subr.mxu0 0.0
      %316 = vmatpush2.msra.mxu0 0.0
      %317 = vmatprep.subr.mxu0 0.0
      %318 = vmatpush2.msra.mxu0 0.0
      %319 = vmatprep.mubr.f32.mxu0 0.0
      %320 = vmatmul.mubr.f32.gmra.mxu0 %v249
      %v321 = vpop.f32.mrf.mxu0
      %v322 = vadd.f32 0.0, %v321
      %v323 = vpop.f32.mrf.mxu0
      %324 = vdwg.mxu0
      %v325 = vpack.c.bf16 %v322, %v322
      %v326 = vld [vmem:[%s4] sm:$0xf]
      %v327 = vld [vmem:[%s4 + $0x4] sm:$0xf]
      %v328 = vld [vmem:[%s4 + $0x8] sm:$0xf]
      %v329 = vld [vmem:[%s4 + $0xc] sm:$0xf]
      %v330 = vld [vmem:[%s4 + $0x10] sm:$0xf]
      %v331 = vld [vmem:[%s4 + $0x14] sm:$0xf]
      %v332 = vld [vmem:[%s4 + $0x18] sm:$0xf]
      %v333 = vld [vmem:[%s4 + $0x1c] sm:$0xf]
      %v334 = vld [vmem:[%s4 + $0x20] sm:$0xf]
      %v335 = vld [vmem:[%s4 + $0x24] sm:$0xf]
      %v336 = vld [vmem:[%s4 + $0x28] sm:$0xf]
      %v337 = vld [vmem:[%s4 + $0x2c] sm:$0xf]
      %v338 = vld [vmem:[%s4 + $0x30] sm:$0xf]
      %v339 = vld [vmem:[%s4 + $0x34] sm:$0xf]
      %v340 = vld [vmem:[%s4 + $0x38] sm:$0xf]
      %v341 = vld [vmem:[%s4 + $0x3c] sm:$0xf]
      %v358 = vunpack.c.l.b16 %v326
      %v359 = vunpack.c.l.b16 %v327
      %v360 = vunpack.c.l.b16 %v328
      %v361 = vunpack.c.l.b16 %v329
      %v362 = vunpack.c.l.b16 %v330
      %v363 = vunpack.c.l.b16 %v331
      %v364 = vunpack.c.l.b16 %v332
      %v365 = vunpack.c.l.b16 %v333
      %v366 = vunpack.c.l.b16 %v334
      %v367 = vunpack.c.l.b16 %v335
      %v368 = vunpack.c.l.b16 %v336
      %v369 = vunpack.c.l.b16 %v337
      %v370 = vunpack.c.l.b16 %v338
      %v371 = vunpack.c.l.b16 %v339
      %v372 = vunpack.c.l.b16 %v340
      %v373 = vunpack.c.l.b16 %v341
      %v374 = vpack.c.b16 %v359, %v358
      %v375 = vpack.c.b16 %v361, %v360
      %v376 = vpack.c.b16 %v363, %v362
      %v377 = vpack.c.b16 %v365, %v364
      %v378 = vpack.c.b16 %v367, %v366
      %v379 = vpack.c.b16 %v369, %v368
      %v380 = vpack.c.b16 %v371, %v370
      %v381 = vpack.c.b16 %v373, %v372
      %390 = vmatprep.subr.bf16.mxu0 0
      %391 = vmatpush1.bf16.msra.mxu0 %v381
      %392 = vmatprep.subr.bf16.mxu0 0
      %393 = vmatpush1.bf16.msra.mxu0 %v380
      %394 = vmatprep.subr.bf16.mxu0 0
      %395 = vmatpush1.bf16.msra.mxu0 %v379
      %396 = vmatprep.subr.bf16.mxu0 0
      %397 = vmatpush1.bf16.msra.mxu0 %v378
      %398 = vmatprep.subr.bf16.mxu0 0
      %399 = vmatpush1.bf16.msra.mxu0 %v377
      %400 = vmatprep.subr.bf16.mxu0 0
      %401 = vmatpush1.bf16.msra.mxu0 %v376
      %402 = vmatprep.subr.bf16.mxu0 0
      %403 = vmatpush1.bf16.msra.mxu0 %v375
      %404 = vmatprep.subr.bf16.mxu0 0
      %405 = vmatpush1.bf16.msra.mxu0 %v374
      %406 = vmatprep.subr.bf16.mxu0 0
      %407 = vmatpush2.bf16.msra.mxu0 0
      %408 = vmatprep.subr.bf16.mxu0 0
      %409 = vmatpush2.bf16.msra.mxu0 0
      %410 = vmatprep.subr.bf16.mxu0 0
      %411 = vmatpush2.bf16.msra.mxu0 0
      %412 = vmatprep.subr.bf16.mxu0 0
      %413 = vmatpush2.bf16.msra.mxu0 0
      %414 = vmatprep.subr.bf16.mxu0 0
      %415 = vmatpush2.bf16.msra.mxu0 0
      %416 = vmatprep.subr.bf16.mxu0 0
      %417 = vmatpush2.bf16.msra.mxu0 0
      %418 = vmatprep.subr.bf16.mxu0 0
      %419 = vmatpush2.bf16.msra.mxu0 0
      %420 = vmatprep.subr.bf16.mxu0 0
      %421 = vmatpush2.bf16.msra.mxu0 0
      %422 = vmatprep.mubr.bf16.mxu0 0
      %423 = vmatmul.mubr.bf16.gmra.mxu0 %v325
      %v424 = vpop.f32.mrf.mxu0
      %v425 = vadd.f32 0.0, %v424
      %v426 = vpop.f32.mrf.mxu0
      %v427 = vpop.f32.mrf.mxu0
      %v428 = vpop.f32.mrf.mxu0
      %429 = vdwg.mxu0
      %v430 = vpack.c.bf16 %v425, %v425
      %vm431 = vcmask 1040384
      %vm432 = vsmask.f32 256
      %vm433 = vmand %vm431, %vm432
      %v434 = vld [vmem:[%s220] sm:$0x1]
      %v435 = vsel %vm433, %v430, %v434
      %436 = vst [vmem:[%s220] sm:$0x1] %v435
      %p437 = scmp.lt.s32.totalorder %s16, 1
      %s438 = scalar_select %p437, %s16, 1
      %s439 = scalar_lea.vmem %s5, %s438
      // Predicated region
      $region41: #{_lambda_.16} parent=39 // pred_check
        %p440 = pneg %p144
      $region42: #{_lambda_.16} parent=39 // pred_check_branch
        %442 = sbr.rel (%p440) target = $region44
      $region43: #{_lambda_.16} parent=39 // pred_region
        _
      $region44: #{_lambda_.16} parent=39 // pred_fallthru
        _
    $region40: #{_lambda_.16} parent=5 // pred_fallthru
      _
    %p443 = scmp.le.s32.totalorder 2, %s11
    // Predicated region
    $region45: #{_lambda_.16} parent=5 // pred_check
      %p444 = pneg %p443
    $region46: #{_lambda_.16} parent=5 // pred_check_branch
      %446 = sbr.rel (%p444) target = $region48
    $region47: #{_lambda_.16} parent=5 // pred_region
      %s447 = ssub.s32 %s11, 2
      // Predicated region
      $region49: #{_lambda_.16} parent=47 // pred_check
        %p448 = pneg %p150
      $region50: #{_lambda_.16} parent=47 // pred_check_branch
        %450 = sbr.rel (%p448) target = $region52
      $region51: #{_lambda_.16} parent=47 // pred_region
        %p451 = scmp.lt.s32.totalorder %s17, 1
        %s452 = scalar_select %p451, %s17, 1
        %s453 = scalar_lea.vmem %s5, %s452
      $region52: #{_lambda_.16} parent=47 // pred_fallthru
        _
    $region48: #{_lambda_.16} parent=5 // pred_fallthru
      _
  $region6: #{_lambda_.16} parent=0 // loop_footer
    %s15 = sadd.s32 1, %s11
  $region7: #{_lambda_.16} parent=0 // loop_footer_branch
    %10 = sbr.rel target = $region3
  $region8: #{_lambda_.16} parent=0 // loop_exit
    _

// kernel: _lambda_.11
$region0: #{_lambda_.11}
  #allocation0 [shape = 'u32[]', space=smem, size = 0x4, offset = 0x4, fixed_abs, tag = 'smem constant byte address 0x4 - core index']
  #allocation1 [shape = 'u32[144,128]{1,0:T(1,128)}', space=vmem, size = 0x12000, scoped, tag = 'internal scratch']
  #allocation2 [shape = 'bf16[56,128]{1,0:T(8,128)(2,1)}', space=vmem, size = 0x3800, scoped, tag = 'scratch operand']
  %s0 = inlined_call_operand.vmem [shape: bf16[2,36,128], index: 0, kind: input, shape index: {}, may-alias: {0,7}]
  %s1 = inlined_call_operand.vmem [shape: f32[1,128], index: 1, kind: input, shape index: {}]
  %s2 = inlined_call_operand.vmem [shape: f32[1,128], index: 2, kind: input, shape index: {}, may-alias: {2,5}]
  %s3 = inlined_call_operand.vmem [shape: bf16[128,128], index: 3, kind: input, shape index: {}]
  %s4 = inlined_call_operand.vmem [shape: f32[1,128], index: 4, kind: input, shape index: {}]
  %s5 = inlined_call_operand.vmem [shape: f32[1,128], index: 5, kind: input, shape index: {}, may-alias: {2,5}]
  %s6 = inlined_call_operand.vmem [shape: bf16[9,128,128], index: 6, kind: input, shape index: {}]
  %s7 = inlined_call_operand.vmem [shape: bf16[2,36,128], index: 7, kind: output, shape index: {}, may-alias: {0,7}]
  %s8 = sld [smem:[#allocation0]]
  $region61: #{_lambda_.11} parent=0
    _
  %s10 = ssub.s32 1, %s8
  %s11 = scalar_select 0, %s10, %s8
  loop: start=0, step=1, limit=4
  $region2: #{_lambda_.11} parent=0 // loop_pre_header
    _
  $region3: #{_lambda_.11} parent=0 // loop_header
    %s13 = sphi 0, %s17
    %p14 = scmp.ge.s32.totalorder %s13, 4
    %s23 = sphi 0, %s25
    %s26 = sphi 0, %s23
    %s27 = sphi 0, %s26
    %s43 = sphi 0, %s27
    %s47 = sphi 0, %s47
    %s49 = sphi 0, %s47
    %s50 = sphi 0, %s49
    %s64 = sphi 0, %s50
    %s68 = sphi 0, %s68
    %s70 = sphi 0, %s68
    %s71 = sphi 0, %s70
    %s85 = sphi 0, %s71
    %s89 = sphi 0, %s89
    %s91 = sphi 0, %s89
    %s92 = sphi 0, %s91
    %s106 = sphi 0, %s92
    %s110 = sphi 0, %s110
    %s112 = sphi 0, %s110
    %s113 = sphi 0, %s112
    %s127 = sphi 0, %s113
    %s131 = sphi 0, %s131
    %s133 = sphi 0, %s131
    %s134 = sphi 0, %s133
    %s148 = sphi 0, %s134
    %s152 = sphi 0, %s152
    %s154 = sphi 0, %s152
    %s155 = sphi 0, %s154
    %s169 = sphi 0, %s155
    %s175 = sphi 0, %s177
    %s178 = sphi 0, %s175
    %s179 = sphi 0, %s178
    %s195 = sphi 0, %s179
  $region4: #{_lambda_.11} parent=0 // loop_header_branch
    %16 = sbr.rel (%p14) target = $region8
  $region5: #{_lambda_.11} parent=0 // loop_body
    %s18 = ssub.s32 %s13, 1
    %s19 = ssub.s32 %s13, 2
    %s20 = sadd.s32 %s13, 1
    %s21 = ssub.s32 %s13, %s20
    %p22 = scmp.eq.s32.totalorder %s21, 0
    %s24 = sadd.s32 %s23, 1
    %s25 = scalar_select %p22, %s23, %s24
    %p28 = pneg %p22
    %p29 = scmp.eq.s32.totalorder %s13, 1
    %p30 = por %p28, %p29
    %p31 = scmp.ne.s32.totalorder %s23, %s26
    %p32 = scmp.eq.s32.totalorder %s13, 0
    %p33 = por %p31, %p32
    %p34 = scmp.ne.s32.totalorder %s23, %s26
    %p35 = scmp.eq.s32.totalorder %s18, 1
    %p36 = por %p34, %p35
    %p37 = scmp.ne.s32.totalorder %s26, %s27
    %p38 = scmp.eq.s32.totalorder %s18, 0
    %p39 = por %p37, %p38
    %p40 = scmp.ne.s32.totalorder %s26, %s27
    %p41 = scmp.eq.s32.totalorder %s19, 1
    %p42 = por %p40, %p41
    %p44 = scmp.ne.s32.totalorder %s27, %s43
    %p45 = scmp.eq.s32.totalorder %s19, 0
    %p46 = por %p44, %p45
    %s48 = sadd.s32 %s47, 1
    %p51 = scmp.eq.s32.totalorder %s13, 1
    %p52 = scmp.ne.s32.totalorder %s47, %s49
    %p53 = scmp.eq.s32.totalorder %s13, 0
    %p54 = por %p52, %p53
    %p55 = scmp.ne.s32.totalorder %s47, %s49
    %p56 = scmp.eq.s32.totalorder %s18, 1
    %p57 = por %p55, %p56
    %p58 = scmp.ne.s32.totalorder %s49, %s50
    %p59 = scmp.eq.s32.totalorder %s18, 0
    %p60 = por %p58, %p59
    %p61 = scmp.ne.s32.totalorder %s49, %s50
    %p62 = scmp.eq.s32.totalorder %s19, 1
    %p63 = por %p61, %p62
    %p65 = scmp.ne.s32.totalorder %s50, %s64
    %p66 = scmp.eq.s32.totalorder %s19, 0
    %p67 = por %p65, %p66
    %s69 = sadd.s32 %s68, 1
    %p72 = scmp.eq.s32.totalorder %s13, 1
    %p73 = scmp.ne.s32.totalorder %s68, %s70
    %p74 = scmp.eq.s32.totalorder %s13, 0
    %p75 = por %p73, %p74
    %p76 = scmp.ne.s32.totalorder %s68, %s70
    %p77 = scmp.eq.s32.totalorder %s18, 1
    %p78 = por %p76, %p77
    %p79 = scmp.ne.s32.totalorder %s70, %s71
    %p80 = scmp.eq.s32.totalorder %s18, 0
    %p81 = por %p79, %p80
    %p82 = scmp.ne.s32.totalorder %s70, %s71
    %p83 = scmp.eq.s32.totalorder %s19, 1
    %p84 = por %p82, %p83
    %p86 = scmp.ne.s32.totalorder %s71, %s85
    %p87 = scmp.eq.s32.totalorder %s19, 0
    %p88 = por %p86, %p87
    %s90 = sadd.s32 %s89, 1
    %p93 = scmp.eq.s32.totalorder %s13, 1
    %p94 = scmp.ne.s32.totalorder %s89, %s91
    %p95 = scmp.eq.s32.totalorder %s13, 0
    %p96 = por %p94, %p95
    %p97 = scmp.ne.s32.totalorder %s89, %s91
    %p98 = scmp.eq.s32.totalorder %s18, 1
    %p99 = por %p97, %p98
    %p100 = scmp.ne.s32.totalorder %s91, %s92
    %p101 = scmp.eq.s32.totalorder %s18, 0
    %p102 = por %p100, %p101
    %p103 = scmp.ne.s32.totalorder %s91, %s92
    %p104 = scmp.eq.s32.totalorder %s19, 1
    %p105 = por %p103, %p104
    %p107 = scmp.ne.s32.totalorder %s92, %s106
    %p108 = scmp.eq.s32.totalorder %s19, 0
    %p109 = por %p107, %p108
    %s111 = sadd.s32 %s110, 1
    %p114 = scmp.eq.s32.totalorder %s13, 1
    %p115 = scmp.ne.s32.totalorder %s110, %s112
    %p116 = scmp.eq.s32.totalorder %s13, 0
    %p117 = por %p115, %p116
    %p118 = scmp.ne.s32.totalorder %s110, %s112
    %p119 = scmp.eq.s32.totalorder %s18, 1
    %p120 = por %p118, %p119
    %p121 = scmp.ne.s32.totalorder %s112, %s113
    %p122 = scmp.eq.s32.totalorder %s18, 0
    %p123 = por %p121, %p122
    %p124 = scmp.ne.s32.totalorder %s112, %s113
    %p125 = scmp.eq.s32.totalorder %s19, 1
    %p126 = por %p124, %p125
    %p128 = scmp.ne.s32.totalorder %s113, %s127
    %p129 = scmp.eq.s32.totalorder %s19, 0
    %p130 = por %p128, %p129
    %s132 = sadd.s32 %s131, 1
    %p135 = scmp.eq.s32.totalorder %s13, 1
    %p136 = scmp.ne.s32.totalorder %s131, %s133
    %p137 = scmp.eq.s32.totalorder %s13, 0
    %p138 = por %p136, %p137
    %p139 = scmp.ne.s32.totalorder %s131, %s133
    %p140 = scmp.eq.s32.totalorder %s18, 1
    %p141 = por %p139, %p140
    %p142 = scmp.ne.s32.totalorder %s133, %s134
    %p143 = scmp.eq.s32.totalorder %s18, 0
    %p144 = por %p142, %p143
    %p145 = scmp.ne.s32.totalorder %s133, %s134
    %p146 = scmp.eq.s32.totalorder %s19, 1
    %p147 = por %p145, %p146
    %p149 = scmp.ne.s32.totalorder %s134, %s148
    %p150 = scmp.eq.s32.totalorder %s19, 0
    %p151 = por %p149, %p150
    %s153 = sadd.s32 %s152, 1
    %p156 = scmp.eq.s32.totalorder %s13, 1
    %p157 = scmp.ne.s32.totalorder %s152, %s154
    %p158 = scmp.eq.s32.totalorder %s13, 0
    %p159 = por %p157, %p158
    %p160 = scmp.ne.s32.totalorder %s152, %s154
    %p161 = scmp.eq.s32.totalorder %s18, 1
    %p162 = por %p160, %p161
    %p163 = scmp.ne.s32.totalorder %s154, %s155
    %p164 = scmp.eq.s32.totalorder %s18, 0
    %p165 = por %p163, %p164
    %p166 = scmp.ne.s32.totalorder %s154, %s155
    %p167 = scmp.eq.s32.totalorder %s19, 1
    %p168 = por %p166, %p167
    %p170 = scmp.ne.s32.totalorder %s155, %s169
    %p171 = scmp.eq.s32.totalorder %s19, 0
    %p172 = por %p170, %p171
    %s173 = ssub.s32 %s13, %s20
    %p174 = scmp.eq.s32.totalorder %s173, 0
    %s176 = sadd.s32 %s175, 1
    %s177 = scalar_select %p174, %s175, %s176
    %p180 = pneg %p174
    %p181 = scmp.eq.s32.totalorder %s13, 1
    %p182 = por %p180, %p181
    %p183 = scmp.ne.s32.totalorder %s175, %s178
    %p184 = scmp.eq.s32.totalorder %s13, 0
    %p185 = por %p183, %p184
    %p186 = scmp.ne.s32.totalorder %s175, %s178
    %p187 = scmp.eq.s32.totalorder %s18, 1
    %p188 = por %p186, %p187
    %p189 = scmp.ne.s32.totalorder %s178, %s179
    %p190 = scmp.eq.s32.totalorder %s18, 0
    %p191 = por %p189, %p190
    %p192 = scmp.ne.s32.totalorder %s178, %s179
    %p193 = scmp.eq.s32.totalorder %s19, 1
    %p194 = por %p192, %p193
    %p196 = scmp.ne.s32.totalorder %s179, %s195
    %p197 = scmp.eq.s32.totalorder %s19, 0
    %p198 = por %p196, %p197
    %p199 = scmp.le.s32.totalorder 1, %s13
    %p200 = scmp.lt.s32.totalorder %s13, 3
    %p201 = pnand %p199, %p200
    %p202 = pneg %p201
    // Predicated region
    $region9: #{_lambda_.11} parent=5 // pred_check
      _
    $region10: #{_lambda_.11} parent=5 // pred_check_branch
      %204 = sbr.rel (%p201) target = $region12
    $region11: #{_lambda_.11} parent=5 // pred_region
      %s205 = ssub.s32 %s13, 1
      // Predicated region
      $region13: #{_lambda_.11} parent=11 // pred_check
        %p206 = pneg %p60
      $region14: #{_lambda_.11} parent=11 // pred_check_branch
        %208 = sbr.rel (%p206) target = $region16
      $region15: #{_lambda_.11} parent=11 // pred_region
        _
      $region16: #{_lambda_.11} parent=11 // pred_fallthru
        _
      // Predicated region
      $region17: #{_lambda_.11} parent=11 // pred_check
        %p209 = pneg %p81
      $region18: #{_lambda_.11} parent=11 // pred_check_branch
        %211 = sbr.rel (%p209) target = $region20
      $region19: #{_lambda_.11} parent=11 // pred_region
        _
      $region20: #{_lambda_.11} parent=11 // pred_fallthru
        _
      // Predicated region
      $region21: #{_lambda_.11} parent=11 // pred_check
        %p212 = pneg %p102
      $region22: #{_lambda_.11} parent=11 // pred_check_branch
        %214 = sbr.rel (%p212) target = $region24
      $region23: #{_lambda_.11} parent=11 // pred_region
        _
      $region24: #{_lambda_.11} parent=11 // pred_fallthru
        _
      // Predicated region
      $region25: #{_lambda_.11} parent=11 // pred_check
        %p215 = pneg %p123
      $region26: #{_lambda_.11} parent=11 // pred_check_branch
        %217 = sbr.rel (%p215) target = $region28
      $region27: #{_lambda_.11} parent=11 // pred_region
        _
      $region28: #{_lambda_.11} parent=11 // pred_fallthru
        _
      // Predicated region
      $region29: #{_lambda_.11} parent=11 // pred_check
        %p218 = pneg %p144
      $region30: #{_lambda_.11} parent=11 // pred_check_branch
        %220 = sbr.rel (%p218) target = $region32
      $region31: #{_lambda_.11} parent=11 // pred_region
        _
      $region32: #{_lambda_.11} parent=11 // pred_fallthru
        _
      // Predicated region
      $region33: #{_lambda_.11} parent=11 // pred_check
        %p221 = pneg %p165
      $region34: #{_lambda_.11} parent=11 // pred_check_branch
        %223 = sbr.rel (%p221) target = $region36
      $region35: #{_lambda_.11} parent=11 // pred_region
        _
      $region36: #{_lambda_.11} parent=11 // pred_fallthru
        _
    $region12: #{_lambda_.11} parent=5 // pred_fallthru
      _
    %p224 = scmp.lt.s32.totalorder %s13, 2
    // Predicated region
    $region37: #{_lambda_.11} parent=5 // pred_check
      %p225 = pneg %p224
    $region38: #{_lambda_.11} parent=5 // pred_check_branch
      %227 = sbr.rel (%p225) target = $region40
    $region39: #{_lambda_.11} parent=5 // pred_region
      // Predicated region
      $region41: #{_lambda_.11} parent=39 // pred_check
        %p228 = pneg %p33
      $region42: #{_lambda_.11} parent=39 // pred_check_branch
        %230 = sbr.rel (%p228) target = $region44
      $region43: #{_lambda_.11} parent=39 // pred_region
        %p231 = scmp.lt.s32.totalorder %s13, 1
        %s232 = scalar_select %p231, %s13, 1
        %s233 = smul.addr %s232, 5
        %s234 = smul.addr %s233, 4
        %s235 = scalar_lea.vmem %s0, %s234
      $region44: #{_lambda_.11} parent=39 // pred_fallthru
        _
    $region40: #{_lambda_.11} parent=5 // pred_fallthru
      _
    %p236 = scmp.le.s32.totalorder 1, %s13
    %p237 = scmp.lt.s32.totalorder %s13, 3
    %p238 = pnand %p236, %p237
    %p239 = pneg %p238
    // Predicated region
    $region45: #{_lambda_.11} parent=5 // pred_check
      _
    $region46: #{_lambda_.11} parent=5 // pred_check_branch
      %241 = sbr.rel (%p238) target = $region48
    $region47: #{_lambda_.11} parent=5 // pred_region
      %s242 = ssub.s32 %s13, 1
      %p243 = scmp.lt.s32.totalorder %s18, 1
      %s244 = scalar_select %p243, %s18, 1
      %s245 = smul.addr %s244, 5
      %s246 = smul.addr %s245, 4
      %s247 = scalar_lea.vmem %s0, %s246
      %p248 = pneg %p39
      %p249 = pneg %p36
      %p250 = pneg %p60
      %p251 = pneg %p57
      %p252 = pneg %p81
      %p253 = pneg %p78
      %p254 = pneg %p102
      %p255 = pneg %p99
      %p256 = pneg %p123
      %p257 = pneg %p120
      %p258 = pneg %p144
      %p259 = pneg %p141
      %p260 = pneg %p165
      %p261 = pneg %p162
      %p262 = pneg %p191
      %p263 = pneg %p188
      %p264 = scmp.lt.s32.totalorder %s18, 1
      %s265 = scalar_select %p264, %s18, 1
      %s266 = smul.addr %s265, 5
      %s267 = smul.addr %s266, 4
      %s268 = scalar_lea.vmem %s7, %s267
      %p269 = scmp.lt.s32.totalorder %s18, 1
      %s270 = scalar_select %p269, %s18, 1
      %s271 = smul.addr %s270, 5
      %s272 = smul.addr %s271, 4
      %s273 = scalar_lea.vmem %s0, %s272
      %p274 = scmp.lt.s32.totalorder %s18, 1
      %s275 = scalar_select %p274, %s18, 1
      %s276 = smul.addr %s275, 5
      %s277 = smul.addr %s276, 4
      %s278 = scalar_lea.vmem %s7, %s277
      %v282 = vld [vmem:[%s273] sm:$0xf]
      %v283 = vld [vmem:[%s273 + $0x4] sm:$0xf]
      %v284 = vld [vmem:[%s273 + $0x8] sm:$0xf]
      %v285 = vld [vmem:[%s273 + $0xc] sm:$0xf]
      %v286 = vld [vmem:[%s273 + $0x10] sm:$0x3]
      %v287 = vunpack.c.l.bf16 %v282
      %v288 = vunpack.c.l.bf16 %v283
      %v289 = vunpack.c.l.bf16 %v284
      %v290 = vunpack.c.l.bf16 %v285
      %v291 = vunpack.c.l.bf16 %v286
      %v292 = vld [vmem:[%s1] sm:$0x1]
      %v294 = vlaneseq
      %v295 = vshrl.u32 %v294, 7
      %v296 = vsub.s32 0, %v295
      %v297 = vrot.slane %v292, %v296
      %v299 = vmul.f32 %v287, %v297
      %v300 = vmul.f32 %v288, %v297
      %v301 = vmul.f32 %v289, %v297
      %v302 = vmul.f32 %v290, %v297
      %v303 = vmul.f32 %v291, %v297
      %v304 = vld [vmem:[%s2] sm:$0x1]
      %v306 = vlaneseq
      %v307 = vshrl.u32 %v306, 7
      %v308 = vsub.s32 0, %v307
      %v309 = vrot.slane %v304, %v308
      %v311 = vadd.f32 %v299, %v309
      %v312 = vadd.f32 %v300, %v309
      %v313 = vadd.f32 %v301, %v309
      %v314 = vadd.f32 %v302, %v309
      %v315 = vadd.f32 %v303, %v309
      %v316 = vmax.f32 %v311, 0.0
      %v317 = vmax.f32 %v312, 0.0
      %v318 = vmax.f32 %v313, 0.0
      %v319 = vmax.f32 %v314, 0.0
      %v320 = vmax.f32 %v315, 0.0
      %v321 = vpack.c.bf16 %v317, %v316
      %v322 = vpack.c.bf16 %v319, %v318
      %v323 = vpack.c.bf16 %v320, %v320
      %v324 = vld [vmem:[%s3] sm:$0xf]
      %v325 = vld [vmem:[%s3 + $0x4] sm:$0xf]
      %v326 = vld [vmem:[%s3 + $0x8] sm:$0xf]
      %v327 = vld [vmem:[%s3 + $0xc] sm:$0xf]
      %v328 = vld [vmem:[%s3 + $0x10] sm:$0xf]
      %v329 = vld [vmem:[%s3 + $0x14] sm:$0xf]
      %v330 = vld [vmem:[%s3 + $0x18] sm:$0xf]
      %v331 = vld [vmem:[%s3 + $0x1c] sm:$0xf]
      %v332 = vld [vmem:[%s3 + $0x20] sm:$0xf]
      %v333 = vld [vmem:[%s3 + $0x24] sm:$0xf]
      %v334 = vld [vmem:[%s3 + $0x28] sm:$0xf]
      %v335 = vld [vmem:[%s3 + $0x2c] sm:$0xf]
      %v336 = vld [vmem:[%s3 + $0x30] sm:$0xf]
      %v337 = vld [vmem:[%s3 + $0x34] sm:$0xf]
      %v338 = vld [vmem:[%s3 + $0x38] sm:$0xf]
      %v339 = vld [vmem:[%s3 + $0x3c] sm:$0xf]
      %v356 = vunpack.c.l.b16 %v324
      %v357 = vunpack.c.l.b16 %v325
      %v358 = vunpack.c.l.b16 %v326
      %v359 = vunpack.c.l.b16 %v327
      %v360 = vunpack.c.l.b16 %v328
      %v361 = vunpack.c.l.b16 %v329
      %v362 = vunpack.c.l.b16 %v330
      %v363 = vunpack.c.l.b16 %v331
      %v364 = vunpack.c.l.b16 %v332
      %v365 = vunpack.c.l.b16 %v333
      %v366 = vunpack.c.l.b16 %v334
      %v367 = vunpack.c.l.b16 %v335
      %v368 = vunpack.c.l.b16 %v336
      %v369 = vunpack.c.l.b16 %v337
      %v370 = vunpack.c.l.b16 %v338
      %v371 = vunpack.c.l.b16 %v339
      %v372 = vpack.c.b16 %v357, %v356
      %v373 = vpack.c.b16 %v359, %v358
      %v374 = vpack.c.b16 %v361, %v360
      %v375 = vpack.c.b16 %v363, %v362
      %v376 = vpack.c.b16 %v365, %v364
      %v377 = vpack.c.b16 %v367, %v366
      %v378 = vpack.c.b16 %v369, %v368
      %v379 = vpack.c.b16 %v371, %v370
      %388 = vmatprep.subr.bf16.mxu0 0
      %389 = vmatpush1.bf16.msra.mxu0 %v379
      %390 = vmatprep.subr.bf16.mxu0 0
      %391 = vmatpush1.bf16.msra.mxu0 %v378
      %392 = vmatprep.subr.bf16.mxu0 0
      %393 = vmatpush1.bf16.msra.mxu0 %v377
      %394 = vmatprep.subr.bf16.mxu0 0
      %395 = vmatpush1.bf16.msra.mxu0 %v376
      %396 = vmatprep.subr.bf16.mxu0 0
      %397 = vmatpush1.bf16.msra.mxu0 %v375
      %398 = vmatprep.subr.bf16.mxu0 0
      %399 = vmatpush1.bf16.msra.mxu0 %v374
      %400 = vmatprep.subr.bf16.mxu0 0
      %401 = vmatpush1.bf16.msra.mxu0 %v373
      %402 = vmatprep.subr.bf16.mxu0 0
      %403 = vmatpush1.bf16.msra.mxu0 %v372
      %404 = vmatprep.subr.bf16.mxu0 0
      %405 = vmatpush2.bf16.msra.mxu0 0
      %406 = vmatprep.subr.bf16.mxu0 0
      %407 = vmatpush2.bf16.msra.mxu0 0
      %408 = vmatprep.subr.bf16.mxu0 0
      %409 = vmatpush2.bf16.msra.mxu0 0
      %410 = vmatprep.subr.bf16.mxu0 0
      %411 = vmatpush2.bf16.msra.mxu0 0
      %412 = vmatprep.subr.bf16.mxu0 0
      %413 = vmatpush2.bf16.msra.mxu0 0
      %414 = vmatprep.subr.bf16.mxu0 0
      %415 = vmatpush2.bf16.msra.mxu0 0
      %416 = vmatprep.subr.bf16.mxu0 0
      %417 = vmatpush2.bf16.msra.mxu0 0
      %418 = vmatprep.subr.bf16.mxu0 0
      %419 = vmatpush2.bf16.msra.mxu0 0
      %420 = vmatprep.mubr.bf16.mxu0 0
      %421 = vmatmul.mubr.bf16.gmra.mxu0 %v321
      %v422 = vpop.f32.mrf.mxu0
      %v423 = vadd.f32 0.0, %v422
      %v424 = vpop.f32.mrf.mxu0
      %v425 = vpop.f32.mrf.mxu0
      %v426 = vadd.f32 0.0, %v425
      %v427 = vpop.f32.mrf.mxu0
      %428 = vmatprep.mubr.bf16.mxu0 0
      %429 = vmatmul.mubr.bf16.gmra.mxu0 %v322
      %v430 = vpop.f32.mrf.mxu0
      %v431 = vadd.f32 0.0, %v430
      %v432 = vpop.f32.mrf.mxu0
      %v433 = vpop.f32.mrf.mxu0
      %v434 = vadd.f32 0.0, %v433
      %v435 = vpop.f32.mrf.mxu0
      %436 = vmatprep.mubr.bf16.mxu0 0
      %437 = vmatmul.mubr.bf16.gmra.mxu0 %v323
      %v438 = vpop.f32.mrf.mxu0
      %v439 = vadd.f32 0.0, %v438
      %v440 = vpop.f32.mrf.mxu0
      %v441 = vpop.f32.mrf.mxu0
      %v442 = vpop.f32.mrf.mxu0
      %443 = vdwg.mxu0
      %v444 = vld [vmem:[%s4] sm:$0x1]
      %v446 = vlaneseq
      %v447 = vshrl.u32 %v446, 7
      %v448 = vsub.s32 0, %v447
      %v449 = vrot.slane %v444, %v448
      %v451 = vmul.f32 %v423, %v449
      %v452 = vmul.f32 %v426, %v449
      %v453 = vmul.f32 %v431, %v449
      %v454 = vmul.f32 %v434, %v449
      %v455 = vmul.f32 %v439, %v449
      %v456 = vld [vmem:[%s5] sm:$0x1]
      %v458 = vlaneseq
      %v459 = vshrl.u32 %v458, 7
      %v460 = vsub.s32 0, %v459
      %v461 = vrot.slane %v456, %v460
      %v463 = vadd.f32 %v451, %v461
      %v464 = vadd.f32 %v452, %v461
      %v465 = vadd.f32 %v453, %v461
      %v466 = vadd.f32 %v454, %v461
      %v467 = vadd.f32 %v455, %v461
      %v468 = vmax.f32 %v463, 0.0
      %v469 = vmax.f32 %v464, 0.0
      %v470 = vmax.f32 %v465, 0.0
      %v471 = vmax.f32 %v466, 0.0
      %v472 = vmax.f32 %v467, 0.0
      %v473 = vpack.c.bf16 %v469, %v468
      %v474 = vpack.c.bf16 %v471, %v470
      %v475 = vpack.c.bf16 %v472, %v472
      %476 = vst [vmem:[#allocation2] sm:$0xf] 0
      %477 = vst [vmem:[#allocation2 + $0x4] sm:$0xf] 0
      %478 = vst [vmem:[#allocation2 + $0x8] sm:$0xf] 0
      %479 = vst [vmem:[#allocation2 + $0xc] sm:$0xf] 0
      %480 = vst [vmem:[#allocation2 + $0x10] sm:$0xf] 0
      %481 = vst [vmem:[#allocation2 + $0x14] sm:$0xf] 0
      %482 = vst [vmem:[#allocation2 + $0x18] sm:$0xf] 0
      %v486 = vunpack.c.l.b16 %v473
      %v487 = vunpack.c.h.b16 %v473
      %v488 = vunpack.c.l.b16 %v474
      %v489 = vunpack.c.h.b16 %v474
      %v490 = vunpack.c.l.b16 %v475
      %v491 = vpack.c.b16 %v486, %v486
      %v492 = vpack.c.b16 %v487, %v487
      %v493 = vpack.c.b16 %v488, %v488
      %v494 = vpack.c.b16 %v489, %v489
      %v495 = vpack.c.b16 %v490, %v490
      %501 = vst [vmem:[#allocation2 + $0x4] sm:$0xf] %v491
      %502 = vst [vmem:[#allocation2 + $0x8] sm:$0xf] %v492
      %503 = vst [vmem:[#allocation2 + $0xc] sm:$0xf] %v493
      %504 = vst [vmem:[#allocation2 + $0x10] sm:$0xf] %v494
      %505 = vst [vmem:[#allocation2 + $0x14] sm:$0x3] %v495
      %v506 = vlaneseq
      %v507 = vshrl.u32 %v506, 7
      %v508 = vadd.s32 %v507, 8
      %v509 = vadd.s32 %v507, 16
      %v510 = vadd.s32 %v507, 24
      %v511 = vadd.s32 %v507, 32
      %vm512 = vcmp.lt.s32.totalorder %v507, 0
      %v513 = vsub.s32 0, %v507
      %v514 = vsel %vm512, %v513, %v507
      %v515 = vmul.u32.u64.compose %v514, 2863311531
      %v516 = vextract.low.u32 %v515
      %v517 = vextract.high.u32 %v515
      %v518 = vshrl.u32 %v517, 2
      %v519 = vmul.u32 %v518, 6
      %v520 = vsub.s32 %v514, %v519
      %v521 = vsub.s32 0, %v520
      %v522 = vsel %vm512, %v521, %v520
      %vm523 = vcmp.lt.s32.totalorder %v508, 0
      %v524 = vsub.s32 0, %v508
      %v525 = vsel %vm523, %v524, %v508
      %v526 = vmul.u32.u64.compose %v525, 2863311531
      %v527 = vextract.low.u32 %v526
      %v528 = vextract.high.u32 %v526
      %v529 = vshrl.u32 %v528, 2
      %v530 = vmul.u32 %v529, 6
      %v531 = vsub.s32 %v525, %v530
      %v532 = vsub.s32 0, %v531
      %v533 = vsel %vm523, %v532, %v531
      %vm534 = vcmp.lt.s32.totalorder %v509, 0
      %v535 = vsub.s32 0, %v509
      %v536 = vsel %vm534, %v535, %v509
      %v537 = vmul.u32.u64.compose %v536, 2863311531
      %v538 = vextract.low.u32 %v537
      %v539 = vextract.high.u32 %v537
      %v540 = vshrl.u32 %v539, 2
      %v541 = vmul.u32 %v540, 6
      %v542 = vsub.s32 %v536, %v541
      %v543 = vsub.s32 0, %v542
      %v544 = vsel %vm534, %v543, %v542
      %vm545 = vcmp.lt.s32.totalorder %v510, 0
      %v546 = vsub.s32 0, %v510
      %v547 = vsel %vm545, %v546, %v510
      %v548 = vmul.u32.u64.compose %v547, 2863311531
      %v549 = vextract.low.u32 %v548
      %v550 = vextract.high.u32 %v548
      %v551 = vshrl.u32 %v550, 2
      %v552 = vmul.u32 %v551, 6
      %v553 = vsub.s32 %v547, %v552
      %v554 = vsub.s32 0, %v553
      %v555 = vsel %vm545, %v554, %v553
      %vm556 = vcmp.lt.s32.totalorder %v511, 0
      %v557 = vsub.s32 0, %v511
      %v558 = vsel %vm556, %v557, %v511
      %v559 = vmul.u32.u64.compose %v558, 2863311531
      %v560 = vextract.low.u32 %v559
      %v561 = vextract.high.u32 %v559
      %v562 = vshrl.u32 %v561, 2
      %v563 = vmul.u32 %v562, 6
      %v564 = vsub.s32 %v558, %v563
      %v565 = vsub.s32 0, %v564
      %v566 = vsel %vm556, %v565, %v564
      %vm567 = vcmp.ne.s32.totalorder %v522, 0
      %vm568 = vcmp.ne.s32.totalorder %v533, 0
      %vm569 = vcmp.ne.s32.totalorder %v544, 0
      %vm570 = vcmp.ne.s32.totalorder %v555, 0
      %vm571 = vcmp.ne.s32.totalorder %v566, 0
      %vm572 = vcmp.lt.s32.totalorder %v522, 0
      %vm573 = vcmp.lt.s32.totalorder %v533, 0
      %vm574 = vcmp.lt.s32.totalorder %v544, 0
      %vm575 = vcmp.lt.s32.totalorder %v555, 0
      %vm576 = vcmp.lt.s32.totalorder %v566, 0
      %vm577 = vmand %vm572, %vm567
      %vm578 = vmand %vm573, %vm568
      %vm579 = vmand %vm574, %vm569
      %vm580 = vmand %vm575, %vm570
      %vm581 = vmand %vm576, %vm571
      %v582 = vadd.s32 %v522, 6
      %v583 = vadd.s32 %v533, 6
      %v584 = vadd.s32 %v544, 6
      %v585 = vadd.s32 %v555, 6
      %v586 = vadd.s32 %v566, 6
      %v587 = vsel %vm577, %v582, %v522
      %v588 = vsel %vm578, %v583, %v533
      %v589 = vsel %vm579, %v584, %v544
      %v590 = vsel %vm580, %v585, %v555
      %v591 = vsel %vm581, %v586, %v566
      %vm592 = vcmp.gt.s32.totalorder %v587, 0
      %vm593 = vcmp.gt.s32.totalorder %v588, 0
      %vm594 = vcmp.gt.s32.totalorder %v589, 0
      %vm595 = vcmp.gt.s32.totalorder %v590, 0
      %vm596 = vcmp.gt.s32.totalorder %v591, 0
      %vm597 = vcmp.lt.s32.totalorder %v587, 5
      %vm598 = vcmp.lt.s32.totalorder %v588, 5
      %vm599 = vcmp.lt.s32.totalorder %v589, 5
      %vm600 = vcmp.lt.s32.totalorder %v590, 5
      %vm601 = vcmp.lt.s32.totalorder %v591, 5
      %v602 = vld [vmem:[#allocation2] sm:$0xf]
      %v603 = vld [vmem:[#allocation2 + $0x4] sm:$0xf]
      %v604 = vld [vmem:[#allocation2 + $0x8] sm:$0xf]
      %v605 = vld [vmem:[#allocation2 + $0xc] sm:$0xf]
      %v606 = vld [vmem:[#allocation2 + $0x10] sm:$0x7]
      %vm607 = vmpackc.low %vm592, %vm592
      %vm608 = vmpackc.low %vm593, %vm593
      %vm609 = vmpackc.low %vm594, %vm594
      %vm610 = vmpackc.low %vm595, %vm595
      %vm611 = vmpackc.low %vm596, %vm596
      %v612 = vsel %vm607, 65537, 0
      %v613 = vsel %vm608, 65537, 0
      %v614 = vsel %vm609, 65537, 0
      %v615 = vsel %vm610, 65537, 0
      %v616 = vsel %vm611, 65537, 0
      %vm617 = vsmask.f32 256
      %vm618 = vsmask.f32 4368
      %vm619 = vmor %vm617, %vm618
      %v621 = vshrl.u32 %v612, 16
      %v623 = vrot.slane %v621, 7
      %v624 = vshll.u32 %v612, 16
      %v626 = vor.u32 %v623, %v624
      %v627 = vrot.slane %v623, 4
      %v629 = vshrl.u32 %v613, 16
      %v631 = vrot.slane %v629, 7
      %v632 = vshll.u32 %v613, 16
      %v634 = vor.u32 %v631, %v632
      %v635 = vsel %vm619, %v627, %v634
      %v636 = vrot.slane %v631, 4
      %v638 = vshrl.u32 %v614, 16
      %v640 = vrot.slane %v638, 7
      %v641 = vshll.u32 %v614, 16
      %v643 = vor.u32 %v640, %v641
      %v644 = vsel %vm619, %v636, %v643
      %v645 = vrot.slane %v640, 4
      %v647 = vshrl.u32 %v615, 16
      %v649 = vrot.slane %v647, 7
      %v650 = vshll.u32 %v615, 16
      %v652 = vor.u32 %v649, %v650
      %v653 = vsel %vm619, %v645, %v652
      %v654 = vrot.slane %v649, 4
      %v656 = vshrl.u32 %v616, 16
      %v658 = vrot.slane %v656, 7
      %v659 = vshll.u32 %v616, 16
      %v661 = vor.u32 %v658, %v659
      %v662 = vsel %vm619, %v654, %v661
      %vm663 = vcmp.ne.s16.totalorder %v626, 0
      %vm664 = vcmp.ne.s16.totalorder %v635, 0
      %vm665 = vcmp.ne.s16.totalorder %v644, 0
      %vm666 = vcmp.ne.s16.totalorder %v653, 0
      %vm667 = vcmp.ne.s16.totalorder %v662, 0
      %v668 = vsel %vm663, %v602, 0
      %v669 = vsel %vm664, %v603, 0
      %v670 = vsel %vm665, %v604, 0
      %v671 = vsel %vm666, %v605, 0
      %v672 = vsel %vm667, %v606, 0
      %v673 = vld [vmem:[%s6] sm:$0xf]
      %v674 = vld [vmem:[%s6 + $0x4] sm:$0xf]
      %v675 = vld [vmem:[%s6 + $0x8] sm:$0xf]
      %v676 = vld [vmem:[%s6 + $0xc] sm:$0xf]
      %v677 = vld [vmem:[%s6 + $0x10] sm:$0xf]
      %v678 = vld [vmem:[%s6 + $0x14] sm:$0xf]
      %v679 = vld [vmem:[%s6 + $0x18] sm:$0xf]
      %v680 = vld [vmem:[%s6 + $0x1c] sm:$0xf]
      %v681 = vld [vmem:[%s6 + $0x20] sm:$0xf]
      %v682 = vld [vmem:[%s6 + $0x24] sm:$0xf]
      %v683 = vld [vmem:[%s6 + $0x28] sm:$0xf]
      %v684 = vld [vmem:[%s6 + $0x2c] sm:$0xf]
      %v685 = vld [vmem:[%s6 + $0x30] sm:$0xf]
      %v686 = vld [vmem:[%s6 + $0x34] sm:$0xf]
      %v687 = vld [vmem:[%s6 + $0x38] sm:$0xf]
      %v688 = vld [vmem:[%s6 + $0x3c] sm:$0xf]
      %v689 = vld [vmem:[#allocation2] sm:$0xe]
      %s690 = scalar_lea.vmem %s6, 64
      %v691 = vld [vmem:[%s690] sm:$0xf]
      %v692 = vld [vmem:[%s690 + $0x4] sm:$0xf]
      %v693 = vld [vmem:[%s690 + $0x8] sm:$0xf]
      %v694 = vld [vmem:[%s690 + $0xc] sm:$0xf]
      %v695 = vld [vmem:[%s690 + $0x10] sm:$0xf]
      %v696 = vld [vmem:[%s690 + $0x14] sm:$0xf]
      %v697 = vld [vmem:[%s690 + $0x18] sm:$0xf]
      %v698 = vld [vmem:[%s690 + $0x1c] sm:$0xf]
      %v699 = vld [vmem:[%s690 + $0x20] sm:$0xf]
      %v700 = vld [vmem:[%s690 + $0x24] sm:$0xf]
      %v701 = vld [vmem:[%s690 + $0x28] sm:$0xf]
      %v702 = vld [vmem:[%s690 + $0x2c] sm:$0xf]
      %v703 = vld [vmem:[%s690 + $0x30] sm:$0xf]
      %v704 = vld [vmem:[%s690 + $0x34] sm:$0xf]
      %v705 = vld [vmem:[%s690 + $0x38] sm:$0xf]
      %v706 = vld [vmem:[%s690 + $0x3c] sm:$0xf]
      %v712 = vunpack.c.l.b16 %v689
      %v713 = vunpack.c.l.b16 %v603
      %v714 = vunpack.c.l.b16 %v604
      %v715 = vunpack.c.l.b16 %v605
      %v716 = vunpack.c.l.b16 %v606
      %v717 = vpack.c.b16 %v713, %v712
      %v718 = vpack.c.b16 %v715, %v714
      %v719 = vpack.c.b16 %v716, %v716
      %vm720 = vcmask 1046528
      %v721 = vrot.slane %v717, 1
      %v722 = vrot.slane %v718, 1
      %v723 = vsel %vm720, %v721, %v722
      %v724 = vrot.slane %v719, 1
      %v725 = vsel %vm720, %v722, %v724
      %v745 = vunpack.c.l.b16 %v691
      %v746 = vunpack.c.l.b16 %v692
      %v747 = vunpack.c.l.b16 %v693
      %v748 = vunpack.c.l.b16 %v694
      %v749 = vunpack.c.l.b16 %v695
      %v750 = vunpack.c.l.b16 %v696
      %v751 = vunpack.c.l.b16 %v697
      %v752 = vunpack.c.l.b16 %v698
      %v753 = vunpack.c.l.b16 %v699
      %v754 = vunpack.c.l.b16 %v700
      %v755 = vunpack.c.l.b16 %v701
      %v756 = vunpack.c.l.b16 %v702
      %v757 = vunpack.c.l.b16 %v703
      %v758 = vunpack.c.l.b16 %v704
      %v759 = vunpack.c.l.b16 %v705
      %v760 = vunpack.c.l.b16 %v706
      %v761 = vpack.c.b16 %v746, %v745
      %v762 = vpack.c.b16 %v748, %v747
      %v763 = vpack.c.b16 %v750, %v749
      %v764 = vpack.c.b16 %v752, %v751
      %v765 = vpack.c.b16 %v754, %v753
      %v766 = vpack.c.b16 %v756, %v755
      %v767 = vpack.c.b16 %v758, %v757
      %v768 = vpack.c.b16 %v760, %v759
      %777 = vmatprep.subr.bf16.mxu0 0
      %778 = vmatpush1.bf16.msra.mxu0 %v768
      %779 = vmatprep.subr.bf16.mxu0 0
      %780 = vmatpush1.bf16.msra.mxu0 %v767
      %781 = vmatprep.subr.bf16.mxu0 0
      %782 = vmatpush1.bf16.msra.mxu0 %v766
      %783 = vmatprep.subr.bf16.mxu0 0
      %784 = vmatpush1.bf16.msra.mxu0 %v765
      %785 = vmatprep.subr.bf16.mxu0 0
      %786 = vmatpush1.bf16.msra.mxu0 %v764
      %787 = vmatprep.subr.bf16.mxu0 0
      %788 = vmatpush1.bf16.msra.mxu0 %v763
      %789 = vmatprep.subr.bf16.mxu0 0
      %790 = vmatpush1.bf16.msra.mxu0 %v762
      %791 = vmatprep.subr.bf16.mxu0 0
      %792 = vmatpush1.bf16.msra.mxu0 %v761
      %793 = vmatprep.subr.bf16.mxu0 0
      %794 = vmatpush2.bf16.msra.mxu0 0
      %795 = vmatprep.subr.bf16.mxu0 0
      %796 = vmatpush2.bf16.msra.mxu0 0
      %797 = vmatprep.subr.bf16.mxu0 0
      %798 = vmatpush2.bf16.msra.mxu0 0
      %799 = vmatprep.subr.bf16.mxu0 0
      %800 = vmatpush2.bf16.msra.mxu0 0
      %801 = vmatprep.subr.bf16.mxu0 0
      %802 = vmatpush2.bf16.msra.mxu0 0
      %803 = vmatprep.subr.bf16.mxu0 0
      %804 = vmatpush2.bf16.msra.mxu0 0
      %805 = vmatprep.subr.bf16.mxu0 0
      %806 = vmatpush2.bf16.msra.mxu0 0
      %807 = vmatprep.subr.bf16.mxu0 0
      %808 = vmatpush2.bf16.msra.mxu0 0
      %809 = vmatprep.mubr.bf16.mxu0 0
      %810 = vmatmul.mubr.bf16.gmra.mxu0 %v723
      %v811 = vpop.f32.mrf.mxu0
      %v812 = vadd.f32 0.0, %v811
      %v813 = vpop.f32.mrf.mxu0
      %v814 = vpop.f32.mrf.mxu0
      %v815 = vadd.f32 0.0, %v814
      %v816 = vpop.f32.mrf.mxu0
      %817 = vmatprep.mubr.bf16.mxu0 0
      %818 = vmatmul.mubr.bf16.gmra.mxu0 %v725
      %v819 = vpop.f32.mrf.mxu0
      %v820 = vadd.f32 0.0, %v819
      %v821 = vpop.f32.mrf.mxu0
      %v822 = vpop.f32.mrf.mxu0
      %v823 = vadd.f32 0.0, %v822
      %v824 = vpop.f32.mrf.mxu0
      %825 = vmatprep.mubr.bf16.mxu0 0
      %826 = vmatmul.mubr.bf16.gmra.mxu0 %v724
      %v827 = vpop.f32.mrf.mxu0
      %v828 = vadd.f32 0.0, %v827
      %v829 = vpop.f32.mrf.mxu0
      %v830 = vpop.f32.mrf.mxu0
      %v831 = vpop.f32.mrf.mxu0
      %832 = vdwg.mxu0
      %v838 = vunpack.c.l.b16 %v668
      %v839 = vunpack.c.l.b16 %v669
      %v840 = vunpack.c.l.b16 %v670
      %v841 = vunpack.c.l.b16 %v671
      %v842 = vunpack.c.l.b16 %v672
      %v843 = vpack.c.b16 %v839, %v838
      %v844 = vpack.c.b16 %v841, %v840
      %v845 = vpack.c.b16 %v842, %v842
      %vm846 = vsmask.f32 7424
      %v848 = vshrl.u32 %v843, 16
      %v850 = vshll.u32 %v843, 16
      %v852 = vrot.slane %v850, 1
      %v853 = vor.u32 %v848, %v852
      %v855 = vshll.u32 %v844, 16
      %v857 = vrot.slane %v855, 1
      %v858 = vsel %vm846, %v853, %v857
      %v859 = vshrl.u32 %v844, 16
      %v861 = vor.u32 %v859, %v857
      %v863 = vshll.u32 %v845, 16
      %v865 = vrot.slane %v863, 1
      %v866 = vsel %vm846, %v861, %v865
      %v867 = vshrl.u32 %v845, 16
      %v869 = vor.u32 %v867, %v865
      %v889 = vunpack.c.l.b16 %v673
      %v890 = vunpack.c.l.b16 %v674
      %v891 = vunpack.c.l.b16 %v675
      %v892 = vunpack.c.l.b16 %v676
      %v893 = vunpack.c.l.b16 %v677
      %v894 = vunpack.c.l.b16 %v678
      %v895 = vunpack.c.l.b16 %v679
      %v896 = vunpack.c.l.b16 %v680
      %v897 = vunpack.c.l.b16 %v681
      %v898 = vunpack.c.l.b16 %v682
      %v899 = vunpack.c.l.b16 %v683
      %v900 = vunpack.c.l.b16 %v684
      %v901 = vunpack.c.l.b16 %v685
      %v902 = vunpack.c.l.b16 %v686
      %v903 = vunpack.c.l.b16 %v687
      %v904 = vunpack.c.l.b16 %v688
      %v905 = vpack.c.b16 %v890, %v889
      %v906 = vpack.c.b16 %v892, %v891
      %v907 = vpack.c.b16 %v894, %v893
      %v908 = vpack.c.b16 %v896, %v895
      %v909 = vpack.c.b16 %v898, %v897
      %v910 = vpack.c.b16 %v900, %v899
      %v911 = vpack.c.b16 %v902, %v901
      %v912 = vpack.c.b16 %v904, %v903
      %921 = vmatprep.subr.bf16.mxu0 0
      %922 = vmatpush1.bf16.msra.mxu0 %v912
      %923 = vmatprep.subr.bf16.mxu0 0
      %924 = vmatpush1.bf16.msra.mxu0 %v911
      %925 = vmatprep.subr.bf16.mxu0 0
      %926 = vmatpush1.bf16.msra.mxu0 %v910
      %927 = vmatprep.subr.bf16.mxu0 0
      %928 = vmatpush1.bf16.msra.mxu0 %v909
      %929 = vmatprep.subr.bf16.mxu0 0
      %930 = vmatpush1.bf16.msra.mxu0 %v908
      %931 = vmatprep.subr.bf16.mxu0 0
      %932 = vmatpush1.bf16.msra.mxu0 %v907
      %933 = vmatprep.subr.bf16.mxu0 0
      %934 = vmatpush1.bf16.msra.mxu0 %v906
      %935 = vmatprep.subr.bf16.mxu0 0
      %936 = vmatpush1.bf16.msra.mxu0 %v905
      %937 = vmatprep.subr.bf16.mxu0 0
      %938 = vmatpush2.bf16.msra.mxu0 0
      %939 = vmatprep.subr.bf16.mxu0 0
      %940 = vmatpush2.bf16.msra.mxu0 0
      %941 = vmatprep.subr.bf16.mxu0 0
      %942 = vmatpush2.bf16.msra.mxu0 0
      %943 = vmatprep.subr.bf16.mxu0 0
      %944 = vmatpush2.bf16.msra.mxu0 0
      %945 = vmatprep.subr.bf16.mxu0 0
      %946 = vmatpush2.bf16.msra.mxu0 0
      %947 = vmatprep.subr.bf16.mxu0 0
      %948 = vmatpush2.bf16.msra.mxu0 0
      %949 = vmatprep.subr.bf16.mxu0 0
      %950 = vmatpush2.bf16.msra.mxu0 0
      %951 = vmatprep.subr.bf16.mxu0 0
      %952 = vmatpush2.bf16.msra.mxu0 0
      %953 = vmatprep.mubr.bf16.mxu0 0
      %954 = vmatmul.mubr.bf16.gmra.mxu0 %v858
      %v955 = vpop.f32.mrf.mxu0
      %v956 = vadd.f32 %v812, %v955
      %v957 = vpop.f32.mrf.mxu0
      %v958 = vpop.f32.mrf.mxu0
      %v959 = vadd.f32 %v815, %v958
      %v960 = vpop.f32.mrf.mxu0
      %961 = vmatprep.mubr.bf16.mxu0 0
      %962 = vmatmul.mubr.bf16.gmra.mxu0 %v866
      %v963 = vpop.f32.mrf.mxu0
      %v964 = vadd.f32 %v820, %v963
      %v965 = vpop.f32.mrf.mxu0
      %v966 = vpop.f32.mrf.mxu0
      %v967 = vadd.f32 %v823, %v966
      %v968 = vpop.f32.mrf.mxu0
      %969 = vmatprep.mubr.bf16.mxu0 0
      %970 = vmatmul.mubr.bf16.gmra.mxu0 %v869
      %v971 = vpop.f32.mrf.mxu0
      %v972 = vadd.f32 %v828, %v971
      %v973 = vpop.f32.mrf.mxu0
      %v974 = vpop.f32.mrf.mxu0
      %v975 = vpop.f32.mrf.mxu0
      %976 = vdwg.mxu0
      %v977 = vld [vmem:[#allocation2 + $0x10] sm:$0xf]
      %vm978 = vmpackc.low %vm597, %vm597
      %vm979 = vmpackc.low %vm598, %vm598
      %vm980 = vmpackc.low %vm599, %vm599
      %vm981 = vmpackc.low %vm600, %vm600
      %vm982 = vmpackc.low %vm601, %vm601
      %v983 = vsel %vm978, 65537, 0
      %v984 = vsel %vm979, 65537, 0
      %v985 = vsel %vm980, 65537, 0
      %v986 = vsel %vm981, 65537, 0
      %v987 = vsel %vm982, 65537, 0
      %vm988 = vsmask.f32 1280
      %vm989 = vsmask.f32 5392
      %vm990 = vmor %vm988, %vm989
      %v992 = vshrl.u32 %v983, 16
      %v994 = vrot.slane %v992, 6
      %v995 = vshll.u32 %v983, 16
      %v997 = vrot.slane %v995, 7
      %v998 = vor.u32 %v994, %v997
      %v999 = vrot.slane %v998, 4
      %v1001 = vshrl.u32 %v984, 16
      %v1003 = vrot.slane %v1001, 6
      %v1004 = vshll.u32 %v984, 16
      %v1006 = vrot.slane %v1004, 7
      %v1007 = vor.u32 %v1003, %v1006
      %v1008 = vsel %vm990, %v999, %v1007
      %v1009 = vrot.slane %v1007, 4
      %v1011 = vshrl.u32 %v985, 16
      %v1013 = vrot.slane %v1011, 6
      %v1014 = vshll.u32 %v985, 16
      %v1016 = vrot.slane %v1014, 7
      %v1017 = vor.u32 %v1013, %v1016
      %v1018 = vsel %vm990, %v1009, %v1017
      %v1019 = vrot.slane %v1017, 4
      %v1021 = vshrl.u32 %v986, 16
      %v1023 = vrot.slane %v1021, 6
      %v1024 = vshll.u32 %v986, 16
      %v1026 = vrot.slane %v1024, 7
      %v1027 = vor.u32 %v1023, %v1026
      %v1028 = vsel %vm990, %v1019, %v1027
      %v1029 = vrot.slane %v1027, 4
      %v1031 = vshrl.u32 %v987, 16
      %v1033 = vrot.slane %v1031, 6
      %v1034 = vshll.u32 %v987, 16
      %v1036 = vrot.slane %v1034, 7
      %v1037 = vor.u32 %v1033, %v1036
      %v1038 = vsel %vm990, %v1029, %v1037
      %vm1039 = vcmp.ne.s16.totalorder %v998, 0
      %vm1040 = vcmp.ne.s16.totalorder %v1008, 0
      %vm1041 = vcmp.ne.s16.totalorder %v1018, 0
      %vm1042 = vcmp.ne.s16.totalorder %v1028, 0
      %vm1043 = vcmp.ne.s16.totalorder %v1038, 0
      %v1044 = vsel %vm1039, %v689, 0
      %v1045 = vsel %vm1040, %v603, 0
      %v1046 = vsel %vm1041, %v604, 0
      %v1047 = vsel %vm1042, %v605, 0
      %v1048 = vsel %vm1043, %v977, 0
      %s1049 = scalar_lea.vmem %s6, 128
      %v1050 = vld [vmem:[%s1049] sm:$0xf]
      %v1051 = vld [vmem:[%s1049 + $0x4] sm:$0xf]
      %v1052 = vld [vmem:[%s1049 + $0x8] sm:$0xf]
      %v1053 = vld [vmem:[%s1049 + $0xc] sm:$0xf]
      %v1054 = vld [vmem:[%s1049 + $0x10] sm:$0xf]
      %v1055 = vld [vmem:[%s1049 + $0x14] sm:$0xf]
      %v1056 = vld [vmem:[%s1049 + $0x18] sm:$0xf]
      %v1057 = vld [vmem:[%s1049 + $0x1c] sm:$0xf]
      %v1058 = vld [vmem:[%s1049 + $0x20] sm:$0xf]
      %v1059 = vld [vmem:[%s1049 + $0x24] sm:$0xf]
      %v1060 = vld [vmem:[%s1049 + $0x28] sm:$0xf]
      %v1061 = vld [vmem:[%s1049 + $0x2c] sm:$0xf]
      %v1062 = vld [vmem:[%s1049 + $0x30] sm:$0xf]
      %v1063 = vld [vmem:[%s1049 + $0x34] sm:$0xf]
      %v1064 = vld [vmem:[%s1049 + $0x38] sm:$0xf]
      %v1065 = vld [vmem:[%s1049 + $0x3c] sm:$0xf]
      %v1071 = vunpack.c.l.b16 %v1044
      %v1072 = vunpack.c.l.b16 %v1045
      %v1073 = vunpack.c.l.b16 %v1046
      %v1074 = vunpack.c.l.b16 %v1047
      %v1075 = vunpack.c.l.b16 %v1048
      %v1076 = vpack.c.b16 %v1072, %v1071
      %v1077 = vpack.c.b16 %v1074, %v1073
      %v1078 = vpack.c.b16 %v1075, %v1075
      %vm1079 = vsmask.f32 6400
      %v1081 = vshrl.u32 %v1076, 16
      %v1083 = vrot.slane %v1081, 1
      %v1084 = vshll.u32 %v1076, 16
      %v1086 = vrot.slane %v1084, 2
      %v1087 = vor.u32 %v1083, %v1086
      %v1089 = vshrl.u32 %v1077, 16
      %v1091 = vrot.slane %v1089, 1
      %v1092 = vshll.u32 %v1077, 16
      %v1094 = vrot.slane %v1092, 2
      %v1095 = vor.u32 %v1091, %v1094
      %v1096 = vsel %vm1079, %v1087, %v1095
      %v1098 = vshrl.u32 %v1078, 16
      %v1100 = vrot.slane %v1098, 1
      %v1101 = vshll.u32 %v1078, 16
      %v1103 = vrot.slane %v1101, 2
      %v1104 = vor.u32 %v1100, %v1103
      %v1105 = vsel %vm1079, %v1095, %v1104
      %v1125 = vunpack.c.l.b16 %v1050
      %v1126 = vunpack.c.l.b16 %v1051
      %v1127 = vunpack.c.l.b16 %v1052
      %v1128 = vunpack.c.l.b16 %v1053
      %v1129 = vunpack.c.l.b16 %v1054
      %v1130 = vunpack.c.l.b16 %v1055
      %v1131 = vunpack.c.l.b16 %v1056
      %v1132 = vunpack.c.l.b16 %v1057
      %v1133 = vunpack.c.l.b16 %v1058
      %v1134 = vunpack.c.l.b16 %v1059
      %v1135 = vunpack.c.l.b16 %v1060
      %v1136 = vunpack.c.l.b16 %v1061
      %v1137 = vunpack.c.l.b16 %v1062
      %v1138 = vunpack.c.l.b16 %v1063
      %v1139 = vunpack.c.l.b16 %v1064
      %v1140 = vunpack.c.l.b16 %v1065
      %v1141 = vpack.c.b16 %v1126, %v1125
      %v1142 = vpack.c.b16 %v1128, %v1127
      %v1143 = vpack.c.b16 %v1130, %v1129
      %v1144 = vpack.c.b16 %v1132, %v1131
      %v1145 = vpack.c.b16 %v1134, %v1133
      %v1146 = vpack.c.b16 %v1136, %v1135
      %v1147 = vpack.c.b16 %v1138, %v1137
      %v1148 = vpack.c.b16 %v1140, %v1139
      %1157 = vmatprep.subr.bf16.mxu0 0
      %1158 = vmatpush1.bf16.msra.mxu0 %v1148
      %1159 = vmatprep.subr.bf16.mxu0 0
      %1160 = vmatpush1.bf16.msra.mxu0 %v1147
      %1161 = vmatprep.subr.bf16.mxu0 0
      %1162 = vmatpush1.bf16.msra.mxu0 %v1146
      %1163 = vmatprep.subr.bf16.mxu0 0
      %1164 = vmatpush1.bf16.msra.mxu0 %v1145
      %1165 = vmatprep.subr.bf16.mxu0 0
      %1166 = vmatpush1.bf16.msra.mxu0 %v1144
      %1167 = vmatprep.subr.bf16.mxu0 0
      %1168 = vmatpush1.bf16.msra.mxu0 %v1143
      %1169 = vmatprep.subr.bf16.mxu0 0
      %1170 = vmatpush1.bf16.msra.mxu0 %v1142
      %1171 = vmatprep.subr.bf16.mxu0 0
      %1172 = vmatpush1.bf16.msra.mxu0 %v1141
      %1173 = vmatprep.subr.bf16.mxu0 0
      %1174 = vmatpush2.bf16.msra.mxu0 0
      %1175 = vmatprep.subr.bf16.mxu0 0
      %1176 = vmatpush2.bf16.msra.mxu0 0
      %1177 = vmatprep.subr.bf16.mxu0 0
      %1178 = vmatpush2.bf16.msra.mxu0 0
      %1179 = vmatprep.subr.bf16.mxu0 0
      %1180 = vmatpush2.bf16.msra.mxu0 0
      %1181 = vmatprep.subr.bf16.mxu0 0
      %1182 = vmatpush2.bf16.msra.mxu0 0
      %1183 = vmatprep.subr.bf16.mxu0 0
      %1184 = vmatpush2.bf16.msra.mxu0 0
      %1185 = vmatprep.subr.bf16.mxu0 0
      %1186 = vmatpush2.bf16.msra.mxu0 0
      %1187 = vmatprep.subr.bf16.mxu0 0
      %1188 = vmatpush2.bf16.msra.mxu0 0
      %1189 = vmatprep.mubr.bf16.mxu0 0
      %1190 = vmatmul.mubr.bf16.gmra.mxu0 %v1096
      %v1191 = vpop.f32.mrf.mxu0
      %v1192 = vadd.f32 0.0, %v1191
      %v1193 = vpop.f32.mrf.mxu0
      %v1194 = vpop.f32.mrf.mxu0
      %v1195 = vadd.f32 0.0, %v1194
      %v1196 = vpop.f32.mrf.mxu0
      %1197 = vmatprep.mubr.bf16.mxu0 0
      %1198 = vmatmul.mubr.bf16.gmra.mxu0 %v1105
      %v1199 = vpop.f32.mrf.mxu0
      %v1200 = vadd.f32 0.0, %v1199
      %v1201 = vpop.f32.mrf.mxu0
      %v1202 = vpop.f32.mrf.mxu0
      %v1203 = vadd.f32 0.0, %v1202
      %v1204 = vpop.f32.mrf.mxu0
      %1205 = vmatprep.mubr.bf16.mxu0 0
      %1206 = vmatmul.mubr.bf16.gmra.mxu0 %v1104
      %v1207 = vpop.f32.mrf.mxu0
      %v1208 = vadd.f32 0.0, %v1207
      %v1209 = vpop.f32.mrf.mxu0
      %v1210 = vpop.f32.mrf.mxu0
      %v1211 = vpop.f32.mrf.mxu0
      %1212 = vdwg.mxu0
      %v1213 = vadd.f32 %v956, %v1192
      %v1214 = vadd.f32 %v959, %v1195
      %v1215 = vadd.f32 %v964, %v1200
      %v1216 = vadd.f32 %v967, %v1203
      %v1217 = vadd.f32 %v972, %v1208
      %v1218 = vld [vmem:[#allocation2] sm:$0x8]
      %v1219 = vld [vmem:[#allocation2 + $0x4] sm:$0xf]
      %v1220 = vld [vmem:[#allocation2 + $0x8] sm:$0xf]
      %v1221 = vld [vmem:[#allocation2 + $0xc] sm:$0xf]
      %v1222 = vld [vmem:[#allocation2 + $0x10] sm:$0xf]
      %v1223 = vld [vmem:[#allocation2 + $0x14] sm:$0x3]
      %vm1224 = vsmask.f32 3328
      %vm1225 = vsmask.f32 7440
      %vm1226 = vmor %vm1224, %vm1225
      %v1227 = vrot.slane %v624, 5
      %v1228 = vrot.slane %v621, 4
      %v1229 = vor.u32 %v1228, %v1227
      %v1230 = vrot.slane %v1229, 4
      %v1231 = vrot.slane %v632, 5
      %v1232 = vsel %vm1226, %v1230, %v1231
      %v1233 = vrot.slane %v629, 4
      %v1234 = vor.u32 %v1233, %v1231
      %v1235 = vrot.slane %v1234, 4
      %v1236 = vrot.slane %v641, 5
      %v1237 = vsel %vm1226, %v1235, %v1236
      %v1238 = vrot.slane %v638, 4
      %v1239 = vor.u32 %v1238, %v1236
      %v1240 = vrot.slane %v1239, 4
      %v1241 = vrot.slane %v650, 5
      %v1242 = vsel %vm1226, %v1240, %v1241
      %v1243 = vrot.slane %v647, 4
      %v1244 = vor.u32 %v1243, %v1241
      %v1245 = vrot.slane %v1244, 4
      %v1246 = vrot.slane %v659, 5
      %v1247 = vsel %vm1226, %v1245, %v1246
      %v1248 = vrot.slane %v656, 4
      %v1249 = vor.u32 %v1248, %v1246
      %v1250 = vrot.slane %v1249, 4
      %vm1251 = vcmp.ne.s16.totalorder %v1227, 0
      %vm1252 = vcmp.ne.s16.totalorder %v1232, 0
      %vm1253 = vcmp.ne.s16.totalorder %v1237, 0
      %vm1254 = vcmp.ne.s16.totalorder %v1242, 0
      %vm1255 = vcmp.ne.s16.totalorder %v1247, 0
      %vm1256 = vcmp.ne.s16.totalorder %v1250, 0
      %v1257 = vsel %vm1251, %v1218, 0
      %v1258 = vsel %vm1252, %v1219, 0
      %v1259 = vsel %vm1253, %v1220, 0
      %v1260 = vsel %vm1254, %v1221, 0
      %v1261 = vsel %vm1255, %v1222, 0
      %v1262 = vsel %vm1256, %v1223, 0
      %s1263 = scalar_lea.vmem %s6, 192
      %v1264 = vld [vmem:[%s1263] sm:$0xf]
      %v1265 = vld [vmem:[%s1263 + $0x4] sm:$0xf]
      %v1266 = vld [vmem:[%s1263 + $0x8] sm:$0xf]
      %v1267 = vld [vmem:[%s1263 + $0xc] sm:$0xf]
      %v1268 = vld [vmem:[%s1263 + $0x10] sm:$0xf]
      %v1269 = vld [vmem:[%s1263 + $0x14] sm:$0xf]
      %v1270 = vld [vmem:[%s1263 + $0x18] sm:$0xf]
      %v1271 = vld [vmem:[%s1263 + $0x1c] sm:$0xf]
      %v1272 = vld [vmem:[%s1263 + $0x20] sm:$0xf]
      %v1273 = vld [vmem:[%s1263 + $0x24] sm:$0xf]
      %v1274 = vld [vmem:[%s1263 + $0x28] sm:$0xf]
      %v1275 = vld [vmem:[%s1263 + $0x2c] sm:$0xf]
      %v1276 = vld [vmem:[%s1263 + $0x30] sm:$0xf]
      %v1277 = vld [vmem:[%s1263 + $0x34] sm:$0xf]
      %v1278 = vld [vmem:[%s1263 + $0x38] sm:$0xf]
      %v1279 = vld [vmem:[%s1263 + $0x3c] sm:$0xf]
      %v1286 = vunpack.c.l.b16 %v1257
      %v1287 = vunpack.c.l.b16 %v1258
      %v1288 = vunpack.c.l.b16 %v1259
      %v1289 = vunpack.c.l.b16 %v1260
      %v1290 = vunpack.c.l.b16 %v1261
      %v1291 = vunpack.c.l.b16 %v1262
      %v1292 = vpack.c.b16 %v1287, %v1286
      %v1293 = vpack.c.b16 %v1289, %v1288
      %v1294 = vpack.c.b16 %v1291, %v1290
      %vm1295 = vsmask.f32 4352
      %v1297 = vshrl.u32 %v1292, 16
      %v1299 = vrot.slane %v1297, 3
      %v1300 = vshll.u32 %v1292, 16
      %v1302 = vrot.slane %v1300, 4
      %v1303 = vor.u32 %v1299, %v1302
      %v1305 = vshrl.u32 %v1293, 16
      %v1307 = vrot.slane %v1305, 3
      %v1308 = vshll.u32 %v1293, 16
      %v1310 = vrot.slane %v1308, 4
      %v1311 = vor.u32 %v1307, %v1310
      %v1312 = vsel %vm1295, %v1303, %v1311
      %v1314 = vshrl.u32 %v1294, 16
      %v1316 = vrot.slane %v1314, 3
      %v1317 = vshll.u32 %v1294, 16
      %v1319 = vrot.slane %v1317, 4
      %v1320 = vor.u32 %v1316, %v1319
      %v1321 = vsel %vm1295, %v1311, %v1320
      %v1341 = vunpack.c.l.b16 %v1264
      %v1342 = vunpack.c.l.b16 %v1265
      %v1343 = vunpack.c.l.b16 %v1266
      %v1344 = vunpack.c.l.b16 %v1267
      %v1345 = vunpack.c.l.b16 %v1268
      %v1346 = vunpack.c.l.b16 %v1269
      %v1347 = vunpack.c.l.b16 %v1270
      %v1348 = vunpack.c.l.b16 %v1271
      %v1349 = vunpack.c.l.b16 %v1272
      %v1350 = vunpack.c.l.b16 %v1273
      %v1351 = vunpack.c.l.b16 %v1274
      %v1352 = vunpack.c.l.b16 %v1275
      %v1353 = vunpack.c.l.b16 %v1276
      %v1354 = vunpack.c.l.b16 %v1277
      %v1355 = vunpack.c.l.b16 %v1278
      %v1356 = vunpack.c.l.b16 %v1279
      %v1357 = vpack.c.b16 %v1342, %v1341
      %v1358 = vpack.c.b16 %v1344, %v1343
      %v1359 = vpack.c.b16 %v1346, %v1345
      %v1360 = vpack.c.b16 %v1348, %v1347
      %v1361 = vpack.c.b16 %v1350, %v1349
      %v1362 = vpack.c.b16 %v1352, %v1351
      %v1363 = vpack.c.b16 %v1354, %v1353
      %v1364 = vpack.c.b16 %v1356, %v1355
      %1373 = vmatprep.subr.bf16.mxu0 0
      %1374 = vmatpush1.bf16.msra.mxu0 %v1364
      %1375 = vmatprep.subr.bf16.mxu0 0
      %1376 = vmatpush1.bf16.msra.mxu0 %v1363
      %1377 = vmatprep.subr.bf16.mxu0 0
      %1378 = vmatpush1.bf16.msra.mxu0 %v1362
      %1379 = vmatprep.subr.bf16.mxu0 0
      %1380 = vmatpush1.bf16.msra.mxu0 %v1361
      %1381 = vmatprep.subr.bf16.mxu0 0
      %1382 = vmatpush1.bf16.msra.mxu0 %v1360
      %1383 = vmatprep.subr.bf16.mxu0 0
      %1384 = vmatpush1.bf16.msra.mxu0 %v1359
      %1385 = vmatprep.subr.bf16.mxu0 0
      %1386 = vmatpush1.bf16.msra.mxu0 %v1358
      %1387 = vmatprep.subr.bf16.mxu0 0
      %1388 = vmatpush1.bf16.msra.mxu0 %v1357
      %1389 = vmatprep.subr.bf16.mxu0 0
      %1390 = vmatpush2.bf16.msra.mxu0 0
      %1391 = vmatprep.subr.bf16.mxu0 0
      %1392 = vmatpush2.bf16.msra.mxu0 0
      %1393 = vmatprep.subr.bf16.mxu0 0
      %1394 = vmatpush2.bf16.msra.mxu0 0
      %1395 = vmatprep.subr.bf16.mxu0 0
      %1396 = vmatpush2.bf16.msra.mxu0 0
      %1397 = vmatprep.subr.bf16.mxu0 0
      %1398 = vmatpush2.bf16.msra.mxu0 0
      %1399 = vmatprep.subr.bf16.mxu0 0
      %1400 = vmatpush2.bf16.msra.mxu0 0
      %1401 = vmatprep.subr.bf16.mxu0 0
      %1402 = vmatpush2.bf16.msra.mxu0 0
      %1403 = vmatprep.subr.bf16.mxu0 0
      %1404 = vmatpush2.bf16.msra.mxu0 0
      %1405 = vmatprep.mubr.bf16.mxu0 0
      %1406 = vmatmul.mubr.bf16.gmra.mxu0 %v1312
      %v1407 = vpop.f32.mrf.mxu0
      %v1408 = vadd.f32 0.0, %v1407
      %v1409 = vpop.f32.mrf.mxu0
      %v1410 = vpop.f32.mrf.mxu0
      %v1411 = vadd.f32 0.0, %v1410
      %v1412 = vpop.f32.mrf.mxu0
      %1413 = vmatprep.mubr.bf16.mxu0 0
      %1414 = vmatmul.mubr.bf16.gmra.mxu0 %v1321
      %v1415 = vpop.f32.mrf.mxu0
      %v1416 = vadd.f32 0.0, %v1415
      %v1417 = vpop.f32.mrf.mxu0
      %v1418 = vpop.f32.mrf.mxu0
      %v1419 = vadd.f32 0.0, %v1418
      %v1420 = vpop.f32.mrf.mxu0
      %1421 = vmatprep.mubr.bf16.mxu0 0
      %1422 = vmatmul.mubr.bf16.gmra.mxu0 %v1320
      %v1423 = vpop.f32.mrf.mxu0
      %v1424 = vadd.f32 0.0, %v1423
      %v1425 = vpop.f32.mrf.mxu0
      %v1426 = vpop.f32.mrf.mxu0
      %v1427 = vpop.f32.mrf.mxu0
      %1428 = vdwg.mxu0
      %v1429 = vadd.f32 %v1213, %v1408
      %v1430 = vadd.f32 %v1214, %v1411
      %v1431 = vadd.f32 %v1215, %v1416
      %v1432 = vadd.f32 %v1216, %v1419
      %v1433 = vadd.f32 %v1217, %v1424
      %s1434 = scalar_lea.vmem %s6, 256
      %v1435 = vld [vmem:[%s1434] sm:$0xf]
      %v1436 = vld [vmem:[%s1434 + $0x4] sm:$0xf]
      %v1437 = vld [vmem:[%s1434 + $0x8] sm:$0xf]
      %v1438 = vld [vmem:[%s1434 + $0xc] sm:$0xf]
      %v1439 = vld [vmem:[%s1434 + $0x10] sm:$0xf]
      %v1440 = vld [vmem:[%s1434 + $0x14] sm:$0xf]
      %v1441 = vld [vmem:[%s1434 + $0x18] sm:$0xf]
      %v1442 = vld [vmem:[%s1434 + $0x1c] sm:$0xf]
      %v1443 = vld [vmem:[%s1434 + $0x20] sm:$0xf]
      %v1444 = vld [vmem:[%s1434 + $0x24] sm:$0xf]
      %v1445 = vld [vmem:[%s1434 + $0x28] sm:$0xf]
      %v1446 = vld [vmem:[%s1434 + $0x2c] sm:$0xf]
      %v1447 = vld [vmem:[%s1434 + $0x30] sm:$0xf]
      %v1448 = vld [vmem:[%s1434 + $0x34] sm:$0xf]
      %v1449 = vld [vmem:[%s1434 + $0x38] sm:$0xf]
      %v1450 = vld [vmem:[%s1434 + $0x3c] sm:$0xf]
      %v1456 = vunpack.c.l.b16 %v1219
      %v1457 = vunpack.c.l.b16 %v1220
      %v1458 = vunpack.c.l.b16 %v1221
      %v1459 = vunpack.c.l.b16 %v1222
      %v1460 = vunpack.c.l.b16 %v1223
      %v1461 = vpack.c.b16 %v1457, %v1456
      %v1462 = vpack.c.b16 %v1459, %v1458
      %v1463 = vpack.c.b16 %v1460, %v1460
      %v1483 = vunpack.c.l.b16 %v1435
      %v1484 = vunpack.c.l.b16 %v1436
      %v1485 = vunpack.c.l.b16 %v1437
      %v1486 = vunpack.c.l.b16 %v1438
      %v1487 = vunpack.c.l.b16 %v1439
      %v1488 = vunpack.c.l.b16 %v1440
      %v1489 = vunpack.c.l.b16 %v1441
      %v1490 = vunpack.c.l.b16 %v1442
      %v1491 = vunpack.c.l.b16 %v1443
      %v1492 = vunpack.c.l.b16 %v1444
      %v1493 = vunpack.c.l.b16 %v1445
      %v1494 = vunpack.c.l.b16 %v1446
      %v1495 = vunpack.c.l.b16 %v1447
      %v1496 = vunpack.c.l.b16 %v1448
      %v1497 = vunpack.c.l.b16 %v1449
      %v1498 = vunpack.c.l.b16 %v1450
      %v1499 = vpack.c.b16 %v1484, %v1483
      %v1500 = vpack.c.b16 %v1486, %v1485
      %v1501 = vpack.c.b16 %v1488, %v1487
      %v1502 = vpack.c.b16 %v1490, %v1489
      %v1503 = vpack.c.b16 %v1492, %v1491
      %v1504 = vpack.c.b16 %v1494, %v1493
      %v1505 = vpack.c.b16 %v1496, %v1495
      %v1506 = vpack.c.b16 %v1498, %v1497
      %1515 = vmatprep.subr.bf16.mxu0 0
      %1516 = vmatpush1.bf16.msra.mxu0 %v1506
      %1517 = vmatprep.subr.bf16.mxu0 0
      %1518 = vmatpush1.bf16.msra.mxu0 %v1505
      %1519 = vmatprep.subr.bf16.mxu0 0
      %1520 = vmatpush1.bf16.msra.mxu0 %v1504
      %1521 = vmatprep.subr.bf16.mxu0 0
      %1522 = vmatpush1.bf16.msra.mxu0 %v1503
      %1523 = vmatprep.subr.bf16.mxu0 0
      %1524 = vmatpush1.bf16.msra.mxu0 %v1502
      %1525 = vmatprep.subr.bf16.mxu0 0
      %1526 = vmatpush1.bf16.msra.mxu0 %v1501
      %1527 = vmatprep.subr.bf16.mxu0 0
      %1528 = vmatpush1.bf16.msra.mxu0 %v1500
      %1529 = vmatprep.subr.bf16.mxu0 0
      %1530 = vmatpush1.bf16.msra.mxu0 %v1499
      %1531 = vmatprep.subr.bf16.mxu0 0
      %1532 = vmatpush2.bf16.msra.mxu0 0
      %1533 = vmatprep.subr.bf16.mxu0 0
      %1534 = vmatpush2.bf16.msra.mxu0 0
      %1535 = vmatprep.subr.bf16.mxu0 0
      %1536 = vmatpush2.bf16.msra.mxu0 0
      %1537 = vmatprep.subr.bf16.mxu0 0
      %1538 = vmatpush2.bf16.msra.mxu0 0
      %1539 = vmatprep.subr.bf16.mxu0 0
      %1540 = vmatpush2.bf16.msra.mxu0 0
      %1541 = vmatprep.subr.bf16.mxu0 0
      %1542 = vmatpush2.bf16.msra.mxu0 0
      %1543 = vmatprep.subr.bf16.mxu0 0
      %1544 = vmatpush2.bf16.msra.mxu0 0
      %1545 = vmatprep.subr.bf16.mxu0 0
      %1546 = vmatpush2.bf16.msra.mxu0 0
      %1547 = vmatprep.mubr.bf16.mxu0 0
      %1548 = vmatmul.mubr.bf16.gmra.mxu0 %v1461
      %v1549 = vpop.f32.mrf.mxu0
      %v1550 = vadd.f32 0.0, %v1549
      %v1551 = vpop.f32.mrf.mxu0
      %v1552 = vpop.f32.mrf.mxu0
      %v1553 = vadd.f32 0.0, %v1552
      %v1554 = vpop.f32.mrf.mxu0
      %1555 = vmatprep.mubr.bf16.mxu0 0
      %1556 = vmatmul.mubr.bf16.gmra.mxu0 %v1462
      %v1557 = vpop.f32.mrf.mxu0
      %v1558 = vadd.f32 0.0, %v1557
      %v1559 = vpop.f32.mrf.mxu0
      %v1560 = vpop.f32.mrf.mxu0
      %v1561 = vadd.f32 0.0, %v1560
      %v1562 = vpop.f32.mrf.mxu0
      %1563 = vmatprep.mubr.bf16.mxu0 0
      %1564 = vmatmul.mubr.bf16.gmra.mxu0 %v1463
      %v1565 = vpop.f32.mrf.mxu0
      %v1566 = vadd.f32 0.0, %v1565
      %v1567 = vpop.f32.mrf.mxu0
      %v1568 = vpop.f32.mrf.mxu0
      %v1569 = vpop.f32.mrf.mxu0
      %1570 = vdwg.mxu0
      %v1571 = vadd.f32 %v1429, %v1550
      %v1572 = vadd.f32 %v1430, %v1553
      %v1573 = vadd.f32 %v1431, %v1558
      %v1574 = vadd.f32 %v1432, %v1561
      %v1575 = vadd.f32 %v1433, %v1566
      %v1576 = vld [vmem:[#allocation2 + $0x14] sm:$0x7]
      %v1577 = vrot.slane %v992, 7
      %v1578 = vor.u32 %v1577, %v995
      %v1579 = vrot.slane %v1577, 4
      %v1580 = vrot.slane %v1001, 7
      %v1581 = vor.u32 %v1580, %v1004
      %v1582 = vsel %vm619, %v1579, %v1581
      %v1583 = vrot.slane %v1580, 4
      %v1584 = vrot.slane %v1011, 7
      %v1585 = vor.u32 %v1584, %v1014
      %v1586 = vsel %vm619, %v1583, %v1585
      %v1587 = vrot.slane %v1584, 4
      %v1588 = vrot.slane %v1021, 7
      %v1589 = vor.u32 %v1588, %v1024
      %v1590 = vsel %vm619, %v1587, %v1589
      %v1591 = vrot.slane %v1588, 4
      %v1592 = vrot.slane %v1031, 7
      %v1593 = vor.u32 %v1592, %v1034
      %v1594 = vsel %vm619, %v1591, %v1593
      %vm1595 = vcmp.ne.s16.totalorder %v1578, 0
      %vm1596 = vcmp.ne.s16.totalorder %v1582, 0
      %vm1597 = vcmp.ne.s16.totalorder %v1586, 0
      %vm1598 = vcmp.ne.s16.totalorder %v1590, 0
      %vm1599 = vcmp.ne.s16.totalorder %v1594, 0
      %v1600 = vsel %vm1595, %v1219, 0
      %v1601 = vsel %vm1596, %v1220, 0
      %v1602 = vsel %vm1597, %v1221, 0
      %v1603 = vsel %vm1598, %v1222, 0
      %v1604 = vsel %vm1599, %v1576, 0
      %s1605 = scalar_lea.vmem %s6, 320
      %v1606 = vld [vmem:[%s1605] sm:$0xf]
      %v1607 = vld [vmem:[%s1605 + $0x4] sm:$0xf]
      %v1608 = vld [vmem:[%s1605 + $0x8] sm:$0xf]
      %v1609 = vld [vmem:[%s1605 + $0xc] sm:$0xf]
      %v1610 = vld [vmem:[%s1605 + $0x10] sm:$0xf]
      %v1611 = vld [vmem:[%s1605 + $0x14] sm:$0xf]
      %v1612 = vld [vmem:[%s1605 + $0x18] sm:$0xf]
      %v1613 = vld [vmem:[%s1605 + $0x1c] sm:$0xf]
      %v1614 = vld [vmem:[%s1605 + $0x20] sm:$0xf]
      %v1615 = vld [vmem:[%s1605 + $0x24] sm:$0xf]
      %v1616 = vld [vmem:[%s1605 + $0x28] sm:$0xf]
      %v1617 = vld [vmem:[%s1605 + $0x2c] sm:$0xf]
      %v1618 = vld [vmem:[%s1605 + $0x30] sm:$0xf]
      %v1619 = vld [vmem:[%s1605 + $0x34] sm:$0xf]
      %v1620 = vld [vmem:[%s1605 + $0x38] sm:$0xf]
      %v1621 = vld [vmem:[%s1605 + $0x3c] sm:$0xf]
      %v1627 = vunpack.c.l.b16 %v1600
      %v1628 = vunpack.c.l.b16 %v1601
      %v1629 = vunpack.c.l.b16 %v1602
      %v1630 = vunpack.c.l.b16 %v1603
      %v1631 = vunpack.c.l.b16 %v1604
      %v1632 = vpack.c.b16 %v1628, %v1627
      %v1633 = vpack.c.b16 %v1630, %v1629
      %v1634 = vpack.c.b16 %v1631, %v1631
      %v1636 = vshrl.u32 %v1632, 16
      %v1638 = vshll.u32 %v1632, 16
      %v1640 = vrot.slane %v1638, 1
      %v1641 = vor.u32 %v1636, %v1640
      %v1643 = vshll.u32 %v1633, 16
      %v1645 = vrot.slane %v1643, 1
      %v1646 = vsel %vm846, %v1641, %v1645
      %v1647 = vshrl.u32 %v1633, 16
      %v1649 = vor.u32 %v1647, %v1645
      %v1651 = vshll.u32 %v1634, 16
      %v1653 = vrot.slane %v1651, 1
      %v1654 = vsel %vm846, %v1649, %v1653
      %v1655 = vshrl.u32 %v1634, 16
      %v1657 = vor.u32 %v1655, %v1653
      %v1677 = vunpack.c.l.b16 %v1606
      %v1678 = vunpack.c.l.b16 %v1607
      %v1679 = vunpack.c.l.b16 %v1608
      %v1680 = vunpack.c.l.b16 %v1609
      %v1681 = vunpack.c.l.b16 %v1610
      %v1682 = vunpack.c.l.b16 %v1611
      %v1683 = vunpack.c.l.b16 %v1612
      %v1684 = vunpack.c.l.b16 %v1613
      %v1685 = vunpack.c.l.b16 %v1614
      %v1686 = vunpack.c.l.b16 %v1615
      %v1687 = vunpack.c.l.b16 %v1616
      %v1688 = vunpack.c.l.b16 %v1617
      %v1689 = vunpack.c.l.b16 %v1618
      %v1690 = vunpack.c.l.b16 %v1619
      %v1691 = vunpack.c.l.b16 %v1620
      %v1692 = vunpack.c.l.b16 %v1621
      %v1693 = vpack.c.b16 %v1678, %v1677
      %v1694 = vpack.c.b16 %v1680, %v1679
      %v1695 = vpack.c.b16 %v1682, %v1681
      %v1696 = vpack.c.b16 %v1684, %v1683
      %v1697 = vpack.c.b16 %v1686, %v1685
      %v1698 = vpack.c.b16 %v1688, %v1687
      %v1699 = vpack.c.b16 %v1690, %v1689
      %v1700 = vpack.c.b16 %v1692, %v1691
      %1709 = vmatprep.subr.bf16.mxu0 0
      %1710 = vmatpush1.bf16.msra.mxu0 %v1700
      %1711 = vmatprep.subr.bf16.mxu0 0
      %1712 = vmatpush1.bf16.msra.mxu0 %v1699
      %1713 = vmatprep.subr.bf16.mxu0 0
      %1714 = vmatpush1.bf16.msra.mxu0 %v1698
      %1715 = vmatprep.subr.bf16.mxu0 0
      %1716 = vmatpush1.bf16.msra.mxu0 %v1697
      %1717 = vmatprep.subr.bf16.mxu0 0
      %1718 = vmatpush1.bf16.msra.mxu0 %v1696
      %1719 = vmatprep.subr.bf16.mxu0 0
      %1720 = vmatpush1.bf16.msra.mxu0 %v1695
      %1721 = vmatprep.subr.bf16.mxu0 0
      %1722 = vmatpush1.bf16.msra.mxu0 %v1694
      %1723 = vmatprep.subr.bf16.mxu0 0
      %1724 = vmatpush1.bf16.msra.mxu0 %v1693
      %1725 = vmatprep.subr.bf16.mxu0 0
      %1726 = vmatpush2.bf16.msra.mxu0 0
      %1727 = vmatprep.subr.bf16.mxu0 0
      %1728 = vmatpush2.bf16.msra.mxu0 0
      %1729 = vmatprep.subr.bf16.mxu0 0
      %1730 = vmatpush2.bf16.msra.mxu0 0
      %1731 = vmatprep.subr.bf16.mxu0 0
      %1732 = vmatpush2.bf16.msra.mxu0 0
      %1733 = vmatprep.subr.bf16.mxu0 0
      %1734 = vmatpush2.bf16.msra.mxu0 0
      %1735 = vmatprep.subr.bf16.mxu0 0
      %1736 = vmatpush2.bf16.msra.mxu0 0
      %1737 = vmatprep.subr.bf16.mxu0 0
      %1738 = vmatpush2.bf16.msra.mxu0 0
      %1739 = vmatprep.subr.bf16.mxu0 0
      %1740 = vmatpush2.bf16.msra.mxu0 0
      %1741 = vmatprep.mubr.bf16.mxu0 0
      %1742 = vmatmul.mubr.bf16.gmra.mxu0 %v1646
      %v1743 = vpop.f32.mrf.mxu0
      %v1744 = vadd.f32 0.0, %v1743
      %v1745 = vpop.f32.mrf.mxu0
      %v1746 = vpop.f32.mrf.mxu0
      %v1747 = vadd.f32 0.0, %v1746
      %v1748 = vpop.f32.mrf.mxu0
      %1749 = vmatprep.mubr.bf16.mxu0 0
      %1750 = vmatmul.mubr.bf16.gmra.mxu0 %v1654
      %v1751 = vpop.f32.mrf.mxu0
      %v1752 = vadd.f32 0.0, %v1751
      %v1753 = vpop.f32.mrf.mxu0
      %v1754 = vpop.f32.mrf.mxu0
      %v1755 = vadd.f32 0.0, %v1754
      %v1756 = vpop.f32.mrf.mxu0
      %1757 = vmatprep.mubr.bf16.mxu0 0
      %1758 = vmatmul.mubr.bf16.gmra.mxu0 %v1657
      %v1759 = vpop.f32.mrf.mxu0
      %v1760 = vadd.f32 0.0, %v1759
      %v1761 = vpop.f32.mrf.mxu0
      %v1762 = vpop.f32.mrf.mxu0
      %v1763 = vpop.f32.mrf.mxu0
      %1764 = vdwg.mxu0
      %v1765 = vadd.f32 %v1571, %v1744
      %v1766 = vadd.f32 %v1572, %v1747
      %v1767 = vadd.f32 %v1573, %v1752
      %v1768 = vadd.f32 %v1574, %v1755
      %v1769 = vadd.f32 %v1575, %v1760
      %v1770 = vld [vmem:[#allocation2 + $0x4] sm:$0xc]
      %v1771 = vld [vmem:[#allocation2 + $0x8] sm:$0xf]
      %v1772 = vld [vmem:[#allocation2 + $0xc] sm:$0xf]
      %v1773 = vld [vmem:[#allocation2 + $0x10] sm:$0xf]
      %v1774 = vld [vmem:[#allocation2 + $0x14] sm:$0xf]
      %v1775 = vld [vmem:[#allocation2 + $0x18] sm:$0x1]
      %vm1776 = vsmask.f32 2304
      %vm1777 = vsmask.f32 6416
      %vm1778 = vmor %vm1776, %vm1777
      %v1779 = vrot.slane %v621, 5
      %v1780 = vrot.slane %v624, 6
      %v1781 = vor.u32 %v1779, %v1780
      %v1782 = vrot.slane %v1781, 4
      %v1783 = vrot.slane %v629, 5
      %v1784 = vrot.slane %v632, 6
      %v1785 = vor.u32 %v1783, %v1784
      %v1786 = vsel %vm1778, %v1782, %v1785
      %v1787 = vrot.slane %v1785, 4
      %v1788 = vrot.slane %v638, 5
      %v1789 = vrot.slane %v641, 6
      %v1790 = vor.u32 %v1788, %v1789
      %v1791 = vsel %vm1778, %v1787, %v1790
      %v1792 = vrot.slane %v1790, 4
      %v1793 = vrot.slane %v647, 5
      %v1794 = vrot.slane %v650, 6
      %v1795 = vor.u32 %v1793, %v1794
      %v1796 = vsel %vm1778, %v1792, %v1795
      %v1797 = vrot.slane %v1795, 4
      %v1798 = vrot.slane %v656, 5
      %v1799 = vrot.slane %v659, 6
      %v1800 = vor.u32 %v1798, %v1799
      %v1801 = vsel %vm1778, %v1797, %v1800
      %v1802 = vrot.slane %v1798, 4
      %vm1803 = vcmp.ne.s16.totalorder %v1781, 0
      %vm1804 = vcmp.ne.s16.totalorder %v1786, 0
      %vm1805 = vcmp.ne.s16.totalorder %v1791, 0
      %vm1806 = vcmp.ne.s16.totalorder %v1796, 0
      %vm1807 = vcmp.ne.s16.totalorder %v1801, 0
      %vm1808 = vcmp.ne.s16.totalorder %v1802, 0
      %v1809 = vsel %vm1803, %v1770, 0
      %v1810 = vsel %vm1804, %v1771, 0
      %v1811 = vsel %vm1805, %v1772, 0
      %v1812 = vsel %vm1806, %v1773, 0
      %v1813 = vsel %vm1807, %v1774, 0
      %v1814 = vsel %vm1808, %v1775, 0
      %s1815 = scalar_lea.vmem %s6, 384
      %v1816 = vld [vmem:[%s1815] sm:$0xf]
      %v1817 = vld [vmem:[%s1815 + $0x4] sm:$0xf]
      %v1818 = vld [vmem:[%s1815 + $0x8] sm:$0xf]
      %v1819 = vld [vmem:[%s1815 + $0xc] sm:$0xf]
      %v1820 = vld [vmem:[%s1815 + $0x10] sm:$0xf]
      %v1821 = vld [vmem:[%s1815 + $0x14] sm:$0xf]
      %v1822 = vld [vmem:[%s1815 + $0x18] sm:$0xf]
      %v1823 = vld [vmem:[%s1815 + $0x1c] sm:$0xf]
      %v1824 = vld [vmem:[%s1815 + $0x20] sm:$0xf]
      %v1825 = vld [vmem:[%s1815 + $0x24] sm:$0xf]
      %v1826 = vld [vmem:[%s1815 + $0x28] sm:$0xf]
      %v1827 = vld [vmem:[%s1815 + $0x2c] sm:$0xf]
      %v1828 = vld [vmem:[%s1815 + $0x30] sm:$0xf]
      %v1829 = vld [vmem:[%s1815 + $0x34] sm:$0xf]
      %v1830 = vld [vmem:[%s1815 + $0x38] sm:$0xf]
      %v1831 = vld [vmem:[%s1815 + $0x3c] sm:$0xf]
      %v1838 = vunpack.c.l.b16 %v1809
      %v1839 = vunpack.c.l.b16 %v1810
      %v1840 = vunpack.c.l.b16 %v1811
      %v1841 = vunpack.c.l.b16 %v1812
      %v1842 = vunpack.c.l.b16 %v1813
      %v1843 = vunpack.c.l.b16 %v1814
      %v1844 = vpack.c.b16 %v1839, %v1838
      %v1845 = vpack.c.b16 %v1841, %v1840
      %v1846 = vpack.c.b16 %v1843, %v1842
      %vm1847 = vsmask.f32 5376
      %v1849 = vshrl.u32 %v1844, 16
      %v1851 = vrot.slane %v1849, 2
      %v1852 = vshll.u32 %v1844, 16
      %v1854 = vrot.slane %v1852, 3
      %v1855 = vor.u32 %v1851, %v1854
      %v1857 = vshrl.u32 %v1845, 16
      %v1859 = vrot.slane %v1857, 2
      %v1860 = vshll.u32 %v1845, 16
      %v1862 = vrot.slane %v1860, 3
      %v1863 = vor.u32 %v1859, %v1862
      %v1864 = vsel %vm1847, %v1855, %v1863
      %v1866 = vshrl.u32 %v1846, 16
      %v1868 = vrot.slane %v1866, 2
      %v1869 = vshll.u32 %v1846, 16
      %v1871 = vrot.slane %v1869, 3
      %v1872 = vor.u32 %v1868, %v1871
      %v1873 = vsel %vm1847, %v1863, %v1872
      %v1893 = vunpack.c.l.b16 %v1816
      %v1894 = vunpack.c.l.b16 %v1817
      %v1895 = vunpack.c.l.b16 %v1818
      %v1896 = vunpack.c.l.b16 %v1819
      %v1897 = vunpack.c.l.b16 %v1820
      %v1898 = vunpack.c.l.b16 %v1821
      %v1899 = vunpack.c.l.b16 %v1822
      %v1900 = vunpack.c.l.b16 %v1823
      %v1901 = vunpack.c.l.b16 %v1824
      %v1902 = vunpack.c.l.b16 %v1825
      %v1903 = vunpack.c.l.b16 %v1826
      %v1904 = vunpack.c.l.b16 %v1827
      %v1905 = vunpack.c.l.b16 %v1828
      %v1906 = vunpack.c.l.b16 %v1829
      %v1907 = vunpack.c.l.b16 %v1830
      %v1908 = vunpack.c.l.b16 %v1831
      %v1909 = vpack.c.b16 %v1894, %v1893
      %v1910 = vpack.c.b16 %v1896, %v1895
      %v1911 = vpack.c.b16 %v1898, %v1897
      %v1912 = vpack.c.b16 %v1900, %v1899
      %v1913 = vpack.c.b16 %v1902, %v1901
      %v1914 = vpack.c.b16 %v1904, %v1903
      %v1915 = vpack.c.b16 %v1906, %v1905
      %v1916 = vpack.c.b16 %v1908, %v1907
      %1925 = vmatprep.subr.bf16.mxu0 0
      %1926 = vmatpush1.bf16.msra.mxu0 %v1916
      %1927 = vmatprep.subr.bf16.mxu0 0
      %1928 = vmatpush1.bf16.msra.mxu0 %v1915
      %1929 = vmatprep.subr.bf16.mxu0 0
      %1930 = vmatpush1.bf16.msra.mxu0 %v1914
      %1931 = vmatprep.subr.bf16.mxu0 0
      %1932 = vmatpush1.bf16.msra.mxu0 %v1913
      %1933 = vmatprep.subr.bf16.mxu0 0
      %1934 = vmatpush1.bf16.msra.mxu0 %v1912
      %1935 = vmatprep.subr.bf16.mxu0 0
      %1936 = vmatpush1.bf16.msra.mxu0 %v1911
      %1937 = vmatprep.subr.bf16.mxu0 0
      %1938 = vmatpush1.bf16.msra.mxu0 %v1910
      %1939 = vmatprep.subr.bf16.mxu0 0
      %1940 = vmatpush1.bf16.msra.mxu0 %v1909
      %1941 = vmatprep.subr.bf16.mxu0 0
      %1942 = vmatpush2.bf16.msra.mxu0 0
      %1943 = vmatprep.subr.bf16.mxu0 0
      %1944 = vmatpush2.bf16.msra.mxu0 0
      %1945 = vmatprep.subr.bf16.mxu0 0
      %1946 = vmatpush2.bf16.msra.mxu0 0
      %1947 = vmatprep.subr.bf16.mxu0 0
      %1948 = vmatpush2.bf16.msra.mxu0 0
      %1949 = vmatprep.subr.bf16.mxu0 0
      %1950 = vmatpush2.bf16.msra.mxu0 0
      %1951 = vmatprep.subr.bf16.mxu0 0
      %1952 = vmatpush2.bf16.msra.mxu0 0
      %1953 = vmatprep.subr.bf16.mxu0 0
      %1954 = vmatpush2.bf16.msra.mxu0 0
      %1955 = vmatprep.subr.bf16.mxu0 0
      %1956 = vmatpush2.bf16.msra.mxu0 0
      %1957 = vmatprep.mubr.bf16.mxu0 0
      %1958 = vmatmul.mubr.bf16.gmra.mxu0 %v1864
      %v1959 = vpop.f32.mrf.mxu0
      %v1960 = vadd.f32 0.0, %v1959
      %v1961 = vpop.f32.mrf.mxu0
      %v1962 = vpop.f32.mrf.mxu0
      %v1963 = vadd.f32 0.0, %v1962
      %v1964 = vpop.f32.mrf.mxu0
      %1965 = vmatprep.mubr.bf16.mxu0 0
      %1966 = vmatmul.mubr.bf16.gmra.mxu0 %v1873
      %v1967 = vpop.f32.mrf.mxu0
      %v1968 = vadd.f32 0.0, %v1967
      %v1969 = vpop.f32.mrf.mxu0
      %v1970 = vpop.f32.mrf.mxu0
      %v1971 = vadd.f32 0.0, %v1970
      %v1972 = vpop.f32.mrf.mxu0
      %1973 = vmatprep.mubr.bf16.mxu0 0
      %1974 = vmatmul.mubr.bf16.gmra.mxu0 %v1872
      %v1975 = vpop.f32.mrf.mxu0
      %v1976 = vadd.f32 0.0, %v1975
      %v1977 = vpop.f32.mrf.mxu0
      %v1978 = vpop.f32.mrf.mxu0
      %v1979 = vpop.f32.mrf.mxu0
      %1980 = vdwg.mxu0
      %v1981 = vadd.f32 %v1765, %v1960
      %v1982 = vadd.f32 %v1766, %v1963
      %v1983 = vadd.f32 %v1767, %v1968
      %v1984 = vadd.f32 %v1768, %v1971
      %v1985 = vadd.f32 %v1769, %v1976
      %v1986 = vld [vmem:[#allocation2 + $0x4] sm:$0x8]
      %s1987 = scalar_lea.vmem %s6, 448
      %v1988 = vld [vmem:[%s1987] sm:$0xf]
      %v1989 = vld [vmem:[%s1987 + $0x4] sm:$0xf]
      %v1990 = vld [vmem:[%s1987 + $0x8] sm:$0xf]
      %v1991 = vld [vmem:[%s1987 + $0xc] sm:$0xf]
      %v1992 = vld [vmem:[%s1987 + $0x10] sm:$0xf]
      %v1993 = vld [vmem:[%s1987 + $0x14] sm:$0xf]
      %v1994 = vld [vmem:[%s1987 + $0x18] sm:$0xf]
      %v1995 = vld [vmem:[%s1987 + $0x1c] sm:$0xf]
      %v1996 = vld [vmem:[%s1987 + $0x20] sm:$0xf]
      %v1997 = vld [vmem:[%s1987 + $0x24] sm:$0xf]
      %v1998 = vld [vmem:[%s1987 + $0x28] sm:$0xf]
      %v1999 = vld [vmem:[%s1987 + $0x2c] sm:$0xf]
      %v2000 = vld [vmem:[%s1987 + $0x30] sm:$0xf]
      %v2001 = vld [vmem:[%s1987 + $0x34] sm:$0xf]
      %v2002 = vld [vmem:[%s1987 + $0x38] sm:$0xf]
      %v2003 = vld [vmem:[%s1987 + $0x3c] sm:$0xf]
      %v2010 = vunpack.c.l.b16 %v1986
      %v2011 = vunpack.c.l.b16 %v1771
      %v2012 = vunpack.c.l.b16 %v1772
      %v2013 = vunpack.c.l.b16 %v1773
      %v2014 = vunpack.c.l.b16 %v1774
      %v2015 = vunpack.c.l.b16 %v1775
      %v2016 = vpack.c.b16 %v2011, %v2010
      %v2017 = vpack.c.b16 %v2013, %v2012
      %v2018 = vpack.c.b16 %v2015, %v2014
      %vm2019 = vcmask 1044480
      %v2020 = vrot.slane %v2016, 3
      %v2021 = vrot.slane %v2017, 3
      %v2022 = vsel %vm2019, %v2020, %v2021
      %v2023 = vrot.slane %v2018, 3
      %v2024 = vsel %vm2019, %v2021, %v2023
      %v2044 = vunpack.c.l.b16 %v1988
      %v2045 = vunpack.c.l.b16 %v1989
      %v2046 = vunpack.c.l.b16 %v1990
      %v2047 = vunpack.c.l.b16 %v1991
      %v2048 = vunpack.c.l.b16 %v1992
      %v2049 = vunpack.c.l.b16 %v1993
      %v2050 = vunpack.c.l.b16 %v1994
      %v2051 = vunpack.c.l.b16 %v1995
      %v2052 = vunpack.c.l.b16 %v1996
      %v2053 = vunpack.c.l.b16 %v1997
      %v2054 = vunpack.c.l.b16 %v1998
      %v2055 = vunpack.c.l.b16 %v1999
      %v2056 = vunpack.c.l.b16 %v2000
      %v2057 = vunpack.c.l.b16 %v2001
      %v2058 = vunpack.c.l.b16 %v2002
      %v2059 = vunpack.c.l.b16 %v2003
      %v2060 = vpack.c.b16 %v2045, %v2044
      %v2061 = vpack.c.b16 %v2047, %v2046
      %v2062 = vpack.c.b16 %v2049, %v2048
      %v2063 = vpack.c.b16 %v2051, %v2050
      %v2064 = vpack.c.b16 %v2053, %v2052
      %v2065 = vpack.c.b16 %v2055, %v2054
      %v2066 = vpack.c.b16 %v2057, %v2056
      %v2067 = vpack.c.b16 %v2059, %v2058
      %2076 = vmatprep.subr.bf16.mxu0 0
      %2077 = vmatpush1.bf16.msra.mxu0 %v2067
      %2078 = vmatprep.subr.bf16.mxu0 0
      %2079 = vmatpush1.bf16.msra.mxu0 %v2066
      %2080 = vmatprep.subr.bf16.mxu0 0
      %2081 = vmatpush1.bf16.msra.mxu0 %v2065
      %2082 = vmatprep.subr.bf16.mxu0 0
      %2083 = vmatpush1.bf16.msra.mxu0 %v2064
      %2084 = vmatprep.subr.bf16.mxu0 0
      %2085 = vmatpush1.bf16.msra.mxu0 %v2063
      %2086 = vmatprep.subr.bf16.mxu0 0
      %2087 = vmatpush1.bf16.msra.mxu0 %v2062
      %2088 = vmatprep.subr.bf16.mxu0 0
      %2089 = vmatpush1.bf16.msra.mxu0 %v2061
      %2090 = vmatprep.subr.bf16.mxu0 0
      %2091 = vmatpush1.bf16.msra.mxu0 %v2060
      %2092 = vmatprep.subr.bf16.mxu0 0
      %2093 = vmatpush2.bf16.msra.mxu0 0
      %2094 = vmatprep.subr.bf16.mxu0 0
      %2095 = vmatpush2.bf16.msra.mxu0 0
      %2096 = vmatprep.subr.bf16.mxu0 0
      %2097 = vmatpush2.bf16.msra.mxu0 0
      %2098 = vmatprep.subr.bf16.mxu0 0
      %2099 = vmatpush2.bf16.msra.mxu0 0
      %2100 = vmatprep.subr.bf16.mxu0 0
      %2101 = vmatpush2.bf16.msra.mxu0 0
      %2102 = vmatprep.subr.bf16.mxu0 0
      %2103 = vmatpush2.bf16.msra.mxu0 0
      %2104 = vmatprep.subr.bf16.mxu0 0
      %2105 = vmatpush2.bf16.msra.mxu0 0
      %2106 = vmatprep.subr.bf16.mxu0 0
      %2107 = vmatpush2.bf16.msra.mxu0 0
      %2108 = vmatprep.mubr.bf16.mxu0 0
      %2109 = vmatmul.mubr.bf16.gmra.mxu0 %v2022
      %v2110 = vpop.f32.mrf.mxu0
      %v2111 = vadd.f32 0.0, %v2110
      %v2112 = vpop.f32.mrf.mxu0
      %v2113 = vpop.f32.mrf.mxu0
      %v2114 = vadd.f32 0.0, %v2113
      %v2115 = vpop.f32.mrf.mxu0
      %2116 = vmatprep.mubr.bf16.mxu0 0
      %2117 = vmatmul.mubr.bf16.gmra.mxu0 %v2024
      %v2118 = vpop.f32.mrf.mxu0
      %v2119 = vadd.f32 0.0, %v2118
      %v2120 = vpop.f32.mrf.mxu0
      %v2121 = vpop.f32.mrf.mxu0
      %v2122 = vadd.f32 0.0, %v2121
      %v2123 = vpop.f32.mrf.mxu0
      %2124 = vmatprep.mubr.bf16.mxu0 0
      %2125 = vmatmul.mubr.bf16.gmra.mxu0 %v2023
      %v2126 = vpop.f32.mrf.mxu0
      %v2127 = vadd.f32 0.0, %v2126
      %v2128 = vpop.f32.mrf.mxu0
      %v2129 = vpop.f32.mrf.mxu0
      %v2130 = vpop.f32.mrf.mxu0
      %2131 = vdwg.mxu0
      %v2132 = vadd.f32 %v1981, %v2111
      %v2133 = vadd.f32 %v1982, %v2114
      %v2134 = vadd.f32 %v1983, %v2119
      %v2135 = vadd.f32 %v1984, %v2122
      %v2136 = vadd.f32 %v1985, %v2127
      %v2137 = vld [vmem:[#allocation2 + $0x18] sm:$0x3]
      %v2138 = vrot.slane %v995, 5
      %v2139 = vrot.slane %v992, 4
      %v2140 = vor.u32 %v2139, %v2138
      %v2141 = vrot.slane %v2140, 4
      %v2142 = vrot.slane %v1004, 5
      %v2143 = vsel %vm1226, %v2141, %v2142
      %v2144 = vrot.slane %v1001, 4
      %v2145 = vor.u32 %v2144, %v2142
      %v2146 = vrot.slane %v2145, 4
      %v2147 = vrot.slane %v1014, 5
      %v2148 = vsel %vm1226, %v2146, %v2147
      %v2149 = vrot.slane %v1011, 4
      %v2150 = vor.u32 %v2149, %v2147
      %v2151 = vrot.slane %v2150, 4
      %v2152 = vrot.slane %v1024, 5
      %v2153 = vsel %vm1226, %v2151, %v2152
      %v2154 = vrot.slane %v1021, 4
      %v2155 = vor.u32 %v2154, %v2152
      %v2156 = vrot.slane %v2155, 4
      %v2157 = vrot.slane %v1034, 5
      %v2158 = vsel %vm1226, %v2156, %v2157
      %v2159 = vrot.slane %v1031, 4
      %v2160 = vor.u32 %v2159, %v2157
      %v2161 = vrot.slane %v2160, 4
      %vm2162 = vcmp.ne.s16.totalorder %v2138, 0
      %vm2163 = vcmp.ne.s16.totalorder %v2143, 0
      %vm2164 = vcmp.ne.s16.totalorder %v2148, 0
      %vm2165 = vcmp.ne.s16.totalorder %v2153, 0
      %vm2166 = vcmp.ne.s16.totalorder %v2158, 0
      %vm2167 = vcmp.ne.s16.totalorder %v2161, 0
      %v2168 = vsel %vm2162, %v1986, 0
      %v2169 = vsel %vm2163, %v1771, 0
      %v2170 = vsel %vm2164, %v1772, 0
      %v2171 = vsel %vm2165, %v1773, 0
      %v2172 = vsel %vm2166, %v1774, 0
      %v2173 = vsel %vm2167, %v2137, 0
      %s2174 = scalar_lea.vmem %s6, 512
      %v2175 = vld [vmem:[%s2174] sm:$0xf]
      %v2176 = vld [vmem:[%s2174 + $0x4] sm:$0xf]
      %v2177 = vld [vmem:[%s2174 + $0x8] sm:$0xf]
      %v2178 = vld [vmem:[%s2174 + $0xc] sm:$0xf]
      %v2179 = vld [vmem:[%s2174 + $0x10] sm:$0xf]
      %v2180 = vld [vmem:[%s2174 + $0x14] sm:$0xf]
      %v2181 = vld [vmem:[%s2174 + $0x18] sm:$0xf]
      %v2182 = vld [vmem:[%s2174 + $0x1c] sm:$0xf]
      %v2183 = vld [vmem:[%s2174 + $0x20] sm:$0xf]
      %v2184 = vld [vmem:[%s2174 + $0x24] sm:$0xf]
      %v2185 = vld [vmem:[%s2174 + $0x28] sm:$0xf]
      %v2186 = vld [vmem:[%s2174 + $0x2c] sm:$0xf]
      %v2187 = vld [vmem:[%s2174 + $0x30] sm:$0xf]
      %v2188 = vld [vmem:[%s2174 + $0x34] sm:$0xf]
      %v2189 = vld [vmem:[%s2174 + $0x38] sm:$0xf]
      %v2190 = vld [vmem:[%s2174 + $0x3c] sm:$0xf]
      %v2197 = vunpack.c.l.b16 %v2168
      %v2198 = vunpack.c.l.b16 %v2169
      %v2199 = vunpack.c.l.b16 %v2170
      %v2200 = vunpack.c.l.b16 %v2171
      %v2201 = vunpack.c.l.b16 %v2172
      %v2202 = vunpack.c.l.b16 %v2173
      %v2203 = vpack.c.b16 %v2198, %v2197
      %v2204 = vpack.c.b16 %v2200, %v2199
      %v2205 = vpack.c.b16 %v2202, %v2201
      %v2207 = vshrl.u32 %v2203, 16
      %v2209 = vrot.slane %v2207, 3
      %v2210 = vshll.u32 %v2203, 16
      %v2212 = vrot.slane %v2210, 4
      %v2213 = vor.u32 %v2209, %v2212
      %v2215 = vshrl.u32 %v2204, 16
      %v2217 = vrot.slane %v2215, 3
      %v2218 = vshll.u32 %v2204, 16
      %v2220 = vrot.slane %v2218, 4
      %v2221 = vor.u32 %v2217, %v2220
      %v2222 = vsel %vm1295, %v2213, %v2221
      %v2224 = vshrl.u32 %v2205, 16
      %v2226 = vrot.slane %v2224, 3
      %v2227 = vshll.u32 %v2205, 16
      %v2229 = vrot.slane %v2227, 4
      %v2230 = vor.u32 %v2226, %v2229
      %v2231 = vsel %vm1295, %v2221, %v2230
      %v2251 = vunpack.c.l.b16 %v2175
      %v2252 = vunpack.c.l.b16 %v2176
      %v2253 = vunpack.c.l.b16 %v2177
      %v2254 = vunpack.c.l.b16 %v2178
      %v2255 = vunpack.c.l.b16 %v2179
      %v2256 = vunpack.c.l.b16 %v2180
      %v2257 = vunpack.c.l.b16 %v2181
      %v2258 = vunpack.c.l.b16 %v2182
      %v2259 = vunpack.c.l.b16 %v2183
      %v2260 = vunpack.c.l.b16 %v2184
      %v2261 = vunpack.c.l.b16 %v2185
      %v2262 = vunpack.c.l.b16 %v2186
      %v2263 = vunpack.c.l.b16 %v2187
      %v2264 = vunpack.c.l.b16 %v2188
      %v2265 = vunpack.c.l.b16 %v2189
      %v2266 = vunpack.c.l.b16 %v2190
      %v2267 = vpack.c.b16 %v2252, %v2251
      %v2268 = vpack.c.b16 %v2254, %v2253
      %v2269 = vpack.c.b16 %v2256, %v2255
      %v2270 = vpack.c.b16 %v2258, %v2257
      %v2271 = vpack.c.b16 %v2260, %v2259
      %v2272 = vpack.c.b16 %v2262, %v2261
      %v2273 = vpack.c.b16 %v2264, %v2263
      %v2274 = vpack.c.b16 %v2266, %v2265
      %2283 = vmatprep.subr.bf16.mxu0 0
      %2284 = vmatpush1.bf16.msra.mxu0 %v2274
      %2285 = vmatprep.subr.bf16.mxu0 0
      %2286 = vmatpush1.bf16.msra.mxu0 %v2273
      %2287 = vmatprep.subr.bf16.mxu0 0
      %2288 = vmatpush1.bf16.msra.mxu0 %v2272
      %2289 = vmatprep.subr.bf16.mxu0 0
      %2290 = vmatpush1.bf16.msra.mxu0 %v2271
      %2291 = vmatprep.subr.bf16.mxu0 0
      %2292 = vmatpush1.bf16.msra.mxu0 %v2270
      %2293 = vmatprep.subr.bf16.mxu0 0
      %2294 = vmatpush1.bf16.msra.mxu0 %v2269
      %2295 = vmatprep.subr.bf16.mxu0 0
      %2296 = vmatpush1.bf16.msra.mxu0 %v2268
      %2297 = vmatprep.subr.bf16.mxu0 0
      %2298 = vmatpush1.bf16.msra.mxu0 %v2267
      %2299 = vmatprep.subr.bf16.mxu0 0
      %2300 = vmatpush2.bf16.msra.mxu0 0
      %2301 = vmatprep.subr.bf16.mxu0 0
      %2302 = vmatpush2.bf16.msra.mxu0 0
      %2303 = vmatprep.subr.bf16.mxu0 0
      %2304 = vmatpush2.bf16.msra.mxu0 0
      %2305 = vmatprep.subr.bf16.mxu0 0
      %2306 = vmatpush2.bf16.msra.mxu0 0
      %2307 = vmatprep.subr.bf16.mxu0 0
      %2308 = vmatpush2.bf16.msra.mxu0 0
      %2309 = vmatprep.subr.bf16.mxu0 0
      %2310 = vmatpush2.bf16.msra.mxu0 0
      %2311 = vmatprep.subr.bf16.mxu0 0
      %2312 = vmatpush2.bf16.msra.mxu0 0
      %2313 = vmatprep.subr.bf16.mxu0 0
      %2314 = vmatpush2.bf16.msra.mxu0 0
      %2315 = vmatprep.mubr.bf16.mxu0 0
      %2316 = vmatmul.mubr.bf16.gmra.mxu0 %v2222
      %v2317 = vpop.f32.mrf.mxu0
      %v2318 = vadd.f32 0.0, %v2317
      %v2319 = vpop.f32.mrf.mxu0
      %v2320 = vpop.f32.mrf.mxu0
      %v2321 = vadd.f32 0.0, %v2320
      %v2322 = vpop.f32.mrf.mxu0
      %2323 = vmatprep.mubr.bf16.mxu0 0
      %2324 = vmatmul.mubr.bf16.gmra.mxu0 %v2231
      %v2325 = vpop.f32.mrf.mxu0
      %v2326 = vadd.f32 0.0, %v2325
      %v2327 = vpop.f32.mrf.mxu0
      %v2328 = vpop.f32.mrf.mxu0
      %v2329 = vadd.f32 0.0, %v2328
      %v2330 = vpop.f32.mrf.mxu0
      %2331 = vmatprep.mubr.bf16.mxu0 0
      %2332 = vmatmul.mubr.bf16.gmra.mxu0 %v2230
      %v2333 = vpop.f32.mrf.mxu0
      %v2334 = vadd.f32 0.0, %v2333
      %v2335 = vpop.f32.mrf.mxu0
      %v2336 = vpop.f32.mrf.mxu0
      %v2337 = vpop.f32.mrf.mxu0
      %2338 = vdwg.mxu0
      %v2339 = vadd.f32 %v2132, %v2318
      %v2340 = vadd.f32 %v2133, %v2321
      %v2341 = vadd.f32 %v2134, %v2326
      %v2342 = vadd.f32 %v2135, %v2329
      %v2343 = vadd.f32 %v2136, %v2334
      %v2344 = vadd.f32 %v287, %v2339
      %v2345 = vadd.f32 %v288, %v2340
      %v2346 = vadd.f32 %v289, %v2341
      %v2347 = vadd.f32 %v290, %v2342
      %v2348 = vadd.f32 %v291, %v2343
      %v2349 = vpack.c.bf16 %v2345, %v2344
      %v2350 = vpack.c.bf16 %v2347, %v2346
      %v2351 = vpack.c.bf16 %v2348, %v2348
      %v2355 = vunpack.c.l.b16 %v2349
      %v2356 = vunpack.c.h.b16 %v2349
      %v2357 = vunpack.c.l.b16 %v2350
      %v2358 = vunpack.c.h.b16 %v2350
      %v2359 = vunpack.c.l.b16 %v2351
      %v2360 = vpack.c.b16 %v2355, %v2355
      %v2361 = vpack.c.b16 %v2356, %v2356
      %v2362 = vpack.c.b16 %v2357, %v2357
      %v2363 = vpack.c.b16 %v2358, %v2358
      %v2364 = vpack.c.b16 %v2359, %v2359
      %2370 = vst [vmem:[%s278] sm:$0xf] %v2360
      %2371 = vst [vmem:[%s278 + $0x4] sm:$0xf] %v2361
      %2372 = vst [vmem:[%s278 + $0x8] sm:$0xf] %v2362
      %2373 = vst [vmem:[%s278 + $0xc] sm:$0xf] %v2363
      %2374 = vst [vmem:[%s278 + $0x10] sm:$0x3] %v2364
      %p2375 = scmp.lt.s32.totalorder %s18, 1
      %s2376 = scalar_select %p2375, %s18, 1
      %s2377 = smul.addr %s2376, 5
      %s2378 = smul.addr %s2377, 4
      %s2379 = scalar_lea.vmem %s7, %s2378
      // Predicated region
      $region49: #{_lambda_.11} parent=47 // pred_check
        %p2380 = pneg %p188
      $region50: #{_lambda_.11} parent=47 // pred_check_branch
        %2382 = sbr.rel (%p2380) target = $region52
      $region51: #{_lambda_.11} parent=47 // pred_region
        _
      $region52: #{_lambda_.11} parent=47 // pred_fallthru
        _
    $region48: #{_lambda_.11} parent=5 // pred_fallthru
      _
    %p2383 = scmp.le.s32.totalorder 2, %s13
    // Predicated region
    $region53: #{_lambda_.11} parent=5 // pred_check
      %p2384 = pneg %p2383
    $region54: #{_lambda_.11} parent=5 // pred_check_branch
      %2386 = sbr.rel (%p2384) target = $region56
    $region55: #{_lambda_.11} parent=5 // pred_region
      %s2387 = ssub.s32 %s13, 2
      // Predicated region
      $region57: #{_lambda_.11} parent=55 // pred_check
        %p2388 = pneg %p194
      $region58: #{_lambda_.11} parent=55 // pred_check_branch
        %2390 = sbr.rel (%p2388) target = $region60
      $region59: #{_lambda_.11} parent=55 // pred_region
        %p2391 = scmp.lt.s32.totalorder %s19, 1
        %s2392 = scalar_select %p2391, %s19, 1
        %s2393 = smul.addr %s2392, 5
        %s2394 = smul.addr %s2393, 4
        %s2395 = scalar_lea.vmem %s7, %s2394
      $region60: #{_lambda_.11} parent=55 // pred_fallthru
        _
    $region56: #{_lambda_.11} parent=5 // pred_fallthru
      _
  $region6: #{_lambda_.11} parent=0 // loop_footer
    %s17 = sadd.s32 1, %s13
  $region7: #{_lambda_.11} parent=0 // loop_footer_branch
    %12 = sbr.rel target = $region3
  $region8: #{_lambda_.11} parent=0 // loop_exit
    _

// kernel: _lambda_.17
$region0: #{_lambda_.17}
  #allocation0 [shape = 'u32[]', space=smem, size = 0x4, offset = 0x4, fixed_abs, tag = 'smem constant byte address 0x4 - core index']
  #allocation1 [shape = 'u32[144,128]{1,0:T(1,128)}', space=vmem, size = 0x12000, scoped, tag = 'internal scratch']
  #allocation2 [shape = 'bf16[16,128]{1,0:T(8,128)(2,1)}', space=vmem, size = 0x1000, scoped, tag = 'scratch operand']
  %s0 = inlined_call_operand.vmem [shape: bf16[2,1,128], index: 0, kind: input, shape index: {}, may-alias: {0,7}]
  %s1 = inlined_call_operand.vmem [shape: f32[1,128], index: 1, kind: input, shape index: {}]
  %s2 = inlined_call_operand.vmem [shape: f32[1,128], index: 2, kind: input, shape index: {}, may-alias: {2,5}]
  %s3 = inlined_call_operand.vmem [shape: bf16[128,128], index: 3, kind: input, shape index: {}]
  %s4 = inlined_call_operand.vmem [shape: f32[1,128], index: 4, kind: input, shape index: {}]
  %s5 = inlined_call_operand.vmem [shape: f32[1,128], index: 5, kind: input, shape index: {}, may-alias: {2,5}]
  %s6 = inlined_call_operand.vmem [shape: bf16[9,128,128], index: 6, kind: input, shape index: {}]
  %s7 = inlined_call_operand.vmem [shape: bf16[2,1,128], index: 7, kind: output, shape index: {}, may-alias: {0,7}]
  %s8 = sld [smem:[#allocation0]]
  $region61: #{_lambda_.17} parent=0
    _
  %s10 = ssub.s32 1, %s8
  %s11 = scalar_select 0, %s10, %s8
  loop: start=0, step=1, limit=4
  $region2: #{_lambda_.17} parent=0 // loop_pre_header
    _
  $region3: #{_lambda_.17} parent=0 // loop_header
    %s13 = sphi 0, %s17
    %p14 = scmp.ge.s32.totalorder %s13, 4
    %s23 = sphi 0, %s25
    %s26 = sphi 0, %s23
    %s27 = sphi 0, %s26
    %s43 = sphi 0, %s27
    %s47 = sphi 0, %s47
    %s49 = sphi 0, %s47
    %s50 = sphi 0, %s49
    %s64 = sphi 0, %s50
    %s68 = sphi 0, %s68
    %s70 = sphi 0, %s68
    %s71 = sphi 0, %s70
    %s85 = sphi 0, %s71
    %s89 = sphi 0, %s89
    %s91 = sphi 0, %s89
    %s92 = sphi 0, %s91
    %s106 = sphi 0, %s92
    %s110 = sphi 0, %s110
    %s112 = sphi 0, %s110
    %s113 = sphi 0, %s112
    %s127 = sphi 0, %s113
    %s131 = sphi 0, %s131
    %s133 = sphi 0, %s131
    %s134 = sphi 0, %s133
    %s148 = sphi 0, %s134
    %s152 = sphi 0, %s152
    %s154 = sphi 0, %s152
    %s155 = sphi 0, %s154
    %s169 = sphi 0, %s155
    %s175 = sphi 0, %s177
    %s178 = sphi 0, %s175
    %s179 = sphi 0, %s178
    %s195 = sphi 0, %s179
  $region4: #{_lambda_.17} parent=0 // loop_header_branch
    %16 = sbr.rel (%p14) target = $region8
  $region5: #{_lambda_.17} parent=0 // loop_body
    %s18 = ssub.s32 %s13, 1
    %s19 = ssub.s32 %s13, 2
    %s20 = sadd.s32 %s13, 1
    %s21 = ssub.s32 %s13, %s20
    %p22 = scmp.eq.s32.totalorder %s21, 0
    %s24 = sadd.s32 %s23, 1
    %s25 = scalar_select %p22, %s23, %s24
    %p28 = pneg %p22
    %p29 = scmp.eq.s32.totalorder %s13, 1
    %p30 = por %p28, %p29
    %p31 = scmp.ne.s32.totalorder %s23, %s26
    %p32 = scmp.eq.s32.totalorder %s13, 0
    %p33 = por %p31, %p32
    %p34 = scmp.ne.s32.totalorder %s23, %s26
    %p35 = scmp.eq.s32.totalorder %s18, 1
    %p36 = por %p34, %p35
    %p37 = scmp.ne.s32.totalorder %s26, %s27
    %p38 = scmp.eq.s32.totalorder %s18, 0
    %p39 = por %p37, %p38
    %p40 = scmp.ne.s32.totalorder %s26, %s27
    %p41 = scmp.eq.s32.totalorder %s19, 1
    %p42 = por %p40, %p41
    %p44 = scmp.ne.s32.totalorder %s27, %s43
    %p45 = scmp.eq.s32.totalorder %s19, 0
    %p46 = por %p44, %p45
    %s48 = sadd.s32 %s47, 1
    %p51 = scmp.eq.s32.totalorder %s13, 1
    %p52 = scmp.ne.s32.totalorder %s47, %s49
    %p53 = scmp.eq.s32.totalorder %s13, 0
    %p54 = por %p52, %p53
    %p55 = scmp.ne.s32.totalorder %s47, %s49
    %p56 = scmp.eq.s32.totalorder %s18, 1
    %p57 = por %p55, %p56
    %p58 = scmp.ne.s32.totalorder %s49, %s50
    %p59 = scmp.eq.s32.totalorder %s18, 0
    %p60 = por %p58, %p59
    %p61 = scmp.ne.s32.totalorder %s49, %s50
    %p62 = scmp.eq.s32.totalorder %s19, 1
    %p63 = por %p61, %p62
    %p65 = scmp.ne.s32.totalorder %s50, %s64
    %p66 = scmp.eq.s32.totalorder %s19, 0
    %p67 = por %p65, %p66
    %s69 = sadd.s32 %s68, 1
    %p72 = scmp.eq.s32.totalorder %s13, 1
    %p73 = scmp.ne.s32.totalorder %s68, %s70
    %p74 = scmp.eq.s32.totalorder %s13, 0
    %p75 = por %p73, %p74
    %p76 = scmp.ne.s32.totalorder %s68, %s70
    %p77 = scmp.eq.s32.totalorder %s18, 1
    %p78 = por %p76, %p77
    %p79 = scmp.ne.s32.totalorder %s70, %s71
    %p80 = scmp.eq.s32.totalorder %s18, 0
    %p81 = por %p79, %p80
    %p82 = scmp.ne.s32.totalorder %s70, %s71
    %p83 = scmp.eq.s32.totalorder %s19, 1
    %p84 = por %p82, %p83
    %p86 = scmp.ne.s32.totalorder %s71, %s85
    %p87 = scmp.eq.s32.totalorder %s19, 0
    %p88 = por %p86, %p87
    %s90 = sadd.s32 %s89, 1
    %p93 = scmp.eq.s32.totalorder %s13, 1
    %p94 = scmp.ne.s32.totalorder %s89, %s91
    %p95 = scmp.eq.s32.totalorder %s13, 0
    %p96 = por %p94, %p95
    %p97 = scmp.ne.s32.totalorder %s89, %s91
    %p98 = scmp.eq.s32.totalorder %s18, 1
    %p99 = por %p97, %p98
    %p100 = scmp.ne.s32.totalorder %s91, %s92
    %p101 = scmp.eq.s32.totalorder %s18, 0
    %p102 = por %p100, %p101
    %p103 = scmp.ne.s32.totalorder %s91, %s92
    %p104 = scmp.eq.s32.totalorder %s19, 1
    %p105 = por %p103, %p104
    %p107 = scmp.ne.s32.totalorder %s92, %s106
    %p108 = scmp.eq.s32.totalorder %s19, 0
    %p109 = por %p107, %p108
    %s111 = sadd.s32 %s110, 1
    %p114 = scmp.eq.s32.totalorder %s13, 1
    %p115 = scmp.ne.s32.totalorder %s110, %s112
    %p116 = scmp.eq.s32.totalorder %s13, 0
    %p117 = por %p115, %p116
    %p118 = scmp.ne.s32.totalorder %s110, %s112
    %p119 = scmp.eq.s32.totalorder %s18, 1
    %p120 = por %p118, %p119
    %p121 = scmp.ne.s32.totalorder %s112, %s113
    %p122 = scmp.eq.s32.totalorder %s18, 0
    %p123 = por %p121, %p122
    %p124 = scmp.ne.s32.totalorder %s112, %s113
    %p125 = scmp.eq.s32.totalorder %s19, 1
    %p126 = por %p124, %p125
    %p128 = scmp.ne.s32.totalorder %s113, %s127
    %p129 = scmp.eq.s32.totalorder %s19, 0
    %p130 = por %p128, %p129
    %s132 = sadd.s32 %s131, 1
    %p135 = scmp.eq.s32.totalorder %s13, 1
    %p136 = scmp.ne.s32.totalorder %s131, %s133
    %p137 = scmp.eq.s32.totalorder %s13, 0
    %p138 = por %p136, %p137
    %p139 = scmp.ne.s32.totalorder %s131, %s133
    %p140 = scmp.eq.s32.totalorder %s18, 1
    %p141 = por %p139, %p140
    %p142 = scmp.ne.s32.totalorder %s133, %s134
    %p143 = scmp.eq.s32.totalorder %s18, 0
    %p144 = por %p142, %p143
    %p145 = scmp.ne.s32.totalorder %s133, %s134
    %p146 = scmp.eq.s32.totalorder %s19, 1
    %p147 = por %p145, %p146
    %p149 = scmp.ne.s32.totalorder %s134, %s148
    %p150 = scmp.eq.s32.totalorder %s19, 0
    %p151 = por %p149, %p150
    %s153 = sadd.s32 %s152, 1
    %p156 = scmp.eq.s32.totalorder %s13, 1
    %p157 = scmp.ne.s32.totalorder %s152, %s154
    %p158 = scmp.eq.s32.totalorder %s13, 0
    %p159 = por %p157, %p158
    %p160 = scmp.ne.s32.totalorder %s152, %s154
    %p161 = scmp.eq.s32.totalorder %s18, 1
    %p162 = por %p160, %p161
    %p163 = scmp.ne.s32.totalorder %s154, %s155
    %p164 = scmp.eq.s32.totalorder %s18, 0
    %p165 = por %p163, %p164
    %p166 = scmp.ne.s32.totalorder %s154, %s155
    %p167 = scmp.eq.s32.totalorder %s19, 1
    %p168 = por %p166, %p167
    %p170 = scmp.ne.s32.totalorder %s155, %s169
    %p171 = scmp.eq.s32.totalorder %s19, 0
    %p172 = por %p170, %p171
    %s173 = ssub.s32 %s13, %s20
    %p174 = scmp.eq.s32.totalorder %s173, 0
    %s176 = sadd.s32 %s175, 1
    %s177 = scalar_select %p174, %s175, %s176
    %p180 = pneg %p174
    %p181 = scmp.eq.s32.totalorder %s13, 1
    %p182 = por %p180, %p181
    %p183 = scmp.ne.s32.totalorder %s175, %s178
    %p184 = scmp.eq.s32.totalorder %s13, 0
    %p185 = por %p183, %p184
    %p186 = scmp.ne.s32.totalorder %s175, %s178
    %p187 = scmp.eq.s32.totalorder %s18, 1
    %p188 = por %p186, %p187
    %p189 = scmp.ne.s32.totalorder %s178, %s179
    %p190 = scmp.eq.s32.totalorder %s18, 0
    %p191 = por %p189, %p190
    %p192 = scmp.ne.s32.totalorder %s178, %s179
    %p193 = scmp.eq.s32.totalorder %s19, 1
    %p194 = por %p192, %p193
    %p196 = scmp.ne.s32.totalorder %s179, %s195
    %p197 = scmp.eq.s32.totalorder %s19, 0
    %p198 = por %p196, %p197
    %p199 = scmp.le.s32.totalorder 1, %s13
    %p200 = scmp.lt.s32.totalorder %s13, 3
    %p201 = pnand %p199, %p200
    %p202 = pneg %p201
    // Predicated region
    $region9: #{_lambda_.17} parent=5 // pred_check
      _
    $region10: #{_lambda_.17} parent=5 // pred_check_branch
      %204 = sbr.rel (%p201) target = $region12
    $region11: #{_lambda_.17} parent=5 // pred_region
      %s205 = ssub.s32 %s13, 1
      // Predicated region
      $region13: #{_lambda_.17} parent=11 // pred_check
        %p206 = pneg %p60
      $region14: #{_lambda_.17} parent=11 // pred_check_branch
        %208 = sbr.rel (%p206) target = $region16
      $region15: #{_lambda_.17} parent=11 // pred_region
        _
      $region16: #{_lambda_.17} parent=11 // pred_fallthru
        _
      // Predicated region
      $region17: #{_lambda_.17} parent=11 // pred_check
        %p209 = pneg %p81
      $region18: #{_lambda_.17} parent=11 // pred_check_branch
        %211 = sbr.rel (%p209) target = $region20
      $region19: #{_lambda_.17} parent=11 // pred_region
        _
      $region20: #{_lambda_.17} parent=11 // pred_fallthru
        _
      // Predicated region
      $region21: #{_lambda_.17} parent=11 // pred_check
        %p212 = pneg %p102
      $region22: #{_lambda_.17} parent=11 // pred_check_branch
        %214 = sbr.rel (%p212) target = $region24
      $region23: #{_lambda_.17} parent=11 // pred_region
        _
      $region24: #{_lambda_.17} parent=11 // pred_fallthru
        _
      // Predicated region
      $region25: #{_lambda_.17} parent=11 // pred_check
        %p215 = pneg %p123
      $region26: #{_lambda_.17} parent=11 // pred_check_branch
        %217 = sbr.rel (%p215) target = $region28
      $region27: #{_lambda_.17} parent=11 // pred_region
        _
      $region28: #{_lambda_.17} parent=11 // pred_fallthru
        _
      // Predicated region
      $region29: #{_lambda_.17} parent=11 // pred_check
        %p218 = pneg %p144
      $region30: #{_lambda_.17} parent=11 // pred_check_branch
        %220 = sbr.rel (%p218) target = $region32
      $region31: #{_lambda_.17} parent=11 // pred_region
        _
      $region32: #{_lambda_.17} parent=11 // pred_fallthru
        _
      // Predicated region
      $region33: #{_lambda_.17} parent=11 // pred_check
        %p221 = pneg %p165
      $region34: #{_lambda_.17} parent=11 // pred_check_branch
        %223 = sbr.rel (%p221) target = $region36
      $region35: #{_lambda_.17} parent=11 // pred_region
        _
      $region36: #{_lambda_.17} parent=11 // pred_fallthru
        _
    $region12: #{_lambda_.17} parent=5 // pred_fallthru
      _
    %p224 = scmp.lt.s32.totalorder %s13, 2
    // Predicated region
    $region37: #{_lambda_.17} parent=5 // pred_check
      %p225 = pneg %p224
    $region38: #{_lambda_.17} parent=5 // pred_check_branch
      %227 = sbr.rel (%p225) target = $region40
    $region39: #{_lambda_.17} parent=5 // pred_region
      // Predicated region
      $region41: #{_lambda_.17} parent=39 // pred_check
        %p228 = pneg %p33
      $region42: #{_lambda_.17} parent=39 // pred_check_branch
        %230 = sbr.rel (%p228) target = $region44
      $region43: #{_lambda_.17} parent=39 // pred_region
        %p231 = scmp.lt.s32.totalorder %s13, 1
        %s232 = scalar_select %p231, %s13, 1
        %s233 = scalar_lea.vmem %s0, %s232
      $region44: #{_lambda_.17} parent=39 // pred_fallthru
        _
    $region40: #{_lambda_.17} parent=5 // pred_fallthru
      _
    %p234 = scmp.le.s32.totalorder 1, %s13
    %p235 = scmp.lt.s32.totalorder %s13, 3
    %p236 = pnand %p234, %p235
    %p237 = pneg %p236
    // Predicated region
    $region45: #{_lambda_.17} parent=5 // pred_check
      _
    $region46: #{_lambda_.17} parent=5 // pred_check_branch
      %239 = sbr.rel (%p236) target = $region48
    $region47: #{_lambda_.17} parent=5 // pred_region
      %s240 = ssub.s32 %s13, 1
      %p241 = scmp.lt.s32.totalorder %s18, 1
      %s242 = scalar_select %p241, %s18, 1
      %s243 = scalar_lea.vmem %s0, %s242
      %p244 = pneg %p39
      %p245 = pneg %p36
      %p246 = pneg %p60
      %p247 = pneg %p57
      %p248 = pneg %p81
      %p249 = pneg %p78
      %p250 = pneg %p102
      %p251 = pneg %p99
      %p252 = pneg %p123
      %p253 = pneg %p120
      %p254 = pneg %p144
      %p255 = pneg %p141
      %p256 = pneg %p165
      %p257 = pneg %p162
      %p258 = pneg %p191
      %p259 = pneg %p188
      %p260 = scmp.lt.s32.totalorder %s18, 1
      %s261 = scalar_select %p260, %s18, 1
      %s262 = scalar_lea.vmem %s7, %s261
      %p263 = scmp.lt.s32.totalorder %s18, 1
      %s264 = scalar_select %p263, %s18, 1
      %s265 = scalar_lea.vmem %s0, %s264
      %p266 = scmp.lt.s32.totalorder %s18, 1
      %s267 = scalar_select %p266, %s18, 1
      %s268 = scalar_lea.vmem %s7, %s267
      %v270 = vld [vmem:[%s265] sm:$0x1]
      %v271 = vunpack.c.l.bf16 %v270
      %v272 = vld [vmem:[%s1] sm:$0x1]
      %v273 = vmul.f32 %v271, %v272
      %v274 = vld [vmem:[%s2] sm:$0x1]
      %v275 = vadd.f32 %v273, %v274
      %v276 = vmax.f32 %v275, 0.0
      %v277 = vpack.c.bf16 %v276, %v276
      %v278 = vld [vmem:[%s3] sm:$0xf]
      %v279 = vld [vmem:[%s3 + $0x4] sm:$0xf]
      %v280 = vld [vmem:[%s3 + $0x8] sm:$0xf]
      %v281 = vld [vmem:[%s3 + $0xc] sm:$0xf]
      %v282 = vld [vmem:[%s3 + $0x10] sm:$0xf]
      %v283 = vld [vmem:[%s3 + $0x14] sm:$0xf]
      %v284 = vld [vmem:[%s3 + $0x18] sm:$0xf]
      %v285 = vld [vmem:[%s3 + $0x1c] sm:$0xf]
      %v286 = vld [vmem:[%s3 + $0x20] sm:$0xf]
      %v287 = vld [vmem:[%s3 + $0x24] sm:$0xf]
      %v288 = vld [vmem:[%s3 + $0x28] sm:$0xf]
      %v289 = vld [vmem:[%s3 + $0x2c] sm:$0xf]
      %v290 = vld [vmem:[%s3 + $0x30] sm:$0xf]
      %v291 = vld [vmem:[%s3 + $0x34] sm:$0xf]
      %v292 = vld [vmem:[%s3 + $0x38] sm:$0xf]
      %v293 = vld [vmem:[%s3 + $0x3c] sm:$0xf]
      %v310 = vunpack.c.l.b16 %v278
      %v311 = vunpack.c.l.b16 %v279
      %v312 = vunpack.c.l.b16 %v280
      %v313 = vunpack.c.l.b16 %v281
      %v314 = vunpack.c.l.b16 %v282
      %v315 = vunpack.c.l.b16 %v283
      %v316 = vunpack.c.l.b16 %v284
      %v317 = vunpack.c.l.b16 %v285
      %v318 = vunpack.c.l.b16 %v286
      %v319 = vunpack.c.l.b16 %v287
      %v320 = vunpack.c.l.b16 %v288
      %v321 = vunpack.c.l.b16 %v289
      %v322 = vunpack.c.l.b16 %v290
      %v323 = vunpack.c.l.b16 %v291
      %v324 = vunpack.c.l.b16 %v292
      %v325 = vunpack.c.l.b16 %v293
      %v326 = vpack.c.b16 %v311, %v310
      %v327 = vpack.c.b16 %v313, %v312
      %v328 = vpack.c.b16 %v315, %v314
      %v329 = vpack.c.b16 %v317, %v316
      %v330 = vpack.c.b16 %v319, %v318
      %v331 = vpack.c.b16 %v321, %v320
      %v332 = vpack.c.b16 %v323, %v322
      %v333 = vpack.c.b16 %v325, %v324
      %342 = vmatprep.subr.bf16.mxu0 0
      %343 = vmatpush1.bf16.msra.mxu0 %v333
      %344 = vmatprep.subr.bf16.mxu0 0
      %345 = vmatpush1.bf16.msra.mxu0 %v332
      %346 = vmatprep.subr.bf16.mxu0 0
      %347 = vmatpush1.bf16.msra.mxu0 %v331
      %348 = vmatprep.subr.bf16.mxu0 0
      %349 = vmatpush1.bf16.msra.mxu0 %v330
      %350 = vmatprep.subr.bf16.mxu0 0
      %351 = vmatpush1.bf16.msra.mxu0 %v329
      %352 = vmatprep.subr.bf16.mxu0 0
      %353 = vmatpush1.bf16.msra.mxu0 %v328
      %354 = vmatprep.subr.bf16.mxu0 0
      %355 = vmatpush1.bf16.msra.mxu0 %v327
      %356 = vmatprep.subr.bf16.mxu0 0
      %357 = vmatpush1.bf16.msra.mxu0 %v326
      %358 = vmatprep.subr.bf16.mxu0 0
      %359 = vmatpush2.bf16.msra.mxu0 0
      %360 = vmatprep.subr.bf16.mxu0 0
      %361 = vmatpush2.bf16.msra.mxu0 0
      %362 = vmatprep.subr.bf16.mxu0 0
      %363 = vmatpush2.bf16.msra.mxu0 0
      %364 = vmatprep.subr.bf16.mxu0 0
      %365 = vmatpush2.bf16.msra.mxu0 0
      %366 = vmatprep.subr.bf16.mxu0 0
      %367 = vmatpush2.bf16.msra.mxu0 0
      %368 = vmatprep.subr.bf16.mxu0 0
      %369 = vmatpush2.bf16.msra.mxu0 0
      %370 = vmatprep.subr.bf16.mxu0 0
      %371 = vmatpush2.bf16.msra.mxu0 0
      %372 = vmatprep.subr.bf16.mxu0 0
      %373 = vmatpush2.bf16.msra.mxu0 0
      %374 = vmatprep.mubr.bf16.mxu0 0
      %375 = vmatmul.mubr.bf16.gmra.mxu0 %v277
      %v376 = vpop.f32.mrf.mxu0
      %v377 = vadd.f32 0.0, %v376
      %v378 = vpop.f32.mrf.mxu0
      %v379 = vpop.f32.mrf.mxu0
      %v380 = vpop.f32.mrf.mxu0
      %381 = vdwg.mxu0
      %v382 = vld [vmem:[%s4] sm:$0x1]
      %v383 = vmul.f32 %v377, %v382
      %v384 = vld [vmem:[%s5] sm:$0x1]
      %v385 = vadd.f32 %v383, %v384
      %v386 = vmax.f32 %v385, 0.0
      %v387 = vpack.c.bf16 %v386, %v386
      %388 = vst [vmem:[#allocation2] sm:$0xf] 0
      %389 = vst [vmem:[#allocation2 + $0x4] sm:$0xf] 0
      %vm390 = vcmask 1040384
      %vm391 = vsmask.f32 256
      %vm392 = vmand %vm390, %vm391
      %v393 = vld [vmem:[#allocation2 + $0x4] sm:$0x1]
      %v394 = vsel %vm392, %v387, %v393
      %395 = vst [vmem:[#allocation2 + $0x4] sm:$0x1] %v394
      %v396 = vld [vmem:[#allocation2 + $0x4] sm:$0x1]
      %s397 = scalar_lea.vmem %s6, 256
      %v398 = vld [vmem:[%s397] sm:$0xf]
      %v399 = vld [vmem:[%s397 + $0x4] sm:$0xf]
      %v400 = vld [vmem:[%s397 + $0x8] sm:$0xf]
      %v401 = vld [vmem:[%s397 + $0xc] sm:$0xf]
      %v402 = vld [vmem:[%s397 + $0x10] sm:$0xf]
      %v403 = vld [vmem:[%s397 + $0x14] sm:$0xf]
      %v404 = vld [vmem:[%s397 + $0x18] sm:$0xf]
      %v405 = vld [vmem:[%s397 + $0x1c] sm:$0xf]
      %v406 = vld [vmem:[%s397 + $0x20] sm:$0xf]
      %v407 = vld [vmem:[%s397 + $0x24] sm:$0xf]
      %v408 = vld [vmem:[%s397 + $0x28] sm:$0xf]
      %v409 = vld [vmem:[%s397 + $0x2c] sm:$0xf]
      %v410 = vld [vmem:[%s397 + $0x30] sm:$0xf]
      %v411 = vld [vmem:[%s397 + $0x34] sm:$0xf]
      %v412 = vld [vmem:[%s397 + $0x38] sm:$0xf]
      %v413 = vld [vmem:[%s397 + $0x3c] sm:$0xf]
      %v430 = vunpack.c.l.b16 %v398
      %v431 = vunpack.c.l.b16 %v399
      %v432 = vunpack.c.l.b16 %v400
      %v433 = vunpack.c.l.b16 %v401
      %v434 = vunpack.c.l.b16 %v402
      %v435 = vunpack.c.l.b16 %v403
      %v436 = vunpack.c.l.b16 %v404
      %v437 = vunpack.c.l.b16 %v405
      %v438 = vunpack.c.l.b16 %v406
      %v439 = vunpack.c.l.b16 %v407
      %v440 = vunpack.c.l.b16 %v408
      %v441 = vunpack.c.l.b16 %v409
      %v442 = vunpack.c.l.b16 %v410
      %v443 = vunpack.c.l.b16 %v411
      %v444 = vunpack.c.l.b16 %v412
      %v445 = vunpack.c.l.b16 %v413
      %v446 = vpack.c.b16 %v431, %v430
      %v447 = vpack.c.b16 %v433, %v432
      %v448 = vpack.c.b16 %v435, %v434
      %v449 = vpack.c.b16 %v437, %v436
      %v450 = vpack.c.b16 %v439, %v438
      %v451 = vpack.c.b16 %v441, %v440
      %v452 = vpack.c.b16 %v443, %v442
      %v453 = vpack.c.b16 %v445, %v444
      %462 = vmatprep.subr.bf16.mxu0 0
      %463 = vmatpush1.bf16.msra.mxu0 %v453
      %464 = vmatprep.subr.bf16.mxu0 0
      %465 = vmatpush1.bf16.msra.mxu0 %v452
      %466 = vmatprep.subr.bf16.mxu0 0
      %467 = vmatpush1.bf16.msra.mxu0 %v451
      %468 = vmatprep.subr.bf16.mxu0 0
      %469 = vmatpush1.bf16.msra.mxu0 %v450
      %470 = vmatprep.subr.bf16.mxu0 0
      %471 = vmatpush1.bf16.msra.mxu0 %v449
      %472 = vmatprep.subr.bf16.mxu0 0
      %473 = vmatpush1.bf16.msra.mxu0 %v448
      %474 = vmatprep.subr.bf16.mxu0 0
      %475 = vmatpush1.bf16.msra.mxu0 %v447
      %476 = vmatprep.subr.bf16.mxu0 0
      %477 = vmatpush1.bf16.msra.mxu0 %v446
      %478 = vmatprep.subr.bf16.mxu0 0
      %479 = vmatpush2.bf16.msra.mxu0 0
      %480 = vmatprep.subr.bf16.mxu0 0
      %481 = vmatpush2.bf16.msra.mxu0 0
      %482 = vmatprep.subr.bf16.mxu0 0
      %483 = vmatpush2.bf16.msra.mxu0 0
      %484 = vmatprep.subr.bf16.mxu0 0
      %485 = vmatpush2.bf16.msra.mxu0 0
      %486 = vmatprep.subr.bf16.mxu0 0
      %487 = vmatpush2.bf16.msra.mxu0 0
      %488 = vmatprep.subr.bf16.mxu0 0
      %489 = vmatpush2.bf16.msra.mxu0 0
      %490 = vmatprep.subr.bf16.mxu0 0
      %491 = vmatpush2.bf16.msra.mxu0 0
      %492 = vmatprep.subr.bf16.mxu0 0
      %493 = vmatpush2.bf16.msra.mxu0 0
      %494 = vmatprep.mubr.bf16.mxu0 0
      %495 = vmatmul.mubr.bf16.gmra.mxu0 %v396
      %v496 = vpop.f32.mrf.mxu0
      %v497 = vadd.f32 0.0, %v496
      %v498 = vpop.f32.mrf.mxu0
      %v499 = vpop.f32.mrf.mxu0
      %v500 = vpop.f32.mrf.mxu0
      %501 = vdwg.mxu0
      %v502 = vadd.f32 %v271, %v497
      %v503 = vpack.c.bf16 %v502, %v502
      %v504 = vld [vmem:[%s268] sm:$0x1]
      %v505 = vsel %vm392, %v503, %v504
      %506 = vst [vmem:[%s268] sm:$0x1] %v505
      %p507 = scmp.lt.s32.totalorder %s18, 1
      %s508 = scalar_select %p507, %s18, 1
      %s509 = scalar_lea.vmem %s7, %s508
      // Predicated region
      $region49: #{_lambda_.17} parent=47 // pred_check
        %p510 = pneg %p188
      $region50: #{_lambda_.17} parent=47 // pred_check_branch
        %512 = sbr.rel (%p510) target = $region52
      $region51: #{_lambda_.17} parent=47 // pred_region
        _
      $region52: #{_lambda_.17} parent=47 // pred_fallthru
        _
    $region48: #{_lambda_.17} parent=5 // pred_fallthru
      _
    %p513 = scmp.le.s32.totalorder 2, %s13
    // Predicated region
    $region53: #{_lambda_.17} parent=5 // pred_check
      %p514 = pneg %p513
    $region54: #{_lambda_.17} parent=5 // pred_check_branch
      %516 = sbr.rel (%p514) target = $region56
    $region55: #{_lambda_.17} parent=5 // pred_region
      %s517 = ssub.s32 %s13, 2
      // Predicated region
      $region57: #{_lambda_.17} parent=55 // pred_check
        %p518 = pneg %p194
      $region58: #{_lambda_.17} parent=55 // pred_check_branch
        %520 = sbr.rel (%p518) target = $region60
      $region59: #{_lambda_.17} parent=55 // pred_region
        %p521 = scmp.lt.s32.totalorder %s19, 1
        %s522 = scalar_select %p521, %s19, 1
        %s523 = scalar_lea.vmem %s7, %s522
      $region60: #{_lambda_.17} parent=55 // pred_fallthru
        _
    $region56: #{_lambda_.17} parent=5 // pred_fallthru
      _
  $region6: #{_lambda_.17} parent=0 // loop_footer
    %s17 = sadd.s32 1, %s13
  $region7: #{_lambda_.17} parent=0 // loop_footer_branch
    %12 = sbr.rel target = $region3
  $region8: #{_lambda_.17} parent=0 // loop_exit
    _

// kernel: _lambda_.19
$region0: #{_lambda_.19}
  #allocation0 [shape = 'u32[]', space=smem, size = 0x4, offset = 0x4, fixed_abs, tag = 'smem constant byte address 0x4 - core index']
  #allocation1 [shape = 'u32[144,128]{1,0:T(1,128)}', space=vmem, size = 0x12000, scoped, tag = 'internal scratch']
  %s0 = inlined_call_operand.vmem [shape: bf16[2,1,128], index: 0, kind: input, shape index: {}]
  %s1 = inlined_call_operand.vmem [shape: f32[1,128], index: 1, kind: input, shape index: {}]
  %s2 = inlined_call_operand.vmem [shape: f32[1,128], index: 2, kind: input, shape index: {}, may-alias: {2,4}]
  %s3 = inlined_call_operand.vmem [shape: bf16[128,128], index: 3, kind: input, shape index: {}]
  %s4 = inlined_call_operand.vmem [shape: f32[1,128], index: 4, kind: input, shape index: {}, may-alias: {2,4}]
  %s5 = inlined_call_operand.hbm [shape: f32[2,128], index: 5, kind: output, shape index: {}]
  %s6 = sld [smem:[#allocation0]]
  $region30: #{_lambda_.19} parent=0
    _
  %s8 = ssub.s32 1, %s6
  %s9 = scalar_select 0, %s8, %s6
  $region1: #{_lambda_.19} parent=0
    #allocation2 [shape = 'u8[1024]{0}', space=vmem, size = 0x400, scoped, tag = 'output window, operand 0, single buffered']
    #allocation3 [shape = 's32[1]{0}', space=sflag, size = 0x4, scoped, tag = 'scoped memory for _lambda_.19']
    %10 = vsyncpa [#allocation3], 0
    // Predicated region
    $region2: #{_lambda_.19} parent=1 // pred_check
      _
    $region3: #{_lambda_.19} parent=1 // pred_check_branch
      %12 = sbr.rel (0) target = $region5
    $region4: #{_lambda_.19} parent=1 // pred_region
      _
    $region5: #{_lambda_.19} parent=1 // pred_fallthru
      _
    // Predicated region
    $region6: #{_lambda_.19} parent=1 // pred_check
      _
    $region7: #{_lambda_.19} parent=1 // pred_check_branch
      %14 = sbr.rel (0) target = $region9
    $region8: #{_lambda_.19} parent=1 // pred_region
      _
    $region9: #{_lambda_.19} parent=1 // pred_fallthru
      _
    // Predicated region
    $region10: #{_lambda_.19} parent=1 // pred_check
      _
    $region11: #{_lambda_.19} parent=1 // pred_check_branch
      %16 = sbr.rel (0) target = $region13
    $region12: #{_lambda_.19} parent=1 // pred_region
      _
    $region13: #{_lambda_.19} parent=1 // pred_fallthru
      _
    // Predicated region
    $region14: #{_lambda_.19} parent=1 // pred_check
      _
    $region15: #{_lambda_.19} parent=1 // pred_check_branch
      %18 = sbr.rel (0) target = $region17
    $region16: #{_lambda_.19} parent=1 // pred_region
      _
    $region17: #{_lambda_.19} parent=1 // pred_fallthru
      _
    // Predicated region
    $region18: #{_lambda_.19} parent=1 // pred_check
      _
    $region19: #{_lambda_.19} parent=1 // pred_check_branch
      %20 = sbr.rel (0) target = $region21
    $region20: #{_lambda_.19} parent=1 // pred_region
      _
    $region21: #{_lambda_.19} parent=1 // pred_fallthru
      _
    %v22 = vld [vmem:[%s0] sm:$0x1]
    %v23 = vld [vmem:[%s0 + $0x1] sm:$0x1]
    %v24 = vunpack.c.l.bf16 %v22
    %v25 = vunpack.c.l.bf16 %v23
    %v26 = vld [vmem:[%s1] sm:$0x1]
    %v27 = vmul.f32 %v24, %v26
    %v28 = vmul.f32 %v25, %v26
    %v29 = vld [vmem:[%s2] sm:$0x1]
    %v30 = vadd.f32 %v27, %v29
    %v31 = vadd.f32 %v28, %v29
    %v32 = vmax.f32 %v30, 0.0
    %v33 = vmax.f32 %v31, 0.0
    %v34 = vadd.f32 %v32, 0.0
    %v35 = vadd.f32 %v33, 0.0
    %v36 = vpack.c.bf16 %v34, %v34
    %v37 = vpack.c.bf16 %v35, %v35
    %v38 = vld [vmem:[%s3] sm:$0xf]
    %v39 = vld [vmem:[%s3 + $0x4] sm:$0xf]
    %v40 = vld [vmem:[%s3 + $0x8] sm:$0xf]
    %v41 = vld [vmem:[%s3 + $0xc] sm:$0xf]
    %v42 = vld [vmem:[%s3 + $0x10] sm:$0xf]
    %v43 = vld [vmem:[%s3 + $0x14] sm:$0xf]
    %v44 = vld [vmem:[%s3 + $0x18] sm:$0xf]
    %v45 = vld [vmem:[%s3 + $0x1c] sm:$0xf]
    %v46 = vld [vmem:[%s3 + $0x20] sm:$0xf]
    %v47 = vld [vmem:[%s3 + $0x24] sm:$0xf]
    %v48 = vld [vmem:[%s3 + $0x28] sm:$0xf]
    %v49 = vld [vmem:[%s3 + $0x2c] sm:$0xf]
    %v50 = vld [vmem:[%s3 + $0x30] sm:$0xf]
    %v51 = vld [vmem:[%s3 + $0x34] sm:$0xf]
    %v52 = vld [vmem:[%s3 + $0x38] sm:$0xf]
    %v53 = vld [vmem:[%s3 + $0x3c] sm:$0xf]
    %v54 = vld [vmem:[%s4] sm:$0x1]
    %v56 = vlaneseq
    %v57 = vshrl.u32 %v56, 7
    %v58 = vsub.s32 0, %v57
    %v59 = vrot.slane %v54, %v58
    %v63 = vunpack.c.l.b16 %v36
    %v64 = vunpack.c.l.b16 %v37
    %v65 = vrot.slane %v64, 7
    %vm66 = vcmask 1041409
    %v67 = vsel %vm66, %v65, %v63
    %v68 = vpack.c.b16 %v67, %v67
    %v86 = vunpack.c.l.b16 %v38
    %v87 = vunpack.c.l.b16 %v39
    %v88 = vunpack.c.l.b16 %v40
    %v89 = vunpack.c.l.b16 %v41
    %v90 = vunpack.c.l.b16 %v42
    %v91 = vunpack.c.l.b16 %v43
    %v92 = vunpack.c.l.b16 %v44
    %v93 = vunpack.c.l.b16 %v45
    %v94 = vunpack.c.l.b16 %v46
    %v95 = vunpack.c.l.b16 %v47
    %v96 = vunpack.c.l.b16 %v48
    %v97 = vunpack.c.l.b16 %v49
    %v98 = vunpack.c.l.b16 %v50
    %v99 = vunpack.c.l.b16 %v51
    %v100 = vunpack.c.l.b16 %v52
    %v101 = vunpack.c.l.b16 %v53
    %v102 = vpack.c.b16 %v87, %v86
    %v103 = vpack.c.b16 %v89, %v88
    %v104 = vpack.c.b16 %v91, %v90
    %v105 = vpack.c.b16 %v93, %v92
    %v106 = vpack.c.b16 %v95, %v94
    %v107 = vpack.c.b16 %v97, %v96
    %v108 = vpack.c.b16 %v99, %v98
    %v109 = vpack.c.b16 %v101, %v100
    %118 = vmatprep.subr.bf16.mxu0 0
    %119 = vmatpush1.bf16.msra.mxu0 %v109
    %120 = vmatprep.subr.bf16.mxu0 0
    %121 = vmatpush1.bf16.msra.mxu0 %v108
    %122 = vmatprep.subr.bf16.mxu0 0
    %123 = vmatpush1.bf16.msra.mxu0 %v107
    %124 = vmatprep.subr.bf16.mxu0 0
    %125 = vmatpush1.bf16.msra.mxu0 %v106
    %126 = vmatprep.subr.bf16.mxu0 0
    %127 = vmatpush1.bf16.msra.mxu0 %v105
    %128 = vmatprep.subr.bf16.mxu0 0
    %129 = vmatpush1.bf16.msra.mxu0 %v104
    %130 = vmatprep.subr.bf16.mxu0 0
    %131 = vmatpush1.bf16.msra.mxu0 %v103
    %132 = vmatprep.subr.bf16.mxu0 0
    %133 = vmatpush1.bf16.msra.mxu0 %v102
    %134 = vmatprep.subr.bf16.mxu0 0
    %135 = vmatpush2.bf16.msra.mxu0 0
    %136 = vmatprep.subr.bf16.mxu0 0
    %137 = vmatpush2.bf16.msra.mxu0 0
    %138 = vmatprep.subr.bf16.mxu0 0
    %139 = vmatpush2.bf16.msra.mxu0 0
    %140 = vmatprep.subr.bf16.mxu0 0
    %141 = vmatpush2.bf16.msra.mxu0 0
    %142 = vmatprep.subr.bf16.mxu0 0
    %143 = vmatpush2.bf16.msra.mxu0 0
    %144 = vmatprep.subr.bf16.mxu0 0
    %145 = vmatpush2.bf16.msra.mxu0 0
    %146 = vmatprep.subr.bf16.mxu0 0
    %147 = vmatpush2.bf16.msra.mxu0 0
    %148 = vmatprep.subr.bf16.mxu0 0
    %149 = vmatpush2.bf16.msra.mxu0 0
    %150 = vmatprep.mubr.bf16.mxu0 0
    %151 = vmatmul.mubr.bf16.gmra.mxu0 %v68
    %v152 = vpop.f32.mrf.mxu0
    %v153 = vadd.f32 %v59, %v152
    %v154 = vpop.f32.mrf.mxu0
    %v155 = vpop.f32.mrf.mxu0
    %v156 = vpop.f32.mrf.mxu0
    %157 = vdwg.mxu0
    %158 = vst [vmem:[#allocation2] sm:$0x3] %v153
    // Predicated region
    $region22: #{_lambda_.19} parent=1 // pred_check
      _
    $region23: #{_lambda_.19} parent=1 // pred_check_branch
      %160 = sbr.rel (0) target = $region25
    $region24: #{_lambda_.19} parent=1 // pred_region
      %s162 = ssub.s32 32, 32
      %163 = vsyncadd [#allocation3], %s162
      %s165 = sshll.u32 [#allocation2], 4
      %s166 = int_to_ptr.vmem [resolvable:$true] %s165
      %168 = dma.vmem_to_hbm [thread:$0]  %s166, 32, %s5, [#allocation3]
    $region25: #{_lambda_.19} parent=1 // pred_fallthru
      _
    // Predicated region
    $region26: #{_lambda_.19} parent=1 // pred_check
      _
    $region27: #{_lambda_.19} parent=1 // pred_check_branch
      %170 = sbr.rel (0) target = $region29
    $region28: #{_lambda_.19} parent=1 // pred_region
      %171 = dma.done [#allocation3], 32
    $region29: #{_lambda_.19} parent=1 // pred_fallthru
      _
    %172 = vsyncpa [#allocation3], 1

</llo_original>
